<compile_context>
chip_gen: v7x
topology: tpu7x:2x2x1
jax: 0.10.0
libtpu: 0.0.40
codegen_flags: <defaults>
</compile_context>

<pallas_src>
import functools

import jax
import jax.numpy as jnp
from jax.experimental import pallas as pl
from jax.experimental.pallas import tpu as pltpu

VMEM_LIMIT_BYTES = 32 * 1024 * 1024  # safe on v5e/v6e (128 MiB) and v7x (64 MiB)


def _round_up(x, m):
    return ((x + m - 1) // m) * m


def _compiler_params():
    return pltpu.CompilerParams(
        dimension_semantics=("parallel",),
        vmem_limit_bytes=VMEM_LIMIT_BYTES,
    )


# ----------------------------------------------------------------------------
# Tiled matmul + bias (+ReLU) kernel (used for conv1/conv2 im2col GEMMs)
# ----------------------------------------------------------------------------
def _matmul_bias_kernel(x_ref, w_ref, b_ref, o_ref, *, relu):
    acc = jnp.dot(x_ref[...], w_ref[...], preferred_element_type=jnp.float32)
    acc = acc + b_ref[...]            # bias in f32
    if relu:
        acc = jnp.maximum(acc, 0.0)
    o_ref[...] = acc.astype(o_ref.dtype)


def matmul_bias(x, w, b, *, relu, out_dtype=jnp.float32, tile_m=256):
    """y = x @ w + b (+ReLU).  x/w in bf16, f32 accumulation, grid-tiled over M."""
    M, K = x.shape
    N = w.shape[1]
    if M <= tile_m:
        tile, Mp = M, M
    else:
        tile = tile_m
        Mp = _round_up(M, tile)
        if Mp != M:
            x = jnp.pad(x, ((0, Mp - M), (0, 0)))
    cost = pl.CostEstimate(
        flops=int(2 * Mp * K * N),
        transcendentals=0,
        bytes_accessed=int(Mp * K * x.dtype.itemsize + K * N * w.dtype.itemsize
                           + Mp * N * jnp.dtype(out_dtype).itemsize),
    )
    y = pl.pallas_call(
        functools.partial(_matmul_bias_kernel, relu=relu),
        out_shape=jax.ShapeDtypeStruct((Mp, N), out_dtype),
        grid=(Mp // tile,),
        in_specs=[
            pl.BlockSpec((tile, K), lambda i: (i, 0)),
            pl.BlockSpec((K, N), lambda i: (0, 0)),
            pl.BlockSpec((1, N), lambda i: (0, 0)),
        ],
        out_specs=pl.BlockSpec((tile, N), lambda i: (i, 0)),
        compiler_params=_compiler_params(),
        cost_estimate=cost,
    )(x, w, b)
    return y[:M] if Mp != M else y


def conv2d_im2col(x_nhwc, w2d, b, *, k, relu, out_dtype):
    """Valid stride-1 conv as im2col (XLA glue) + tiled Pallas GEMM (small layers)."""
    N, H, W, C = x_nhwc.shape
    Ho, Wo = H - k + 1, W - k + 1
    cols = [x_nhwc[:, di:di + Ho, dj:dj + Wo, :]
            for di in range(k) for dj in range(k)]
    patches = jnp.stack(cols, axis=3).reshape(N * Ho * Wo, k * k * C)
    patches = patches.astype(jnp.bfloat16)
    cout = w2d.shape[1]
    y = matmul_bias(patches, w2d, b, relu=relu, out_dtype=out_dtype)
    return y.reshape(N, Ho, Wo, cout)


# ----------------------------------------------------------------------------
# Direct conv kernel for conv3 (no HBM im2col): per-image sum of k*k shifted
# matmuls on the flattened (H*W, Cin) activation.
# ----------------------------------------------------------------------------
def _conv_direct_kernel(x_ref, w_ref, b_ref, o_ref, *, W, KS, Ho, Wo, relu):
    # x_ref: (H*W, Cin); accumulator rows are indexed by p = i*W + j
    # (rows with j >= Wo are junk and never stored).
    L = (Ho - 1) * W + Wo
    cout = o_ref.shape[-1]
    xf = x_ref[...]
    acc = jnp.zeros((L, cout), jnp.float32)
    for kh in range(KS):
        for kw in range(KS):
            s = kh * W + kw
            acc = acc + jnp.dot(xf[s:s + L, :], w_ref[kh * KS + kw],
                                preferred_element_type=jnp.float32)
    y = acc + b_ref[...]
    if relu:
        y = jnp.maximum(y, 0.0)
    for i in range(Ho):
        o_ref[i, :, :] = y[i * W:i * W + Wo, :].astype(o_ref.dtype)


def conv2d_direct(x_nhwc, w_taps, b, *, k, relu=True):
    N, H, W, C = x_nhwc.shape
    cout = w_taps.shape[-1]
    Ho, Wo = H - k + 1, W - k + 1
    xf = x_nhwc.reshape(N, H * W, C)           # free reshape
    cost = pl.CostEstimate(
        flops=int(2 * N * ((Ho - 1) * W + Wo) * C * cout * k * k),
        transcendentals=0,
        bytes_accessed=int(xf.size * xf.dtype.itemsize
                           + w_taps.size * w_taps.dtype.itemsize
                           + N * Ho * Wo * cout * 4),
    )
    out = pl.pallas_call(
        functools.partial(_conv_direct_kernel, W=W, KS=k, Ho=Ho, Wo=Wo, relu=relu),
        out_shape=jax.ShapeDtypeStruct((N, Ho, Wo, cout), jnp.float32),
        grid=(N,),
        in_specs=[
            pl.BlockSpec((None, H * W, C), lambda n: (n, 0, 0)),
            pl.BlockSpec((k * k, C, cout), lambda n: (0, 0, 0)),
            pl.BlockSpec((1, cout), lambda n: (0, 0)),
        ],
        out_specs=pl.BlockSpec((None, Ho, Wo, cout), lambda n: (n, 0, 0, 0)),
        compiler_params=_compiler_params(),
        cost_estimate=cost,
    )(xf, w_taps, b)
    return out


# ----------------------------------------------------------------------------
# 2x2 / stride-2 max-pool: single input pass, the 2x2 max is done in-kernel.
# Input is reshaped (free) to (N*Ho, 2, Wo, 2*C): the row-pair lives in dim 1
# and the column-pair is folded into the lane dimension.
# ----------------------------------------------------------------------------
def _maxpool_kernel(x_ref, o_ref, *, C):
    v = x_ref[...]                                   # (tile, 2, Wo, 2*C)
    m = jnp.maximum(v[:, 0, :, :], v[:, 1, :, :])    # max over row pair
    o_ref[...] = jnp.maximum(m[:, :, :C], m[:, :, C:]).astype(o_ref.dtype)


def maxpool_2x2(x_nhwc, *, out_dtype, tile_rows=512):
    N, H, W, C = x_nhwc.shape
    Ho, Wo = H // 2, W // 2
    M = N * Ho
    xr = x_nhwc.reshape(M, 2, Wo, 2 * C)             # free reshape
    if M <= tile_rows:
        tile, Mp = M, M
    else:
        tile = tile_rows
        Mp = _round_up(M, tile)
        if Mp != M:
            xr = jnp.pad(xr, ((0, Mp - M), (0, 0), (0, 0), (0, 0)))
    y = pl.pallas_call(
        functools.partial(_maxpool_kernel, C=C),
        out_shape=jax.ShapeDtypeStruct((Mp, Wo, C), out_dtype),
        grid=(Mp // tile,),
        in_specs=[pl.BlockSpec((tile, 2, Wo, 2 * C), lambda i: (i, 0, 0, 0))],
        out_specs=pl.BlockSpec((tile, Wo, C), lambda i: (i, 0, 0)),
        compiler_params=_compiler_params(),
    )(xr)
    y = y[:M] if Mp != M else y
    return y.reshape(N, Ho, Wo, C)


# ----------------------------------------------------------------------------
# Fused fc1 -> relu -> fc2 -> relu -> fc3 (all dims padded to 128 lanes)
# ----------------------------------------------------------------------------
def _fc_fused_kernel(x_ref, w1_ref, b1_ref, w2_ref, b2_ref, w3_ref, b3_ref, o_ref):
    h = jnp.dot(x_ref[...], w1_ref[...], preferred_element_type=jnp.float32)
    h = jnp.maximum(h + b1_ref[...], 0.0).astype(jnp.bfloat16)
    h = jnp.dot(h, w2_ref[...], preferred_element_type=jnp.float32)
    h = jnp.maximum(h + b2_ref[...], 0.0).astype(jnp.bfloat16)
    h = jnp.dot(h, w3_ref[...], preferred_element_type=jnp.float32)
    o_ref[...] = (h + b3_ref[...]).astype(o_ref.dtype)


def fc_fused(x, w1, b1, w2, b2, w3, b3, *, tile_m=256):
    M, K = x.shape
    H1, H2, NO = w1.shape[1], w2.shape[1], w3.shape[1]
    if M <= tile_m:
        tile, Mp = M, M
    else:
        tile = tile_m
        Mp = _round_up(M, tile)
        if Mp != M:
            x = jnp.pad(x, ((0, Mp - M), (0, 0)))
    cost = pl.CostEstimate(
        flops=int(2 * Mp * (K * H1 + H1 * H2 + H2 * NO)),
        transcendentals=0,
        bytes_accessed=int(Mp * K * 2 + (K * H1 + H1 * H2 + H2 * NO) * 2 + Mp * NO * 4),
    )
    y = pl.pallas_call(
        _fc_fused_kernel,
        out_shape=jax.ShapeDtypeStruct((Mp, NO), jnp.float32),
        grid=(Mp // tile,),
        in_specs=[
            pl.BlockSpec((tile, K), lambda i: (i, 0)),
            pl.BlockSpec((K, H1), lambda i: (0, 0)),
            pl.BlockSpec((1, H1), lambda i: (0, 0)),
            pl.BlockSpec((H1, H2), lambda i: (0, 0)),
            pl.BlockSpec((1, H2), lambda i: (0, 0)),
            pl.BlockSpec((H2, NO), lambda i: (0, 0)),
            pl.BlockSpec((1, NO), lambda i: (0, 0)),
        ],
        out_specs=pl.BlockSpec((tile, NO), lambda i: (i, 0)),
        compiler_params=_compiler_params(),
        cost_estimate=cost,
    )(x, w1, b1, w2, b2, w3, b3)
    return y[:M] if Mp != M else y


# ----------------------------------------------------------------------------
# Parameters: PyTorch layouts, then one-time conversion to kernel layouts.
# ----------------------------------------------------------------------------
def init_params(key):
    ks = jax.random.split(key, 12)
    s = 0.05
    return {
        "conv1_w": jax.random.normal(ks[0], (8, 3, 3, 3), jnp.float32) * s,
        "conv1_b": jax.random.normal(ks[1], (8,), jnp.float32) * s,
        "conv2_w": jax.random.normal(ks[2], (64, 8, 3, 3), jnp.float32) * s,
        "conv2_b": jax.random.normal(ks[3], (64,), jnp.float32) * s,
        "conv3_w": jax.random.normal(ks[4], (128, 64, 5, 5), jnp.float32) * s,
        "conv3_b": jax.random.normal(ks[5], (128,), jnp.float32) * s,
        "fc1_w": jax.random.normal(ks[6], (120, 3200), jnp.float32) * s,
        "fc1_b": jax.random.normal(ks[7], (120,), jnp.float32) * s,
        "fc2_w": jax.random.normal(ks[8], (84, 120), jnp.float32) * s,
        "fc2_b": jax.random.normal(ks[9], (84,), jnp.float32) * s,
        "fc3_w": jax.random.normal(ks[10], (10, 84), jnp.float32) * s,
        "fc3_b": jax.random.normal(ks[11], (10,), jnp.float32) * s,
    }


def prepare_params(p):
    def conv_w2d(w):  # (Cout,Cin,kh,kw) -> (kh*kw*Cin, Cout), matches im2col order
        co, ci, kh, kw = w.shape
        return jnp.transpose(w, (2, 3, 1, 0)).reshape(kh * kw * ci, co)

    kp = {
        "w1": conv_w2d(p["conv1_w"]).astype(jnp.bfloat16),
        "b1": p["conv1_b"].reshape(1, 8).astype(jnp.float32),
        "w2": conv_w2d(p["conv2_w"]).astype(jnp.bfloat16),
        "b2": p["conv2_b"].reshape(1, 64).astype(jnp.float32),
        # conv3: taps (25, Cin, Cout), f32 (input stays f32; tiny layer)
        "w3": jnp.transpose(p["conv3_w"], (2, 3, 1, 0)).reshape(25, 64, 128)
                 .astype(jnp.float32),
        "b3": p["conv3_b"].reshape(1, 128).astype(jnp.float32),
    }
    # fc1: permute rows from PyTorch NCHW-flatten order (c*25+a*5+b) to the
    # NHWC-flatten order ((a*5+b)*128+c) used here; pad 120 -> 128 output lanes.
    wf1 = p["fc1_w"].T.reshape(128, 5, 5, 120).transpose(1, 2, 0, 3).reshape(3200, 120)
    kp["wf1"] = jnp.pad(wf1, ((0, 0), (0, 8))).astype(jnp.bfloat16)
    kp["bf1"] = jnp.pad(p["fc1_b"], (0, 8)).reshape(1, 128).astype(jnp.float32)
    kp["wf2"] = jnp.pad(p["fc2_w"].T, ((0, 8), (0, 44))).astype(jnp.bfloat16)
    kp["bf2"] = jnp.pad(p["fc2_b"], (0, 44)).reshape(1, 128).astype(jnp.float32)
    kp["wf3"] = jnp.pad(p["fc3_w"].T, ((0, 44), (0, 118))).astype(jnp.bfloat16)
    kp["bf3"] = jnp.pad(p["fc3_b"], (0, 118)).reshape(1, 128).astype(jnp.float32)
    return kp


# ----------------------------------------------------------------------------
# Forward pass (mirrors Net.forward; takes NCHW like PyTorch)
# ----------------------------------------------------------------------------
@jax.jit
def net_forward(kp, x_nchw):
    x = jnp.transpose(x_nchw, (0, 2, 3, 1))                                    # NHWC
    x = conv2d_im2col(x, kp["w1"], kp["b1"], k=3, relu=True,
                      out_dtype=jnp.bfloat16)                                  # (N,30,30,8)
    x = conv2d_im2col(x, kp["w2"], kp["b2"], k=3, relu=True,
                      out_dtype=jnp.float32)                                   # (N,28,28,64)
    x = maxpool_2x2(x, out_dtype=jnp.float32)                                  # (N,14,14,64)
    x = conv2d_direct(x, kp["w3"], kp["b3"], k=5, relu=True)                   # (N,10,10,128)
    x = maxpool_2x2(x, out_dtype=jnp.bfloat16)                                 # (N,5,5,128)
    n = x.shape[0]
    x = x.reshape(n, 5 * 5 * 128)        # NHWC flatten (fc1 weight pre-permuted to match)
    out = fc_fused(x, kp["wf1"], kp["bf1"], kp["wf2"], kp["bf2"],
                   kp["wf3"], kp["bf3"])                                       # (N,128)
    return out[:, :10]


# ----------------------------------------------------------------------------
if __name__ == "__main__":
    key = jax.random.PRNGKey(0)
    pkey, xkey = jax.random.split(key)
    params = init_params(pkey)
    kparams = prepare_params(params)

    # Architecture implies 3x32x32 inputs (final feature map is 128x5x5).
    x = jax.random.normal(xkey, (2, 3, 32, 32), jnp.float32)   # NCHW like PyTorch

    out = net_forward(kparams, x)
    out = jax.block_until_ready(out)
    assert out.shape == (2, 10) and out.dtype == jnp.float32
    assert bool(jnp.all(jnp.isfinite(out)))
    print("KERNEL_OK")
</pallas_src>

<mosaic_0001>
module attributes {stable_mosaic.version = 11 : i64} {
  func.func @_matmul_bias_kernel(%arg0: i32, %arg1: memref<256x27xbf16, #tpu.memory_space<vmem>>, %arg2: memref<27x8xbf16, #tpu.memory_space<vmem>>, %arg3: memref<1x8xf32, #tpu.memory_space<vmem>>, %arg4: memref<256x8xbf16, #tpu.memory_space<vmem>>) attributes {dimension_semantics = [#tpu.dimension_semantics<parallel>], iteration_bounds = array<i64: 8>, scalar_prefetch = 0 : i64, scratch_operands = 0 : i64, tpu.core_type = #tpu.core_type<tc>, window_params = [{transform_indices = @transform_0, window_bounds = array<i64: 256, 27>}, {pipeline_mode = #tpu.pipeline_mode<synchronous>, transform_indices = @transform_1, window_bounds = array<i64: 27, 8>}, {pipeline_mode = #tpu.pipeline_mode<synchronous>, transform_indices = @transform_2, window_bounds = array<i64: 1, 8>}, {transform_indices = @transform_3, window_bounds = array<i64: 256, 8>}]} {
    %c0 = arith.constant 0 : index
    %c0_0 = arith.constant 0 : index
    %0 = vector.load %arg1[%c0, %c0_0] : memref<256x27xbf16, #tpu.memory_space<vmem>>, vector<256x27xbf16>
    %c0_1 = arith.constant 0 : index
    %c0_2 = arith.constant 0 : index
    %1 = vector.load %arg2[%c0_1, %c0_2] : memref<27x8xbf16, #tpu.memory_space<vmem>>, vector<27x8xbf16>
    %cst = arith.constant dense<0.000000e+00> : vector<256x8xf32>
    %2 = tpu.matmul %0, %1, %cst {dimension_numbers = #tpu.dot_dimension_numbers<[1], [0], [0], [1], [0, 0, 1, 1], [], []>} : vector<256x27xbf16>, vector<27x8xbf16>, vector<256x8xf32> -> vector<256x8xf32>
    %c0_3 = arith.constant 0 : index
    %c0_4 = arith.constant 0 : index
    %3 = vector.load %arg3[%c0_3, %c0_4] : memref<1x8xf32, #tpu.memory_space<vmem>>, vector<1x8xf32>
    %4 = vector.broadcast %3 : vector<1x8xf32> to vector<256x8xf32>
    %5 = arith.addf %2, %4 : vector<256x8xf32>
    %cst_5 = arith.constant 0.000000e+00 : f32
    %6 = vector.broadcast %cst_5 : f32 to vector<256x8xf32>
    %7 = arith.maximumf %5, %6 : vector<256x8xf32>
    %8 = arith.truncf %7 : vector<256x8xf32> to vector<256x8xbf16>
    %c0_6 = arith.constant 0 : index
    %c0_7 = arith.constant 0 : index
    %9 = vector.load %arg4[%c0_6, %c0_7] : memref<256x8xbf16, #tpu.memory_space<vmem>>, vector<256x8xbf16>
    tpu.vector_store %arg4[%c0_6, %c0_7], %8 {strides = array<i32>} : memref<256x8xbf16, #tpu.memory_space<vmem>>, vector<256x8xbf16>,
    return
  }
  func.func @transform_0(%arg0: i32) -> (i32, i32) {
    %c0_i32 = arith.constant 0 : i32
    %c0_i32_0 = arith.constant 0 : i32
    return %arg0, %c0_i32 : i32, i32
  }
  func.func @transform_1(%arg0: i32) -> (i32, i32) {
    %c0_i32 = arith.constant 0 : i32
    %c0_i32_0 = arith.constant 0 : i32
    %c0_i32_1 = arith.constant 0 : i32
    return %c0_i32, %c0_i32_0 : i32, i32
  }
  func.func @transform_2(%arg0: i32) -> (i32, i32) {
    %c0_i32 = arith.constant 0 : i32
    %c0_i32_0 = arith.constant 0 : i32
    %c0_i32_1 = arith.constant 0 : i32
    return %c0_i32, %c0_i32_0 : i32, i32
  }
  func.func @transform_3(%arg0: i32) -> (i32, i32) {
    %c0_i32 = arith.constant 0 : i32
    %c0_i32_0 = arith.constant 0 : i32
    return %arg0, %c0_i32 : i32, i32
  }
}

module attributes {stable_mosaic.version = 11 : i64} {
  func.func @_matmul_bias_kernel(%arg0: i32, %arg1: memref<256x72xbf16, #tpu.memory_space<vmem>>, %arg2: memref<72x64xbf16, #tpu.memory_space<vmem>>, %arg3: memref<1x64xf32, #tpu.memory_space<vmem>>, %arg4: memref<256x64xf32, #tpu.memory_space<vmem>>) attributes {dimension_semantics = [#tpu.dimension_semantics<parallel>], iteration_bounds = array<i64: 7>, scalar_prefetch = 0 : i64, scratch_operands = 0 : i64, tpu.core_type = #tpu.core_type<tc>, window_params = [{transform_indices = @transform_0, window_bounds = array<i64: 256, 72>}, {pipeline_mode = #tpu.pipeline_mode<synchronous>, transform_indices = @transform_1, window_bounds = array<i64: 72, 64>}, {pipeline_mode = #tpu.pipeline_mode<synchronous>, transform_indices = @transform_2, window_bounds = array<i64: 1, 64>}, {transform_indices = @transform_3, window_bounds = array<i64: 256, 64>}]} {
    %c0 = arith.constant 0 : index
    %c0_0 = arith.constant 0 : index
    %0 = vector.load %arg1[%c0, %c0_0] : memref<256x72xbf16, #tpu.memory_space<vmem>>, vector<256x72xbf16>
    %c0_1 = arith.constant 0 : index
    %c0_2 = arith.constant 0 : index
    %1 = vector.load %arg2[%c0_1, %c0_2] : memref<72x64xbf16, #tpu.memory_space<vmem>>, vector<72x64xbf16>
    %cst = arith.constant dense<0.000000e+00> : vector<256x64xf32>
    %2 = tpu.matmul %0, %1, %cst {dimension_numbers = #tpu.dot_dimension_numbers<[1], [0], [0], [1], [0, 0, 1, 1], [], []>} : vector<256x72xbf16>, vector<72x64xbf16>, vector<256x64xf32> -> vector<256x64xf32>
    %c0_3 = arith.constant 0 : index
    %c0_4 = arith.constant 0 : index
    %3 = vector.load %arg3[%c0_3, %c0_4] : memref<1x64xf32, #tpu.memory_space<vmem>>, vector<1x64xf32>
    %4 = vector.broadcast %3 : vector<1x64xf32> to vector<256x64xf32>
    %5 = arith.addf %2, %4 : vector<256x64xf32>
    %cst_5 = arith.constant 0.000000e+00 : f32
    %6 = vector.broadcast %cst_5 : f32 to vector<256x64xf32>
    %7 = arith.maximumf %5, %6 : vector<256x64xf32>
    %c0_6 = arith.constant 0 : index
    %c0_7 = arith.constant 0 : index
    %8 = vector.load %arg4[%c0_6, %c0_7] : memref<256x64xf32, #tpu.memory_space<vmem>>, vector<256x64xf32>
    tpu.vector_store %arg4[%c0_6, %c0_7], %7 {strides = array<i32>} : memref<256x64xf32, #tpu.memory_space<vmem>>, vector<256x64xf32>,
    return
  }
  func.func @transform_0(%arg0: i32) -> (i32, i32) {
    %c0_i32 = arith.constant 0 : i32
    %c0_i32_0 = arith.constant 0 : i32
    return %arg0, %c0_i32 : i32, i32
  }
  func.func @transform_1(%arg0: i32) -> (i32, i32) {
    %c0_i32 = arith.constant 0 : i32
    %c0_i32_0 = arith.constant 0 : i32
    %c0_i32_1 = arith.constant 0 : i32
    return %c0_i32, %c0_i32_0 : i32, i32
  }
  func.func @transform_2(%arg0: i32) -> (i32, i32) {
    %c0_i32 = arith.constant 0 : i32
    %c0_i32_0 = arith.constant 0 : i32
    %c0_i32_1 = arith.constant 0 : i32
    return %c0_i32, %c0_i32_0 : i32, i32
  }
  func.func @transform_3(%arg0: i32) -> (i32, i32) {
    %c0_i32 = arith.constant 0 : i32
    %c0_i32_0 = arith.constant 0 : i32
    return %arg0, %c0_i32 : i32, i32
  }
}

module attributes {stable_mosaic.version = 11 : i64} {
  func.func @_maxpool_kernel(%arg0: i32, %arg1: memref<28x2x14x128xf32, #tpu.memory_space<vmem>>, %arg2: memref<28x14x64xf32, #tpu.memory_space<vmem>>) attributes {dimension_semantics = [#tpu.dimension_semantics<parallel>], iteration_bounds = array<i64: 1>, scalar_prefetch = 0 : i64, scratch_operands = 0 : i64, tpu.core_type = #tpu.core_type<tc>, window_params = [{transform_indices = @transform_0, window_bounds = array<i64: 28, 2, 14, 128>}, {transform_indices = @transform_1, window_bounds = array<i64: 28, 14, 64>}]} {
    %c0 = arith.constant 0 : index
    %c0_0 = arith.constant 0 : index
    %c0_1 = arith.constant 0 : index
    %c0_2 = arith.constant 0 : index
    %0 = vector.load %arg1[%c0, %c0_0, %c0_1, %c0_2] : memref<28x2x14x128xf32, #tpu.memory_space<vmem>>, vector<28x2x14x128xf32>
    %1 = vector.extract_strided_slice %0 {offsets = [0, 0, 0, 0], sizes = [28, 1, 14, 128], strides = [1, 1, 1, 1]} : vector<28x2x14x128xf32> to vector<28x1x14x128xf32>
    %2 = vector.shape_cast %1 : vector<28x1x14x128xf32> to vector<28x14x128xf32>
    %3 = vector.extract_strided_slice %0 {offsets = [0, 1, 0, 0], sizes = [28, 1, 14, 128], strides = [1, 1, 1, 1]} : vector<28x2x14x128xf32> to vector<28x1x14x128xf32>
    %4 = vector.shape_cast %3 : vector<28x1x14x128xf32> to vector<28x14x128xf32>
    %5 = arith.maximumf %2, %4 : vector<28x14x128xf32>
    %6 = vector.extract_strided_slice %5 {offsets = [0, 0, 0], sizes = [28, 14, 64], strides = [1, 1, 1]} : vector<28x14x128xf32> to vector<28x14x64xf32>
    %7 = vector.extract_strided_slice %5 {offsets = [0, 0, 64], sizes = [28, 14, 64], strides = [1, 1, 1]} : vector<28x14x128xf32> to vector<28x14x64xf32>
    %8 = arith.maximumf %6, %7 : vector<28x14x64xf32>
    %c0_3 = arith.constant 0 : index
    %c0_4 = arith.constant 0 : index
    %c0_5 = arith.constant 0 : index
    %9 = vector.load %arg2[%c0_3, %c0_4, %c0_5] : memref<28x14x64xf32, #tpu.memory_space<vmem>>, vector<28x14x64xf32>
    tpu.vector_store %arg2[%c0_3, %c0_4, %c0_5], %8 {strides = array<i32>} : memref<28x14x64xf32, #tpu.memory_space<vmem>>, vector<28x14x64xf32>,
    return
  }
  func.func @transform_0(%arg0: i32) -> (i32, i32, i32, i32) {
    %c0_i32 = arith.constant 0 : i32
    %c0_i32_0 = arith.constant 0 : i32
    %c0_i32_1 = arith.constant 0 : i32
    %c0_i32_2 = arith.constant 0 : i32
    return %arg0, %c0_i32, %c0_i32_0, %c0_i32_1 : i32, i32, i32, i32
  }
  func.func @transform_1(%arg0: i32) -> (i32, i32, i32) {
    %c0_i32 = arith.constant 0 : i32
    %c0_i32_0 = arith.constant 0 : i32
    %c0_i32_1 = arith.constant 0 : i32
    return %arg0, %c0_i32, %c0_i32_0 : i32, i32, i32
  }
}

module attributes {stable_mosaic.version = 11 : i64} {
  func.func @_conv_direct_kernel(%arg0: i32, %arg1: memref<1x196x64xf32, #tpu.memory_space<vmem>>, %arg2: memref<25x64x128xf32, #tpu.memory_space<vmem>>, %arg3: memref<1x128xf32, #tpu.memory_space<vmem>>, %arg4: memref<1x10x10x128xf32, #tpu.memory_space<vmem>>) attributes {dimension_semantics = [#tpu.dimension_semantics<parallel>], iteration_bounds = array<i64: 2>, scalar_prefetch = 0 : i64, scratch_operands = 0 : i64, tpu.core_type = #tpu.core_type<tc>, window_params = [{transform_indices = @transform_0, window_bounds = array<i64: 1, 196, 64>}, {pipeline_mode = #tpu.pipeline_mode<synchronous>, transform_indices = @transform_1, window_bounds = array<i64: 25, 64, 128>}, {pipeline_mode = #tpu.pipeline_mode<synchronous>, transform_indices = @transform_2, window_bounds = array<i64: 1, 128>}, {transform_indices = @transform_3, window_bounds = array<i64: 1, 10, 10, 128>}]} {
    %c0 = arith.constant 0 : index
    %c0_0 = arith.constant 0 : index
    %c0_1 = arith.constant 0 : index
    %0 = vector.load %arg1[%c0, %c0_0, %c0_1] : memref<1x196x64xf32, #tpu.memory_space<vmem>>, vector<1x196x64xf32>
    %1 = vector.shape_cast %0 : vector<1x196x64xf32> to vector<196x64xf32>
    %cst = arith.constant 0.000000e+00 : f32
    %2 = vector.broadcast %cst : f32 to vector<136x128xf32>
    %3 = vector.extract_strided_slice %1 {offsets = [0, 0], sizes = [136, 64], strides = [1, 1]} : vector<196x64xf32> to vector<136x64xf32>
    %c0_2 = arith.constant 0 : index
    %c0_3 = arith.constant 0 : index
    %c0_4 = arith.constant 0 : index
    %4 = vector.load %arg2[%c0_2, %c0_3, %c0_4] : memref<25x64x128xf32, #tpu.memory_space<vmem>>, vector<1x64x128xf32>
    %5 = vector.shape_cast %4 : vector<1x64x128xf32> to vector<64x128xf32>
    %cst_5 = arith.constant dense<0.000000e+00> : vector<136x128xf32>
    %6 = tpu.matmul %3, %5, %cst_5 {dimension_numbers = #tpu.dot_dimension_numbers<[1], [0], [0], [1], [0, 0, 1, 1], [], []>} : vector<136x64xf32>, vector<64x128xf32>, vector<136x128xf32> -> vector<136x128xf32>
    %7 = arith.addf %2, %6 : vector<136x128xf32>
    %8 = vector.extract_strided_slice %1 {offsets = [1, 0], sizes = [136, 64], strides = [1, 1]} : vector<196x64xf32> to vector<136x64xf32>
    %c1 = arith.constant 1 : index
    %c0_6 = arith.constant 0 : index
    %c0_7 = arith.constant 0 : index
    %9 = vector.load %arg2[%c1, %c0_6, %c0_7] : memref<25x64x128xf32, #tpu.memory_space<vmem>>, vector<1x64x128xf32>
    %10 = vector.shape_cast %9 : vector<1x64x128xf32> to vector<64x128xf32>
    %cst_8 = arith.constant dense<0.000000e+00> : vector<136x128xf32>
    %11 = tpu.matmul %8, %10, %cst_8 {dimension_numbers = #tpu.dot_dimension_numbers<[1], [0], [0], [1], [0, 0, 1, 1], [], []>} : vector<136x64xf32>, vector<64x128xf32>, vector<136x128xf32> -> vector<136x128xf32>
    %12 = arith.addf %7, %11 : vector<136x128xf32>
    %13 = vector.extract_strided_slice %1 {offsets = [2, 0], sizes = [136, 64], strides = [1, 1]} : vector<196x64xf32> to vector<136x64xf32>
    %c2 = arith.constant 2 : index
    %c0_9 = arith.constant 0 : index
    %c0_10 = arith.constant 0 : index
    %14 = vector.load %arg2[%c2, %c0_9, %c0_10] : memref<25x64x128xf32, #tpu.memory_space<vmem>>, vector<1x64x128xf32>
    %15 = vector.shape_cast %14 : vector<1x64x128xf32> to vector<64x128xf32>
    %cst_11 = arith.constant dense<0.000000e+00> : vector<136x128xf32>
    %16 = tpu.matmul %13, %15, %cst_11 {dimension_numbers = #tpu.dot_dimension_numbers<[1], [0], [0], [1], [0, 0, 1, 1], [], []>} : vector<136x64xf32>, vector<64x128xf32>, vector<136x128xf32> -> vector<136x128xf32>
    %17 = arith.addf %12, %16 : vector<136x128xf32>
    %18 = vector.extract_strided_slice %1 {offsets = [3, 0], sizes = [136, 64], strides = [1, 1]} : vector<196x64xf32> to vector<136x64xf32>
    %c3 = arith.constant 3 : index
    %c0_12 = arith.constant 0 : index
    %c0_13 = arith.constant 0 : index
    %19 = vector.load %arg2[%c3, %c0_12, %c0_13] : memref<25x64x128xf32, #tpu.memory_space<vmem>>, vector<1x64x128xf32>
    %20 = vector.shape_cast %19 : vector<1x64x128xf32> to vector<64x128xf32>
    %cst_14 = arith.constant dense<0.000000e+00> : vector<136x128xf32>
    %21 = tpu.matmul %18, %20, %cst_14 {dimension_numbers = #tpu.dot_dimension_numbers<[1], [0], [0], [1], [0, 0, 1, 1], [], []>} : vector<136x64xf32>, vector<64x128xf32>, vector<136x128xf32> -> vector<136x128xf32>
    %22 = arith.addf %17, %21 : vector<136x128xf32>
    %23 = vector.extract_strided_slice %1 {offsets = [4, 0], sizes = [136, 64], strides = [1, 1]} : vector<196x64xf32> to vector<136x64xf32>
    %c4 = arith.constant 4 : index
    %c0_15 = arith.constant 0 : index
    %c0_16 = arith.constant 0 : index
    %24 = vector.load %arg2[%c4, %c0_15, %c0_16] : memref<25x64x128xf32, #tpu.memory_space<vmem>>, vector<1x64x128xf32>
    %25 = vector.shape_cast %24 : vector<1x64x128xf32> to vector<64x128xf32>
    %cst_17 = arith.constant dense<0.000000e+00> : vector<136x128xf32>
    %26 = tpu.matmul %23, %25, %cst_17 {dimension_numbers = #tpu.dot_dimension_numbers<[1], [0], [0], [1], [0, 0, 1, 1], [], []>} : vector<136x64xf32>, vector<64x128xf32>, vector<136x128xf32> -> vector<136x128xf32>
    %27 = arith.addf %22, %26 : vector<136x128xf32>
    %28 = vector.extract_strided_slice %1 {offsets = [14, 0], sizes = [136, 64], strides = [1, 1]} : vector<196x64xf32> to vector<136x64xf32>
    %c5 = arith.constant 5 : index
    %c0_18 = arith.constant 0 : index
    %c0_19 = arith.constant 0 : index
    %29 = vector.load %arg2[%c5, %c0_18, %c0_19] : memref<25x64x128xf32, #tpu.memory_space<vmem>>, vector<1x64x128xf32>
    %30 = vector.shape_cast %29 : vector<1x64x128xf32> to vector<64x128xf32>
    %cst_20 = arith.constant dense<0.000000e+00> : vector<136x128xf32>
    %31 = tpu.matmul %28, %30, %cst_20 {dimension_numbers = #tpu.dot_dimension_numbers<[1], [0], [0], [1], [0, 0, 1, 1], [], []>} : vector<136x64xf32>, vector<64x128xf32>, vector<136x128xf32> -> vector<136x128xf32>
    %32 = arith.addf %27, %31 : vector<136x128xf32>
    %33 = vector.extract_strided_slice %1 {offsets = [15, 0], sizes = [136, 64], strides = [1, 1]} : vector<196x64xf32> to vector<136x64xf32>
    %c6 = arith.constant 6 : index
    %c0_21 = arith.constant 0 : index
    %c0_22 = arith.constant 0 : index
    %34 = vector.load %arg2[%c6, %c0_21, %c0_22] : memref<25x64x128xf32, #tpu.memory_space<vmem>>, vector<1x64x128xf32>
    %35 = vector.shape_cast %34 : vector<1x64x128xf32> to vector<64x128xf32>
    %cst_23 = arith.constant dense<0.000000e+00> : vector<136x128xf32>
    %36 = tpu.matmul %33, %35, %cst_23 {dimension_numbers = #tpu.dot_dimension_numbers<[1], [0], [0], [1], [0, 0, 1, 1], [], []>} : vector<136x64xf32>, vector<64x128xf32>, vector<136x128xf32> -> vector<136x128xf32>
    %37 = arith.addf %32, %36 : vector<136x128xf32>
    %38 = vector.extract_strided_slice %1 {offsets = [16, 0], sizes = [136, 64], strides = [1, 1]} : vector<196x64xf32> to vector<136x64xf32>
    %c7 = arith.constant 7 : index
    %c0_24 = arith.constant 0 : index
    %c0_25 = arith.constant 0 : index
    %39 = vector.load %arg2[%c7, %c0_24, %c0_25] : memref<25x64x128xf32, #tpu.memory_space<vmem>>, vector<1x64x128xf32>
    %40 = vector.shape_cast %39 : vector<1x64x128xf32> to vector<64x128xf32>
    %cst_26 = arith.constant dense<0.000000e+00> : vector<136x128xf32>
    %41 = tpu.matmul %38, %40, %cst_26 {dimension_numbers = #tpu.dot_dimension_numbers<[1], [0], [0], [1], [0, 0, 1, 1], [], []>} : vector<136x64xf32>, vector<64x128xf32>, vector<136x128xf32> -> vector<136x128xf32>
    %42 = arith.addf %37, %41 : vector<136x128xf32>
    %43 = vector.extract_strided_slice %1 {offsets = [17, 0], sizes = [136, 64], strides = [1, 1]} : vector<196x64xf32> to vector<136x64xf32>
    %c8 = arith.constant 8 : index
    %c0_27 = arith.constant 0 : index
    %c0_28 = arith.constant 0 : index
    %44 = vector.load %arg2[%c8, %c0_27, %c0_28] : memref<25x64x128xf32, #tpu.memory_space<vmem>>, vector<1x64x128xf32>
    %45 = vector.shape_cast %44 : vector<1x64x128xf32> to vector<64x128xf32>
    %cst_29 = arith.constant dense<0.000000e+00> : vector<136x128xf32>
    %46 = tpu.matmul %43, %45, %cst_29 {dimension_numbers = #tpu.dot_dimension_numbers<[1], [0], [0], [1], [0, 0, 1, 1], [], []>} : vector<136x64xf32>, vector<64x128xf32>, vector<136x128xf32> -> vector<136x128xf32>
    %47 = arith.addf %42, %46 : vector<136x128xf32>
    %48 = vector.extract_strided_slice %1 {offsets = [18, 0], sizes = [136, 64], strides = [1, 1]} : vector<196x64xf32> to vector<136x64xf32>
    %c9 = arith.constant 9 : index
    %c0_30 = arith.constant 0 : index
    %c0_31 = arith.constant 0 : index
    %49 = vector.load %arg2[%c9, %c0_30, %c0_31] : memref<25x64x128xf32, #tpu.memory_space<vmem>>, vector<1x64x128xf32>
    %50 = vector.shape_cast %49 : vector<1x64x128xf32> to vector<64x128xf32>
    %cst_32 = arith.constant dense<0.000000e+00> : vector<136x128xf32>
    %51 = tpu.matmul %48, %50, %cst_32 {dimension_numbers = #tpu.dot_dimension_numbers<[1], [0], [0], [1], [0, 0, 1, 1], [], []>} : vector<136x64xf32>, vector<64x128xf32>, vector<136x128xf32> -> vector<136x128xf32>
    %52 = arith.addf %47, %51 : vector<136x128xf32>
    %53 = vector.extract_strided_slice %1 {offsets = [28, 0], sizes = [136, 64], strides = [1, 1]} : vector<196x64xf32> to vector<136x64xf32>
    %c10 = arith.constant 10 : index
    %c0_33 = arith.constant 0 : index
    %c0_34 = arith.constant 0 : index
    %54 = vector.load %arg2[%c10, %c0_33, %c0_34] : memref<25x64x128xf32, #tpu.memory_space<vmem>>, vector<1x64x128xf32>
    %55 = vector.shape_cast %54 : vector<1x64x128xf32> to vector<64x128xf32>
    %cst_35 = arith.constant dense<0.000000e+00> : vector<136x128xf32>
    %56 = tpu.matmul %53, %55, %cst_35 {dimension_numbers = #tpu.dot_dimension_numbers<[1], [0], [0], [1], [0, 0, 1, 1], [], []>} : vector<136x64xf32>, vector<64x128xf32>, vector<136x128xf32> -> vector<136x128xf32>
    %57 = arith.addf %52, %56 : vector<136x128xf32>
    %58 = vector.extract_strided_slice %1 {offsets = [29, 0], sizes = [136, 64], strides = [1, 1]} : vector<196x64xf32> to vector<136x64xf32>
    %c11 = arith.constant 11 : index
    %c0_36 = arith.constant 0 : index
    %c0_37 = arith.constant 0 : index
    %59 = vector.load %arg2[%c11, %c0_36, %c0_37] : memref<25x64x128xf32, #tpu.memory_space<vmem>>, vector<1x64x128xf32>
    %60 = vector.shape_cast %59 : vector<1x64x128xf32> to vector<64x128xf32>
    %cst_38 = arith.constant dense<0.000000e+00> : vector<136x128xf32>
    %61 = tpu.matmul %58, %60, %cst_38 {dimension_numbers = #tpu.dot_dimension_numbers<[1], [0], [0], [1], [0, 0, 1, 1], [], []>} : vector<136x64xf32>, vector<64x128xf32>, vector<136x128xf32> -> vector<136x128xf32>
    %62 = arith.addf %57, %61 : vector<136x128xf32>
    %63 = vector.extract_strided_slice %1 {offsets = [30, 0], sizes = [136, 64], strides = [1, 1]} : vector<196x64xf32> to vector<136x64xf32>
    %c12 = arith.constant 12 : index
    %c0_39 = arith.constant 0 : index
    %c0_40 = arith.constant 0 : index
    %64 = vector.load %arg2[%c12, %c0_39, %c0_40] : memref<25x64x128xf32, #tpu.memory_space<vmem>>, vector<1x64x128xf32>
    %65 = vector.shape_cast %64 : vector<1x64x128xf32> to vector<64x128xf32>
    %cst_41 = arith.constant dense<0.000000e+00> : vector<136x128xf32>
    %66 = tpu.matmul %63, %65, %cst_41 {dimension_numbers = #tpu.dot_dimension_numbers<[1], [0], [0], [1], [0, 0, 1, 1], [], []>} : vector<136x64xf32>, vector<64x128xf32>, vector<136x128xf32> -> vector<136x128xf32>
    %67 = arith.addf %62, %66 : vector<136x128xf32>
    %68 = vector.extract_strided_slice %1 {offsets = [31, 0], sizes = [136, 64], strides = [1, 1]} : vector<196x64xf32> to vector<136x64xf32>
    %c13 = arith.constant 13 : index
    %c0_42 = arith.constant 0 : index
    %c0_43 = arith.constant 0 : index
    %69 = vector.load %arg2[%c13, %c0_42, %c0_43] : memref<25x64x128xf32, #tpu.memory_space<vmem>>, vector<1x64x128xf32>
    %70 = vector.shape_cast %69 : vector<1x64x128xf32> to vector<64x128xf32>
    %cst_44 = arith.constant dense<0.000000e+00> : vector<136x128xf32>
    %71 = tpu.matmul %68, %70, %cst_44 {dimension_numbers = #tpu.dot_dimension_numbers<[1], [0], [0], [1], [0, 0, 1, 1], [], []>} : vector<136x64xf32>, vector<64x128xf32>, vector<136x128xf32> -> vector<136x128xf32>
    %72 = arith.addf %67, %71 : vector<136x128xf32>
    %73 = vector.extract_strided_slice %1 {offsets = [32, 0], sizes = [136, 64], strides = [1, 1]} : vector<196x64xf32> to vector<136x64xf32>
    %c14 = arith.constant 14 : index
    %c0_45 = arith.constant 0 : index
    %c0_46 = arith.constant 0 : index
    %74 = vector.load %arg2[%c14, %c0_45, %c0_46] : memref<25x64x128xf32, #tpu.memory_space<vmem>>, vector<1x64x128xf32>
    %75 = vector.shape_cast %74 : vector<1x64x128xf32> to vector<64x128xf32>
    %cst_47 = arith.constant dense<0.000000e+00> : vector<136x128xf32>
    %76 = tpu.matmul %73, %75, %cst_47 {dimension_numbers = #tpu.dot_dimension_numbers<[1], [0], [0], [1], [0, 0, 1, 1], [], []>} : vector<136x64xf32>, vector<64x128xf32>, vector<136x128xf32> -> vector<136x128xf32>
    %77 = arith.addf %72, %76 : vector<136x128xf32>
    %78 = vector.extract_strided_slice %1 {offsets = [42, 0], sizes = [136, 64], strides = [1, 1]} : vector<196x64xf32> to vector<136x64xf32>
    %c15 = arith.constant 15 : index
    %c0_48 = arith.constant 0 : index
    %c0_49 = arith.constant 0 : index
    %79 = vector.load %arg2[%c15, %c0_48, %c0_49] : memref<25x64x128xf32, #tpu.memory_space<vmem>>, vector<1x64x128xf32>
    %80 = vector.shape_cast %79 : vector<1x64x128xf32> to vector<64x128xf32>
    %cst_50 = arith.constant dense<0.000000e+00> : vector<136x128xf32>
    %81 = tpu.matmul %78, %80, %cst_50 {dimension_numbers = #tpu.dot_dimension_numbers<[1], [0], [0], [1], [0, 0, 1, 1], [], []>} : vector<136x64xf32>, vector<64x128xf32>, vector<136x128xf32> -> vector<136x128xf32>
    %82 = arith.addf %77, %81 : vector<136x128xf32>
    %83 = vector.extract_strided_slice %1 {offsets = [43, 0], sizes = [136, 64], strides = [1, 1]} : vector<196x64xf32> to vector<136x64xf32>
    %c16 = arith.constant 16 : index
    %c0_51 = arith.constant 0 : index
    %c0_52 = arith.constant 0 : index
    %84 = vector.load %arg2[%c16, %c0_51, %c0_52] : memref<25x64x128xf32, #tpu.memory_space<vmem>>, vector<1x64x128xf32>
    %85 = vector.shape_cast %84 : vector<1x64x128xf32> to vector<64x128xf32>
    %cst_53 = arith.constant dense<0.000000e+00> : vector<136x128xf32>
    %86 = tpu.matmul %83, %85, %cst_53 {dimension_numbers = #tpu.dot_dimension_numbers<[1], [0], [0], [1], [0, 0, 1, 1], [], []>} : vector<136x64xf32>, vector<64x128xf32>, vector<136x128xf32> -> vector<136x128xf32>
    %87 = arith.addf %82, %86 : vector<136x128xf32>
    %88 = vector.extract_strided_slice %1 {offsets = [44, 0], sizes = [136, 64], strides = [1, 1]} : vector<196x64xf32> to vector<136x64xf32>
    %c17 = arith.constant 17 : index
    %c0_54 = arith.constant 0 : index
    %c0_55 = arith.constant 0 : index
    %89 = vector.load %arg2[%c17, %c0_54, %c0_55] : memref<25x64x128xf32, #tpu.memory_space<vmem>>, vector<1x64x128xf32>
    %90 = vector.shape_cast %89 : vector<1x64x128xf32> to vector<64x128xf32>
    %cst_56 = arith.constant dense<0.000000e+00> : vector<136x128xf32>
    %91 = tpu.matmul %88, %90, %cst_56 {dimension_numbers = #tpu.dot_dimension_numbers<[1], [0], [0], [1], [0, 0, 1, 1], [], []>} : vector<136x64xf32>, vector<64x128xf32>, vector<136x128xf32> -> vector<136x128xf32>
    %92 = arith.addf %87, %91 : vector<136x128xf32>
    %93 = vector.extract_strided_slice %1 {offsets = [45, 0], sizes = [136, 64], strides = [1, 1]} : vector<196x64xf32> to vector<136x64xf32>
    %c18 = arith.constant 18 : index
    %c0_57 = arith.constant 0 : index
    %c0_58 = arith.constant 0 : index
    %94 = vector.load %arg2[%c18, %c0_57, %c0_58] : memref<25x64x128xf32, #tpu.memory_space<vmem>>, vector<1x64x128xf32>
    %95 = vector.shape_cast %94 : vector<1x64x128xf32> to vector<64x128xf32>
    %cst_59 = arith.constant dense<0.000000e+00> : vector<136x128xf32>
    %96 = tpu.matmul %93, %95, %cst_59 {dimension_numbers = #tpu.dot_dimension_numbers<[1], [0], [0], [1], [0, 0, 1, 1], [], []>} : vector<136x64xf32>, vector<64x128xf32>, vector<136x128xf32> -> vector<136x128xf32>
    %97 = arith.addf %92, %96 : vector<136x128xf32>
    %98 = vector.extract_strided_slice %1 {offsets = [46, 0], sizes = [136, 64], strides = [1, 1]} : vector<196x64xf32> to vector<136x64xf32>
    %c19 = arith.constant 19 : index
    %c0_60 = arith.constant 0 : index
    %c0_61 = arith.constant 0 : index
    %99 = vector.load %arg2[%c19, %c0_60, %c0_61] : memref<25x64x128xf32, #tpu.memory_space<vmem>>, vector<1x64x128xf32>
    %100 = vector.shape_cast %99 : vector<1x64x128xf32> to vector<64x128xf32>
    %cst_62 = arith.constant dense<0.000000e+00> : vector<136x128xf32>
    %101 = tpu.matmul %98, %100, %cst_62 {dimension_numbers = #tpu.dot_dimension_numbers<[1], [0], [0], [1], [0, 0, 1, 1], [], []>} : vector<136x64xf32>, vector<64x128xf32>, vector<136x128xf32> -> vector<136x128xf32>
    %102 = arith.addf %97, %101 : vector<136x128xf32>
    %103 = vector.extract_strided_slice %1 {offsets = [56, 0], sizes = [136, 64], strides = [1, 1]} : vector<196x64xf32> to vector<136x64xf32>
    %c20 = arith.constant 20 : index
    %c0_63 = arith.constant 0 : index
    %c0_64 = arith.constant 0 : index
    %104 = vector.load %arg2[%c20, %c0_63, %c0_64] : memref<25x64x128xf32, #tpu.memory_space<vmem>>, vector<1x64x128xf32>
    %105 = vector.shape_cast %104 : vector<1x64x128xf32> to vector<64x128xf32>
    %cst_65 = arith.constant dense<0.000000e+00> : vector<136x128xf32>
    %106 = tpu.matmul %103, %105, %cst_65 {dimension_numbers = #tpu.dot_dimension_numbers<[1], [0], [0], [1], [0, 0, 1, 1], [], []>} : vector<136x64xf32>, vector<64x128xf32>, vector<136x128xf32> -> vector<136x128xf32>
    %107 = arith.addf %102, %106 : vector<136x128xf32>
    %108 = vector.extract_strided_slice %1 {offsets = [57, 0], sizes = [136, 64], strides = [1, 1]} : vector<196x64xf32> to vector<136x64xf32>
    %c21 = arith.constant 21 : index
    %c0_66 = arith.constant 0 : index
    %c0_67 = arith.constant 0 : index
    %109 = vector.load %arg2[%c21, %c0_66, %c0_67] : memref<25x64x128xf32, #tpu.memory_space<vmem>>, vector<1x64x128xf32>
    %110 = vector.shape_cast %109 : vector<1x64x128xf32> to vector<64x128xf32>
    %cst_68 = arith.constant dense<0.000000e+00> : vector<136x128xf32>
    %111 = tpu.matmul %108, %110, %cst_68 {dimension_numbers = #tpu.dot_dimension_numbers<[1], [0], [0], [1], [0, 0, 1, 1], [], []>} : vector<136x64xf32>, vector<64x128xf32>, vector<136x128xf32> -> vector<136x128xf32>
    %112 = arith.addf %107, %111 : vector<136x128xf32>
    %113 = vector.extract_strided_slice %1 {offsets = [58, 0], sizes = [136, 64], strides = [1, 1]} : vector<196x64xf32> to vector<136x64xf32>
    %c22 = arith.constant 22 : index
    %c0_69 = arith.constant 0 : index
    %c0_70 = arith.constant 0 : index
    %114 = vector.load %arg2[%c22, %c0_69, %c0_70] : memref<25x64x128xf32, #tpu.memory_space<vmem>>, vector<1x64x128xf32>
    %115 = vector.shape_cast %114 : vector<1x64x128xf32> to vector<64x128xf32>
    %cst_71 = arith.constant dense<0.000000e+00> : vector<136x128xf32>
    %116 = tpu.matmul %113, %115, %cst_71 {dimension_numbers = #tpu.dot_dimension_numbers<[1], [0], [0], [1], [0, 0, 1, 1], [], []>} : vector<136x64xf32>, vector<64x128xf32>, vector<136x128xf32> -> vector<136x128xf32>
    %117 = arith.addf %112, %116 : vector<136x128xf32>
    %118 = vector.extract_strided_slice %1 {offsets = [59, 0], sizes = [136, 64], strides = [1, 1]} : vector<196x64xf32> to vector<136x64xf32>
    %c23 = arith.constant 23 : index
    %c0_72 = arith.constant 0 : index
    %c0_73 = arith.constant 0 : index
    %119 = vector.load %arg2[%c23, %c0_72, %c0_73] : memref<25x64x128xf32, #tpu.memory_space<vmem>>, vector<1x64x128xf32>
    %120 = vector.shape_cast %119 : vector<1x64x128xf32> to vector<64x128xf32>
    %cst_74 = arith.constant dense<0.000000e+00> : vector<136x128xf32>
    %121 = tpu.matmul %118, %120, %cst_74 {dimension_numbers = #tpu.dot_dimension_numbers<[1], [0], [0], [1], [0, 0, 1, 1], [], []>} : vector<136x64xf32>, vector<64x128xf32>, vector<136x128xf32> -> vector<136x128xf32>
    %122 = arith.addf %117, %121 : vector<136x128xf32>
    %123 = vector.extract_strided_slice %1 {offsets = [60, 0], sizes = [136, 64], strides = [1, 1]} : vector<196x64xf32> to vector<136x64xf32>
    %c24 = arith.constant 24 : index
    %c0_75 = arith.constant 0 : index
    %c0_76 = arith.constant 0 : index
    %124 = vector.load %arg2[%c24, %c0_75, %c0_76] : memref<25x64x128xf32, #tpu.memory_space<vmem>>, vector<1x64x128xf32>
    %125 = vector.shape_cast %124 : vector<1x64x128xf32> to vector<64x128xf32>
    %cst_77 = arith.constant dense<0.000000e+00> : vector<136x128xf32>
    %126 = tpu.matmul %123, %125, %cst_77 {dimension_numbers = #tpu.dot_dimension_numbers<[1], [0], [0], [1], [0, 0, 1, 1], [], []>} : vector<136x64xf32>, vector<64x128xf32>, vector<136x128xf32> -> vector<136x128xf32>
    %127 = arith.addf %122, %126 : vector<136x128xf32>
    %c0_78 = arith.constant 0 : index
    %c0_79 = arith.constant 0 : index
    %128 = vector.load %arg3[%c0_78, %c0_79] : memref<1x128xf32, #tpu.memory_space<vmem>>, vector<1x128xf32>
    %129 = vector.broadcast %128 : vector<1x128xf32> to vector<136x128xf32>
    %130 = arith.addf %127, %129 : vector<136x128xf32>
    %cst_80 = arith.constant 0.000000e+00 : f32
    %131 = vector.broadcast %cst_80 : f32 to vector<136x128xf32>
    %132 = arith.maximumf %130, %131 : vector<136x128xf32>
    %133 = vector.extract_strided_slice %132 {offsets = [0, 0], sizes = [10, 128], strides = [1, 1]} : vector<136x128xf32> to vector<10x128xf32>
    %c0_81 = arith.constant 0 : index
    %c0_82 = arith.constant 0 : index
    %c0_83 = arith.constant 0 : index
    %c0_84 = arith.constant 0 : index
    %134 = vector.load %arg4[%c0_81, %c0_82, %c0_83, %c0_84] : memref<1x10x10x128xf32, #tpu.memory_space<vmem>>, vector<1x1x10x128xf32>
    %135 = vector.shape_cast %134 : vector<1x1x10x128xf32> to vector<10x128xf32>
    %136 = vector.shape_cast %133 : vector<10x128xf32> to vector<1x1x10x128xf32>
    tpu.vector_store %arg4[%c0_81, %c0_82, %c0_83, %c0_84], %136 {strides = array<i32>} : memref<1x10x10x128xf32, #tpu.memory_space<vmem>>, vector<1x1x10x128xf32>,
    %137 = vector.extract_strided_slice %132 {offsets = [14, 0], sizes = [10, 128], strides = [1, 1]} : vector<136x128xf32> to vector<10x128xf32>
    %c0_85 = arith.constant 0 : index
    %c1_86 = arith.constant 1 : index
    %c0_87 = arith.constant 0 : index
    %c0_88 = arith.constant 0 : index
    %138 = vector.load %arg4[%c0_85, %c1_86, %c0_87, %c0_88] : memref<1x10x10x128xf32, #tpu.memory_space<vmem>>, vector<1x1x10x128xf32>
    %139 = vector.shape_cast %138 : vector<1x1x10x128xf32> to vector<10x128xf32>
    %140 = vector.shape_cast %137 : vector<10x128xf32> to vector<1x1x10x128xf32>
    tpu.vector_store %arg4[%c0_85, %c1_86, %c0_87, %c0_88], %140 {strides = array<i32>} : memref<1x10x10x128xf32, #tpu.memory_space<vmem>>, vector<1x1x10x128xf32>,
    %141 = vector.extract_strided_slice %132 {offsets = [28, 0], sizes = [10, 128], strides = [1, 1]} : vector<136x128xf32> to vector<10x128xf32>
    %c0_89 = arith.constant 0 : index
    %c2_90 = arith.constant 2 : index
    %c0_91 = arith.constant 0 : index
    %c0_92 = arith.constant 0 : index
    %142 = vector.load %arg4[%c0_89, %c2_90, %c0_91, %c0_92] : memref<1x10x10x128xf32, #tpu.memory_space<vmem>>, vector<1x1x10x128xf32>
    %143 = vector.shape_cast %142 : vector<1x1x10x128xf32> to vector<10x128xf32>
    %144 = vector.shape_cast %141 : vector<10x128xf32> to vector<1x1x10x128xf32>
    tpu.vector_store %arg4[%c0_89, %c2_90, %c0_91, %c0_92], %144 {strides = array<i32>} : memref<1x10x10x128xf32, #tpu.memory_space<vmem>>, vector<1x1x10x128xf32>,
    %145 = vector.extract_strided_slice %132 {offsets = [42, 0], sizes = [10, 128], strides = [1, 1]} : vector<136x128xf32> to vector<10x128xf32>
    %c0_93 = arith.constant 0 : index
    %c3_94 = arith.constant 3 : index
    %c0_95 = arith.constant 0 : index
    %c0_96 = arith.constant 0 : index
    %146 = vector.load %arg4[%c0_93, %c3_94, %c0_95, %c0_96] : memref<1x10x10x128xf32, #tpu.memory_space<vmem>>, vector<1x1x10x128xf32>
    %147 = vector.shape_cast %146 : vector<1x1x10x128xf32> to vector<10x128xf32>
    %148 = vector.shape_cast %145 : vector<10x128xf32> to vector<1x1x10x128xf32>
    tpu.vector_store %arg4[%c0_93, %c3_94, %c0_95, %c0_96], %148 {strides = array<i32>} : memref<1x10x10x128xf32, #tpu.memory_space<vmem>>, vector<1x1x10x128xf32>,
    %149 = vector.extract_strided_slice %132 {offsets = [56, 0], sizes = [10, 128], strides = [1, 1]} : vector<136x128xf32> to vector<10x128xf32>
    %c0_97 = arith.constant 0 : index
    %c4_98 = arith.constant 4 : index
    %c0_99 = arith.constant 0 : index
    %c0_100 = arith.constant 0 : index
    %150 = vector.load %arg4[%c0_97, %c4_98, %c0_99, %c0_100] : memref<1x10x10x128xf32, #tpu.memory_space<vmem>>, vector<1x1x10x128xf32>
    %151 = vector.shape_cast %150 : vector<1x1x10x128xf32> to vector<10x128xf32>
    %152 = vector.shape_cast %149 : vector<10x128xf32> to vector<1x1x10x128xf32>
    tpu.vector_store %arg4[%c0_97, %c4_98, %c0_99, %c0_100], %152 {strides = array<i32>} : memref<1x10x10x128xf32, #tpu.memory_space<vmem>>, vector<1x1x10x128xf32>,
    %153 = vector.extract_strided_slice %132 {offsets = [70, 0], sizes = [10, 128], strides = [1, 1]} : vector<136x128xf32> to vector<10x128xf32>
    %c0_101 = arith.constant 0 : index
    %c5_102 = arith.constant 5 : index
    %c0_103 = arith.constant 0 : index
    %c0_104 = arith.constant 0 : index
    %154 = vector.load %arg4[%c0_101, %c5_102, %c0_103, %c0_104] : memref<1x10x10x128xf32, #tpu.memory_space<vmem>>, vector<1x1x10x128xf32>
    %155 = vector.shape_cast %154 : vector<1x1x10x128xf32> to vector<10x128xf32>
    %156 = vector.shape_cast %153 : vector<10x128xf32> to vector<1x1x10x128xf32>
    tpu.vector_store %arg4[%c0_101, %c5_102, %c0_103, %c0_104], %156 {strides = array<i32>} : memref<1x10x10x128xf32, #tpu.memory_space<vmem>>, vector<1x1x10x128xf32>,
    %157 = vector.extract_strided_slice %132 {offsets = [84, 0], sizes = [10, 128], strides = [1, 1]} : vector<136x128xf32> to vector<10x128xf32>
    %c0_105 = arith.constant 0 : index
    %c6_106 = arith.constant 6 : index
    %c0_107 = arith.constant 0 : index
    %c0_108 = arith.constant 0 : index
    %158 = vector.load %arg4[%c0_105, %c6_106, %c0_107, %c0_108] : memref<1x10x10x128xf32, #tpu.memory_space<vmem>>, vector<1x1x10x128xf32>
    %159 = vector.shape_cast %158 : vector<1x1x10x128xf32> to vector<10x128xf32>
    %160 = vector.shape_cast %157 : vector<10x128xf32> to vector<1x1x10x128xf32>
    tpu.vector_store %arg4[%c0_105, %c6_106, %c0_107, %c0_108], %160 {strides = array<i32>} : memref<1x10x10x128xf32, #tpu.memory_space<vmem>>, vector<1x1x10x128xf32>,
    %161 = vector.extract_strided_slice %132 {offsets = [98, 0], sizes = [10, 128], strides = [1, 1]} : vector<136x128xf32> to vector<10x128xf32>
    %c0_109 = arith.constant 0 : index
    %c7_110 = arith.constant 7 : index
    %c0_111 = arith.constant 0 : index
    %c0_112 = arith.constant 0 : index
    %162 = vector.load %arg4[%c0_109, %c7_110, %c0_111, %c0_112] : memref<1x10x10x128xf32, #tpu.memory_space<vmem>>, vector<1x1x10x128xf32>
    %163 = vector.shape_cast %162 : vector<1x1x10x128xf32> to vector<10x128xf32>
    %164 = vector.shape_cast %161 : vector<10x128xf32> to vector<1x1x10x128xf32>
    tpu.vector_store %arg4[%c0_109, %c7_110, %c0_111, %c0_112], %164 {strides = array<i32>} : memref<1x10x10x128xf32, #tpu.memory_space<vmem>>, vector<1x1x10x128xf32>,
    %165 = vector.extract_strided_slice %132 {offsets = [112, 0], sizes = [10, 128], strides = [1, 1]} : vector<136x128xf32> to vector<10x128xf32>
    %c0_113 = arith.constant 0 : index
    %c8_114 = arith.constant 8 : index
    %c0_115 = arith.constant 0 : index
    %c0_116 = arith.constant 0 : index
    %166 = vector.load %arg4[%c0_113, %c8_114, %c0_115, %c0_116] : memref<1x10x10x128xf32, #tpu.memory_space<vmem>>, vector<1x1x10x128xf32>
    %167 = vector.shape_cast %166 : vector<1x1x10x128xf32> to vector<10x128xf32>
    %168 = vector.shape_cast %165 : vector<10x128xf32> to vector<1x1x10x128xf32>
    tpu.vector_store %arg4[%c0_113, %c8_114, %c0_115, %c0_116], %168 {strides = array<i32>} : memref<1x10x10x128xf32, #tpu.memory_space<vmem>>, vector<1x1x10x128xf32>,
    %169 = vector.extract_strided_slice %132 {offsets = [126, 0], sizes = [10, 128], strides = [1, 1]} : vector<136x128xf32> to vector<10x128xf32>
    %c0_117 = arith.constant 0 : index
    %c9_118 = arith.constant 9 : index
    %c0_119 = arith.constant 0 : index
    %c0_120 = arith.constant 0 : index
    %170 = vector.load %arg4[%c0_117, %c9_118, %c0_119, %c0_120] : memref<1x10x10x128xf32, #tpu.memory_space<vmem>>, vector<1x1x10x128xf32>
    %171 = vector.shape_cast %170 : vector<1x1x10x128xf32> to vector<10x128xf32>
    %172 = vector.shape_cast %169 : vector<10x128xf32> to vector<1x1x10x128xf32>
    tpu.vector_store %arg4[%c0_117, %c9_118, %c0_119, %c0_120], %172 {strides = array<i32>} : memref<1x10x10x128xf32, #tpu.memory_space<vmem>>, vector<1x1x10x128xf32>,
    return
  }
  func.func @transform_0(%arg0: i32) -> (i32, i32, i32) {
    %c0_i32 = arith.constant 0 : i32
    %c0_i32_0 = arith.constant 0 : i32
    %c0_i32_1 = arith.constant 0 : i32
    return %arg0, %c0_i32, %c0_i32_0 : i32, i32, i32
  }
  func.func @transform_1(%arg0: i32) -> (i32, i32, i32) {
    %c0_i32 = arith.constant 0 : i32
    %c0_i32_0 = arith.constant 0 : i32
    %c0_i32_1 = arith.constant 0 : i32
    %c0_i32_2 = arith.constant 0 : i32
    return %c0_i32, %c0_i32_0, %c0_i32_1 : i32, i32, i32
  }
  func.func @transform_2(%arg0: i32) -> (i32, i32) {
    %c0_i32 = arith.constant 0 : i32
    %c0_i32_0 = arith.constant 0 : i32
    %c0_i32_1 = arith.constant 0 : i32
    return %c0_i32, %c0_i32_0 : i32, i32
  }
  func.func @transform_3(%arg0: i32) -> (i32, i32, i32, i32) {
    %c0_i32 = arith.constant 0 : i32
    %c0_i32_0 = arith.constant 0 : i32
    %c0_i32_1 = arith.constant 0 : i32
    %c0_i32_2 = arith.constant 0 : i32
    return %arg0, %c0_i32, %c0_i32_0, %c0_i32_1 : i32, i32, i32, i32
  }
}

module attributes {stable_mosaic.version = 11 : i64} {
  func.func @_maxpool_kernel(%arg0: i32, %arg1: memref<10x2x5x256xf32, #tpu.memory_space<vmem>>, %arg2: memref<10x5x128xbf16, #tpu.memory_space<vmem>>) attributes {dimension_semantics = [#tpu.dimension_semantics<parallel>], iteration_bounds = array<i64: 1>, scalar_prefetch = 0 : i64, scratch_operands = 0 : i64, tpu.core_type = #tpu.core_type<tc>, window_params = [{transform_indices = @transform_0, window_bounds = array<i64: 10, 2, 5, 256>}, {transform_indices = @transform_1, window_bounds = array<i64: 10, 5, 128>}]} {
    %c0 = arith.constant 0 : index
    %c0_0 = arith.constant 0 : index
    %c0_1 = arith.constant 0 : index
    %c0_2 = arith.constant 0 : index
    %0 = vector.load %arg1[%c0, %c0_0, %c0_1, %c0_2] : memref<10x2x5x256xf32, #tpu.memory_space<vmem>>, vector<10x2x5x256xf32>
    %1 = vector.extract_strided_slice %0 {offsets = [0, 0, 0, 0], sizes = [10, 1, 5, 256], strides = [1, 1, 1, 1]} : vector<10x2x5x256xf32> to vector<10x1x5x256xf32>
    %2 = vector.shape_cast %1 : vector<10x1x5x256xf32> to vector<10x5x256xf32>
    %3 = vector.extract_strided_slice %0 {offsets = [0, 1, 0, 0], sizes = [10, 1, 5, 256], strides = [1, 1, 1, 1]} : vector<10x2x5x256xf32> to vector<10x1x5x256xf32>
    %4 = vector.shape_cast %3 : vector<10x1x5x256xf32> to vector<10x5x256xf32>
    %5 = arith.maximumf %2, %4 : vector<10x5x256xf32>
    %6 = vector.extract_strided_slice %5 {offsets = [0, 0, 0], sizes = [10, 5, 128], strides = [1, 1, 1]} : vector<10x5x256xf32> to vector<10x5x128xf32>
    %7 = vector.extract_strided_slice %5 {offsets = [0, 0, 128], sizes = [10, 5, 128], strides = [1, 1, 1]} : vector<10x5x256xf32> to vector<10x5x128xf32>
    %8 = arith.maximumf %6, %7 : vector<10x5x128xf32>
    %9 = arith.truncf %8 : vector<10x5x128xf32> to vector<10x5x128xbf16>
    %c0_3 = arith.constant 0 : index
    %c0_4 = arith.constant 0 : index
    %c0_5 = arith.constant 0 : index
    %10 = vector.load %arg2[%c0_3, %c0_4, %c0_5] : memref<10x5x128xbf16, #tpu.memory_space<vmem>>, vector<10x5x128xbf16>
    tpu.vector_store %arg2[%c0_3, %c0_4, %c0_5], %9 {strides = array<i32>} : memref<10x5x128xbf16, #tpu.memory_space<vmem>>, vector<10x5x128xbf16>,
    return
  }
  func.func @transform_0(%arg0: i32) -> (i32, i32, i32, i32) {
    %c0_i32 = arith.constant 0 : i32
    %c0_i32_0 = arith.constant 0 : i32
    %c0_i32_1 = arith.constant 0 : i32
    %c0_i32_2 = arith.constant 0 : i32
    return %arg0, %c0_i32, %c0_i32_0, %c0_i32_1 : i32, i32, i32, i32
  }
  func.func @transform_1(%arg0: i32) -> (i32, i32, i32) {
    %c0_i32 = arith.constant 0 : i32
    %c0_i32_0 = arith.constant 0 : i32
    %c0_i32_1 = arith.constant 0 : i32
    return %arg0, %c0_i32, %c0_i32_0 : i32, i32, i32
  }
}

module attributes {stable_mosaic.version = 11 : i64} {
  func.func @_fc_fused_kernel(%arg0: i32, %arg1: memref<2x3200xbf16, #tpu.memory_space<vmem>>, %arg2: memref<3200x128xbf16, #tpu.memory_space<vmem>>, %arg3: memref<1x128xf32, #tpu.memory_space<vmem>>, %arg4: memref<128x128xbf16, #tpu.memory_space<vmem>>, %arg5: memref<1x128xf32, #tpu.memory_space<vmem>>, %arg6: memref<128x128xbf16, #tpu.memory_space<vmem>>, %arg7: memref<1x128xf32, #tpu.memory_space<vmem>>, %arg8: memref<2x128xf32, #tpu.memory_space<vmem>>) attributes {dimension_semantics = [#tpu.dimension_semantics<parallel>], iteration_bounds = array<i64: 1>, scalar_prefetch = 0 : i64, scratch_operands = 0 : i64, tpu.core_type = #tpu.core_type<tc>, window_params = [{transform_indices = @transform_0, window_bounds = array<i64: 2, 3200>}, {pipeline_mode = #tpu.pipeline_mode<synchronous>, transform_indices = @transform_1, window_bounds = array<i64: 3200, 128>}, {pipeline_mode = #tpu.pipeline_mode<synchronous>, transform_indices = @transform_2, window_bounds = array<i64: 1, 128>}, {pipeline_mode = #tpu.pipeline_mode<synchronous>, transform_indices = @transform_3, window_bounds = array<i64: 128, 128>}, {pipeline_mode = #tpu.pipeline_mode<synchronous>, transform_indices = @transform_4, window_bounds = array<i64: 1, 128>}, {pipeline_mode = #tpu.pipeline_mode<synchronous>, transform_indices = @transform_5, window_bounds = array<i64: 128, 128>}, {pipeline_mode = #tpu.pipeline_mode<synchronous>, transform_indices = @transform_6, window_bounds = array<i64: 1, 128>}, {transform_indices = @transform_7, window_bounds = array<i64: 2, 128>}]} {
    %c0 = arith.constant 0 : index
    %c0_0 = arith.constant 0 : index
    %0 = vector.load %arg1[%c0, %c0_0] : memref<2x3200xbf16, #tpu.memory_space<vmem>>, vector<2x3200xbf16>
    %c0_1 = arith.constant 0 : index
    %c0_2 = arith.constant 0 : index
    %1 = vector.load %arg2[%c0_1, %c0_2] : memref<3200x128xbf16, #tpu.memory_space<vmem>>, vector<3200x128xbf16>
    %cst = arith.constant dense<0.000000e+00> : vector<2x128xf32>
    %2 = tpu.matmul %0, %1, %cst {dimension_numbers = #tpu.dot_dimension_numbers<[1], [0], [0], [1], [0, 0, 1, 1], [], []>} : vector<2x3200xbf16>, vector<3200x128xbf16>, vector<2x128xf32> -> vector<2x128xf32>
    %c0_3 = arith.constant 0 : index
    %c0_4 = arith.constant 0 : index
    %3 = vector.load %arg3[%c0_3, %c0_4] : memref<1x128xf32, #tpu.memory_space<vmem>>, vector<1x128xf32>
    %4 = vector.broadcast %3 : vector<1x128xf32> to vector<2x128xf32>
    %5 = arith.addf %2, %4 : vector<2x128xf32>
    %cst_5 = arith.constant 0.000000e+00 : f32
    %6 = vector.broadcast %cst_5 : f32 to vector<2x128xf32>
    %7 = arith.maximumf %5, %6 : vector<2x128xf32>
    %8 = arith.truncf %7 : vector<2x128xf32> to vector<2x128xbf16>
    %c0_6 = arith.constant 0 : index
    %c0_7 = arith.constant 0 : index
    %9 = vector.load %arg4[%c0_6, %c0_7] : memref<128x128xbf16, #tpu.memory_space<vmem>>, vector<128x128xbf16>
    %cst_8 = arith.constant dense<0.000000e+00> : vector<2x128xf32>
    %10 = tpu.matmul %8, %9, %cst_8 {dimension_numbers = #tpu.dot_dimension_numbers<[1], [0], [0], [1], [0, 0, 1, 1], [], []>} : vector<2x128xbf16>, vector<128x128xbf16>, vector<2x128xf32> -> vector<2x128xf32>
    %c0_9 = arith.constant 0 : index
    %c0_10 = arith.constant 0 : index
    %11 = vector.load %arg5[%c0_9, %c0_10] : memref<1x128xf32, #tpu.memory_space<vmem>>, vector<1x128xf32>
    %12 = vector.broadcast %11 : vector<1x128xf32> to vector<2x128xf32>
    %13 = arith.addf %10, %12 : vector<2x128xf32>
    %cst_11 = arith.constant 0.000000e+00 : f32
    %14 = vector.broadcast %cst_11 : f32 to vector<2x128xf32>
    %15 = arith.maximumf %13, %14 : vector<2x128xf32>
    %16 = arith.truncf %15 : vector<2x128xf32> to vector<2x128xbf16>
    %c0_12 = arith.constant 0 : index
    %c0_13 = arith.constant 0 : index
    %17 = vector.load %arg6[%c0_12, %c0_13] : memref<128x128xbf16, #tpu.memory_space<vmem>>, vector<128x128xbf16>
    %cst_14 = arith.constant dense<0.000000e+00> : vector<2x128xf32>
    %18 = tpu.matmul %16, %17, %cst_14 {dimension_numbers = #tpu.dot_dimension_numbers<[1], [0], [0], [1], [0, 0, 1, 1], [], []>} : vector<2x128xbf16>, vector<128x128xbf16>, vector<2x128xf32> -> vector<2x128xf32>
    %c0_15 = arith.constant 0 : index
    %c0_16 = arith.constant 0 : index
    %19 = vector.load %arg7[%c0_15, %c0_16] : memref<1x128xf32, #tpu.memory_space<vmem>>, vector<1x128xf32>
    %20 = vector.broadcast %19 : vector<1x128xf32> to vector<2x128xf32>
    %21 = arith.addf %18, %20 : vector<2x128xf32>
    %c0_17 = arith.constant 0 : index
    %c0_18 = arith.constant 0 : index
    %22 = vector.load %arg8[%c0_17, %c0_18] : memref<2x128xf32, #tpu.memory_space<vmem>>, vector<2x128xf32>
    tpu.vector_store %arg8[%c0_17, %c0_18], %21 {strides = array<i32>} : memref<2x128xf32, #tpu.memory_space<vmem>>, vector<2x128xf32>,
    return
  }
  func.func @transform_0(%arg0: i32) -> (i32, i32) {
    %c0_i32 = arith.constant 0 : i32
    %c0_i32_0 = arith.constant 0 : i32
    return %arg0, %c0_i32 : i32, i32
  }
  func.func @transform_1(%arg0: i32) -> (i32, i32) {
    %c0_i32 = arith.constant 0 : i32
    %c0_i32_0 = arith.constant 0 : i32
    %c0_i32_1 = arith.constant 0 : i32
    return %c0_i32, %c0_i32_0 : i32, i32
  }
  func.func @transform_2(%arg0: i32) -> (i32, i32) {
    %c0_i32 = arith.constant 0 : i32
    %c0_i32_0 = arith.constant 0 : i32
    %c0_i32_1 = arith.constant 0 : i32
    return %c0_i32, %c0_i32_0 : i32, i32
  }
  func.func @transform_3(%arg0: i32) -> (i32, i32) {
    %c0_i32 = arith.constant 0 : i32
    %c0_i32_0 = arith.constant 0 : i32
    %c0_i32_1 = arith.constant 0 : i32
    return %c0_i32, %c0_i32_0 : i32, i32
  }
  func.func @transform_4(%arg0: i32) -> (i32, i32) {
    %c0_i32 = arith.constant 0 : i32
    %c0_i32_0 = arith.constant 0 : i32
    %c0_i32_1 = arith.constant 0 : i32
    return %c0_i32, %c0_i32_0 : i32, i32
  }
  func.func @transform_5(%arg0: i32) -> (i32, i32) {
    %c0_i32 = arith.constant 0 : i32
    %c0_i32_0 = arith.constant 0 : i32
    %c0_i32_1 = arith.constant 0 : i32
    return %c0_i32, %c0_i32_0 : i32, i32
  }
  func.func @transform_6(%arg0: i32) -> (i32, i32) {
    %c0_i32 = arith.constant 0 : i32
    %c0_i32_0 = arith.constant 0 : i32
    %c0_i32_1 = arith.constant 0 : i32
    return %c0_i32, %c0_i32_0 : i32, i32
  }
  func.func @transform_7(%arg0: i32) -> (i32, i32) {
    %c0_i32 = arith.constant 0 : i32
    %c0_i32_0 = arith.constant 0 : i32
    return %arg0, %c0_i32 : i32, i32
  }
}

</mosaic_0001>

<llo_original>
// kernel: net_forward.6
$region0: #{net_forward.6}
  #allocation0 [shape = 'u32[]', space=smem, size = 0x4, offset = 0x4, fixed_abs, tag = 'smem constant byte address 0x4 - core index']
  #allocation1 [shape = 'u32[144,128]{1,0:T(1,128)}', space=vmem, size = 0x12000, scoped, tag = 'internal scratch']
  %s0 = inlined_call_operand.vmem [shape: bf16[2048,27], index: 0, kind: input, shape index: {}]
  %s1 = inlined_call_operand.vmem [shape: bf16[27,8], index: 1, kind: input, shape index: {}]
  %s2 = inlined_call_operand.vmem [shape: f32[1,8], index: 2, kind: input, shape index: {}]
  %s3 = inlined_call_operand.vmem [shape: bf16[2048,8], index: 3, kind: output, shape index: {}]
  %s4 = sld [smem:[#allocation0]]
  $region45: #{net_forward.6} parent=0
    _
  %s6 = ssub.s32 1, %s4
  %s7 = scalar_select 0, %s6, %s4
  loop: start=0, step=1, limit=10
  $region2: #{net_forward.6} parent=0 // loop_pre_header
    _
  $region3: #{net_forward.6} parent=0 // loop_header
    %s9 = sphi 0, %s13
    %p10 = scmp.ge.s32.totalorder %s9, 10
    %s19 = sphi 0, %s21
    %s22 = sphi 0, %s19
    %s23 = sphi 0, %s22
    %s39 = sphi 0, %s23
    %s43 = sphi 0, %s43
    %s45 = sphi 0, %s43
    %s46 = sphi 0, %s45
    %s60 = sphi 0, %s46
    %s64 = sphi 0, %s64
    %s66 = sphi 0, %s64
    %s67 = sphi 0, %s66
    %s81 = sphi 0, %s67
    %s87 = sphi 0, %s89
    %s90 = sphi 0, %s87
    %s91 = sphi 0, %s90
    %s107 = sphi 0, %s91
  $region4: #{net_forward.6} parent=0 // loop_header_branch
    %12 = sbr.rel (%p10) target = $region8
  $region5: #{net_forward.6} parent=0 // loop_body
    %s14 = ssub.s32 %s9, 1
    %s15 = ssub.s32 %s9, 2
    %s16 = sadd.s32 %s9, 1
    %s17 = ssub.s32 %s9, %s16
    %p18 = scmp.eq.s32.totalorder %s17, 0
    %s20 = sadd.s32 %s19, 1
    %s21 = scalar_select %p18, %s19, %s20
    %p24 = pneg %p18
    %p25 = scmp.eq.s32.totalorder %s9, 7
    %p26 = por %p24, %p25
    %p27 = scmp.ne.s32.totalorder %s19, %s22
    %p28 = scmp.eq.s32.totalorder %s9, 0
    %p29 = por %p27, %p28
    %p30 = scmp.ne.s32.totalorder %s19, %s22
    %p31 = scmp.eq.s32.totalorder %s14, 7
    %p32 = por %p30, %p31
    %p33 = scmp.ne.s32.totalorder %s22, %s23
    %p34 = scmp.eq.s32.totalorder %s14, 0
    %p35 = por %p33, %p34
    %p36 = scmp.ne.s32.totalorder %s22, %s23
    %p37 = scmp.eq.s32.totalorder %s15, 7
    %p38 = por %p36, %p37
    %p40 = scmp.ne.s32.totalorder %s23, %s39
    %p41 = scmp.eq.s32.totalorder %s15, 0
    %p42 = por %p40, %p41
    %s44 = sadd.s32 %s43, 1
    %p47 = scmp.eq.s32.totalorder %s9, 7
    %p48 = scmp.ne.s32.totalorder %s43, %s45
    %p49 = scmp.eq.s32.totalorder %s9, 0
    %p50 = por %p48, %p49
    %p51 = scmp.ne.s32.totalorder %s43, %s45
    %p52 = scmp.eq.s32.totalorder %s14, 7
    %p53 = por %p51, %p52
    %p54 = scmp.ne.s32.totalorder %s45, %s46
    %p55 = scmp.eq.s32.totalorder %s14, 0
    %p56 = por %p54, %p55
    %p57 = scmp.ne.s32.totalorder %s45, %s46
    %p58 = scmp.eq.s32.totalorder %s15, 7
    %p59 = por %p57, %p58
    %p61 = scmp.ne.s32.totalorder %s46, %s60
    %p62 = scmp.eq.s32.totalorder %s15, 0
    %p63 = por %p61, %p62
    %s65 = sadd.s32 %s64, 1
    %p68 = scmp.eq.s32.totalorder %s9, 7
    %p69 = scmp.ne.s32.totalorder %s64, %s66
    %p70 = scmp.eq.s32.totalorder %s9, 0
    %p71 = por %p69, %p70
    %p72 = scmp.ne.s32.totalorder %s64, %s66
    %p73 = scmp.eq.s32.totalorder %s14, 7
    %p74 = por %p72, %p73
    %p75 = scmp.ne.s32.totalorder %s66, %s67
    %p76 = scmp.eq.s32.totalorder %s14, 0
    %p77 = por %p75, %p76
    %p78 = scmp.ne.s32.totalorder %s66, %s67
    %p79 = scmp.eq.s32.totalorder %s15, 7
    %p80 = por %p78, %p79
    %p82 = scmp.ne.s32.totalorder %s67, %s81
    %p83 = scmp.eq.s32.totalorder %s15, 0
    %p84 = por %p82, %p83
    %s85 = ssub.s32 %s9, %s16
    %p86 = scmp.eq.s32.totalorder %s85, 0
    %s88 = sadd.s32 %s87, 1
    %s89 = scalar_select %p86, %s87, %s88
    %p92 = pneg %p86
    %p93 = scmp.eq.s32.totalorder %s9, 7
    %p94 = por %p92, %p93
    %p95 = scmp.ne.s32.totalorder %s87, %s90
    %p96 = scmp.eq.s32.totalorder %s9, 0
    %p97 = por %p95, %p96
    %p98 = scmp.ne.s32.totalorder %s87, %s90
    %p99 = scmp.eq.s32.totalorder %s14, 7
    %p100 = por %p98, %p99
    %p101 = scmp.ne.s32.totalorder %s90, %s91
    %p102 = scmp.eq.s32.totalorder %s14, 0
    %p103 = por %p101, %p102
    %p104 = scmp.ne.s32.totalorder %s90, %s91
    %p105 = scmp.eq.s32.totalorder %s15, 7
    %p106 = por %p104, %p105
    %p108 = scmp.ne.s32.totalorder %s91, %s107
    %p109 = scmp.eq.s32.totalorder %s15, 0
    %p110 = por %p108, %p109
    %p111 = scmp.le.s32.totalorder 1, %s9
    %p112 = scmp.lt.s32.totalorder %s9, 9
    %p113 = pnand %p111, %p112
    %p114 = pneg %p113
    // Predicated region
    $region9: #{net_forward.6} parent=5 // pred_check
      _
    $region10: #{net_forward.6} parent=5 // pred_check_branch
      %116 = sbr.rel (%p113) target = $region12
    $region11: #{net_forward.6} parent=5 // pred_region
      %s117 = ssub.s32 %s9, 1
      // Predicated region
      $region13: #{net_forward.6} parent=11 // pred_check
        %p118 = pneg %p56
      $region14: #{net_forward.6} parent=11 // pred_check_branch
        %120 = sbr.rel (%p118) target = $region16
      $region15: #{net_forward.6} parent=11 // pred_region
        _
      $region16: #{net_forward.6} parent=11 // pred_fallthru
        _
      // Predicated region
      $region17: #{net_forward.6} parent=11 // pred_check
        %p121 = pneg %p77
      $region18: #{net_forward.6} parent=11 // pred_check_branch
        %123 = sbr.rel (%p121) target = $region20
      $region19: #{net_forward.6} parent=11 // pred_region
        _
      $region20: #{net_forward.6} parent=11 // pred_fallthru
        _
    $region12: #{net_forward.6} parent=5 // pred_fallthru
      _
    %p124 = scmp.lt.s32.totalorder %s9, 8
    // Predicated region
    $region21: #{net_forward.6} parent=5 // pred_check
      %p125 = pneg %p124
    $region22: #{net_forward.6} parent=5 // pred_check_branch
      %127 = sbr.rel (%p125) target = $region24
    $region23: #{net_forward.6} parent=5 // pred_region
      // Predicated region
      $region25: #{net_forward.6} parent=23 // pred_check
        %p128 = pneg %p29
      $region26: #{net_forward.6} parent=23 // pred_check_branch
        %130 = sbr.rel (%p128) target = $region28
      $region27: #{net_forward.6} parent=23 // pred_region
        %s131 = smul.u32 32, %s9
        %p132 = scmp.lt.s32.totalorder %s131, 255
        %s133 = scalar_select %p132, %s131, 255
        %s134 = smul.addr %s133, 4
        %s135 = scalar_lea.vmem %s0, %s134
        %s136 = smul.u32 32, %s9
      $region28: #{net_forward.6} parent=23 // pred_fallthru
        _
    $region24: #{net_forward.6} parent=5 // pred_fallthru
      _
    %p137 = scmp.le.s32.totalorder 1, %s9
    %p138 = scmp.lt.s32.totalorder %s9, 9
    %p139 = pnand %p137, %p138
    %p140 = pneg %p139
    // Predicated region
    $region29: #{net_forward.6} parent=5 // pred_check
      _
    $region30: #{net_forward.6} parent=5 // pred_check_branch
      %142 = sbr.rel (%p139) target = $region32
    $region31: #{net_forward.6} parent=5 // pred_region
      %s143 = ssub.s32 %s9, 1
      %s144 = smul.u32 32, %s14
      %p145 = scmp.lt.s32.totalorder %s144, 255
      %s146 = scalar_select %p145, %s144, 255
      %s147 = smul.addr %s146, 4
      %s148 = scalar_lea.vmem %s0, %s147
      %p149 = pneg %p35
      %p150 = pneg %p32
      %p151 = pneg %p56
      %p152 = pneg %p53
      %p153 = pneg %p77
      %p154 = pneg %p74
      %p155 = pneg %p103
      %p156 = pneg %p100
      %s157 = smul.u32 32, %s14
      %p158 = scmp.lt.s32.totalorder %s157, 255
      %s159 = scalar_select %p158, %s157, 255
      %s160 = smul.addr %s159, 4
      %s161 = scalar_lea.vmem %s3, %s160
      %s162 = smul.u32 32, %s14
      %p163 = scmp.lt.s32.totalorder %s162, 255
      %s164 = scalar_select %p163, %s162, 255
      %s165 = smul.addr %s164, 4
      %s166 = scalar_lea.vmem %s0, %s165
      %s167 = smul.u32 32, %s14
      %s168 = smul.u32 32, %s14
      %p169 = scmp.lt.s32.totalorder %s168, 255
      %s170 = scalar_select %p169, %s168, 255
      %s171 = smul.addr %s170, 4
      %s172 = scalar_lea.vmem %s3, %s171
      %s173 = smul.u32 32, %s14
      %v175 = vld [vmem:[%s166] sm:$0xf]
      %v176 = vld [vmem:[%s166 + $0x4] sm:$0xf]
      %v177 = vld [vmem:[%s166 + $0x8] sm:$0xf]
      %v178 = vld [vmem:[%s166 + $0xc] sm:$0xf]
      %v179 = vld [vmem:[%s166 + $0x10] sm:$0xf]
      %v180 = vld [vmem:[%s166 + $0x14] sm:$0xf]
      %v181 = vld [vmem:[%s166 + $0x18] sm:$0xf]
      %v182 = vld [vmem:[%s166 + $0x1c] sm:$0xf]
      %v183 = vld [vmem:[%s166 + $0x20] sm:$0xf]
      %v184 = vld [vmem:[%s166 + $0x24] sm:$0xf]
      %v185 = vld [vmem:[%s166 + $0x28] sm:$0xf]
      %v186 = vld [vmem:[%s166 + $0x2c] sm:$0xf]
      %v187 = vld [vmem:[%s166 + $0x30] sm:$0xf]
      %v188 = vld [vmem:[%s166 + $0x34] sm:$0xf]
      %v189 = vld [vmem:[%s166 + $0x38] sm:$0xf]
      %v190 = vld [vmem:[%s166 + $0x3c] sm:$0xf]
      %v191 = vld [vmem:[%s166 + $0x40] sm:$0xf]
      %v192 = vld [vmem:[%s166 + $0x44] sm:$0xf]
      %v193 = vld [vmem:[%s166 + $0x48] sm:$0xf]
      %v194 = vld [vmem:[%s166 + $0x4c] sm:$0xf]
      %v195 = vld [vmem:[%s166 + $0x50] sm:$0xf]
      %v196 = vld [vmem:[%s166 + $0x54] sm:$0xf]
      %v197 = vld [vmem:[%s166 + $0x58] sm:$0xf]
      %v198 = vld [vmem:[%s166 + $0x5c] sm:$0xf]
      %v199 = vld [vmem:[%s166 + $0x60] sm:$0xf]
      %v200 = vld [vmem:[%s166 + $0x64] sm:$0xf]
      %v201 = vld [vmem:[%s166 + $0x68] sm:$0xf]
      %v202 = vld [vmem:[%s166 + $0x6c] sm:$0xf]
      %v203 = vld [vmem:[%s166 + $0x70] sm:$0xf]
      %v204 = vld [vmem:[%s166 + $0x74] sm:$0xf]
      %v205 = vld [vmem:[%s166 + $0x78] sm:$0xf]
      %v206 = vld [vmem:[%s166 + $0x7c] sm:$0xf]
      %v207 = vld [vmem:[%s1] sm:$0xf]
      %v208 = vld [vmem:[%s1 + $0x4] sm:$0xf]
      %v209 = vld [vmem:[%s1 + $0x8] sm:$0xf]
      %v210 = vld [vmem:[%s1 + $0xc] sm:$0x3]
      %v211 = vld [vmem:[%s2] sm:$0x1]
      %v213 = vlaneseq
      %v214 = vshrl.u32 %v213, 7
      %v215 = vsub.s32 0, %v214
      %v216 = vrot.slane %v211, %v215
      %v250 = vunpack.c.l.b16 %v175
      %v251 = vunpack.c.l.b16 %v176
      %v252 = vunpack.c.l.b16 %v177
      %v253 = vunpack.c.l.b16 %v178
      %v254 = vunpack.c.l.b16 %v179
      %v255 = vunpack.c.l.b16 %v180
      %v256 = vunpack.c.l.b16 %v181
      %v257 = vunpack.c.l.b16 %v182
      %v258 = vunpack.c.l.b16 %v183
      %v259 = vunpack.c.l.b16 %v184
      %v260 = vunpack.c.l.b16 %v185
      %v261 = vunpack.c.l.b16 %v186
      %v262 = vunpack.c.l.b16 %v187
      %v263 = vunpack.c.l.b16 %v188
      %v264 = vunpack.c.l.b16 %v189
      %v265 = vunpack.c.l.b16 %v190
      %v266 = vunpack.c.l.b16 %v191
      %v267 = vunpack.c.l.b16 %v192
      %v268 = vunpack.c.l.b16 %v193
      %v269 = vunpack.c.l.b16 %v194
      %v270 = vunpack.c.l.b16 %v195
      %v271 = vunpack.c.l.b16 %v196
      %v272 = vunpack.c.l.b16 %v197
      %v273 = vunpack.c.l.b16 %v198
      %v274 = vunpack.c.l.b16 %v199
      %v275 = vunpack.c.l.b16 %v200
      %v276 = vunpack.c.l.b16 %v201
      %v277 = vunpack.c.l.b16 %v202
      %v278 = vunpack.c.l.b16 %v203
      %v279 = vunpack.c.l.b16 %v204
      %v280 = vunpack.c.l.b16 %v205
      %v281 = vunpack.c.l.b16 %v206
      %v282 = vpack.c.b16 %v251, %v250
      %v283 = vpack.c.b16 %v253, %v252
      %v284 = vpack.c.b16 %v255, %v254
      %v285 = vpack.c.b16 %v257, %v256
      %v286 = vpack.c.b16 %v259, %v258
      %v287 = vpack.c.b16 %v261, %v260
      %v288 = vpack.c.b16 %v263, %v262
      %v289 = vpack.c.b16 %v265, %v264
      %v290 = vpack.c.b16 %v267, %v266
      %v291 = vpack.c.b16 %v269, %v268
      %v292 = vpack.c.b16 %v271, %v270
      %v293 = vpack.c.b16 %v273, %v272
      %v294 = vpack.c.b16 %v275, %v274
      %v295 = vpack.c.b16 %v277, %v276
      %v296 = vpack.c.b16 %v279, %v278
      %v297 = vpack.c.b16 %v281, %v280
      %v302 = vunpack.c.l.b16 %v207
      %v303 = vunpack.c.l.b16 %v208
      %v304 = vunpack.c.l.b16 %v209
      %v305 = vunpack.c.l.b16 %v210
      %v306 = vpack.c.b16 %v303, %v302
      %v307 = vpack.c.b16 %v305, %v304
      %vm309 = vcmask 220160
      %v311 = vsel %vm309, %v282, 0
      %v314 = vsel %vm309, %v283, 0
      %v317 = vsel %vm309, %v284, 0
      %v320 = vsel %vm309, %v285, 0
      %v323 = vsel %vm309, %v286, 0
      %v326 = vsel %vm309, %v287, 0
      %v329 = vsel %vm309, %v288, 0
      %v332 = vsel %vm309, %v289, 0
      %v335 = vsel %vm309, %v290, 0
      %v338 = vsel %vm309, %v291, 0
      %v341 = vsel %vm309, %v292, 0
      %v344 = vsel %vm309, %v293, 0
      %v347 = vsel %vm309, %v294, 0
      %v350 = vsel %vm309, %v295, 0
      %v353 = vsel %vm309, %v296, 0
      %v356 = vsel %vm309, %v297, 0
      %vm358 = vcmask 1044480
      %vm359 = vcmask 1045504
      %v360 = vsel %vm358, 4294967295, 65535
      %v361 = vsel %vm359, %v360, 0
      %v363 = vand.u32 %v307, %v361
      %365 = vmatprep.subr.bf16.mxu0 0
      %366 = vmatpush1.bf16.msra.mxu0 %v306
      %367 = vmatprep.subr.bf16.mxu0 0
      %368 = vmatpush1.bf16.msra.mxu0 %v363
      %369 = vmatprep.subr.bf16.mxu0 0
      %370 = vmatpush1.bf16.msra.mxu0 0
      %371 = vmatprep.subr.bf16.mxu0 0
      %372 = vmatpush1.bf16.msra.mxu0 0
      %373 = vmatprep.subr.bf16.mxu0 0
      %374 = vmatpush1.bf16.msra.mxu0 0
      %375 = vmatprep.subr.bf16.mxu0 0
      %376 = vmatpush1.bf16.msra.mxu0 0
      %377 = vmatprep.subr.bf16.mxu0 0
      %378 = vmatpush1.bf16.msra.mxu0 0
      %379 = vmatprep.subr.bf16.mxu0 0
      %380 = vmatpush1.bf16.msra.mxu0 0
      %381 = vmatprep.subr.bf16.mxu0 0
      %382 = vmatpush1.bf16.msra.mxu0 0
      %383 = vmatprep.subr.bf16.mxu0 0
      %384 = vmatpush1.bf16.msra.mxu0 0
      %385 = vmatprep.subr.bf16.mxu0 0
      %386 = vmatpush1.bf16.msra.mxu0 0
      %387 = vmatprep.subr.bf16.mxu0 0
      %388 = vmatpush1.bf16.msra.mxu0 0
      %389 = vmatprep.subr.bf16.mxu0 0
      %390 = vmatpush1.bf16.msra.mxu0 0
      %391 = vmatprep.subr.bf16.mxu0 0
      %392 = vmatpush1.bf16.msra.mxu0 0
      %393 = vmatprep.subr.bf16.mxu0 0
      %394 = vmatpush1.bf16.msra.mxu0 0
      %395 = vmatprep.subr.bf16.mxu0 0
      %396 = vmatpush1.bf16.msra.mxu0 0
      %397 = vmatprep.mubr.bf16.mxu0 0
      %398 = vmatmul.mubr.bf16.gmra.mrb[0].mxu0 %v311
      %v399 = vpop.f32.mrb[0].mxu0
      %v400 = vadd.f32 %v216, %v399
      %v401 = vpop.f32.mrb[0].mxu0
      %v402 = vpop.f32.mrb[0].mxu0
      %v403 = vadd.f32 %v216, %v402
      %v404 = vpop.f32.mrb[0].mxu0
      %405 = vmatprep.mubr.bf16.mxu0 0
      %406 = vmatmul.mubr.bf16.gmra.mrb[0].mxu0 %v314
      %v407 = vpop.f32.mrb[0].mxu0
      %v408 = vadd.f32 %v216, %v407
      %v409 = vpop.f32.mrb[0].mxu0
      %v410 = vpop.f32.mrb[0].mxu0
      %v411 = vadd.f32 %v216, %v410
      %v412 = vpop.f32.mrb[0].mxu0
      %413 = vmatprep.mubr.bf16.mxu0 0
      %414 = vmatmul.mubr.bf16.gmra.mrb[0].mxu0 %v317
      %v415 = vpop.f32.mrb[0].mxu0
      %v416 = vadd.f32 %v216, %v415
      %v417 = vpop.f32.mrb[0].mxu0
      %v418 = vpop.f32.mrb[0].mxu0
      %v419 = vadd.f32 %v216, %v418
      %v420 = vpop.f32.mrb[0].mxu0
      %421 = vmatprep.mubr.bf16.mxu0 0
      %422 = vmatmul.mubr.bf16.gmra.mrb[0].mxu0 %v320
      %v423 = vpop.f32.mrb[0].mxu0
      %v424 = vadd.f32 %v216, %v423
      %v425 = vpop.f32.mrb[0].mxu0
      %v426 = vpop.f32.mrb[0].mxu0
      %v427 = vadd.f32 %v216, %v426
      %v428 = vpop.f32.mrb[0].mxu0
      %429 = vmatprep.mubr.bf16.mxu0 0
      %430 = vmatmul.mubr.bf16.gmra.mrb[0].mxu0 %v323
      %v431 = vpop.f32.mrb[0].mxu0
      %v432 = vadd.f32 %v216, %v431
      %v433 = vpop.f32.mrb[0].mxu0
      %v434 = vpop.f32.mrb[0].mxu0
      %v435 = vadd.f32 %v216, %v434
      %v436 = vpop.f32.mrb[0].mxu0
      %437 = vmatprep.mubr.bf16.mxu0 0
      %438 = vmatmul.mubr.bf16.gmra.mrb[0].mxu0 %v326
      %v439 = vpop.f32.mrb[0].mxu0
      %v440 = vadd.f32 %v216, %v439
      %v441 = vpop.f32.mrb[0].mxu0
      %v442 = vpop.f32.mrb[0].mxu0
      %v443 = vadd.f32 %v216, %v442
      %v444 = vpop.f32.mrb[0].mxu0
      %445 = vmatprep.mubr.bf16.mxu0 0
      %446 = vmatmul.mubr.bf16.gmra.mrb[0].mxu0 %v329
      %v447 = vpop.f32.mrb[0].mxu0
      %v448 = vadd.f32 %v216, %v447
      %v449 = vpop.f32.mrb[0].mxu0
      %v450 = vpop.f32.mrb[0].mxu0
      %v451 = vadd.f32 %v216, %v450
      %v452 = vpop.f32.mrb[0].mxu0
      %453 = vmatprep.mubr.bf16.mxu0 0
      %454 = vmatmul.mubr.bf16.gmra.mrb[0].mxu0 %v332
      %v455 = vpop.f32.mrb[0].mxu0
      %v456 = vadd.f32 %v216, %v455
      %v457 = vpop.f32.mrb[0].mxu0
      %v458 = vpop.f32.mrb[0].mxu0
      %v459 = vadd.f32 %v216, %v458
      %v460 = vpop.f32.mrb[0].mxu0
      %461 = vmatprep.mubr.bf16.mxu0 0
      %462 = vmatmul.mubr.bf16.gmra.mrb[0].mxu0 %v335
      %v463 = vpop.f32.mrb[0].mxu0
      %v464 = vadd.f32 %v216, %v463
      %v465 = vpop.f32.mrb[0].mxu0
      %v466 = vpop.f32.mrb[0].mxu0
      %v467 = vadd.f32 %v216, %v466
      %v468 = vpop.f32.mrb[0].mxu0
      %469 = vmatprep.mubr.bf16.mxu0 0
      %470 = vmatmul.mubr.bf16.gmra.mrb[0].mxu0 %v338
      %v471 = vpop.f32.mrb[0].mxu0
      %v472 = vadd.f32 %v216, %v471
      %v473 = vpop.f32.mrb[0].mxu0
      %v474 = vpop.f32.mrb[0].mxu0
      %v475 = vadd.f32 %v216, %v474
      %v476 = vpop.f32.mrb[0].mxu0
      %477 = vmatprep.mubr.bf16.mxu0 0
      %478 = vmatmul.mubr.bf16.gmra.mrb[0].mxu0 %v341
      %v479 = vpop.f32.mrb[0].mxu0
      %v480 = vadd.f32 %v216, %v479
      %v481 = vpop.f32.mrb[0].mxu0
      %v482 = vpop.f32.mrb[0].mxu0
      %v483 = vadd.f32 %v216, %v482
      %v484 = vpop.f32.mrb[0].mxu0
      %485 = vmatprep.mubr.bf16.mxu0 0
      %486 = vmatmul.mubr.bf16.gmra.mrb[0].mxu0 %v344
      %v487 = vpop.f32.mrb[0].mxu0
      %v488 = vadd.f32 %v216, %v487
      %v489 = vpop.f32.mrb[0].mxu0
      %v490 = vpop.f32.mrb[0].mxu0
      %v491 = vadd.f32 %v216, %v490
      %v492 = vpop.f32.mrb[0].mxu0
      %493 = vmatprep.mubr.bf16.mxu0 0
      %494 = vmatmul.mubr.bf16.gmra.mrb[0].mxu0 %v347
      %v495 = vpop.f32.mrb[0].mxu0
      %v496 = vadd.f32 %v216, %v495
      %v497 = vpop.f32.mrb[0].mxu0
      %v498 = vpop.f32.mrb[0].mxu0
      %v499 = vadd.f32 %v216, %v498
      %v500 = vpop.f32.mrb[0].mxu0
      %501 = vmatprep.mubr.bf16.mxu0 0
      %502 = vmatmul.mubr.bf16.gmra.mrb[0].mxu0 %v350
      %v503 = vpop.f32.mrb[0].mxu0
      %v504 = vadd.f32 %v216, %v503
      %v505 = vpop.f32.mrb[0].mxu0
      %v506 = vpop.f32.mrb[0].mxu0
      %v507 = vadd.f32 %v216, %v506
      %v508 = vpop.f32.mrb[0].mxu0
      %509 = vmatprep.mubr.bf16.mxu0 0
      %510 = vmatmul.mubr.bf16.gmra.mrb[0].mxu0 %v353
      %v511 = vpop.f32.mrb[0].mxu0
      %v512 = vadd.f32 %v216, %v511
      %v513 = vpop.f32.mrb[0].mxu0
      %v514 = vpop.f32.mrb[0].mxu0
      %v515 = vadd.f32 %v216, %v514
      %v516 = vpop.f32.mrb[0].mxu0
      %517 = vmatprep.mubr.bf16.mxu0 0
      %518 = vmatmul.mubr.bf16.gmra.mrb[0].mxu0 %v356
      %v519 = vpop.f32.mrb[0].mxu0
      %v520 = vadd.f32 %v216, %v519
      %v521 = vpop.f32.mrb[0].mxu0
      %v522 = vpop.f32.mrb[0].mxu0
      %v523 = vadd.f32 %v216, %v522
      %v524 = vpop.f32.mrb[0].mxu0
      %525 = vdwg.mxu0
      %v526 = vmax.f32 %v400, 0.0
      %v527 = vmax.f32 %v403, 0.0
      %v528 = vmax.f32 %v408, 0.0
      %v529 = vmax.f32 %v411, 0.0
      %v530 = vmax.f32 %v416, 0.0
      %v531 = vmax.f32 %v419, 0.0
      %v532 = vmax.f32 %v424, 0.0
      %v533 = vmax.f32 %v427, 0.0
      %v534 = vmax.f32 %v432, 0.0
      %v535 = vmax.f32 %v435, 0.0
      %v536 = vmax.f32 %v440, 0.0
      %v537 = vmax.f32 %v443, 0.0
      %v538 = vmax.f32 %v448, 0.0
      %v539 = vmax.f32 %v451, 0.0
      %v540 = vmax.f32 %v456, 0.0
      %v541 = vmax.f32 %v459, 0.0
      %v542 = vmax.f32 %v464, 0.0
      %v543 = vmax.f32 %v467, 0.0
      %v544 = vmax.f32 %v472, 0.0
      %v545 = vmax.f32 %v475, 0.0
      %v546 = vmax.f32 %v480, 0.0
      %v547 = vmax.f32 %v483, 0.0
      %v548 = vmax.f32 %v488, 0.0
      %v549 = vmax.f32 %v491, 0.0
      %v550 = vmax.f32 %v496, 0.0
      %v551 = vmax.f32 %v499, 0.0
      %v552 = vmax.f32 %v504, 0.0
      %v553 = vmax.f32 %v507, 0.0
      %v554 = vmax.f32 %v512, 0.0
      %v555 = vmax.f32 %v515, 0.0
      %v556 = vmax.f32 %v520, 0.0
      %v557 = vmax.f32 %v523, 0.0
      %v558 = vpack.c.bf16 %v527, %v526
      %v559 = vpack.c.bf16 %v529, %v528
      %v560 = vpack.c.bf16 %v531, %v530
      %v561 = vpack.c.bf16 %v533, %v532
      %v562 = vpack.c.bf16 %v535, %v534
      %v563 = vpack.c.bf16 %v537, %v536
      %v564 = vpack.c.bf16 %v539, %v538
      %v565 = vpack.c.bf16 %v541, %v540
      %v566 = vpack.c.bf16 %v543, %v542
      %v567 = vpack.c.bf16 %v545, %v544
      %v568 = vpack.c.bf16 %v547, %v546
      %v569 = vpack.c.bf16 %v549, %v548
      %v570 = vpack.c.bf16 %v551, %v550
      %v571 = vpack.c.bf16 %v553, %v552
      %v572 = vpack.c.bf16 %v555, %v554
      %v573 = vpack.c.bf16 %v557, %v556
      %v590 = vunpack.c.l.b16 %v558
      %v591 = vunpack.c.h.b16 %v558
      %v592 = vunpack.c.l.b16 %v559
      %v593 = vunpack.c.h.b16 %v559
      %v594 = vunpack.c.l.b16 %v560
      %v595 = vunpack.c.h.b16 %v560
      %v596 = vunpack.c.l.b16 %v561
      %v597 = vunpack.c.h.b16 %v561
      %v598 = vunpack.c.l.b16 %v562
      %v599 = vunpack.c.h.b16 %v562
      %v600 = vunpack.c.l.b16 %v563
      %v601 = vunpack.c.h.b16 %v563
      %v602 = vunpack.c.l.b16 %v564
      %v603 = vunpack.c.h.b16 %v564
      %v604 = vunpack.c.l.b16 %v565
      %v605 = vunpack.c.h.b16 %v565
      %v606 = vunpack.c.l.b16 %v566
      %v607 = vunpack.c.h.b16 %v566
      %v608 = vunpack.c.l.b16 %v567
      %v609 = vunpack.c.h.b16 %v567
      %v610 = vunpack.c.l.b16 %v568
      %v611 = vunpack.c.h.b16 %v568
      %v612 = vunpack.c.l.b16 %v569
      %v613 = vunpack.c.h.b16 %v569
      %v614 = vunpack.c.l.b16 %v570
      %v615 = vunpack.c.h.b16 %v570
      %v616 = vunpack.c.l.b16 %v571
      %v617 = vunpack.c.h.b16 %v571
      %v618 = vunpack.c.l.b16 %v572
      %v619 = vunpack.c.h.b16 %v572
      %v620 = vunpack.c.l.b16 %v573
      %v621 = vunpack.c.h.b16 %v573
      %v622 = vpack.c.b16 %v590, %v590
      %v623 = vpack.c.b16 %v591, %v591
      %v624 = vpack.c.b16 %v592, %v592
      %v625 = vpack.c.b16 %v593, %v593
      %v626 = vpack.c.b16 %v594, %v594
      %v627 = vpack.c.b16 %v595, %v595
      %v628 = vpack.c.b16 %v596, %v596
      %v629 = vpack.c.b16 %v597, %v597
      %v630 = vpack.c.b16 %v598, %v598
      %v631 = vpack.c.b16 %v599, %v599
      %v632 = vpack.c.b16 %v600, %v600
      %v633 = vpack.c.b16 %v601, %v601
      %v634 = vpack.c.b16 %v602, %v602
      %v635 = vpack.c.b16 %v603, %v603
      %v636 = vpack.c.b16 %v604, %v604
      %v637 = vpack.c.b16 %v605, %v605
      %v638 = vpack.c.b16 %v606, %v606
      %v639 = vpack.c.b16 %v607, %v607
      %v640 = vpack.c.b16 %v608, %v608
      %v641 = vpack.c.b16 %v609, %v609
      %v642 = vpack.c.b16 %v610, %v610
      %v643 = vpack.c.b16 %v611, %v611
      %v644 = vpack.c.b16 %v612, %v612
      %v645 = vpack.c.b16 %v613, %v613
      %v646 = vpack.c.b16 %v614, %v614
      %v647 = vpack.c.b16 %v615, %v615
      %v648 = vpack.c.b16 %v616, %v616
      %v649 = vpack.c.b16 %v617, %v617
      %v650 = vpack.c.b16 %v618, %v618
      %v651 = vpack.c.b16 %v619, %v619
      %v652 = vpack.c.b16 %v620, %v620
      %v653 = vpack.c.b16 %v621, %v621
      %vm686 = vcmask 60416
      %687 = vst.msk [vmem:[%s172] sm:$0xf] %vm686, %v622
      %688 = vst.msk [vmem:[%s172 + $0x4] sm:$0xf] %vm686, %v623
      %689 = vst.msk [vmem:[%s172 + $0x8] sm:$0xf] %vm686, %v624
      %690 = vst.msk [vmem:[%s172 + $0xc] sm:$0xf] %vm686, %v625
      %691 = vst.msk [vmem:[%s172 + $0x10] sm:$0xf] %vm686, %v626
      %692 = vst.msk [vmem:[%s172 + $0x14] sm:$0xf] %vm686, %v627
      %693 = vst.msk [vmem:[%s172 + $0x18] sm:$0xf] %vm686, %v628
      %694 = vst.msk [vmem:[%s172 + $0x1c] sm:$0xf] %vm686, %v629
      %695 = vst.msk [vmem:[%s172 + $0x20] sm:$0xf] %vm686, %v630
      %696 = vst.msk [vmem:[%s172 + $0x24] sm:$0xf] %vm686, %v631
      %697 = vst.msk [vmem:[%s172 + $0x28] sm:$0xf] %vm686, %v632
      %698 = vst.msk [vmem:[%s172 + $0x2c] sm:$0xf] %vm686, %v633
      %699 = vst.msk [vmem:[%s172 + $0x30] sm:$0xf] %vm686, %v634
      %700 = vst.msk [vmem:[%s172 + $0x34] sm:$0xf] %vm686, %v635
      %701 = vst.msk [vmem:[%s172 + $0x38] sm:$0xf] %vm686, %v636
      %702 = vst.msk [vmem:[%s172 + $0x3c] sm:$0xf] %vm686, %v637
      %703 = vst.msk [vmem:[%s172 + $0x40] sm:$0xf] %vm686, %v638
      %704 = vst.msk [vmem:[%s172 + $0x44] sm:$0xf] %vm686, %v639
      %705 = vst.msk [vmem:[%s172 + $0x48] sm:$0xf] %vm686, %v640
      %706 = vst.msk [vmem:[%s172 + $0x4c] sm:$0xf] %vm686, %v641
      %707 = vst.msk [vmem:[%s172 + $0x50] sm:$0xf] %vm686, %v642
      %708 = vst.msk [vmem:[%s172 + $0x54] sm:$0xf] %vm686, %v643
      %709 = vst.msk [vmem:[%s172 + $0x58] sm:$0xf] %vm686, %v644
      %710 = vst.msk [vmem:[%s172 + $0x5c] sm:$0xf] %vm686, %v645
      %711 = vst.msk [vmem:[%s172 + $0x60] sm:$0xf] %vm686, %v646
      %712 = vst.msk [vmem:[%s172 + $0x64] sm:$0xf] %vm686, %v647
      %713 = vst.msk [vmem:[%s172 + $0x68] sm:$0xf] %vm686, %v648
      %714 = vst.msk [vmem:[%s172 + $0x6c] sm:$0xf] %vm686, %v649
      %715 = vst.msk [vmem:[%s172 + $0x70] sm:$0xf] %vm686, %v650
      %716 = vst.msk [vmem:[%s172 + $0x74] sm:$0xf] %vm686, %v651
      %717 = vst.msk [vmem:[%s172 + $0x78] sm:$0xf] %vm686, %v652
      %718 = vst.msk [vmem:[%s172 + $0x7c] sm:$0xf] %vm686, %v653
      %s719 = smul.u32 32, %s14
      %p720 = scmp.lt.s32.totalorder %s719, 255
      %s721 = scalar_select %p720, %s719, 255
      %s722 = smul.addr %s721, 4
      %s723 = scalar_lea.vmem %s3, %s722
      // Predicated region
      $region33: #{net_forward.6} parent=31 // pred_check
        %p724 = pneg %p100
      $region34: #{net_forward.6} parent=31 // pred_check_branch
        %726 = sbr.rel (%p724) target = $region36
      $region35: #{net_forward.6} parent=31 // pred_region
        %s727 = smul.u32 32, %s14
      $region36: #{net_forward.6} parent=31 // pred_fallthru
        _
    $region32: #{net_forward.6} parent=5 // pred_fallthru
      _
    %p728 = scmp.le.s32.totalorder 2, %s9
    // Predicated region
    $region37: #{net_forward.6} parent=5 // pred_check
      %p729 = pneg %p728
    $region38: #{net_forward.6} parent=5 // pred_check_branch
      %731 = sbr.rel (%p729) target = $region40
    $region39: #{net_forward.6} parent=5 // pred_region
      %s732 = ssub.s32 %s9, 2
      // Predicated region
      $region41: #{net_forward.6} parent=39 // pred_check
        %p733 = pneg %p106
      $region42: #{net_forward.6} parent=39 // pred_check_branch
        %735 = sbr.rel (%p733) target = $region44
      $region43: #{net_forward.6} parent=39 // pred_region
        %s736 = smul.u32 32, %s15
        %p737 = scmp.lt.s32.totalorder %s736, 255
        %s738 = scalar_select %p737, %s736, 255
        %s739 = smul.addr %s738, 4
        %s740 = scalar_lea.vmem %s3, %s739
      $region44: #{net_forward.6} parent=39 // pred_fallthru
        _
    $region40: #{net_forward.6} parent=5 // pred_fallthru
      _
  $region6: #{net_forward.6} parent=0 // loop_footer
    %s13 = sadd.s32 1, %s9
  $region7: #{net_forward.6} parent=0 // loop_footer_branch
    %8 = sbr.rel target = $region3
  $region8: #{net_forward.6} parent=0 // loop_exit
    _

// kernel: net_forward.7
$region0: #{net_forward.7}
  #allocation0 [shape = 'u32[]', space=smem, size = 0x4, offset = 0x4, fixed_abs, tag = 'smem constant byte address 0x4 - core index']
  #allocation1 [shape = 'u32[144,128]{1,0:T(1,128)}', space=vmem, size = 0x12000, scoped, tag = 'internal scratch']
  %s0 = inlined_call_operand.vmem [shape: bf16[1792,72], index: 0, kind: input, shape index: {}]
  %s1 = inlined_call_operand.vmem [shape: bf16[72,64], index: 1, kind: input, shape index: {}]
  %s2 = inlined_call_operand.vmem [shape: f32[1,64], index: 2, kind: input, shape index: {}]
  %s3 = inlined_call_operand.vmem [shape: f32[1792,64], index: 3, kind: output, shape index: {}]
  %s4 = sld [smem:[#allocation0]]
  $region45: #{net_forward.7} parent=0
    _
  %s6 = ssub.s32 1, %s4
  %s7 = scalar_select 0, %s6, %s4
  loop: start=0, step=1, limit=9
  $region2: #{net_forward.7} parent=0 // loop_pre_header
    _
  $region3: #{net_forward.7} parent=0 // loop_header
    %s9 = sphi 0, %s13
    %p10 = scmp.ge.s32.totalorder %s9, 9
    %s19 = sphi 0, %s21
    %s22 = sphi 0, %s19
    %s23 = sphi 0, %s22
    %s39 = sphi 0, %s23
    %s43 = sphi 0, %s43
    %s45 = sphi 0, %s43
    %s46 = sphi 0, %s45
    %s60 = sphi 0, %s46
    %s64 = sphi 0, %s64
    %s66 = sphi 0, %s64
    %s67 = sphi 0, %s66
    %s81 = sphi 0, %s67
    %s87 = sphi 0, %s89
    %s90 = sphi 0, %s87
    %s91 = sphi 0, %s90
    %s107 = sphi 0, %s91
  $region4: #{net_forward.7} parent=0 // loop_header_branch
    %12 = sbr.rel (%p10) target = $region8
  $region5: #{net_forward.7} parent=0 // loop_body
    %s14 = ssub.s32 %s9, 1
    %s15 = ssub.s32 %s9, 2
    %s16 = sadd.s32 %s9, 1
    %s17 = ssub.s32 %s9, %s16
    %p18 = scmp.eq.s32.totalorder %s17, 0
    %s20 = sadd.s32 %s19, 1
    %s21 = scalar_select %p18, %s19, %s20
    %p24 = pneg %p18
    %p25 = scmp.eq.s32.totalorder %s9, 6
    %p26 = por %p24, %p25
    %p27 = scmp.ne.s32.totalorder %s19, %s22
    %p28 = scmp.eq.s32.totalorder %s9, 0
    %p29 = por %p27, %p28
    %p30 = scmp.ne.s32.totalorder %s19, %s22
    %p31 = scmp.eq.s32.totalorder %s14, 6
    %p32 = por %p30, %p31
    %p33 = scmp.ne.s32.totalorder %s22, %s23
    %p34 = scmp.eq.s32.totalorder %s14, 0
    %p35 = por %p33, %p34
    %p36 = scmp.ne.s32.totalorder %s22, %s23
    %p37 = scmp.eq.s32.totalorder %s15, 6
    %p38 = por %p36, %p37
    %p40 = scmp.ne.s32.totalorder %s23, %s39
    %p41 = scmp.eq.s32.totalorder %s15, 0
    %p42 = por %p40, %p41
    %s44 = sadd.s32 %s43, 1
    %p47 = scmp.eq.s32.totalorder %s9, 6
    %p48 = scmp.ne.s32.totalorder %s43, %s45
    %p49 = scmp.eq.s32.totalorder %s9, 0
    %p50 = por %p48, %p49
    %p51 = scmp.ne.s32.totalorder %s43, %s45
    %p52 = scmp.eq.s32.totalorder %s14, 6
    %p53 = por %p51, %p52
    %p54 = scmp.ne.s32.totalorder %s45, %s46
    %p55 = scmp.eq.s32.totalorder %s14, 0
    %p56 = por %p54, %p55
    %p57 = scmp.ne.s32.totalorder %s45, %s46
    %p58 = scmp.eq.s32.totalorder %s15, 6
    %p59 = por %p57, %p58
    %p61 = scmp.ne.s32.totalorder %s46, %s60
    %p62 = scmp.eq.s32.totalorder %s15, 0
    %p63 = por %p61, %p62
    %s65 = sadd.s32 %s64, 1
    %p68 = scmp.eq.s32.totalorder %s9, 6
    %p69 = scmp.ne.s32.totalorder %s64, %s66
    %p70 = scmp.eq.s32.totalorder %s9, 0
    %p71 = por %p69, %p70
    %p72 = scmp.ne.s32.totalorder %s64, %s66
    %p73 = scmp.eq.s32.totalorder %s14, 6
    %p74 = por %p72, %p73
    %p75 = scmp.ne.s32.totalorder %s66, %s67
    %p76 = scmp.eq.s32.totalorder %s14, 0
    %p77 = por %p75, %p76
    %p78 = scmp.ne.s32.totalorder %s66, %s67
    %p79 = scmp.eq.s32.totalorder %s15, 6
    %p80 = por %p78, %p79
    %p82 = scmp.ne.s32.totalorder %s67, %s81
    %p83 = scmp.eq.s32.totalorder %s15, 0
    %p84 = por %p82, %p83
    %s85 = ssub.s32 %s9, %s16
    %p86 = scmp.eq.s32.totalorder %s85, 0
    %s88 = sadd.s32 %s87, 1
    %s89 = scalar_select %p86, %s87, %s88
    %p92 = pneg %p86
    %p93 = scmp.eq.s32.totalorder %s9, 6
    %p94 = por %p92, %p93
    %p95 = scmp.ne.s32.totalorder %s87, %s90
    %p96 = scmp.eq.s32.totalorder %s9, 0
    %p97 = por %p95, %p96
    %p98 = scmp.ne.s32.totalorder %s87, %s90
    %p99 = scmp.eq.s32.totalorder %s14, 6
    %p100 = por %p98, %p99
    %p101 = scmp.ne.s32.totalorder %s90, %s91
    %p102 = scmp.eq.s32.totalorder %s14, 0
    %p103 = por %p101, %p102
    %p104 = scmp.ne.s32.totalorder %s90, %s91
    %p105 = scmp.eq.s32.totalorder %s15, 6
    %p106 = por %p104, %p105
    %p108 = scmp.ne.s32.totalorder %s91, %s107
    %p109 = scmp.eq.s32.totalorder %s15, 0
    %p110 = por %p108, %p109
    %p111 = scmp.le.s32.totalorder 1, %s9
    %p112 = scmp.lt.s32.totalorder %s9, 8
    %p113 = pnand %p111, %p112
    %p114 = pneg %p113
    // Predicated region
    $region9: #{net_forward.7} parent=5 // pred_check
      _
    $region10: #{net_forward.7} parent=5 // pred_check_branch
      %116 = sbr.rel (%p113) target = $region12
    $region11: #{net_forward.7} parent=5 // pred_region
      %s117 = ssub.s32 %s9, 1
      // Predicated region
      $region13: #{net_forward.7} parent=11 // pred_check
        %p118 = pneg %p56
      $region14: #{net_forward.7} parent=11 // pred_check_branch
        %120 = sbr.rel (%p118) target = $region16
      $region15: #{net_forward.7} parent=11 // pred_region
        _
      $region16: #{net_forward.7} parent=11 // pred_fallthru
        _
      // Predicated region
      $region17: #{net_forward.7} parent=11 // pred_check
        %p121 = pneg %p77
      $region18: #{net_forward.7} parent=11 // pred_check_branch
        %123 = sbr.rel (%p121) target = $region20
      $region19: #{net_forward.7} parent=11 // pred_region
        _
      $region20: #{net_forward.7} parent=11 // pred_fallthru
        _
    $region12: #{net_forward.7} parent=5 // pred_fallthru
      _
    %p124 = scmp.lt.s32.totalorder %s9, 7
    // Predicated region
    $region21: #{net_forward.7} parent=5 // pred_check
      %p125 = pneg %p124
    $region22: #{net_forward.7} parent=5 // pred_check_branch
      %127 = sbr.rel (%p125) target = $region24
    $region23: #{net_forward.7} parent=5 // pred_region
      // Predicated region
      $region25: #{net_forward.7} parent=23 // pred_check
        %p128 = pneg %p29
      $region26: #{net_forward.7} parent=23 // pred_check_branch
        %130 = sbr.rel (%p128) target = $region28
      $region27: #{net_forward.7} parent=23 // pred_region
        %s131 = smul.u32 32, %s9
        %p132 = scmp.lt.s32.totalorder %s131, 223
        %s133 = scalar_select %p132, %s131, 223
        %s134 = smul.addr %s133, 4
        %s135 = scalar_lea.vmem %s0, %s134
        %s136 = smul.u32 32, %s9
      $region28: #{net_forward.7} parent=23 // pred_fallthru
        _
    $region24: #{net_forward.7} parent=5 // pred_fallthru
      _
    %p137 = scmp.le.s32.totalorder 1, %s9
    %p138 = scmp.lt.s32.totalorder %s9, 8
    %p139 = pnand %p137, %p138
    %p140 = pneg %p139
    // Predicated region
    $region29: #{net_forward.7} parent=5 // pred_check
      _
    $region30: #{net_forward.7} parent=5 // pred_check_branch
      %142 = sbr.rel (%p139) target = $region32
    $region31: #{net_forward.7} parent=5 // pred_region
      %s143 = ssub.s32 %s9, 1
      %s144 = smul.u32 32, %s14
      %p145 = scmp.lt.s32.totalorder %s144, 223
      %s146 = scalar_select %p145, %s144, 223
      %s147 = smul.addr %s146, 4
      %s148 = scalar_lea.vmem %s0, %s147
      %p149 = pneg %p35
      %p150 = pneg %p32
      %p151 = pneg %p56
      %p152 = pneg %p53
      %p153 = pneg %p77
      %p154 = pneg %p74
      %p155 = pneg %p103
      %p156 = pneg %p100
      %s157 = smul.u32 32, %s14
      %p158 = scmp.lt.s32.totalorder %s157, 223
      %s159 = scalar_select %p158, %s157, 223
      %s160 = smul.addr %s159, 8
      %s161 = scalar_lea.vmem %s3, %s160
      %s162 = smul.u32 32, %s14
      %p163 = scmp.lt.s32.totalorder %s162, 223
      %s164 = scalar_select %p163, %s162, 223
      %s165 = smul.addr %s164, 4
      %s166 = scalar_lea.vmem %s0, %s165
      %s167 = smul.u32 32, %s14
      %s168 = smul.u32 32, %s14
      %p169 = scmp.lt.s32.totalorder %s168, 223
      %s170 = scalar_select %p169, %s168, 223
      %s171 = smul.addr %s170, 8
      %s172 = scalar_lea.vmem %s3, %s171
      %s173 = smul.u32 32, %s14
      %v175 = vld [vmem:[%s166] sm:$0xf]
      %v176 = vld [vmem:[%s166 + $0x4] sm:$0xf]
      %v177 = vld [vmem:[%s166 + $0x8] sm:$0xf]
      %v178 = vld [vmem:[%s166 + $0xc] sm:$0xf]
      %v179 = vld [vmem:[%s166 + $0x10] sm:$0xf]
      %v180 = vld [vmem:[%s166 + $0x14] sm:$0xf]
      %v181 = vld [vmem:[%s166 + $0x18] sm:$0xf]
      %v182 = vld [vmem:[%s166 + $0x1c] sm:$0xf]
      %v183 = vld [vmem:[%s166 + $0x20] sm:$0xf]
      %v184 = vld [vmem:[%s166 + $0x24] sm:$0xf]
      %v185 = vld [vmem:[%s166 + $0x28] sm:$0xf]
      %v186 = vld [vmem:[%s166 + $0x2c] sm:$0xf]
      %v187 = vld [vmem:[%s166 + $0x30] sm:$0xf]
      %v188 = vld [vmem:[%s166 + $0x34] sm:$0xf]
      %v189 = vld [vmem:[%s166 + $0x38] sm:$0xf]
      %v190 = vld [vmem:[%s166 + $0x3c] sm:$0xf]
      %v191 = vld [vmem:[%s166 + $0x40] sm:$0xf]
      %v192 = vld [vmem:[%s166 + $0x44] sm:$0xf]
      %v193 = vld [vmem:[%s166 + $0x48] sm:$0xf]
      %v194 = vld [vmem:[%s166 + $0x4c] sm:$0xf]
      %v195 = vld [vmem:[%s166 + $0x50] sm:$0xf]
      %v196 = vld [vmem:[%s166 + $0x54] sm:$0xf]
      %v197 = vld [vmem:[%s166 + $0x58] sm:$0xf]
      %v198 = vld [vmem:[%s166 + $0x5c] sm:$0xf]
      %v199 = vld [vmem:[%s166 + $0x60] sm:$0xf]
      %v200 = vld [vmem:[%s166 + $0x64] sm:$0xf]
      %v201 = vld [vmem:[%s166 + $0x68] sm:$0xf]
      %v202 = vld [vmem:[%s166 + $0x6c] sm:$0xf]
      %v203 = vld [vmem:[%s166 + $0x70] sm:$0xf]
      %v204 = vld [vmem:[%s166 + $0x74] sm:$0xf]
      %v205 = vld [vmem:[%s166 + $0x78] sm:$0xf]
      %v206 = vld [vmem:[%s166 + $0x7c] sm:$0xf]
      %v207 = vld [vmem:[%s1] sm:$0xf]
      %v208 = vld [vmem:[%s1 + $0x4] sm:$0xf]
      %v209 = vld [vmem:[%s1 + $0x8] sm:$0xf]
      %v210 = vld [vmem:[%s1 + $0xc] sm:$0xf]
      %v211 = vld [vmem:[%s1 + $0x10] sm:$0xf]
      %v212 = vld [vmem:[%s1 + $0x14] sm:$0xf]
      %v213 = vld [vmem:[%s1 + $0x18] sm:$0xf]
      %v214 = vld [vmem:[%s1 + $0x1c] sm:$0xf]
      %v215 = vld [vmem:[%s1 + $0x20] sm:$0xf]
      %v216 = vld [vmem:[%s2] sm:$0x1]
      %v218 = vlaneseq
      %v219 = vshrl.u32 %v218, 7
      %v220 = vsub.s32 0, %v219
      %v221 = vrot.slane %v216, %v220
      %v255 = vunpack.c.l.b16 %v175
      %v256 = vunpack.c.l.b16 %v176
      %v257 = vunpack.c.l.b16 %v177
      %v258 = vunpack.c.l.b16 %v178
      %v259 = vunpack.c.l.b16 %v179
      %v260 = vunpack.c.l.b16 %v180
      %v261 = vunpack.c.l.b16 %v181
      %v262 = vunpack.c.l.b16 %v182
      %v263 = vunpack.c.l.b16 %v183
      %v264 = vunpack.c.l.b16 %v184
      %v265 = vunpack.c.l.b16 %v185
      %v266 = vunpack.c.l.b16 %v186
      %v267 = vunpack.c.l.b16 %v187
      %v268 = vunpack.c.l.b16 %v188
      %v269 = vunpack.c.l.b16 %v189
      %v270 = vunpack.c.l.b16 %v190
      %v271 = vunpack.c.l.b16 %v191
      %v272 = vunpack.c.l.b16 %v192
      %v273 = vunpack.c.l.b16 %v193
      %v274 = vunpack.c.l.b16 %v194
      %v275 = vunpack.c.l.b16 %v195
      %v276 = vunpack.c.l.b16 %v196
      %v277 = vunpack.c.l.b16 %v197
      %v278 = vunpack.c.l.b16 %v198
      %v279 = vunpack.c.l.b16 %v199
      %v280 = vunpack.c.l.b16 %v200
      %v281 = vunpack.c.l.b16 %v201
      %v282 = vunpack.c.l.b16 %v202
      %v283 = vunpack.c.l.b16 %v203
      %v284 = vunpack.c.l.b16 %v204
      %v285 = vunpack.c.l.b16 %v205
      %v286 = vunpack.c.l.b16 %v206
      %v287 = vpack.c.b16 %v256, %v255
      %v288 = vpack.c.b16 %v258, %v257
      %v289 = vpack.c.b16 %v260, %v259
      %v290 = vpack.c.b16 %v262, %v261
      %v291 = vpack.c.b16 %v264, %v263
      %v292 = vpack.c.b16 %v266, %v265
      %v293 = vpack.c.b16 %v268, %v267
      %v294 = vpack.c.b16 %v270, %v269
      %v295 = vpack.c.b16 %v272, %v271
      %v296 = vpack.c.b16 %v274, %v273
      %v297 = vpack.c.b16 %v276, %v275
      %v298 = vpack.c.b16 %v278, %v277
      %v299 = vpack.c.b16 %v280, %v279
      %v300 = vpack.c.b16 %v282, %v281
      %v301 = vpack.c.b16 %v284, %v283
      %v302 = vpack.c.b16 %v286, %v285
      %v312 = vunpack.c.l.b16 %v207
      %v313 = vunpack.c.l.b16 %v208
      %v314 = vunpack.c.l.b16 %v209
      %v315 = vunpack.c.l.b16 %v210
      %v316 = vunpack.c.l.b16 %v211
      %v317 = vunpack.c.l.b16 %v212
      %v318 = vunpack.c.l.b16 %v213
      %v319 = vunpack.c.l.b16 %v214
      %v320 = vunpack.c.l.b16 %v215
      %v321 = vpack.c.b16 %v313, %v312
      %v322 = vpack.c.b16 %v315, %v314
      %v323 = vpack.c.b16 %v317, %v316
      %v324 = vpack.c.b16 %v319, %v318
      %v325 = vpack.c.b16 %v320, %v320
      %vm330 = vcmask 588800
      %v332 = vsel %vm330, %v287, 0
      %v335 = vsel %vm330, %v288, 0
      %v338 = vsel %vm330, %v289, 0
      %v341 = vsel %vm330, %v290, 0
      %v344 = vsel %vm330, %v291, 0
      %v347 = vsel %vm330, %v292, 0
      %v350 = vsel %vm330, %v293, 0
      %v353 = vsel %vm330, %v294, 0
      %v356 = vsel %vm330, %v295, 0
      %v359 = vsel %vm330, %v296, 0
      %v362 = vsel %vm330, %v297, 0
      %v365 = vsel %vm330, %v298, 0
      %v368 = vsel %vm330, %v299, 0
      %v371 = vsel %vm330, %v300, 0
      %v374 = vsel %vm330, %v301, 0
      %v377 = vsel %vm330, %v302, 0
      %vm379 = vcmask 1043456
      %v381 = vsel %vm379, %v325, 0
      %383 = vmatprep.subr.bf16.mxu0 0
      %384 = vmatpush1.bf16.msra.mxu0 %v321
      %385 = vmatprep.subr.bf16.mxu0 0
      %386 = vmatpush1.bf16.msra.mxu0 %v322
      %387 = vmatprep.subr.bf16.mxu0 0
      %388 = vmatpush1.bf16.msra.mxu0 %v323
      %389 = vmatprep.subr.bf16.mxu0 0
      %390 = vmatpush1.bf16.msra.mxu0 %v324
      %391 = vmatprep.subr.bf16.mxu0 0
      %392 = vmatpush1.bf16.msra.mxu0 %v381
      %393 = vmatprep.subr.bf16.mxu0 0
      %394 = vmatpush1.bf16.msra.mxu0 0
      %395 = vmatprep.subr.bf16.mxu0 0
      %396 = vmatpush1.bf16.msra.mxu0 0
      %397 = vmatprep.subr.bf16.mxu0 0
      %398 = vmatpush1.bf16.msra.mxu0 0
      %399 = vmatprep.subr.bf16.mxu0 0
      %400 = vmatpush1.bf16.msra.mxu0 0
      %401 = vmatprep.subr.bf16.mxu0 0
      %402 = vmatpush1.bf16.msra.mxu0 0
      %403 = vmatprep.subr.bf16.mxu0 0
      %404 = vmatpush1.bf16.msra.mxu0 0
      %405 = vmatprep.subr.bf16.mxu0 0
      %406 = vmatpush1.bf16.msra.mxu0 0
      %407 = vmatprep.subr.bf16.mxu0 0
      %408 = vmatpush1.bf16.msra.mxu0 0
      %409 = vmatprep.subr.bf16.mxu0 0
      %410 = vmatpush1.bf16.msra.mxu0 0
      %411 = vmatprep.subr.bf16.mxu0 0
      %412 = vmatpush1.bf16.msra.mxu0 0
      %413 = vmatprep.subr.bf16.mxu0 0
      %414 = vmatpush1.bf16.msra.mxu0 0
      %415 = vmatprep.mubr.bf16.mxu0 0
      %416 = vmatmul.mubr.bf16.gmra.mrb[0].mxu0 %v332
      %v417 = vpop.f32.mrb[0].mxu0
      %v418 = vadd.f32 %v221, %v417
      %v419 = vpop.f32.mrb[0].mxu0
      %v420 = vpop.f32.mrb[0].mxu0
      %v421 = vadd.f32 %v221, %v420
      %v422 = vpop.f32.mrb[0].mxu0
      %423 = vmatprep.mubr.bf16.mxu0 0
      %424 = vmatmul.mubr.bf16.gmra.mrb[0].mxu0 %v335
      %v425 = vpop.f32.mrb[0].mxu0
      %v426 = vadd.f32 %v221, %v425
      %v427 = vpop.f32.mrb[0].mxu0
      %v428 = vpop.f32.mrb[0].mxu0
      %v429 = vadd.f32 %v221, %v428
      %v430 = vpop.f32.mrb[0].mxu0
      %431 = vmatprep.mubr.bf16.mxu0 0
      %432 = vmatmul.mubr.bf16.gmra.mrb[0].mxu0 %v338
      %v433 = vpop.f32.mrb[0].mxu0
      %v434 = vadd.f32 %v221, %v433
      %v435 = vpop.f32.mrb[0].mxu0
      %v436 = vpop.f32.mrb[0].mxu0
      %v437 = vadd.f32 %v221, %v436
      %v438 = vpop.f32.mrb[0].mxu0
      %439 = vmatprep.mubr.bf16.mxu0 0
      %440 = vmatmul.mubr.bf16.gmra.mrb[0].mxu0 %v341
      %v441 = vpop.f32.mrb[0].mxu0
      %v442 = vadd.f32 %v221, %v441
      %v443 = vpop.f32.mrb[0].mxu0
      %v444 = vpop.f32.mrb[0].mxu0
      %v445 = vadd.f32 %v221, %v444
      %v446 = vpop.f32.mrb[0].mxu0
      %447 = vmatprep.mubr.bf16.mxu0 0
      %448 = vmatmul.mubr.bf16.gmra.mrb[0].mxu0 %v344
      %v449 = vpop.f32.mrb[0].mxu0
      %v450 = vadd.f32 %v221, %v449
      %v451 = vpop.f32.mrb[0].mxu0
      %v452 = vpop.f32.mrb[0].mxu0
      %v453 = vadd.f32 %v221, %v452
      %v454 = vpop.f32.mrb[0].mxu0
      %455 = vmatprep.mubr.bf16.mxu0 0
      %456 = vmatmul.mubr.bf16.gmra.mrb[0].mxu0 %v347
      %v457 = vpop.f32.mrb[0].mxu0
      %v458 = vadd.f32 %v221, %v457
      %v459 = vpop.f32.mrb[0].mxu0
      %v460 = vpop.f32.mrb[0].mxu0
      %v461 = vadd.f32 %v221, %v460
      %v462 = vpop.f32.mrb[0].mxu0
      %463 = vmatprep.mubr.bf16.mxu0 0
      %464 = vmatmul.mubr.bf16.gmra.mrb[0].mxu0 %v350
      %v465 = vpop.f32.mrb[0].mxu0
      %v466 = vadd.f32 %v221, %v465
      %v467 = vpop.f32.mrb[0].mxu0
      %v468 = vpop.f32.mrb[0].mxu0
      %v469 = vadd.f32 %v221, %v468
      %v470 = vpop.f32.mrb[0].mxu0
      %471 = vmatprep.mubr.bf16.mxu0 0
      %472 = vmatmul.mubr.bf16.gmra.mrb[0].mxu0 %v353
      %v473 = vpop.f32.mrb[0].mxu0
      %v474 = vadd.f32 %v221, %v473
      %v475 = vpop.f32.mrb[0].mxu0
      %v476 = vpop.f32.mrb[0].mxu0
      %v477 = vadd.f32 %v221, %v476
      %v478 = vpop.f32.mrb[0].mxu0
      %479 = vmatprep.mubr.bf16.mxu0 0
      %480 = vmatmul.mubr.bf16.gmra.mrb[0].mxu0 %v356
      %v481 = vpop.f32.mrb[0].mxu0
      %v482 = vadd.f32 %v221, %v481
      %v483 = vpop.f32.mrb[0].mxu0
      %v484 = vpop.f32.mrb[0].mxu0
      %v485 = vadd.f32 %v221, %v484
      %v486 = vpop.f32.mrb[0].mxu0
      %487 = vmatprep.mubr.bf16.mxu0 0
      %488 = vmatmul.mubr.bf16.gmra.mrb[0].mxu0 %v359
      %v489 = vpop.f32.mrb[0].mxu0
      %v490 = vadd.f32 %v221, %v489
      %v491 = vpop.f32.mrb[0].mxu0
      %v492 = vpop.f32.mrb[0].mxu0
      %v493 = vadd.f32 %v221, %v492
      %v494 = vpop.f32.mrb[0].mxu0
      %495 = vmatprep.mubr.bf16.mxu0 0
      %496 = vmatmul.mubr.bf16.gmra.mrb[0].mxu0 %v362
      %v497 = vpop.f32.mrb[0].mxu0
      %v498 = vadd.f32 %v221, %v497
      %v499 = vpop.f32.mrb[0].mxu0
      %v500 = vpop.f32.mrb[0].mxu0
      %v501 = vadd.f32 %v221, %v500
      %v502 = vpop.f32.mrb[0].mxu0
      %503 = vmatprep.mubr.bf16.mxu0 0
      %504 = vmatmul.mubr.bf16.gmra.mrb[0].mxu0 %v365
      %v505 = vpop.f32.mrb[0].mxu0
      %v506 = vadd.f32 %v221, %v505
      %v507 = vpop.f32.mrb[0].mxu0
      %v508 = vpop.f32.mrb[0].mxu0
      %v509 = vadd.f32 %v221, %v508
      %v510 = vpop.f32.mrb[0].mxu0
      %511 = vmatprep.mubr.bf16.mxu0 0
      %512 = vmatmul.mubr.bf16.gmra.mrb[0].mxu0 %v368
      %v513 = vpop.f32.mrb[0].mxu0
      %v514 = vadd.f32 %v221, %v513
      %v515 = vpop.f32.mrb[0].mxu0
      %v516 = vpop.f32.mrb[0].mxu0
      %v517 = vadd.f32 %v221, %v516
      %v518 = vpop.f32.mrb[0].mxu0
      %519 = vmatprep.mubr.bf16.mxu0 0
      %520 = vmatmul.mubr.bf16.gmra.mrb[0].mxu0 %v371
      %v521 = vpop.f32.mrb[0].mxu0
      %v522 = vadd.f32 %v221, %v521
      %v523 = vpop.f32.mrb[0].mxu0
      %v524 = vpop.f32.mrb[0].mxu0
      %v525 = vadd.f32 %v221, %v524
      %v526 = vpop.f32.mrb[0].mxu0
      %527 = vmatprep.mubr.bf16.mxu0 0
      %528 = vmatmul.mubr.bf16.gmra.mrb[0].mxu0 %v374
      %v529 = vpop.f32.mrb[0].mxu0
      %v530 = vadd.f32 %v221, %v529
      %v531 = vpop.f32.mrb[0].mxu0
      %v532 = vpop.f32.mrb[0].mxu0
      %v533 = vadd.f32 %v221, %v532
      %v534 = vpop.f32.mrb[0].mxu0
      %535 = vmatprep.mubr.bf16.mxu0 0
      %536 = vmatmul.mubr.bf16.gmra.mrb[0].mxu0 %v377
      %v537 = vpop.f32.mrb[0].mxu0
      %v538 = vadd.f32 %v221, %v537
      %v539 = vpop.f32.mrb[0].mxu0
      %v540 = vpop.f32.mrb[0].mxu0
      %v541 = vadd.f32 %v221, %v540
      %v542 = vpop.f32.mrb[0].mxu0
      %543 = vdwg.mxu0
      %v544 = vmax.f32 %v418, 0.0
      %v545 = vmax.f32 %v421, 0.0
      %v546 = vmax.f32 %v426, 0.0
      %v547 = vmax.f32 %v429, 0.0
      %v548 = vmax.f32 %v434, 0.0
      %v549 = vmax.f32 %v437, 0.0
      %v550 = vmax.f32 %v442, 0.0
      %v551 = vmax.f32 %v445, 0.0
      %v552 = vmax.f32 %v450, 0.0
      %v553 = vmax.f32 %v453, 0.0
      %v554 = vmax.f32 %v458, 0.0
      %v555 = vmax.f32 %v461, 0.0
      %v556 = vmax.f32 %v466, 0.0
      %v557 = vmax.f32 %v469, 0.0
      %v558 = vmax.f32 %v474, 0.0
      %v559 = vmax.f32 %v477, 0.0
      %v560 = vmax.f32 %v482, 0.0
      %v561 = vmax.f32 %v485, 0.0
      %v562 = vmax.f32 %v490, 0.0
      %v563 = vmax.f32 %v493, 0.0
      %v564 = vmax.f32 %v498, 0.0
      %v565 = vmax.f32 %v501, 0.0
      %v566 = vmax.f32 %v506, 0.0
      %v567 = vmax.f32 %v509, 0.0
      %v568 = vmax.f32 %v514, 0.0
      %v569 = vmax.f32 %v517, 0.0
      %v570 = vmax.f32 %v522, 0.0
      %v571 = vmax.f32 %v525, 0.0
      %v572 = vmax.f32 %v530, 0.0
      %v573 = vmax.f32 %v533, 0.0
      %v574 = vmax.f32 %v538, 0.0
      %v575 = vmax.f32 %v541, 0.0
      %vm576 = vcmask 523264
      %577 = vst.msk [vmem:[%s172] sm:$0xff] %vm576, %v544
      %578 = vst.msk [vmem:[%s172 + $0x8] sm:$0xff] %vm576, %v545
      %579 = vst.msk [vmem:[%s172 + $0x10] sm:$0xff] %vm576, %v546
      %580 = vst.msk [vmem:[%s172 + $0x18] sm:$0xff] %vm576, %v547
      %581 = vst.msk [vmem:[%s172 + $0x20] sm:$0xff] %vm576, %v548
      %582 = vst.msk [vmem:[%s172 + $0x28] sm:$0xff] %vm576, %v549
      %583 = vst.msk [vmem:[%s172 + $0x30] sm:$0xff] %vm576, %v550
      %584 = vst.msk [vmem:[%s172 + $0x38] sm:$0xff] %vm576, %v551
      %585 = vst.msk [vmem:[%s172 + $0x40] sm:$0xff] %vm576, %v552
      %586 = vst.msk [vmem:[%s172 + $0x48] sm:$0xff] %vm576, %v553
      %587 = vst.msk [vmem:[%s172 + $0x50] sm:$0xff] %vm576, %v554
      %588 = vst.msk [vmem:[%s172 + $0x58] sm:$0xff] %vm576, %v555
      %589 = vst.msk [vmem:[%s172 + $0x60] sm:$0xff] %vm576, %v556
      %590 = vst.msk [vmem:[%s172 + $0x68] sm:$0xff] %vm576, %v557
      %591 = vst.msk [vmem:[%s172 + $0x70] sm:$0xff] %vm576, %v558
      %592 = vst.msk [vmem:[%s172 + $0x78] sm:$0xff] %vm576, %v559
      %593 = vst.msk [vmem:[%s172 + $0x80] sm:$0xff] %vm576, %v560
      %594 = vst.msk [vmem:[%s172 + $0x88] sm:$0xff] %vm576, %v561
      %595 = vst.msk [vmem:[%s172 + $0x90] sm:$0xff] %vm576, %v562
      %596 = vst.msk [vmem:[%s172 + $0x98] sm:$0xff] %vm576, %v563
      %597 = vst.msk [vmem:[%s172 + $0xa0] sm:$0xff] %vm576, %v564
      %598 = vst.msk [vmem:[%s172 + $0xa8] sm:$0xff] %vm576, %v565
      %599 = vst.msk [vmem:[%s172 + $0xb0] sm:$0xff] %vm576, %v566
      %600 = vst.msk [vmem:[%s172 + $0xb8] sm:$0xff] %vm576, %v567
      %601 = vst.msk [vmem:[%s172 + $0xc0] sm:$0xff] %vm576, %v568
      %602 = vst.msk [vmem:[%s172 + $0xc8] sm:$0xff] %vm576, %v569
      %603 = vst.msk [vmem:[%s172 + $0xd0] sm:$0xff] %vm576, %v570
      %604 = vst.msk [vmem:[%s172 + $0xd8] sm:$0xff] %vm576, %v571
      %605 = vst.msk [vmem:[%s172 + $0xe0] sm:$0xff] %vm576, %v572
      %606 = vst.msk [vmem:[%s172 + $0xe8] sm:$0xff] %vm576, %v573
      %607 = vst.msk [vmem:[%s172 + $0xf0] sm:$0xff] %vm576, %v574
      %608 = vst.msk [vmem:[%s172 + $0xf8] sm:$0xff] %vm576, %v575
      %s609 = smul.u32 32, %s14
      %p610 = scmp.lt.s32.totalorder %s609, 223
      %s611 = scalar_select %p610, %s609, 223
      %s612 = smul.addr %s611, 8
      %s613 = scalar_lea.vmem %s3, %s612
      // Predicated region
      $region33: #{net_forward.7} parent=31 // pred_check
        %p614 = pneg %p100
      $region34: #{net_forward.7} parent=31 // pred_check_branch
        %616 = sbr.rel (%p614) target = $region36
      $region35: #{net_forward.7} parent=31 // pred_region
        %s617 = smul.u32 32, %s14
      $region36: #{net_forward.7} parent=31 // pred_fallthru
        _
    $region32: #{net_forward.7} parent=5 // pred_fallthru
      _
    %p618 = scmp.le.s32.totalorder 2, %s9
    // Predicated region
    $region37: #{net_forward.7} parent=5 // pred_check
      %p619 = pneg %p618
    $region38: #{net_forward.7} parent=5 // pred_check_branch
      %621 = sbr.rel (%p619) target = $region40
    $region39: #{net_forward.7} parent=5 // pred_region
      %s622 = ssub.s32 %s9, 2
      // Predicated region
      $region41: #{net_forward.7} parent=39 // pred_check
        %p623 = pneg %p106
      $region42: #{net_forward.7} parent=39 // pred_check_branch
        %625 = sbr.rel (%p623) target = $region44
      $region43: #{net_forward.7} parent=39 // pred_region
        %s626 = smul.u32 32, %s15
        %p627 = scmp.lt.s32.totalorder %s626, 223
        %s628 = scalar_select %p627, %s626, 223
        %s629 = smul.addr %s628, 8
        %s630 = scalar_lea.vmem %s3, %s629
      $region44: #{net_forward.7} parent=39 // pred_fallthru
        _
    $region40: #{net_forward.7} parent=5 // pred_fallthru
      _
  $region6: #{net_forward.7} parent=0 // loop_footer
    %s13 = sadd.s32 1, %s9
  $region7: #{net_forward.7} parent=0 // loop_footer_branch
    %8 = sbr.rel target = $region3
  $region8: #{net_forward.7} parent=0 // loop_exit
    _

// kernel: net_forward.8
$region0: #{net_forward.8}
  #allocation0 [shape = 'u32[]', space=smem, size = 0x4, offset = 0x4, fixed_abs, tag = 'smem constant byte address 0x4 - core index']
  #allocation1 [shape = 'u32[144,128]{1,0:T(1,128)}', space=vmem, size = 0x12000, scoped, tag = 'internal scratch']
  %s0 = inlined_call_operand.vmem [shape: f32[28,2,14,128], index: 0, kind: input, shape index: {}]
  %s1 = inlined_call_operand.vmem [shape: f32[28,14,64], index: 1, kind: output, shape index: {}]
  %s2 = sld [smem:[#allocation0]]
  $region14: #{net_forward.8} parent=0
    _
  %s4 = ssub.s32 1, %s2
  %s5 = scalar_select 0, %s4, %s2
  // Predicated region
  $region2: #{net_forward.8} parent=0 // pred_check
    _
  $region3: #{net_forward.8} parent=0 // pred_check_branch
    %7 = sbr.rel (0) target = $region5
  $region4: #{net_forward.8} parent=0 // pred_region
    _
  $region5: #{net_forward.8} parent=0 // pred_fallthru
    _
  %v8 = vld [vmem:[%s0] sm:$0xff]
  %v9 = vld [vmem:[%s0 + $0x8] sm:$0x3f]
  %v10 = vld [vmem:[%s0 + $0x10] sm:$0xff]
  %v11 = vld [vmem:[%s0 + $0x18] sm:$0x3f]
  %v12 = vld [vmem:[%s0 + $0x20] sm:$0xff]
  %v13 = vld [vmem:[%s0 + $0x28] sm:$0x3f]
  %v14 = vld [vmem:[%s0 + $0x30] sm:$0xff]
  %v15 = vld [vmem:[%s0 + $0x38] sm:$0x3f]
  %v16 = vld [vmem:[%s0 + $0x40] sm:$0xff]
  %v17 = vld [vmem:[%s0 + $0x48] sm:$0x3f]
  %v18 = vld [vmem:[%s0 + $0x50] sm:$0xff]
  %v19 = vld [vmem:[%s0 + $0x58] sm:$0x3f]
  %v20 = vld [vmem:[%s0 + $0x60] sm:$0xff]
  %v21 = vld [vmem:[%s0 + $0x68] sm:$0x3f]
  %v22 = vld [vmem:[%s0 + $0x70] sm:$0xff]
  %v23 = vld [vmem:[%s0 + $0x78] sm:$0x3f]
  %v24 = vld [vmem:[%s0 + $0x80] sm:$0xff]
  %v25 = vld [vmem:[%s0 + $0x88] sm:$0x3f]
  %v26 = vld [vmem:[%s0 + $0x90] sm:$0xff]
  %v27 = vld [vmem:[%s0 + $0x98] sm:$0x3f]
  %v28 = vld [vmem:[%s0 + $0xa0] sm:$0xff]
  %v29 = vld [vmem:[%s0 + $0xa8] sm:$0x3f]
  %v30 = vld [vmem:[%s0 + $0xb0] sm:$0xff]
  %v31 = vld [vmem:[%s0 + $0xb8] sm:$0x3f]
  %v32 = vld [vmem:[%s0 + $0xc0] sm:$0xff]
  %v33 = vld [vmem:[%s0 + $0xc8] sm:$0x3f]
  %v34 = vld [vmem:[%s0 + $0xd0] sm:$0xff]
  %v35 = vld [vmem:[%s0 + $0xd8] sm:$0x3f]
  %v36 = vld [vmem:[%s0 + $0xe0] sm:$0xff]
  %v37 = vld [vmem:[%s0 + $0xe8] sm:$0x3f]
  %v38 = vld [vmem:[%s0 + $0xf0] sm:$0xff]
  %v39 = vld [vmem:[%s0 + $0xf8] sm:$0x3f]
  %v40 = vld [vmem:[%s0 + $0x100] sm:$0xff]
  %v41 = vld [vmem:[%s0 + $0x108] sm:$0x3f]
  %v42 = vld [vmem:[%s0 + $0x110] sm:$0xff]
  %v43 = vld [vmem:[%s0 + $0x118] sm:$0x3f]
  %v44 = vld [vmem:[%s0 + $0x120] sm:$0xff]
  %v45 = vld [vmem:[%s0 + $0x128] sm:$0x3f]
  %v46 = vld [vmem:[%s0 + $0x130] sm:$0xff]
  %v47 = vld [vmem:[%s0 + $0x138] sm:$0x3f]
  %v48 = vld [vmem:[%s0 + $0x140] sm:$0xff]
  %v49 = vld [vmem:[%s0 + $0x148] sm:$0x3f]
  %v50 = vld [vmem:[%s0 + $0x150] sm:$0xff]
  %v51 = vld [vmem:[%s0 + $0x158] sm:$0x3f]
  %v52 = vld [vmem:[%s0 + $0x160] sm:$0xff]
  %v53 = vld [vmem:[%s0 + $0x168] sm:$0x3f]
  %v54 = vld [vmem:[%s0 + $0x170] sm:$0xff]
  %v55 = vld [vmem:[%s0 + $0x178] sm:$0x3f]
  %v56 = vld [vmem:[%s0 + $0x180] sm:$0xff]
  %v57 = vld [vmem:[%s0 + $0x188] sm:$0x3f]
  %v58 = vld [vmem:[%s0 + $0x190] sm:$0xff]
  %v59 = vld [vmem:[%s0 + $0x198] sm:$0x3f]
  %v60 = vld [vmem:[%s0 + $0x1a0] sm:$0xff]
  %v61 = vld [vmem:[%s0 + $0x1a8] sm:$0x3f]
  %v62 = vld [vmem:[%s0 + $0x1b0] sm:$0xff]
  %v63 = vld [vmem:[%s0 + $0x1b8] sm:$0x3f]
  %v64 = vld [vmem:[%s0 + $0x1c0] sm:$0xff]
  %v65 = vld [vmem:[%s0 + $0x1c8] sm:$0x3f]
  %v66 = vld [vmem:[%s0 + $0x1d0] sm:$0xff]
  %v67 = vld [vmem:[%s0 + $0x1d8] sm:$0x3f]
  %v68 = vld [vmem:[%s0 + $0x1e0] sm:$0xff]
  %v69 = vld [vmem:[%s0 + $0x1e8] sm:$0x3f]
  %v70 = vld [vmem:[%s0 + $0x1f0] sm:$0xff]
  %v71 = vld [vmem:[%s0 + $0x1f8] sm:$0x3f]
  %v72 = vld [vmem:[%s0 + $0x200] sm:$0xff]
  %v73 = vld [vmem:[%s0 + $0x208] sm:$0x3f]
  %v74 = vld [vmem:[%s0 + $0x210] sm:$0xff]
  %v75 = vld [vmem:[%s0 + $0x218] sm:$0x3f]
  %v76 = vld [vmem:[%s0 + $0x220] sm:$0xff]
  %v77 = vld [vmem:[%s0 + $0x228] sm:$0x3f]
  %v78 = vld [vmem:[%s0 + $0x230] sm:$0xff]
  %v79 = vld [vmem:[%s0 + $0x238] sm:$0x3f]
  %v80 = vld [vmem:[%s0 + $0x240] sm:$0xff]
  %v81 = vld [vmem:[%s0 + $0x248] sm:$0x3f]
  %v82 = vld [vmem:[%s0 + $0x250] sm:$0xff]
  %v83 = vld [vmem:[%s0 + $0x258] sm:$0x3f]
  %v84 = vld [vmem:[%s0 + $0x260] sm:$0xff]
  %v85 = vld [vmem:[%s0 + $0x268] sm:$0x3f]
  %v86 = vld [vmem:[%s0 + $0x270] sm:$0xff]
  %v87 = vld [vmem:[%s0 + $0x278] sm:$0x3f]
  %v88 = vld [vmem:[%s0 + $0x280] sm:$0xff]
  %v89 = vld [vmem:[%s0 + $0x288] sm:$0x3f]
  %v90 = vld [vmem:[%s0 + $0x290] sm:$0xff]
  %v91 = vld [vmem:[%s0 + $0x298] sm:$0x3f]
  %v92 = vld [vmem:[%s0 + $0x2a0] sm:$0xff]
  %v93 = vld [vmem:[%s0 + $0x2a8] sm:$0x3f]
  %v94 = vld [vmem:[%s0 + $0x2b0] sm:$0xff]
  %v95 = vld [vmem:[%s0 + $0x2b8] sm:$0x3f]
  %v96 = vld [vmem:[%s0 + $0x2c0] sm:$0xff]
  %v97 = vld [vmem:[%s0 + $0x2c8] sm:$0x3f]
  %v98 = vld [vmem:[%s0 + $0x2d0] sm:$0xff]
  %v99 = vld [vmem:[%s0 + $0x2d8] sm:$0x3f]
  %v100 = vld [vmem:[%s0 + $0x2e0] sm:$0xff]
  %v101 = vld [vmem:[%s0 + $0x2e8] sm:$0x3f]
  %v102 = vld [vmem:[%s0 + $0x2f0] sm:$0xff]
  %v103 = vld [vmem:[%s0 + $0x2f8] sm:$0x3f]
  %v104 = vld [vmem:[%s0 + $0x300] sm:$0xff]
  %v105 = vld [vmem:[%s0 + $0x308] sm:$0x3f]
  %v106 = vld [vmem:[%s0 + $0x310] sm:$0xff]
  %v107 = vld [vmem:[%s0 + $0x318] sm:$0x3f]
  %v108 = vld [vmem:[%s0 + $0x320] sm:$0xff]
  %v109 = vld [vmem:[%s0 + $0x328] sm:$0x3f]
  %v110 = vld [vmem:[%s0 + $0x330] sm:$0xff]
  %v111 = vld [vmem:[%s0 + $0x338] sm:$0x3f]
  %v112 = vld [vmem:[%s0 + $0x340] sm:$0xff]
  %v113 = vld [vmem:[%s0 + $0x348] sm:$0x3f]
  %v114 = vld [vmem:[%s0 + $0x350] sm:$0xff]
  %v115 = vld [vmem:[%s0 + $0x358] sm:$0x3f]
  %v116 = vld [vmem:[%s0 + $0x360] sm:$0xff]
  %v117 = vld [vmem:[%s0 + $0x368] sm:$0x3f]
  %v118 = vld [vmem:[%s0 + $0x370] sm:$0xff]
  %v119 = vld [vmem:[%s0 + $0x378] sm:$0x3f]
  %v120 = vmax.f32 %v8, %v10
  %v121 = vmax.f32 %v9, %v11
  %v122 = vmax.f32 %v12, %v14
  %v123 = vmax.f32 %v13, %v15
  %v124 = vmax.f32 %v16, %v18
  %v125 = vmax.f32 %v17, %v19
  %v126 = vmax.f32 %v20, %v22
  %v127 = vmax.f32 %v21, %v23
  %v128 = vmax.f32 %v24, %v26
  %v129 = vmax.f32 %v25, %v27
  %v130 = vmax.f32 %v28, %v30
  %v131 = vmax.f32 %v29, %v31
  %v132 = vmax.f32 %v32, %v34
  %v133 = vmax.f32 %v33, %v35
  %v134 = vmax.f32 %v36, %v38
  %v135 = vmax.f32 %v37, %v39
  %v136 = vmax.f32 %v40, %v42
  %v137 = vmax.f32 %v41, %v43
  %v138 = vmax.f32 %v44, %v46
  %v139 = vmax.f32 %v45, %v47
  %v140 = vmax.f32 %v48, %v50
  %v141 = vmax.f32 %v49, %v51
  %v142 = vmax.f32 %v52, %v54
  %v143 = vmax.f32 %v53, %v55
  %v144 = vmax.f32 %v56, %v58
  %v145 = vmax.f32 %v57, %v59
  %v146 = vmax.f32 %v60, %v62
  %v147 = vmax.f32 %v61, %v63
  %v148 = vmax.f32 %v64, %v66
  %v149 = vmax.f32 %v65, %v67
  %v150 = vmax.f32 %v68, %v70
  %v151 = vmax.f32 %v69, %v71
  %v152 = vmax.f32 %v72, %v74
  %v153 = vmax.f32 %v73, %v75
  %v154 = vmax.f32 %v76, %v78
  %v155 = vmax.f32 %v77, %v79
  %v156 = vmax.f32 %v80, %v82
  %v157 = vmax.f32 %v81, %v83
  %v158 = vmax.f32 %v84, %v86
  %v159 = vmax.f32 %v85, %v87
  %v160 = vmax.f32 %v88, %v90
  %v161 = vmax.f32 %v89, %v91
  %v162 = vmax.f32 %v92, %v94
  %v163 = vmax.f32 %v93, %v95
  %v164 = vmax.f32 %v96, %v98
  %v165 = vmax.f32 %v97, %v99
  %v166 = vmax.f32 %v100, %v102
  %v167 = vmax.f32 %v101, %v103
  %v168 = vmax.f32 %v104, %v106
  %v169 = vmax.f32 %v105, %v107
  %v170 = vmax.f32 %v108, %v110
  %v171 = vmax.f32 %v109, %v111
  %v172 = vmax.f32 %v112, %v114
  %v173 = vmax.f32 %v113, %v115
  %v174 = vmax.f32 %v116, %v118
  %v175 = vmax.f32 %v117, %v119
  %232 = vrot.lane.b32.xlu0 %v120, 64
  %v233 = vpop.permute.xlu0 %232
  %234 = vrot.lane.b32.xlu0 %v121, 64
  %v235 = vpop.permute.xlu0 %234
  %236 = vrot.lane.b32.xlu0 %v122, 64
  %v237 = vpop.permute.xlu0 %236
  %238 = vrot.lane.b32.xlu0 %v123, 64
  %v239 = vpop.permute.xlu0 %238
  %240 = vrot.lane.b32.xlu0 %v124, 64
  %v241 = vpop.permute.xlu0 %240
  %242 = vrot.lane.b32.xlu0 %v125, 64
  %v243 = vpop.permute.xlu0 %242
  %244 = vrot.lane.b32.xlu0 %v126, 64
  %v245 = vpop.permute.xlu0 %244
  %246 = vrot.lane.b32.xlu0 %v127, 64
  %v247 = vpop.permute.xlu0 %246
  %248 = vrot.lane.b32.xlu0 %v128, 64
  %v249 = vpop.permute.xlu0 %248
  %250 = vrot.lane.b32.xlu0 %v129, 64
  %v251 = vpop.permute.xlu0 %250
  %252 = vrot.lane.b32.xlu0 %v130, 64
  %v253 = vpop.permute.xlu0 %252
  %254 = vrot.lane.b32.xlu0 %v131, 64
  %v255 = vpop.permute.xlu0 %254
  %256 = vrot.lane.b32.xlu0 %v132, 64
  %v257 = vpop.permute.xlu0 %256
  %258 = vrot.lane.b32.xlu0 %v133, 64
  %v259 = vpop.permute.xlu0 %258
  %260 = vrot.lane.b32.xlu0 %v134, 64
  %v261 = vpop.permute.xlu0 %260
  %262 = vrot.lane.b32.xlu0 %v135, 64
  %v263 = vpop.permute.xlu0 %262
  %264 = vrot.lane.b32.xlu0 %v136, 64
  %v265 = vpop.permute.xlu0 %264
  %266 = vrot.lane.b32.xlu0 %v137, 64
  %v267 = vpop.permute.xlu0 %266
  %268 = vrot.lane.b32.xlu0 %v138, 64
  %v269 = vpop.permute.xlu0 %268
  %270 = vrot.lane.b32.xlu0 %v139, 64
  %v271 = vpop.permute.xlu0 %270
  %272 = vrot.lane.b32.xlu0 %v140, 64
  %v273 = vpop.permute.xlu0 %272
  %274 = vrot.lane.b32.xlu0 %v141, 64
  %v275 = vpop.permute.xlu0 %274
  %276 = vrot.lane.b32.xlu0 %v142, 64
  %v277 = vpop.permute.xlu0 %276
  %278 = vrot.lane.b32.xlu0 %v143, 64
  %v279 = vpop.permute.xlu0 %278
  %280 = vrot.lane.b32.xlu0 %v144, 64
  %v281 = vpop.permute.xlu0 %280
  %282 = vrot.lane.b32.xlu0 %v145, 64
  %v283 = vpop.permute.xlu0 %282
  %284 = vrot.lane.b32.xlu0 %v146, 64
  %v285 = vpop.permute.xlu0 %284
  %286 = vrot.lane.b32.xlu0 %v147, 64
  %v287 = vpop.permute.xlu0 %286
  %288 = vrot.lane.b32.xlu0 %v148, 64
  %v289 = vpop.permute.xlu0 %288
  %290 = vrot.lane.b32.xlu0 %v149, 64
  %v291 = vpop.permute.xlu0 %290
  %292 = vrot.lane.b32.xlu0 %v150, 64
  %v293 = vpop.permute.xlu0 %292
  %294 = vrot.lane.b32.xlu0 %v151, 64
  %v295 = vpop.permute.xlu0 %294
  %296 = vrot.lane.b32.xlu0 %v152, 64
  %v297 = vpop.permute.xlu0 %296
  %298 = vrot.lane.b32.xlu0 %v153, 64
  %v299 = vpop.permute.xlu0 %298
  %300 = vrot.lane.b32.xlu0 %v154, 64
  %v301 = vpop.permute.xlu0 %300
  %302 = vrot.lane.b32.xlu0 %v155, 64
  %v303 = vpop.permute.xlu0 %302
  %304 = vrot.lane.b32.xlu0 %v156, 64
  %v305 = vpop.permute.xlu0 %304
  %306 = vrot.lane.b32.xlu0 %v157, 64
  %v307 = vpop.permute.xlu0 %306
  %308 = vrot.lane.b32.xlu0 %v158, 64
  %v309 = vpop.permute.xlu0 %308
  %310 = vrot.lane.b32.xlu0 %v159, 64
  %v311 = vpop.permute.xlu0 %310
  %312 = vrot.lane.b32.xlu0 %v160, 64
  %v313 = vpop.permute.xlu0 %312
  %314 = vrot.lane.b32.xlu0 %v161, 64
  %v315 = vpop.permute.xlu0 %314
  %316 = vrot.lane.b32.xlu0 %v162, 64
  %v317 = vpop.permute.xlu0 %316
  %318 = vrot.lane.b32.xlu0 %v163, 64
  %v319 = vpop.permute.xlu0 %318
  %320 = vrot.lane.b32.xlu0 %v164, 64
  %v321 = vpop.permute.xlu0 %320
  %322 = vrot.lane.b32.xlu0 %v165, 64
  %v323 = vpop.permute.xlu0 %322
  %324 = vrot.lane.b32.xlu0 %v166, 64
  %v325 = vpop.permute.xlu0 %324
  %326 = vrot.lane.b32.xlu0 %v167, 64
  %v327 = vpop.permute.xlu0 %326
  %328 = vrot.lane.b32.xlu0 %v168, 64
  %v329 = vpop.permute.xlu0 %328
  %330 = vrot.lane.b32.xlu0 %v169, 64
  %v331 = vpop.permute.xlu0 %330
  %332 = vrot.lane.b32.xlu0 %v170, 64
  %v333 = vpop.permute.xlu0 %332
  %334 = vrot.lane.b32.xlu0 %v171, 64
  %v335 = vpop.permute.xlu0 %334
  %336 = vrot.lane.b32.xlu0 %v172, 64
  %v337 = vpop.permute.xlu0 %336
  %338 = vrot.lane.b32.xlu0 %v173, 64
  %v339 = vpop.permute.xlu0 %338
  %340 = vrot.lane.b32.xlu0 %v174, 64
  %v341 = vpop.permute.xlu0 %340
  %342 = vrot.lane.b32.xlu0 %v175, 64
  %v343 = vpop.permute.xlu0 %342
  %v400 = vmax.f32 %v120, %v233
  %v401 = vmax.f32 %v121, %v235
  %v402 = vmax.f32 %v122, %v237
  %v403 = vmax.f32 %v123, %v239
  %v404 = vmax.f32 %v124, %v241
  %v405 = vmax.f32 %v125, %v243
  %v406 = vmax.f32 %v126, %v245
  %v407 = vmax.f32 %v127, %v247
  %v408 = vmax.f32 %v128, %v249
  %v409 = vmax.f32 %v129, %v251
  %v410 = vmax.f32 %v130, %v253
  %v411 = vmax.f32 %v131, %v255
  %v412 = vmax.f32 %v132, %v257
  %v413 = vmax.f32 %v133, %v259
  %v414 = vmax.f32 %v134, %v261
  %v415 = vmax.f32 %v135, %v263
  %v416 = vmax.f32 %v136, %v265
  %v417 = vmax.f32 %v137, %v267
  %v418 = vmax.f32 %v138, %v269
  %v419 = vmax.f32 %v139, %v271
  %v420 = vmax.f32 %v140, %v273
  %v421 = vmax.f32 %v141, %v275
  %v422 = vmax.f32 %v142, %v277
  %v423 = vmax.f32 %v143, %v279
  %v424 = vmax.f32 %v144, %v281
  %v425 = vmax.f32 %v145, %v283
  %v426 = vmax.f32 %v146, %v285
  %v427 = vmax.f32 %v147, %v287
  %v428 = vmax.f32 %v148, %v289
  %v429 = vmax.f32 %v149, %v291
  %v430 = vmax.f32 %v150, %v293
  %v431 = vmax.f32 %v151, %v295
  %v432 = vmax.f32 %v152, %v297
  %v433 = vmax.f32 %v153, %v299
  %v434 = vmax.f32 %v154, %v301
  %v435 = vmax.f32 %v155, %v303
  %v436 = vmax.f32 %v156, %v305
  %v437 = vmax.f32 %v157, %v307
  %v438 = vmax.f32 %v158, %v309
  %v439 = vmax.f32 %v159, %v311
  %v440 = vmax.f32 %v160, %v313
  %v441 = vmax.f32 %v161, %v315
  %v442 = vmax.f32 %v162, %v317
  %v443 = vmax.f32 %v163, %v319
  %v444 = vmax.f32 %v164, %v321
  %v445 = vmax.f32 %v165, %v323
  %v446 = vmax.f32 %v166, %v325
  %v447 = vmax.f32 %v167, %v327
  %v448 = vmax.f32 %v168, %v329
  %v449 = vmax.f32 %v169, %v331
  %v450 = vmax.f32 %v170, %v333
  %v451 = vmax.f32 %v171, %v335
  %v452 = vmax.f32 %v172, %v337
  %v453 = vmax.f32 %v173, %v339
  %v454 = vmax.f32 %v174, %v341
  %v455 = vmax.f32 %v175, %v343
  %vm456 = vcmask 523264
  %457 = vst.msk [vmem:[%s1] sm:$0xff] %vm456, %v400
  %vm458 = vcmask 521216
  %459 = vst.msk [vmem:[%s1 + $0x8] sm:$0x3f] %vm458, %v401
  %460 = vst.msk [vmem:[%s1 + $0x10] sm:$0xff] %vm456, %v402
  %461 = vst.msk [vmem:[%s1 + $0x18] sm:$0x3f] %vm458, %v403
  %462 = vst.msk [vmem:[%s1 + $0x20] sm:$0xff] %vm456, %v404
  %463 = vst.msk [vmem:[%s1 + $0x28] sm:$0x3f] %vm458, %v405
  %464 = vst.msk [vmem:[%s1 + $0x30] sm:$0xff] %vm456, %v406
  %465 = vst.msk [vmem:[%s1 + $0x38] sm:$0x3f] %vm458, %v407
  %466 = vst.msk [vmem:[%s1 + $0x40] sm:$0xff] %vm456, %v408
  %467 = vst.msk [vmem:[%s1 + $0x48] sm:$0x3f] %vm458, %v409
  %468 = vst.msk [vmem:[%s1 + $0x50] sm:$0xff] %vm456, %v410
  %469 = vst.msk [vmem:[%s1 + $0x58] sm:$0x3f] %vm458, %v411
  %470 = vst.msk [vmem:[%s1 + $0x60] sm:$0xff] %vm456, %v412
  %471 = vst.msk [vmem:[%s1 + $0x68] sm:$0x3f] %vm458, %v413
  %472 = vst.msk [vmem:[%s1 + $0x70] sm:$0xff] %vm456, %v414
  %473 = vst.msk [vmem:[%s1 + $0x78] sm:$0x3f] %vm458, %v415
  %474 = vst.msk [vmem:[%s1 + $0x80] sm:$0xff] %vm456, %v416
  %475 = vst.msk [vmem:[%s1 + $0x88] sm:$0x3f] %vm458, %v417
  %476 = vst.msk [vmem:[%s1 + $0x90] sm:$0xff] %vm456, %v418
  %477 = vst.msk [vmem:[%s1 + $0x98] sm:$0x3f] %vm458, %v419
  %478 = vst.msk [vmem:[%s1 + $0xa0] sm:$0xff] %vm456, %v420
  %479 = vst.msk [vmem:[%s1 + $0xa8] sm:$0x3f] %vm458, %v421
  %480 = vst.msk [vmem:[%s1 + $0xb0] sm:$0xff] %vm456, %v422
  %481 = vst.msk [vmem:[%s1 + $0xb8] sm:$0x3f] %vm458, %v423
  %482 = vst.msk [vmem:[%s1 + $0xc0] sm:$0xff] %vm456, %v424
  %483 = vst.msk [vmem:[%s1 + $0xc8] sm:$0x3f] %vm458, %v425
  %484 = vst.msk [vmem:[%s1 + $0xd0] sm:$0xff] %vm456, %v426
  %485 = vst.msk [vmem:[%s1 + $0xd8] sm:$0x3f] %vm458, %v427
  %486 = vst.msk [vmem:[%s1 + $0xe0] sm:$0xff] %vm456, %v428
  %487 = vst.msk [vmem:[%s1 + $0xe8] sm:$0x3f] %vm458, %v429
  %488 = vst.msk [vmem:[%s1 + $0xf0] sm:$0xff] %vm456, %v430
  %489 = vst.msk [vmem:[%s1 + $0xf8] sm:$0x3f] %vm458, %v431
  %490 = vst.msk [vmem:[%s1 + $0x100] sm:$0xff] %vm456, %v432
  %491 = vst.msk [vmem:[%s1 + $0x108] sm:$0x3f] %vm458, %v433
  %492 = vst.msk [vmem:[%s1 + $0x110] sm:$0xff] %vm456, %v434
  %493 = vst.msk [vmem:[%s1 + $0x118] sm:$0x3f] %vm458, %v435
  %494 = vst.msk [vmem:[%s1 + $0x120] sm:$0xff] %vm456, %v436
  %495 = vst.msk [vmem:[%s1 + $0x128] sm:$0x3f] %vm458, %v437
  %496 = vst.msk [vmem:[%s1 + $0x130] sm:$0xff] %vm456, %v438
  %497 = vst.msk [vmem:[%s1 + $0x138] sm:$0x3f] %vm458, %v439
  %498 = vst.msk [vmem:[%s1 + $0x140] sm:$0xff] %vm456, %v440
  %499 = vst.msk [vmem:[%s1 + $0x148] sm:$0x3f] %vm458, %v441
  %500 = vst.msk [vmem:[%s1 + $0x150] sm:$0xff] %vm456, %v442
  %501 = vst.msk [vmem:[%s1 + $0x158] sm:$0x3f] %vm458, %v443
  %502 = vst.msk [vmem:[%s1 + $0x160] sm:$0xff] %vm456, %v444
  %503 = vst.msk [vmem:[%s1 + $0x168] sm:$0x3f] %vm458, %v445
  %504 = vst.msk [vmem:[%s1 + $0x170] sm:$0xff] %vm456, %v446
  %505 = vst.msk [vmem:[%s1 + $0x178] sm:$0x3f] %vm458, %v447
  %506 = vst.msk [vmem:[%s1 + $0x180] sm:$0xff] %vm456, %v448
  %507 = vst.msk [vmem:[%s1 + $0x188] sm:$0x3f] %vm458, %v449
  %508 = vst.msk [vmem:[%s1 + $0x190] sm:$0xff] %vm456, %v450
  %509 = vst.msk [vmem:[%s1 + $0x198] sm:$0x3f] %vm458, %v451
  %510 = vst.msk [vmem:[%s1 + $0x1a0] sm:$0xff] %vm456, %v452
  %511 = vst.msk [vmem:[%s1 + $0x1a8] sm:$0x3f] %vm458, %v453
  %512 = vst.msk [vmem:[%s1 + $0x1b0] sm:$0xff] %vm456, %v454
  %513 = vst.msk [vmem:[%s1 + $0x1b8] sm:$0x3f] %vm458, %v455
  // Predicated region
  $region6: #{net_forward.8} parent=0 // pred_check
    _
  $region7: #{net_forward.8} parent=0 // pred_check_branch
    %515 = sbr.rel (0) target = $region9
  $region8: #{net_forward.8} parent=0 // pred_region
    _
  $region9: #{net_forward.8} parent=0 // pred_fallthru
    _
  // Predicated region
  $region10: #{net_forward.8} parent=0 // pred_check
    _
  $region11: #{net_forward.8} parent=0 // pred_check_branch
    %517 = sbr.rel (0) target = $region13
  $region12: #{net_forward.8} parent=0 // pred_region
    _
  $region13: #{net_forward.8} parent=0 // pred_fallthru
    _

// kernel: net_forward.10
$region0: #{net_forward.10}
  #allocation0 [shape = 'u32[]', space=smem, size = 0x4, offset = 0x4, fixed_abs, tag = 'smem constant byte address 0x4 - core index']
  #allocation1 [shape = 'u32[144,128]{1,0:T(1,128)}', space=vmem, size = 0x12000, scoped, tag = 'internal scratch']
  %s0 = inlined_call_operand.vmem [shape: f32[10,2,5,256], index: 0, kind: input, shape index: {}]
  %s1 = inlined_call_operand.vmem [shape: bf16[10,5,128], index: 1, kind: output, shape index: {}]
  %s2 = sld [smem:[#allocation0]]
  $region14: #{net_forward.10} parent=0
    _
  %s4 = ssub.s32 1, %s2
  %s5 = scalar_select 0, %s4, %s2
  // Predicated region
  $region2: #{net_forward.10} parent=0 // pred_check
    _
  $region3: #{net_forward.10} parent=0 // pred_check_branch
    %7 = sbr.rel (0) target = $region5
  $region4: #{net_forward.10} parent=0 // pred_region
    _
  $region5: #{net_forward.10} parent=0 // pred_fallthru
    _
  %v8 = vld [vmem:[%s0] sm:$0x1f]
  %v9 = vld [vmem:[%s0 + $0x8] sm:$0x1f]
  %v10 = vld [vmem:[%s0 + $0x10] sm:$0x1f]
  %v11 = vld [vmem:[%s0 + $0x18] sm:$0x1f]
  %v12 = vld [vmem:[%s0 + $0x20] sm:$0x1f]
  %v13 = vld [vmem:[%s0 + $0x28] sm:$0x1f]
  %v14 = vld [vmem:[%s0 + $0x30] sm:$0x1f]
  %v15 = vld [vmem:[%s0 + $0x38] sm:$0x1f]
  %v16 = vld [vmem:[%s0 + $0x40] sm:$0x1f]
  %v17 = vld [vmem:[%s0 + $0x48] sm:$0x1f]
  %v18 = vld [vmem:[%s0 + $0x50] sm:$0x1f]
  %v19 = vld [vmem:[%s0 + $0x58] sm:$0x1f]
  %v20 = vld [vmem:[%s0 + $0x60] sm:$0x1f]
  %v21 = vld [vmem:[%s0 + $0x68] sm:$0x1f]
  %v22 = vld [vmem:[%s0 + $0x70] sm:$0x1f]
  %v23 = vld [vmem:[%s0 + $0x78] sm:$0x1f]
  %v24 = vld [vmem:[%s0 + $0x80] sm:$0x1f]
  %v25 = vld [vmem:[%s0 + $0x88] sm:$0x1f]
  %v26 = vld [vmem:[%s0 + $0x90] sm:$0x1f]
  %v27 = vld [vmem:[%s0 + $0x98] sm:$0x1f]
  %v28 = vld [vmem:[%s0 + $0xa0] sm:$0x1f]
  %v29 = vld [vmem:[%s0 + $0xa8] sm:$0x1f]
  %v30 = vld [vmem:[%s0 + $0xb0] sm:$0x1f]
  %v31 = vld [vmem:[%s0 + $0xb8] sm:$0x1f]
  %v32 = vld [vmem:[%s0 + $0xc0] sm:$0x1f]
  %v33 = vld [vmem:[%s0 + $0xc8] sm:$0x1f]
  %v34 = vld [vmem:[%s0 + $0xd0] sm:$0x1f]
  %v35 = vld [vmem:[%s0 + $0xd8] sm:$0x1f]
  %v36 = vld [vmem:[%s0 + $0xe0] sm:$0x1f]
  %v37 = vld [vmem:[%s0 + $0xe8] sm:$0x1f]
  %v38 = vld [vmem:[%s0 + $0xf0] sm:$0x1f]
  %v39 = vld [vmem:[%s0 + $0xf8] sm:$0x1f]
  %v40 = vld [vmem:[%s0 + $0x100] sm:$0x1f]
  %v41 = vld [vmem:[%s0 + $0x108] sm:$0x1f]
  %v42 = vld [vmem:[%s0 + $0x110] sm:$0x1f]
  %v43 = vld [vmem:[%s0 + $0x118] sm:$0x1f]
  %v44 = vld [vmem:[%s0 + $0x120] sm:$0x1f]
  %v45 = vld [vmem:[%s0 + $0x128] sm:$0x1f]
  %v46 = vld [vmem:[%s0 + $0x130] sm:$0x1f]
  %v47 = vld [vmem:[%s0 + $0x138] sm:$0x1f]
  %v48 = vmax.f32 %v8, %v10
  %v49 = vmax.f32 %v9, %v11
  %v50 = vmax.f32 %v12, %v14
  %v51 = vmax.f32 %v13, %v15
  %v52 = vmax.f32 %v16, %v18
  %v53 = vmax.f32 %v17, %v19
  %v54 = vmax.f32 %v20, %v22
  %v55 = vmax.f32 %v21, %v23
  %v56 = vmax.f32 %v24, %v26
  %v57 = vmax.f32 %v25, %v27
  %v58 = vmax.f32 %v28, %v30
  %v59 = vmax.f32 %v29, %v31
  %v60 = vmax.f32 %v32, %v34
  %v61 = vmax.f32 %v33, %v35
  %v62 = vmax.f32 %v36, %v38
  %v63 = vmax.f32 %v37, %v39
  %v64 = vmax.f32 %v40, %v42
  %v65 = vmax.f32 %v41, %v43
  %v66 = vmax.f32 %v44, %v46
  %v67 = vmax.f32 %v45, %v47
  %v68 = vmax.f32 %v48, %v49
  %v69 = vmax.f32 %v50, %v51
  %v70 = vmax.f32 %v52, %v53
  %v71 = vmax.f32 %v54, %v55
  %v72 = vmax.f32 %v56, %v57
  %v73 = vmax.f32 %v58, %v59
  %v74 = vmax.f32 %v60, %v61
  %v75 = vmax.f32 %v62, %v63
  %v76 = vmax.f32 %v64, %v65
  %v77 = vmax.f32 %v66, %v67
  %v78 = vpack.c.bf16 %v68, %v68
  %v79 = vpack.c.bf16 %v69, %v69
  %v80 = vpack.c.bf16 %v70, %v70
  %v81 = vpack.c.bf16 %v71, %v71
  %v82 = vpack.c.bf16 %v72, %v72
  %v83 = vpack.c.bf16 %v73, %v73
  %v84 = vpack.c.bf16 %v74, %v74
  %v85 = vpack.c.bf16 %v75, %v75
  %v86 = vpack.c.bf16 %v76, %v76
  %v87 = vpack.c.bf16 %v77, %v77
  %vm88 = vcmask 1042432
  %vm89 = vsmask.f32 2304
  %vm90 = vmand %vm88, %vm89
  %v91 = vld [vmem:[%s1] sm:$0x7]
  %v92 = vsel %vm90, %v78, %v91
  %93 = vst [vmem:[%s1] sm:$0x7] %v92
  %v94 = vld [vmem:[%s1 + $0x4] sm:$0x7]
  %v95 = vsel %vm90, %v79, %v94
  %96 = vst [vmem:[%s1 + $0x4] sm:$0x7] %v95
  %v97 = vld [vmem:[%s1 + $0x8] sm:$0x7]
  %v98 = vsel %vm90, %v80, %v97
  %99 = vst [vmem:[%s1 + $0x8] sm:$0x7] %v98
  %v100 = vld [vmem:[%s1 + $0xc] sm:$0x7]
  %v101 = vsel %vm90, %v81, %v100
  %102 = vst [vmem:[%s1 + $0xc] sm:$0x7] %v101
  %v103 = vld [vmem:[%s1 + $0x10] sm:$0x7]
  %v104 = vsel %vm90, %v82, %v103
  %105 = vst [vmem:[%s1 + $0x10] sm:$0x7] %v104
  %v106 = vld [vmem:[%s1 + $0x14] sm:$0x7]
  %v107 = vsel %vm90, %v83, %v106
  %108 = vst [vmem:[%s1 + $0x14] sm:$0x7] %v107
  %v109 = vld [vmem:[%s1 + $0x18] sm:$0x7]
  %v110 = vsel %vm90, %v84, %v109
  %111 = vst [vmem:[%s1 + $0x18] sm:$0x7] %v110
  %v112 = vld [vmem:[%s1 + $0x1c] sm:$0x7]
  %v113 = vsel %vm90, %v85, %v112
  %114 = vst [vmem:[%s1 + $0x1c] sm:$0x7] %v113
  %v115 = vld [vmem:[%s1 + $0x20] sm:$0x7]
  %v116 = vsel %vm90, %v86, %v115
  %117 = vst [vmem:[%s1 + $0x20] sm:$0x7] %v116
  %v118 = vld [vmem:[%s1 + $0x24] sm:$0x7]
  %v119 = vsel %vm90, %v87, %v118
  %120 = vst [vmem:[%s1 + $0x24] sm:$0x7] %v119
  // Predicated region
  $region6: #{net_forward.10} parent=0 // pred_check
    _
  $region7: #{net_forward.10} parent=0 // pred_check_branch
    %122 = sbr.rel (0) target = $region9
  $region8: #{net_forward.10} parent=0 // pred_region
    _
  $region9: #{net_forward.10} parent=0 // pred_fallthru
    _
  // Predicated region
  $region10: #{net_forward.10} parent=0 // pred_check
    _
  $region11: #{net_forward.10} parent=0 // pred_check_branch
    %124 = sbr.rel (0) target = $region13
  $region12: #{net_forward.10} parent=0 // pred_region
    _
  $region13: #{net_forward.10} parent=0 // pred_fallthru
    _

// kernel: net_forward.9
$region0: #{net_forward.9}
  #allocation0 [shape = 'u32[]', space=smem, size = 0x4, offset = 0x4, fixed_abs, tag = 'smem constant byte address 0x4 - core index']
  #allocation1 [shape = 'u32[144,128]{1,0:T(1,128)}', space=vmem, size = 0x12000, scoped, tag = 'internal scratch']
  %s0 = inlined_call_operand.vmem [shape: f32[2,196,64], index: 0, kind: input, shape index: {}]
  %s1 = inlined_call_operand.vmem [shape: f32[25,64,128], index: 1, kind: input, shape index: {}]
  %s2 = inlined_call_operand.vmem [shape: f32[1,128], index: 2, kind: input, shape index: {}]
  %s3 = inlined_call_operand.vmem [shape: f32[2,10,10,128], index: 3, kind: output, shape index: {}]
  %s4 = sld [smem:[#allocation0]]
  $region45: #{net_forward.9} parent=0
    _
  %s6 = ssub.s32 1, %s4
  %s7 = scalar_select 0, %s6, %s4
  loop: start=0, step=1, limit=4
  $region2: #{net_forward.9} parent=0 // loop_pre_header
    _
  $region3: #{net_forward.9} parent=0 // loop_header
    %s9 = sphi 0, %s13
    %p10 = scmp.ge.s32.totalorder %s9, 4
    %s19 = sphi 0, %s21
    %s22 = sphi 0, %s19
    %s23 = sphi 0, %s22
    %s39 = sphi 0, %s23
    %s43 = sphi 0, %s43
    %s45 = sphi 0, %s43
    %s46 = sphi 0, %s45
    %s60 = sphi 0, %s46
    %s64 = sphi 0, %s64
    %s66 = sphi 0, %s64
    %s67 = sphi 0, %s66
    %s81 = sphi 0, %s67
    %s87 = sphi 0, %s89
    %s90 = sphi 0, %s87
    %s91 = sphi 0, %s90
    %s107 = sphi 0, %s91
  $region4: #{net_forward.9} parent=0 // loop_header_branch
    %12 = sbr.rel (%p10) target = $region8
  $region5: #{net_forward.9} parent=0 // loop_body
    %s14 = ssub.s32 %s9, 1
    %s15 = ssub.s32 %s9, 2
    %s16 = sadd.s32 %s9, 1
    %s17 = ssub.s32 %s9, %s16
    %p18 = scmp.eq.s32.totalorder %s17, 0
    %s20 = sadd.s32 %s19, 1
    %s21 = scalar_select %p18, %s19, %s20
    %p24 = pneg %p18
    %p25 = scmp.eq.s32.totalorder %s9, 1
    %p26 = por %p24, %p25
    %p27 = scmp.ne.s32.totalorder %s19, %s22
    %p28 = scmp.eq.s32.totalorder %s9, 0
    %p29 = por %p27, %p28
    %p30 = scmp.ne.s32.totalorder %s19, %s22
    %p31 = scmp.eq.s32.totalorder %s14, 1
    %p32 = por %p30, %p31
    %p33 = scmp.ne.s32.totalorder %s22, %s23
    %p34 = scmp.eq.s32.totalorder %s14, 0
    %p35 = por %p33, %p34
    %p36 = scmp.ne.s32.totalorder %s22, %s23
    %p37 = scmp.eq.s32.totalorder %s15, 1
    %p38 = por %p36, %p37
    %p40 = scmp.ne.s32.totalorder %s23, %s39
    %p41 = scmp.eq.s32.totalorder %s15, 0
    %p42 = por %p40, %p41
    %s44 = sadd.s32 %s43, 1
    %p47 = scmp.eq.s32.totalorder %s9, 1
    %p48 = scmp.ne.s32.totalorder %s43, %s45
    %p49 = scmp.eq.s32.totalorder %s9, 0
    %p50 = por %p48, %p49
    %p51 = scmp.ne.s32.totalorder %s43, %s45
    %p52 = scmp.eq.s32.totalorder %s14, 1
    %p53 = por %p51, %p52
    %p54 = scmp.ne.s32.totalorder %s45, %s46
    %p55 = scmp.eq.s32.totalorder %s14, 0
    %p56 = por %p54, %p55
    %p57 = scmp.ne.s32.totalorder %s45, %s46
    %p58 = scmp.eq.s32.totalorder %s15, 1
    %p59 = por %p57, %p58
    %p61 = scmp.ne.s32.totalorder %s46, %s60
    %p62 = scmp.eq.s32.totalorder %s15, 0
    %p63 = por %p61, %p62
    %s65 = sadd.s32 %s64, 1
    %p68 = scmp.eq.s32.totalorder %s9, 1
    %p69 = scmp.ne.s32.totalorder %s64, %s66
    %p70 = scmp.eq.s32.totalorder %s9, 0
    %p71 = por %p69, %p70
    %p72 = scmp.ne.s32.totalorder %s64, %s66
    %p73 = scmp.eq.s32.totalorder %s14, 1
    %p74 = por %p72, %p73
    %p75 = scmp.ne.s32.totalorder %s66, %s67
    %p76 = scmp.eq.s32.totalorder %s14, 0
    %p77 = por %p75, %p76
    %p78 = scmp.ne.s32.totalorder %s66, %s67
    %p79 = scmp.eq.s32.totalorder %s15, 1
    %p80 = por %p78, %p79
    %p82 = scmp.ne.s32.totalorder %s67, %s81
    %p83 = scmp.eq.s32.totalorder %s15, 0
    %p84 = por %p82, %p83
    %s85 = ssub.s32 %s9, %s16
    %p86 = scmp.eq.s32.totalorder %s85, 0
    %s88 = sadd.s32 %s87, 1
    %s89 = scalar_select %p86, %s87, %s88
    %p92 = pneg %p86
    %p93 = scmp.eq.s32.totalorder %s9, 1
    %p94 = por %p92, %p93
    %p95 = scmp.ne.s32.totalorder %s87, %s90
    %p96 = scmp.eq.s32.totalorder %s9, 0
    %p97 = por %p95, %p96
    %p98 = scmp.ne.s32.totalorder %s87, %s90
    %p99 = scmp.eq.s32.totalorder %s14, 1
    %p100 = por %p98, %p99
    %p101 = scmp.ne.s32.totalorder %s90, %s91
    %p102 = scmp.eq.s32.totalorder %s14, 0
    %p103 = por %p101, %p102
    %p104 = scmp.ne.s32.totalorder %s90, %s91
    %p105 = scmp.eq.s32.totalorder %s15, 1
    %p106 = por %p104, %p105
    %p108 = scmp.ne.s32.totalorder %s91, %s107
    %p109 = scmp.eq.s32.totalorder %s15, 0
    %p110 = por %p108, %p109
    %p111 = scmp.le.s32.totalorder 1, %s9
    %p112 = scmp.lt.s32.totalorder %s9, 3
    %p113 = pnand %p111, %p112
    %p114 = pneg %p113
    // Predicated region
    $region9: #{net_forward.9} parent=5 // pred_check
      _
    $region10: #{net_forward.9} parent=5 // pred_check_branch
      %116 = sbr.rel (%p113) target = $region12
    $region11: #{net_forward.9} parent=5 // pred_region
      %s117 = ssub.s32 %s9, 1
      // Predicated region
      $region13: #{net_forward.9} parent=11 // pred_check
        %p118 = pneg %p56
      $region14: #{net_forward.9} parent=11 // pred_check_branch
        %120 = sbr.rel (%p118) target = $region16
      $region15: #{net_forward.9} parent=11 // pred_region
        _
      $region16: #{net_forward.9} parent=11 // pred_fallthru
        _
      // Predicated region
      $region17: #{net_forward.9} parent=11 // pred_check
        %p121 = pneg %p77
      $region18: #{net_forward.9} parent=11 // pred_check_branch
        %123 = sbr.rel (%p121) target = $region20
      $region19: #{net_forward.9} parent=11 // pred_region
        _
      $region20: #{net_forward.9} parent=11 // pred_fallthru
        _
    $region12: #{net_forward.9} parent=5 // pred_fallthru
      _
    %p124 = scmp.lt.s32.totalorder %s9, 2
    // Predicated region
    $region21: #{net_forward.9} parent=5 // pred_check
      %p125 = pneg %p124
    $region22: #{net_forward.9} parent=5 // pred_check_branch
      %127 = sbr.rel (%p125) target = $region24
    $region23: #{net_forward.9} parent=5 // pred_region
      // Predicated region
      $region25: #{net_forward.9} parent=23 // pred_check
        %p128 = pneg %p29
      $region26: #{net_forward.9} parent=23 // pred_check_branch
        %130 = sbr.rel (%p128) target = $region28
      $region27: #{net_forward.9} parent=23 // pred_region
        %p131 = scmp.lt.s32.totalorder %s9, 1
        %s132 = scalar_select %p131, %s9, 1
        %s133 = smul.addr %s132, 25
        %s134 = smul.addr %s133, 8
        %s135 = scalar_lea.vmem %s0, %s134
      $region28: #{net_forward.9} parent=23 // pred_fallthru
        _
    $region24: #{net_forward.9} parent=5 // pred_fallthru
      _
    %p136 = scmp.le.s32.totalorder 1, %s9
    %p137 = scmp.lt.s32.totalorder %s9, 3
    %p138 = pnand %p136, %p137
    %p139 = pneg %p138
    // Predicated region
    $region29: #{net_forward.9} parent=5 // pred_check
      _
    $region30: #{net_forward.9} parent=5 // pred_check_branch
      %141 = sbr.rel (%p138) target = $region32
    $region31: #{net_forward.9} parent=5 // pred_region
      %s142 = ssub.s32 %s9, 1
      %p143 = scmp.lt.s32.totalorder %s14, 1
      %s144 = scalar_select %p143, %s14, 1
      %s145 = smul.addr %s144, 25
      %s146 = smul.addr %s145, 8
      %s147 = scalar_lea.vmem %s0, %s146
      %p148 = pneg %p35
      %p149 = pneg %p32
      %p150 = pneg %p56
      %p151 = pneg %p53
      %p152 = pneg %p77
      %p153 = pneg %p74
      %p154 = pneg %p103
      %p155 = pneg %p100
      %p156 = scmp.lt.s32.totalorder %s14, 1
      %s157 = scalar_select %p156, %s14, 1
      %s158 = smul.addr %s157, 20
      %s159 = smul.addr %s158, 8
      %s160 = scalar_lea.vmem %s3, %s159
      %p161 = scmp.lt.s32.totalorder %s14, 1
      %s162 = scalar_select %p161, %s14, 1
      %s163 = smul.addr %s162, 25
      %s164 = smul.addr %s163, 8
      %s165 = scalar_lea.vmem %s0, %s164
      %p166 = scmp.lt.s32.totalorder %s14, 1
      %s167 = scalar_select %p166, %s14, 1
      %s168 = smul.addr %s167, 20
      %s169 = smul.addr %s168, 8
      %s170 = scalar_lea.vmem %s3, %s169
      %v171 = vld [vmem:[%s165] sm:$0xff]
      %v172 = vld [vmem:[%s165 + $0x8] sm:$0xff]
      %v173 = vld [vmem:[%s165 + $0x10] sm:$0xff]
      %v174 = vld [vmem:[%s165 + $0x18] sm:$0xff]
      %v175 = vld [vmem:[%s165 + $0x20] sm:$0xff]
      %v176 = vld [vmem:[%s165 + $0x28] sm:$0xff]
      %v177 = vld [vmem:[%s165 + $0x30] sm:$0xff]
      %v178 = vld [vmem:[%s165 + $0x38] sm:$0xff]
      %v179 = vld [vmem:[%s165 + $0x40] sm:$0xff]
      %v180 = vld [vmem:[%s165 + $0x48] sm:$0xff]
      %v181 = vld [vmem:[%s165 + $0x50] sm:$0xff]
      %v182 = vld [vmem:[%s165 + $0x58] sm:$0xff]
      %v183 = vld [vmem:[%s165 + $0x60] sm:$0xff]
      %v184 = vld [vmem:[%s165 + $0x68] sm:$0xff]
      %v185 = vld [vmem:[%s165 + $0x70] sm:$0xff]
      %v186 = vld [vmem:[%s165 + $0x78] sm:$0xff]
      %v187 = vld [vmem:[%s165 + $0x80] sm:$0xff]
      %v188 = vld [vmem:[%s165 + $0x88] sm:$0xff]
      %v189 = vld [vmem:[%s165 + $0x90] sm:$0xff]
      %v190 = vld [vmem:[%s165 + $0x98] sm:$0xff]
      %v191 = vld [vmem:[%s165 + $0xa0] sm:$0xff]
      %v192 = vld [vmem:[%s165 + $0xa8] sm:$0xff]
      %v193 = vld [vmem:[%s165 + $0xb0] sm:$0xff]
      %v194 = vld [vmem:[%s165 + $0xb8] sm:$0xff]
      %v195 = vld [vmem:[%s165 + $0xc0] sm:$0xf]
      %v196 = vld [vmem:[%s1] sm:$0xff]
      %v197 = vld [vmem:[%s1 + $0x8] sm:$0xff]
      %v198 = vld [vmem:[%s1 + $0x10] sm:$0xff]
      %v199 = vld [vmem:[%s1 + $0x18] sm:$0xff]
      %v200 = vld [vmem:[%s1 + $0x20] sm:$0xff]
      %v201 = vld [vmem:[%s1 + $0x28] sm:$0xff]
      %v202 = vld [vmem:[%s1 + $0x30] sm:$0xff]
      %v203 = vld [vmem:[%s1 + $0x38] sm:$0xff]
      %s204 = scalar_lea.vmem %s1, 64
      %v205 = vld [vmem:[%s204] sm:$0xff]
      %v206 = vld [vmem:[%s204 + $0x8] sm:$0xff]
      %v207 = vld [vmem:[%s204 + $0x10] sm:$0xff]
      %v208 = vld [vmem:[%s204 + $0x18] sm:$0xff]
      %v209 = vld [vmem:[%s204 + $0x20] sm:$0xff]
      %v210 = vld [vmem:[%s204 + $0x28] sm:$0xff]
      %v211 = vld [vmem:[%s204 + $0x30] sm:$0xff]
      %v212 = vld [vmem:[%s204 + $0x38] sm:$0xff]
      %vm231 = vcmask 1046528
      %v232 = vrot.slane %v171, 1
      %v233 = vrot.slane %v172, 1
      %v234 = vsel %vm231, %v232, %v233
      %v235 = vrot.slane %v173, 1
      %v236 = vsel %vm231, %v233, %v235
      %v237 = vrot.slane %v174, 1
      %v238 = vsel %vm231, %v235, %v237
      %v239 = vrot.slane %v175, 1
      %v240 = vsel %vm231, %v237, %v239
      %v241 = vrot.slane %v176, 1
      %v242 = vsel %vm231, %v239, %v241
      %v243 = vrot.slane %v177, 1
      %v244 = vsel %vm231, %v241, %v243
      %v245 = vrot.slane %v178, 1
      %v246 = vsel %vm231, %v243, %v245
      %v247 = vrot.slane %v179, 1
      %v248 = vsel %vm231, %v245, %v247
      %v249 = vrot.slane %v180, 1
      %v250 = vsel %vm231, %v247, %v249
      %v251 = vrot.slane %v181, 1
      %v252 = vsel %vm231, %v249, %v251
      %v253 = vrot.slane %v182, 1
      %v254 = vsel %vm231, %v251, %v253
      %v255 = vrot.slane %v183, 1
      %v256 = vsel %vm231, %v253, %v255
      %v257 = vrot.slane %v184, 1
      %v258 = vsel %vm231, %v255, %v257
      %v259 = vrot.slane %v185, 1
      %v260 = vsel %vm231, %v257, %v259
      %v261 = vrot.slane %v186, 1
      %v262 = vsel %vm231, %v259, %v261
      %v263 = vrot.slane %v187, 1
      %v264 = vsel %vm231, %v261, %v263
      %v265 = vrot.slane %v188, 1
      %v266 = vsel %vm231, %v263, %v265
      %vm267 = vcmask 523264
      %v268 = vsel %vm267, %v234, 0
      %v270 = vsel %vm267, %v236, 0
      %v272 = vsel %vm267, %v238, 0
      %v274 = vsel %vm267, %v240, 0
      %v276 = vsel %vm267, %v242, 0
      %v278 = vsel %vm267, %v244, 0
      %v280 = vsel %vm267, %v246, 0
      %v282 = vsel %vm267, %v248, 0
      %v284 = vsel %vm267, %v250, 0
      %v286 = vsel %vm267, %v252, 0
      %v288 = vsel %vm267, %v254, 0
      %v290 = vsel %vm267, %v256, 0
      %v292 = vsel %vm267, %v258, 0
      %v294 = vsel %vm267, %v260, 0
      %v296 = vsel %vm267, %v262, 0
      %v298 = vsel %vm267, %v264, 0
      %v300 = vsel %vm267, %v266, 0
      %302 = vmatprep.subr.mxu0 0.0
      %303 = vmatpush1.msra.mxu0 %v205
      %304 = vmatprep.subr.mxu0 0.0
      %305 = vmatpush1.msra.mxu0 %v206
      %306 = vmatprep.subr.mxu0 0.0
      %307 = vmatpush1.msra.mxu0 %v207
      %308 = vmatprep.subr.mxu0 0.0
      %309 = vmatpush1.msra.mxu0 %v208
      %310 = vmatprep.subr.mxu0 0.0
      %311 = vmatpush1.msra.mxu0 %v209
      %312 = vmatprep.subr.mxu0 0.0
      %313 = vmatpush1.msra.mxu0 %v210
      %314 = vmatprep.subr.mxu0 0.0
      %315 = vmatpush1.msra.mxu0 %v211
      %316 = vmatprep.subr.mxu0 0.0
      %317 = vmatpush1.msra.mxu0 %v212
      %318 = vmatprep.subr.mxu0 0.0
      %319 = vmatpush1.msra.mxu0 0.0
      %320 = vmatprep.subr.mxu0 0.0
      %321 = vmatpush1.msra.mxu0 0.0
      %322 = vmatprep.subr.mxu0 0.0
      %323 = vmatpush1.msra.mxu0 0.0
      %324 = vmatprep.subr.mxu0 0.0
      %325 = vmatpush1.msra.mxu0 0.0
      %326 = vmatprep.subr.mxu0 0.0
      %327 = vmatpush1.msra.mxu0 0.0
      %328 = vmatprep.subr.mxu0 0.0
      %329 = vmatpush1.msra.mxu0 0.0
      %330 = vmatprep.subr.mxu0 0.0
      %331 = vmatpush1.msra.mxu0 0.0
      %332 = vmatprep.subr.mxu0 0.0
      %333 = vmatpush1.msra.mxu0 0.0
      %334 = vmatprep.subr.mxu0 0.0
      %335 = vmatpush1.msra.mxu0 0.0
      %336 = vmatprep.subr.mxu0 0.0
      %337 = vmatpush1.msra.mxu0 0.0
      %338 = vmatprep.subr.mxu0 0.0
      %339 = vmatpush1.msra.mxu0 0.0
      %340 = vmatprep.subr.mxu0 0.0
      %341 = vmatpush1.msra.mxu0 0.0
      %342 = vmatprep.subr.mxu0 0.0
      %343 = vmatpush1.msra.mxu0 0.0
      %344 = vmatprep.subr.mxu0 0.0
      %345 = vmatpush1.msra.mxu0 0.0
      %346 = vmatprep.subr.mxu0 0.0
      %347 = vmatpush1.msra.mxu0 0.0
      %348 = vmatprep.subr.mxu0 0.0
      %349 = vmatpush1.msra.mxu0 0.0
      %350 = vmatprep.subr.mxu0 0.0
      %351 = vmatpush1.msra.mxu0 0.0
      %352 = vmatprep.subr.mxu0 0.0
      %353 = vmatpush1.msra.mxu0 0.0
      %354 = vmatprep.subr.mxu0 0.0
      %355 = vmatpush1.msra.mxu0 0.0
      %356 = vmatprep.subr.mxu0 0.0
      %357 = vmatpush1.msra.mxu0 0.0
      %358 = vmatprep.subr.mxu0 0.0
      %359 = vmatpush1.msra.mxu0 0.0
      %360 = vmatprep.subr.mxu0 0.0
      %361 = vmatpush1.msra.mxu0 0.0
      %362 = vmatprep.subr.mxu0 0.0
      %363 = vmatpush1.msra.mxu0 0.0
      %364 = vmatprep.subr.mxu0 0.0
      %365 = vmatpush1.msra.mxu0 0.0
      %366 = vmatprep.mubr.f32.mxu0 0.0
      %367 = vmatmul.mubr.f32.gmra.mrb[0].mxu0 %v268
      %v368 = vpop.f32.mrb[0].mxu0
      %v369 = vadd.f32 0.0, %v368
      %v370 = vpop.f32.mrb[0].mxu0
      %371 = vmatprep.mubr.f32.mxu0 0.0
      %372 = vmatmul.mubr.f32.gmra.mrb[0].mxu0 %v270
      %v373 = vpop.f32.mrb[0].mxu0
      %v374 = vadd.f32 0.0, %v373
      %v375 = vpop.f32.mrb[0].mxu0
      %376 = vmatprep.mubr.f32.mxu0 0.0
      %377 = vmatmul.mubr.f32.gmra.mrb[0].mxu0 %v272
      %v378 = vpop.f32.mrb[0].mxu0
      %v379 = vadd.f32 0.0, %v378
      %v380 = vpop.f32.mrb[0].mxu0
      %381 = vmatprep.mubr.f32.mxu0 0.0
      %382 = vmatmul.mubr.f32.gmra.mrb[0].mxu0 %v274
      %v383 = vpop.f32.mrb[0].mxu0
      %v384 = vadd.f32 0.0, %v383
      %v385 = vpop.f32.mrb[0].mxu0
      %386 = vmatprep.mubr.f32.mxu0 0.0
      %387 = vmatmul.mubr.f32.gmra.mrb[0].mxu0 %v276
      %v388 = vpop.f32.mrb[0].mxu0
      %v389 = vadd.f32 0.0, %v388
      %v390 = vpop.f32.mrb[0].mxu0
      %391 = vmatprep.mubr.f32.mxu0 0.0
      %392 = vmatmul.mubr.f32.gmra.mrb[0].mxu0 %v278
      %v393 = vpop.f32.mrb[0].mxu0
      %v394 = vadd.f32 0.0, %v393
      %v395 = vpop.f32.mrb[0].mxu0
      %396 = vmatprep.mubr.f32.mxu0 0.0
      %397 = vmatmul.mubr.f32.gmra.mrb[0].mxu0 %v280
      %v398 = vpop.f32.mrb[0].mxu0
      %v399 = vadd.f32 0.0, %v398
      %v400 = vpop.f32.mrb[0].mxu0
      %401 = vmatprep.mubr.f32.mxu0 0.0
      %402 = vmatmul.mubr.f32.gmra.mrb[0].mxu0 %v282
      %v403 = vpop.f32.mrb[0].mxu0
      %v404 = vadd.f32 0.0, %v403
      %v405 = vpop.f32.mrb[0].mxu0
      %406 = vmatprep.mubr.f32.mxu0 0.0
      %407 = vmatmul.mubr.f32.gmra.mrb[0].mxu0 %v284
      %v408 = vpop.f32.mrb[0].mxu0
      %v409 = vadd.f32 0.0, %v408
      %v410 = vpop.f32.mrb[0].mxu0
      %411 = vmatprep.mubr.f32.mxu0 0.0
      %412 = vmatmul.mubr.f32.gmra.mrb[0].mxu0 %v286
      %v413 = vpop.f32.mrb[0].mxu0
      %v414 = vadd.f32 0.0, %v413
      %v415 = vpop.f32.mrb[0].mxu0
      %416 = vmatprep.mubr.f32.mxu0 0.0
      %417 = vmatmul.mubr.f32.gmra.mrb[0].mxu0 %v288
      %v418 = vpop.f32.mrb[0].mxu0
      %v419 = vadd.f32 0.0, %v418
      %v420 = vpop.f32.mrb[0].mxu0
      %421 = vmatprep.mubr.f32.mxu0 0.0
      %422 = vmatmul.mubr.f32.gmra.mrb[0].mxu0 %v290
      %v423 = vpop.f32.mrb[0].mxu0
      %v424 = vadd.f32 0.0, %v423
      %v425 = vpop.f32.mrb[0].mxu0
      %426 = vmatprep.mubr.f32.mxu0 0.0
      %427 = vmatmul.mubr.f32.gmra.mrb[0].mxu0 %v292
      %v428 = vpop.f32.mrb[0].mxu0
      %v429 = vadd.f32 0.0, %v428
      %v430 = vpop.f32.mrb[0].mxu0
      %431 = vmatprep.mubr.f32.mxu0 0.0
      %432 = vmatmul.mubr.f32.gmra.mrb[0].mxu0 %v294
      %v433 = vpop.f32.mrb[0].mxu0
      %v434 = vadd.f32 0.0, %v433
      %v435 = vpop.f32.mrb[0].mxu0
      %436 = vmatprep.mubr.f32.mxu0 0.0
      %437 = vmatmul.mubr.f32.gmra.mrb[0].mxu0 %v296
      %v438 = vpop.f32.mrb[0].mxu0
      %v439 = vadd.f32 0.0, %v438
      %v440 = vpop.f32.mrb[0].mxu0
      %441 = vmatprep.mubr.f32.mxu0 0.0
      %442 = vmatmul.mubr.f32.gmra.mrb[0].mxu0 %v298
      %v443 = vpop.f32.mrb[0].mxu0
      %v444 = vadd.f32 0.0, %v443
      %v445 = vpop.f32.mrb[0].mxu0
      %446 = vmatprep.mubr.f32.mxu0 0.0
      %447 = vmatmul.mubr.f32.gmra.mrb[0].mxu0 %v300
      %v448 = vpop.f32.mrb[0].mxu0
      %v449 = vadd.f32 0.0, %v448
      %v450 = vpop.f32.mrb[0].mxu0
      %451 = vdwg.mxu0
      %v452 = vsel %vm267, %v171, 0
      %v454 = vsel %vm267, %v172, 0
      %v456 = vsel %vm267, %v173, 0
      %v458 = vsel %vm267, %v174, 0
      %v460 = vsel %vm267, %v175, 0
      %v462 = vsel %vm267, %v176, 0
      %v464 = vsel %vm267, %v177, 0
      %v466 = vsel %vm267, %v178, 0
      %v468 = vsel %vm267, %v179, 0
      %v470 = vsel %vm267, %v180, 0
      %v472 = vsel %vm267, %v181, 0
      %v474 = vsel %vm267, %v182, 0
      %v476 = vsel %vm267, %v183, 0
      %v478 = vsel %vm267, %v184, 0
      %v480 = vsel %vm267, %v185, 0
      %v482 = vsel %vm267, %v186, 0
      %v484 = vsel %vm267, %v187, 0
      %486 = vmatprep.subr.mxu0 0.0
      %487 = vmatpush1.msra.mxu0 %v196
      %488 = vmatprep.subr.mxu0 0.0
      %489 = vmatpush1.msra.mxu0 %v197
      %490 = vmatprep.subr.mxu0 0.0
      %491 = vmatpush1.msra.mxu0 %v198
      %492 = vmatprep.subr.mxu0 0.0
      %493 = vmatpush1.msra.mxu0 %v199
      %494 = vmatprep.subr.mxu0 0.0
      %495 = vmatpush1.msra.mxu0 %v200
      %496 = vmatprep.subr.mxu0 0.0
      %497 = vmatpush1.msra.mxu0 %v201
      %498 = vmatprep.subr.mxu0 0.0
      %499 = vmatpush1.msra.mxu0 %v202
      %500 = vmatprep.subr.mxu0 0.0
      %501 = vmatpush1.msra.mxu0 %v203
      %502 = vmatprep.subr.mxu0 0.0
      %503 = vmatpush1.msra.mxu0 0.0
      %504 = vmatprep.subr.mxu0 0.0
      %505 = vmatpush1.msra.mxu0 0.0
      %506 = vmatprep.subr.mxu0 0.0
      %507 = vmatpush1.msra.mxu0 0.0
      %508 = vmatprep.subr.mxu0 0.0
      %509 = vmatpush1.msra.mxu0 0.0
      %510 = vmatprep.subr.mxu0 0.0
      %511 = vmatpush1.msra.mxu0 0.0
      %512 = vmatprep.subr.mxu0 0.0
      %513 = vmatpush1.msra.mxu0 0.0
      %514 = vmatprep.subr.mxu0 0.0
      %515 = vmatpush1.msra.mxu0 0.0
      %516 = vmatprep.subr.mxu0 0.0
      %517 = vmatpush1.msra.mxu0 0.0
      %518 = vmatprep.subr.mxu0 0.0
      %519 = vmatpush1.msra.mxu0 0.0
      %520 = vmatprep.subr.mxu0 0.0
      %521 = vmatpush1.msra.mxu0 0.0
      %522 = vmatprep.subr.mxu0 0.0
      %523 = vmatpush1.msra.mxu0 0.0
      %524 = vmatprep.subr.mxu0 0.0
      %525 = vmatpush1.msra.mxu0 0.0
      %526 = vmatprep.subr.mxu0 0.0
      %527 = vmatpush1.msra.mxu0 0.0
      %528 = vmatprep.subr.mxu0 0.0
      %529 = vmatpush1.msra.mxu0 0.0
      %530 = vmatprep.subr.mxu0 0.0
      %531 = vmatpush1.msra.mxu0 0.0
      %532 = vmatprep.subr.mxu0 0.0
      %533 = vmatpush1.msra.mxu0 0.0
      %534 = vmatprep.subr.mxu0 0.0
      %535 = vmatpush1.msra.mxu0 0.0
      %536 = vmatprep.subr.mxu0 0.0
      %537 = vmatpush1.msra.mxu0 0.0
      %538 = vmatprep.subr.mxu0 0.0
      %539 = vmatpush1.msra.mxu0 0.0
      %540 = vmatprep.subr.mxu0 0.0
      %541 = vmatpush1.msra.mxu0 0.0
      %542 = vmatprep.subr.mxu0 0.0
      %543 = vmatpush1.msra.mxu0 0.0
      %544 = vmatprep.subr.mxu0 0.0
      %545 = vmatpush1.msra.mxu0 0.0
      %546 = vmatprep.subr.mxu0 0.0
      %547 = vmatpush1.msra.mxu0 0.0
      %548 = vmatprep.subr.mxu0 0.0
      %549 = vmatpush1.msra.mxu0 0.0
      %550 = vmatprep.mubr.f32.mxu0 0.0
      %551 = vmatmul.mubr.f32.gmra.mrb[0].mxu0 %v452
      %v552 = vpop.f32.mrb[0].mxu0
      %v553 = vadd.f32 %v369, %v552
      %v554 = vpop.f32.mrb[0].mxu0
      %555 = vmatprep.mubr.f32.mxu0 0.0
      %556 = vmatmul.mubr.f32.gmra.mrb[0].mxu0 %v454
      %v557 = vpop.f32.mrb[0].mxu0
      %v558 = vadd.f32 %v374, %v557
      %v559 = vpop.f32.mrb[0].mxu0
      %560 = vmatprep.mubr.f32.mxu0 0.0
      %561 = vmatmul.mubr.f32.gmra.mrb[0].mxu0 %v456
      %v562 = vpop.f32.mrb[0].mxu0
      %v563 = vadd.f32 %v379, %v562
      %v564 = vpop.f32.mrb[0].mxu0
      %565 = vmatprep.mubr.f32.mxu0 0.0
      %566 = vmatmul.mubr.f32.gmra.mrb[0].mxu0 %v458
      %v567 = vpop.f32.mrb[0].mxu0
      %v568 = vadd.f32 %v384, %v567
      %v569 = vpop.f32.mrb[0].mxu0
      %570 = vmatprep.mubr.f32.mxu0 0.0
      %571 = vmatmul.mubr.f32.gmra.mrb[0].mxu0 %v460
      %v572 = vpop.f32.mrb[0].mxu0
      %v573 = vadd.f32 %v389, %v572
      %v574 = vpop.f32.mrb[0].mxu0
      %575 = vmatprep.mubr.f32.mxu0 0.0
      %576 = vmatmul.mubr.f32.gmra.mrb[0].mxu0 %v462
      %v577 = vpop.f32.mrb[0].mxu0
      %v578 = vadd.f32 %v394, %v577
      %v579 = vpop.f32.mrb[0].mxu0
      %580 = vmatprep.mubr.f32.mxu0 0.0
      %581 = vmatmul.mubr.f32.gmra.mrb[0].mxu0 %v464
      %v582 = vpop.f32.mrb[0].mxu0
      %v583 = vadd.f32 %v399, %v582
      %v584 = vpop.f32.mrb[0].mxu0
      %585 = vmatprep.mubr.f32.mxu0 0.0
      %586 = vmatmul.mubr.f32.gmra.mrb[0].mxu0 %v466
      %v587 = vpop.f32.mrb[0].mxu0
      %v588 = vadd.f32 %v404, %v587
      %v589 = vpop.f32.mrb[0].mxu0
      %590 = vmatprep.mubr.f32.mxu0 0.0
      %591 = vmatmul.mubr.f32.gmra.mrb[0].mxu0 %v468
      %v592 = vpop.f32.mrb[0].mxu0
      %v593 = vadd.f32 %v409, %v592
      %v594 = vpop.f32.mrb[0].mxu0
      %595 = vmatprep.mubr.f32.mxu0 0.0
      %596 = vmatmul.mubr.f32.gmra.mrb[0].mxu0 %v470
      %v597 = vpop.f32.mrb[0].mxu0
      %v598 = vadd.f32 %v414, %v597
      %v599 = vpop.f32.mrb[0].mxu0
      %600 = vmatprep.mubr.f32.mxu0 0.0
      %601 = vmatmul.mubr.f32.gmra.mrb[0].mxu0 %v472
      %v602 = vpop.f32.mrb[0].mxu0
      %v603 = vadd.f32 %v419, %v602
      %v604 = vpop.f32.mrb[0].mxu0
      %605 = vmatprep.mubr.f32.mxu0 0.0
      %606 = vmatmul.mubr.f32.gmra.mrb[0].mxu0 %v474
      %v607 = vpop.f32.mrb[0].mxu0
      %v608 = vadd.f32 %v424, %v607
      %v609 = vpop.f32.mrb[0].mxu0
      %610 = vmatprep.mubr.f32.mxu0 0.0
      %611 = vmatmul.mubr.f32.gmra.mrb[0].mxu0 %v476
      %v612 = vpop.f32.mrb[0].mxu0
      %v613 = vadd.f32 %v429, %v612
      %v614 = vpop.f32.mrb[0].mxu0
      %615 = vmatprep.mubr.f32.mxu0 0.0
      %616 = vmatmul.mubr.f32.gmra.mrb[0].mxu0 %v478
      %v617 = vpop.f32.mrb[0].mxu0
      %v618 = vadd.f32 %v434, %v617
      %v619 = vpop.f32.mrb[0].mxu0
      %620 = vmatprep.mubr.f32.mxu0 0.0
      %621 = vmatmul.mubr.f32.gmra.mrb[0].mxu0 %v480
      %v622 = vpop.f32.mrb[0].mxu0
      %v623 = vadd.f32 %v439, %v622
      %v624 = vpop.f32.mrb[0].mxu0
      %625 = vmatprep.mubr.f32.mxu0 0.0
      %626 = vmatmul.mubr.f32.gmra.mrb[0].mxu0 %v482
      %v627 = vpop.f32.mrb[0].mxu0
      %v628 = vadd.f32 %v444, %v627
      %v629 = vpop.f32.mrb[0].mxu0
      %630 = vmatprep.mubr.f32.mxu0 0.0
      %631 = vmatmul.mubr.f32.gmra.mrb[0].mxu0 %v484
      %v632 = vpop.f32.mrb[0].mxu0
      %v633 = vadd.f32 %v449, %v632
      %v634 = vpop.f32.mrb[0].mxu0
      %635 = vdwg.mxu0
      %s636 = scalar_lea.vmem %s1, 128
      %v637 = vld [vmem:[%s636] sm:$0xff]
      %v638 = vld [vmem:[%s636 + $0x8] sm:$0xff]
      %v639 = vld [vmem:[%s636 + $0x10] sm:$0xff]
      %v640 = vld [vmem:[%s636 + $0x18] sm:$0xff]
      %v641 = vld [vmem:[%s636 + $0x20] sm:$0xff]
      %v642 = vld [vmem:[%s636 + $0x28] sm:$0xff]
      %v643 = vld [vmem:[%s636 + $0x30] sm:$0xff]
      %v644 = vld [vmem:[%s636 + $0x38] sm:$0xff]
      %vm645 = vcmask 1045504
      %v646 = vrot.slane %v171, 2
      %v647 = vrot.slane %v172, 2
      %v648 = vsel %vm645, %v646, %v647
      %v649 = vrot.slane %v173, 2
      %v650 = vsel %vm645, %v647, %v649
      %v651 = vrot.slane %v174, 2
      %v652 = vsel %vm645, %v649, %v651
      %v653 = vrot.slane %v175, 2
      %v654 = vsel %vm645, %v651, %v653
      %v655 = vrot.slane %v176, 2
      %v656 = vsel %vm645, %v653, %v655
      %v657 = vrot.slane %v177, 2
      %v658 = vsel %vm645, %v655, %v657
      %v659 = vrot.slane %v178, 2
      %v660 = vsel %vm645, %v657, %v659
      %v661 = vrot.slane %v179, 2
      %v662 = vsel %vm645, %v659, %v661
      %v663 = vrot.slane %v180, 2
      %v664 = vsel %vm645, %v661, %v663
      %v665 = vrot.slane %v181, 2
      %v666 = vsel %vm645, %v663, %v665
      %v667 = vrot.slane %v182, 2
      %v668 = vsel %vm645, %v665, %v667
      %v669 = vrot.slane %v183, 2
      %v670 = vsel %vm645, %v667, %v669
      %v671 = vrot.slane %v184, 2
      %v672 = vsel %vm645, %v669, %v671
      %v673 = vrot.slane %v185, 2
      %v674 = vsel %vm645, %v671, %v673
      %v675 = vrot.slane %v186, 2
      %v676 = vsel %vm645, %v673, %v675
      %v677 = vrot.slane %v187, 2
      %v678 = vsel %vm645, %v675, %v677
      %v679 = vrot.slane %v188, 2
      %v680 = vsel %vm645, %v677, %v679
      %v681 = vsel %vm267, %v648, 0
      %v683 = vsel %vm267, %v650, 0
      %v685 = vsel %vm267, %v652, 0
      %v687 = vsel %vm267, %v654, 0
      %v689 = vsel %vm267, %v656, 0
      %v691 = vsel %vm267, %v658, 0
      %v693 = vsel %vm267, %v660, 0
      %v695 = vsel %vm267, %v662, 0
      %v697 = vsel %vm267, %v664, 0
      %v699 = vsel %vm267, %v666, 0
      %v701 = vsel %vm267, %v668, 0
      %v703 = vsel %vm267, %v670, 0
      %v705 = vsel %vm267, %v672, 0
      %v707 = vsel %vm267, %v674, 0
      %v709 = vsel %vm267, %v676, 0
      %v711 = vsel %vm267, %v678, 0
      %v713 = vsel %vm267, %v680, 0
      %715 = vmatprep.subr.mxu0 0.0
      %716 = vmatpush1.msra.mxu0 %v637
      %717 = vmatprep.subr.mxu0 0.0
      %718 = vmatpush1.msra.mxu0 %v638
      %719 = vmatprep.subr.mxu0 0.0
      %720 = vmatpush1.msra.mxu0 %v639
      %721 = vmatprep.subr.mxu0 0.0
      %722 = vmatpush1.msra.mxu0 %v640
      %723 = vmatprep.subr.mxu0 0.0
      %724 = vmatpush1.msra.mxu0 %v641
      %725 = vmatprep.subr.mxu0 0.0
      %726 = vmatpush1.msra.mxu0 %v642
      %727 = vmatprep.subr.mxu0 0.0
      %728 = vmatpush1.msra.mxu0 %v643
      %729 = vmatprep.subr.mxu0 0.0
      %730 = vmatpush1.msra.mxu0 %v644
      %731 = vmatprep.subr.mxu0 0.0
      %732 = vmatpush1.msra.mxu0 0.0
      %733 = vmatprep.subr.mxu0 0.0
      %734 = vmatpush1.msra.mxu0 0.0
      %735 = vmatprep.subr.mxu0 0.0
      %736 = vmatpush1.msra.mxu0 0.0
      %737 = vmatprep.subr.mxu0 0.0
      %738 = vmatpush1.msra.mxu0 0.0
      %739 = vmatprep.subr.mxu0 0.0
      %740 = vmatpush1.msra.mxu0 0.0
      %741 = vmatprep.subr.mxu0 0.0
      %742 = vmatpush1.msra.mxu0 0.0
      %743 = vmatprep.subr.mxu0 0.0
      %744 = vmatpush1.msra.mxu0 0.0
      %745 = vmatprep.subr.mxu0 0.0
      %746 = vmatpush1.msra.mxu0 0.0
      %747 = vmatprep.subr.mxu0 0.0
      %748 = vmatpush1.msra.mxu0 0.0
      %749 = vmatprep.subr.mxu0 0.0
      %750 = vmatpush1.msra.mxu0 0.0
      %751 = vmatprep.subr.mxu0 0.0
      %752 = vmatpush1.msra.mxu0 0.0
      %753 = vmatprep.subr.mxu0 0.0
      %754 = vmatpush1.msra.mxu0 0.0
      %755 = vmatprep.subr.mxu0 0.0
      %756 = vmatpush1.msra.mxu0 0.0
      %757 = vmatprep.subr.mxu0 0.0
      %758 = vmatpush1.msra.mxu0 0.0
      %759 = vmatprep.subr.mxu0 0.0
      %760 = vmatpush1.msra.mxu0 0.0
      %761 = vmatprep.subr.mxu0 0.0
      %762 = vmatpush1.msra.mxu0 0.0
      %763 = vmatprep.subr.mxu0 0.0
      %764 = vmatpush1.msra.mxu0 0.0
      %765 = vmatprep.subr.mxu0 0.0
      %766 = vmatpush1.msra.mxu0 0.0
      %767 = vmatprep.subr.mxu0 0.0
      %768 = vmatpush1.msra.mxu0 0.0
      %769 = vmatprep.subr.mxu0 0.0
      %770 = vmatpush1.msra.mxu0 0.0
      %771 = vmatprep.subr.mxu0 0.0
      %772 = vmatpush1.msra.mxu0 0.0
      %773 = vmatprep.subr.mxu0 0.0
      %774 = vmatpush1.msra.mxu0 0.0
      %775 = vmatprep.subr.mxu0 0.0
      %776 = vmatpush1.msra.mxu0 0.0
      %777 = vmatprep.subr.mxu0 0.0
      %778 = vmatpush1.msra.mxu0 0.0
      %779 = vmatprep.mubr.f32.mxu0 0.0
      %780 = vmatmul.mubr.f32.gmra.mrb[0].mxu0 %v681
      %v781 = vpop.f32.mrb[0].mxu0
      %v782 = vadd.f32 0.0, %v781
      %v783 = vpop.f32.mrb[0].mxu0
      %784 = vmatprep.mubr.f32.mxu0 0.0
      %785 = vmatmul.mubr.f32.gmra.mrb[0].mxu0 %v683
      %v786 = vpop.f32.mrb[0].mxu0
      %v787 = vadd.f32 0.0, %v786
      %v788 = vpop.f32.mrb[0].mxu0
      %789 = vmatprep.mubr.f32.mxu0 0.0
      %790 = vmatmul.mubr.f32.gmra.mrb[0].mxu0 %v685
      %v791 = vpop.f32.mrb[0].mxu0
      %v792 = vadd.f32 0.0, %v791
      %v793 = vpop.f32.mrb[0].mxu0
      %794 = vmatprep.mubr.f32.mxu0 0.0
      %795 = vmatmul.mubr.f32.gmra.mrb[0].mxu0 %v687
      %v796 = vpop.f32.mrb[0].mxu0
      %v797 = vadd.f32 0.0, %v796
      %v798 = vpop.f32.mrb[0].mxu0
      %799 = vmatprep.mubr.f32.mxu0 0.0
      %800 = vmatmul.mubr.f32.gmra.mrb[0].mxu0 %v689
      %v801 = vpop.f32.mrb[0].mxu0
      %v802 = vadd.f32 0.0, %v801
      %v803 = vpop.f32.mrb[0].mxu0
      %804 = vmatprep.mubr.f32.mxu0 0.0
      %805 = vmatmul.mubr.f32.gmra.mrb[0].mxu0 %v691
      %v806 = vpop.f32.mrb[0].mxu0
      %v807 = vadd.f32 0.0, %v806
      %v808 = vpop.f32.mrb[0].mxu0
      %809 = vmatprep.mubr.f32.mxu0 0.0
      %810 = vmatmul.mubr.f32.gmra.mrb[0].mxu0 %v693
      %v811 = vpop.f32.mrb[0].mxu0
      %v812 = vadd.f32 0.0, %v811
      %v813 = vpop.f32.mrb[0].mxu0
      %814 = vmatprep.mubr.f32.mxu0 0.0
      %815 = vmatmul.mubr.f32.gmra.mrb[0].mxu0 %v695
      %v816 = vpop.f32.mrb[0].mxu0
      %v817 = vadd.f32 0.0, %v816
      %v818 = vpop.f32.mrb[0].mxu0
      %819 = vmatprep.mubr.f32.mxu0 0.0
      %820 = vmatmul.mubr.f32.gmra.mrb[0].mxu0 %v697
      %v821 = vpop.f32.mrb[0].mxu0
      %v822 = vadd.f32 0.0, %v821
      %v823 = vpop.f32.mrb[0].mxu0
      %824 = vmatprep.mubr.f32.mxu0 0.0
      %825 = vmatmul.mubr.f32.gmra.mrb[0].mxu0 %v699
      %v826 = vpop.f32.mrb[0].mxu0
      %v827 = vadd.f32 0.0, %v826
      %v828 = vpop.f32.mrb[0].mxu0
      %829 = vmatprep.mubr.f32.mxu0 0.0
      %830 = vmatmul.mubr.f32.gmra.mrb[0].mxu0 %v701
      %v831 = vpop.f32.mrb[0].mxu0
      %v832 = vadd.f32 0.0, %v831
      %v833 = vpop.f32.mrb[0].mxu0
      %834 = vmatprep.mubr.f32.mxu0 0.0
      %835 = vmatmul.mubr.f32.gmra.mrb[0].mxu0 %v703
      %v836 = vpop.f32.mrb[0].mxu0
      %v837 = vadd.f32 0.0, %v836
      %v838 = vpop.f32.mrb[0].mxu0
      %839 = vmatprep.mubr.f32.mxu0 0.0
      %840 = vmatmul.mubr.f32.gmra.mrb[0].mxu0 %v705
      %v841 = vpop.f32.mrb[0].mxu0
      %v842 = vadd.f32 0.0, %v841
      %v843 = vpop.f32.mrb[0].mxu0
      %844 = vmatprep.mubr.f32.mxu0 0.0
      %845 = vmatmul.mubr.f32.gmra.mrb[0].mxu0 %v707
      %v846 = vpop.f32.mrb[0].mxu0
      %v847 = vadd.f32 0.0, %v846
      %v848 = vpop.f32.mrb[0].mxu0
      %849 = vmatprep.mubr.f32.mxu0 0.0
      %850 = vmatmul.mubr.f32.gmra.mrb[0].mxu0 %v709
      %v851 = vpop.f32.mrb[0].mxu0
      %v852 = vadd.f32 0.0, %v851
      %v853 = vpop.f32.mrb[0].mxu0
      %854 = vmatprep.mubr.f32.mxu0 0.0
      %855 = vmatmul.mubr.f32.gmra.mrb[0].mxu0 %v711
      %v856 = vpop.f32.mrb[0].mxu0
      %v857 = vadd.f32 0.0, %v856
      %v858 = vpop.f32.mrb[0].mxu0
      %859 = vmatprep.mubr.f32.mxu0 0.0
      %860 = vmatmul.mubr.f32.gmra.mrb[0].mxu0 %v713
      %v861 = vpop.f32.mrb[0].mxu0
      %v862 = vadd.f32 0.0, %v861
      %v863 = vpop.f32.mrb[0].mxu0
      %864 = vdwg.mxu0
      %v865 = vadd.f32 %v553, %v782
      %v866 = vadd.f32 %v558, %v787
      %v867 = vadd.f32 %v563, %v792
      %v868 = vadd.f32 %v568, %v797
      %v869 = vadd.f32 %v573, %v802
      %v870 = vadd.f32 %v578, %v807
      %v871 = vadd.f32 %v583, %v812
      %v872 = vadd.f32 %v588, %v817
      %v873 = vadd.f32 %v593, %v822
      %v874 = vadd.f32 %v598, %v827
      %v875 = vadd.f32 %v603, %v832
      %v876 = vadd.f32 %v608, %v837
      %v877 = vadd.f32 %v613, %v842
      %v878 = vadd.f32 %v618, %v847
      %v879 = vadd.f32 %v623, %v852
      %v880 = vadd.f32 %v628, %v857
      %v881 = vadd.f32 %v633, %v862
      %s882 = scalar_lea.vmem %s1, 192
      %v883 = vld [vmem:[%s882] sm:$0xff]
      %v884 = vld [vmem:[%s882 + $0x8] sm:$0xff]
      %v885 = vld [vmem:[%s882 + $0x10] sm:$0xff]
      %v886 = vld [vmem:[%s882 + $0x18] sm:$0xff]
      %v887 = vld [vmem:[%s882 + $0x20] sm:$0xff]
      %v888 = vld [vmem:[%s882 + $0x28] sm:$0xff]
      %v889 = vld [vmem:[%s882 + $0x30] sm:$0xff]
      %v890 = vld [vmem:[%s882 + $0x38] sm:$0xff]
      %vm891 = vcmask 1044480
      %v892 = vrot.slane %v171, 3
      %v893 = vrot.slane %v172, 3
      %v894 = vsel %vm891, %v892, %v893
      %v895 = vrot.slane %v173, 3
      %v896 = vsel %vm891, %v893, %v895
      %v897 = vrot.slane %v174, 3
      %v898 = vsel %vm891, %v895, %v897
      %v899 = vrot.slane %v175, 3
      %v900 = vsel %vm891, %v897, %v899
      %v901 = vrot.slane %v176, 3
      %v902 = vsel %vm891, %v899, %v901
      %v903 = vrot.slane %v177, 3
      %v904 = vsel %vm891, %v901, %v903
      %v905 = vrot.slane %v178, 3
      %v906 = vsel %vm891, %v903, %v905
      %v907 = vrot.slane %v179, 3
      %v908 = vsel %vm891, %v905, %v907
      %v909 = vrot.slane %v180, 3
      %v910 = vsel %vm891, %v907, %v909
      %v911 = vrot.slane %v181, 3
      %v912 = vsel %vm891, %v909, %v911
      %v913 = vrot.slane %v182, 3
      %v914 = vsel %vm891, %v911, %v913
      %v915 = vrot.slane %v183, 3
      %v916 = vsel %vm891, %v913, %v915
      %v917 = vrot.slane %v184, 3
      %v918 = vsel %vm891, %v915, %v917
      %v919 = vrot.slane %v185, 3
      %v920 = vsel %vm891, %v917, %v919
      %v921 = vrot.slane %v186, 3
      %v922 = vsel %vm891, %v919, %v921
      %v923 = vrot.slane %v187, 3
      %v924 = vsel %vm891, %v921, %v923
      %v925 = vrot.slane %v188, 3
      %v926 = vsel %vm891, %v923, %v925
      %v927 = vsel %vm267, %v894, 0
      %v929 = vsel %vm267, %v896, 0
      %v931 = vsel %vm267, %v898, 0
      %v933 = vsel %vm267, %v900, 0
      %v935 = vsel %vm267, %v902, 0
      %v937 = vsel %vm267, %v904, 0
      %v939 = vsel %vm267, %v906, 0
      %v941 = vsel %vm267, %v908, 0
      %v943 = vsel %vm267, %v910, 0
      %v945 = vsel %vm267, %v912, 0
      %v947 = vsel %vm267, %v914, 0
      %v949 = vsel %vm267, %v916, 0
      %v951 = vsel %vm267, %v918, 0
      %v953 = vsel %vm267, %v920, 0
      %v955 = vsel %vm267, %v922, 0
      %v957 = vsel %vm267, %v924, 0
      %v959 = vsel %vm267, %v926, 0
      %961 = vmatprep.subr.mxu0 0.0
      %962 = vmatpush1.msra.mxu0 %v883
      %963 = vmatprep.subr.mxu0 0.0
      %964 = vmatpush1.msra.mxu0 %v884
      %965 = vmatprep.subr.mxu0 0.0
      %966 = vmatpush1.msra.mxu0 %v885
      %967 = vmatprep.subr.mxu0 0.0
      %968 = vmatpush1.msra.mxu0 %v886
      %969 = vmatprep.subr.mxu0 0.0
      %970 = vmatpush1.msra.mxu0 %v887
      %971 = vmatprep.subr.mxu0 0.0
      %972 = vmatpush1.msra.mxu0 %v888
      %973 = vmatprep.subr.mxu0 0.0
      %974 = vmatpush1.msra.mxu0 %v889
      %975 = vmatprep.subr.mxu0 0.0
      %976 = vmatpush1.msra.mxu0 %v890
      %977 = vmatprep.subr.mxu0 0.0
      %978 = vmatpush1.msra.mxu0 0.0
      %979 = vmatprep.subr.mxu0 0.0
      %980 = vmatpush1.msra.mxu0 0.0
      %981 = vmatprep.subr.mxu0 0.0
      %982 = vmatpush1.msra.mxu0 0.0
      %983 = vmatprep.subr.mxu0 0.0
      %984 = vmatpush1.msra.mxu0 0.0
      %985 = vmatprep.subr.mxu0 0.0
      %986 = vmatpush1.msra.mxu0 0.0
      %987 = vmatprep.subr.mxu0 0.0
      %988 = vmatpush1.msra.mxu0 0.0
      %989 = vmatprep.subr.mxu0 0.0
      %990 = vmatpush1.msra.mxu0 0.0
      %991 = vmatprep.subr.mxu0 0.0
      %992 = vmatpush1.msra.mxu0 0.0
      %993 = vmatprep.subr.mxu0 0.0
      %994 = vmatpush1.msra.mxu0 0.0
      %995 = vmatprep.subr.mxu0 0.0
      %996 = vmatpush1.msra.mxu0 0.0
      %997 = vmatprep.subr.mxu0 0.0
      %998 = vmatpush1.msra.mxu0 0.0
      %999 = vmatprep.subr.mxu0 0.0
      %1000 = vmatpush1.msra.mxu0 0.0
      %1001 = vmatprep.subr.mxu0 0.0
      %1002 = vmatpush1.msra.mxu0 0.0
      %1003 = vmatprep.subr.mxu0 0.0
      %1004 = vmatpush1.msra.mxu0 0.0
      %1005 = vmatprep.subr.mxu0 0.0
      %1006 = vmatpush1.msra.mxu0 0.0
      %1007 = vmatprep.subr.mxu0 0.0
      %1008 = vmatpush1.msra.mxu0 0.0
      %1009 = vmatprep.subr.mxu0 0.0
      %1010 = vmatpush1.msra.mxu0 0.0
      %1011 = vmatprep.subr.mxu0 0.0
      %1012 = vmatpush1.msra.mxu0 0.0
      %1013 = vmatprep.subr.mxu0 0.0
      %1014 = vmatpush1.msra.mxu0 0.0
      %1015 = vmatprep.subr.mxu0 0.0
      %1016 = vmatpush1.msra.mxu0 0.0
      %1017 = vmatprep.subr.mxu0 0.0
      %1018 = vmatpush1.msra.mxu0 0.0
      %1019 = vmatprep.subr.mxu0 0.0
      %1020 = vmatpush1.msra.mxu0 0.0
      %1021 = vmatprep.subr.mxu0 0.0
      %1022 = vmatpush1.msra.mxu0 0.0
      %1023 = vmatprep.subr.mxu0 0.0
      %1024 = vmatpush1.msra.mxu0 0.0
      %1025 = vmatprep.mubr.f32.mxu0 0.0
      %1026 = vmatmul.mubr.f32.gmra.mrb[0].mxu0 %v927
      %v1027 = vpop.f32.mrb[0].mxu0
      %v1028 = vadd.f32 0.0, %v1027
      %v1029 = vpop.f32.mrb[0].mxu0
      %1030 = vmatprep.mubr.f32.mxu0 0.0
      %1031 = vmatmul.mubr.f32.gmra.mrb[0].mxu0 %v929
      %v1032 = vpop.f32.mrb[0].mxu0
      %v1033 = vadd.f32 0.0, %v1032
      %v1034 = vpop.f32.mrb[0].mxu0
      %1035 = vmatprep.mubr.f32.mxu0 0.0
      %1036 = vmatmul.mubr.f32.gmra.mrb[0].mxu0 %v931
      %v1037 = vpop.f32.mrb[0].mxu0
      %v1038 = vadd.f32 0.0, %v1037
      %v1039 = vpop.f32.mrb[0].mxu0
      %1040 = vmatprep.mubr.f32.mxu0 0.0
      %1041 = vmatmul.mubr.f32.gmra.mrb[0].mxu0 %v933
      %v1042 = vpop.f32.mrb[0].mxu0
      %v1043 = vadd.f32 0.0, %v1042
      %v1044 = vpop.f32.mrb[0].mxu0
      %1045 = vmatprep.mubr.f32.mxu0 0.0
      %1046 = vmatmul.mubr.f32.gmra.mrb[0].mxu0 %v935
      %v1047 = vpop.f32.mrb[0].mxu0
      %v1048 = vadd.f32 0.0, %v1047
      %v1049 = vpop.f32.mrb[0].mxu0
      %1050 = vmatprep.mubr.f32.mxu0 0.0
      %1051 = vmatmul.mubr.f32.gmra.mrb[0].mxu0 %v937
      %v1052 = vpop.f32.mrb[0].mxu0
      %v1053 = vadd.f32 0.0, %v1052
      %v1054 = vpop.f32.mrb[0].mxu0
      %1055 = vmatprep.mubr.f32.mxu0 0.0
      %1056 = vmatmul.mubr.f32.gmra.mrb[0].mxu0 %v939
      %v1057 = vpop.f32.mrb[0].mxu0
      %v1058 = vadd.f32 0.0, %v1057
      %v1059 = vpop.f32.mrb[0].mxu0
      %1060 = vmatprep.mubr.f32.mxu0 0.0
      %1061 = vmatmul.mubr.f32.gmra.mrb[0].mxu0 %v941
      %v1062 = vpop.f32.mrb[0].mxu0
      %v1063 = vadd.f32 0.0, %v1062
      %v1064 = vpop.f32.mrb[0].mxu0
      %1065 = vmatprep.mubr.f32.mxu0 0.0
      %1066 = vmatmul.mubr.f32.gmra.mrb[0].mxu0 %v943
      %v1067 = vpop.f32.mrb[0].mxu0
      %v1068 = vadd.f32 0.0, %v1067
      %v1069 = vpop.f32.mrb[0].mxu0
      %1070 = vmatprep.mubr.f32.mxu0 0.0
      %1071 = vmatmul.mubr.f32.gmra.mrb[0].mxu0 %v945
      %v1072 = vpop.f32.mrb[0].mxu0
      %v1073 = vadd.f32 0.0, %v1072
      %v1074 = vpop.f32.mrb[0].mxu0
      %1075 = vmatprep.mubr.f32.mxu0 0.0
      %1076 = vmatmul.mubr.f32.gmra.mrb[0].mxu0 %v947
      %v1077 = vpop.f32.mrb[0].mxu0
      %v1078 = vadd.f32 0.0, %v1077
      %v1079 = vpop.f32.mrb[0].mxu0
      %1080 = vmatprep.mubr.f32.mxu0 0.0
      %1081 = vmatmul.mubr.f32.gmra.mrb[0].mxu0 %v949
      %v1082 = vpop.f32.mrb[0].mxu0
      %v1083 = vadd.f32 0.0, %v1082
      %v1084 = vpop.f32.mrb[0].mxu0
      %1085 = vmatprep.mubr.f32.mxu0 0.0
      %1086 = vmatmul.mubr.f32.gmra.mrb[0].mxu0 %v951
      %v1087 = vpop.f32.mrb[0].mxu0
      %v1088 = vadd.f32 0.0, %v1087
      %v1089 = vpop.f32.mrb[0].mxu0
      %1090 = vmatprep.mubr.f32.mxu0 0.0
      %1091 = vmatmul.mubr.f32.gmra.mrb[0].mxu0 %v953
      %v1092 = vpop.f32.mrb[0].mxu0
      %v1093 = vadd.f32 0.0, %v1092
      %v1094 = vpop.f32.mrb[0].mxu0
      %1095 = vmatprep.mubr.f32.mxu0 0.0
      %1096 = vmatmul.mubr.f32.gmra.mrb[0].mxu0 %v955
      %v1097 = vpop.f32.mrb[0].mxu0
      %v1098 = vadd.f32 0.0, %v1097
      %v1099 = vpop.f32.mrb[0].mxu0
      %1100 = vmatprep.mubr.f32.mxu0 0.0
      %1101 = vmatmul.mubr.f32.gmra.mrb[0].mxu0 %v957
      %v1102 = vpop.f32.mrb[0].mxu0
      %v1103 = vadd.f32 0.0, %v1102
      %v1104 = vpop.f32.mrb[0].mxu0
      %1105 = vmatprep.mubr.f32.mxu0 0.0
      %1106 = vmatmul.mubr.f32.gmra.mrb[0].mxu0 %v959
      %v1107 = vpop.f32.mrb[0].mxu0
      %v1108 = vadd.f32 0.0, %v1107
      %v1109 = vpop.f32.mrb[0].mxu0
      %1110 = vdwg.mxu0
      %v1111 = vadd.f32 %v865, %v1028
      %v1112 = vadd.f32 %v866, %v1033
      %v1113 = vadd.f32 %v867, %v1038
      %v1114 = vadd.f32 %v868, %v1043
      %v1115 = vadd.f32 %v869, %v1048
      %v1116 = vadd.f32 %v870, %v1053
      %v1117 = vadd.f32 %v871, %v1058
      %v1118 = vadd.f32 %v872, %v1063
      %v1119 = vadd.f32 %v873, %v1068
      %v1120 = vadd.f32 %v874, %v1073
      %v1121 = vadd.f32 %v875, %v1078
      %v1122 = vadd.f32 %v876, %v1083
      %v1123 = vadd.f32 %v877, %v1088
      %v1124 = vadd.f32 %v878, %v1093
      %v1125 = vadd.f32 %v879, %v1098
      %v1126 = vadd.f32 %v880, %v1103
      %v1127 = vadd.f32 %v881, %v1108
      %s1128 = scalar_lea.vmem %s1, 256
      %v1129 = vld [vmem:[%s1128] sm:$0xff]
      %v1130 = vld [vmem:[%s1128 + $0x8] sm:$0xff]
      %v1131 = vld [vmem:[%s1128 + $0x10] sm:$0xff]
      %v1132 = vld [vmem:[%s1128 + $0x18] sm:$0xff]
      %v1133 = vld [vmem:[%s1128 + $0x20] sm:$0xff]
      %v1134 = vld [vmem:[%s1128 + $0x28] sm:$0xff]
      %v1135 = vld [vmem:[%s1128 + $0x30] sm:$0xff]
      %v1136 = vld [vmem:[%s1128 + $0x38] sm:$0xff]
      %vm1137 = vcmask 1043456
      %v1138 = vrot.slane %v171, 4
      %v1139 = vrot.slane %v172, 4
      %v1140 = vsel %vm1137, %v1138, %v1139
      %v1141 = vrot.slane %v173, 4
      %v1142 = vsel %vm1137, %v1139, %v1141
      %v1143 = vrot.slane %v174, 4
      %v1144 = vsel %vm1137, %v1141, %v1143
      %v1145 = vrot.slane %v175, 4
      %v1146 = vsel %vm1137, %v1143, %v1145
      %v1147 = vrot.slane %v176, 4
      %v1148 = vsel %vm1137, %v1145, %v1147
      %v1149 = vrot.slane %v177, 4
      %v1150 = vsel %vm1137, %v1147, %v1149
      %v1151 = vrot.slane %v178, 4
      %v1152 = vsel %vm1137, %v1149, %v1151
      %v1153 = vrot.slane %v179, 4
      %v1154 = vsel %vm1137, %v1151, %v1153
      %v1155 = vrot.slane %v180, 4
      %v1156 = vsel %vm1137, %v1153, %v1155
      %v1157 = vrot.slane %v181, 4
      %v1158 = vsel %vm1137, %v1155, %v1157
      %v1159 = vrot.slane %v182, 4
      %v1160 = vsel %vm1137, %v1157, %v1159
      %v1161 = vrot.slane %v183, 4
      %v1162 = vsel %vm1137, %v1159, %v1161
      %v1163 = vrot.slane %v184, 4
      %v1164 = vsel %vm1137, %v1161, %v1163
      %v1165 = vrot.slane %v185, 4
      %v1166 = vsel %vm1137, %v1163, %v1165
      %v1167 = vrot.slane %v186, 4
      %v1168 = vsel %vm1137, %v1165, %v1167
      %v1169 = vrot.slane %v187, 4
      %v1170 = vsel %vm1137, %v1167, %v1169
      %v1171 = vrot.slane %v188, 4
      %v1172 = vsel %vm1137, %v1169, %v1171
      %v1173 = vsel %vm267, %v1140, 0
      %v1175 = vsel %vm267, %v1142, 0
      %v1177 = vsel %vm267, %v1144, 0
      %v1179 = vsel %vm267, %v1146, 0
      %v1181 = vsel %vm267, %v1148, 0
      %v1183 = vsel %vm267, %v1150, 0
      %v1185 = vsel %vm267, %v1152, 0
      %v1187 = vsel %vm267, %v1154, 0
      %v1189 = vsel %vm267, %v1156, 0
      %v1191 = vsel %vm267, %v1158, 0
      %v1193 = vsel %vm267, %v1160, 0
      %v1195 = vsel %vm267, %v1162, 0
      %v1197 = vsel %vm267, %v1164, 0
      %v1199 = vsel %vm267, %v1166, 0
      %v1201 = vsel %vm267, %v1168, 0
      %v1203 = vsel %vm267, %v1170, 0
      %v1205 = vsel %vm267, %v1172, 0
      %1207 = vmatprep.subr.mxu0 0.0
      %1208 = vmatpush1.msra.mxu0 %v1129
      %1209 = vmatprep.subr.mxu0 0.0
      %1210 = vmatpush1.msra.mxu0 %v1130
      %1211 = vmatprep.subr.mxu0 0.0
      %1212 = vmatpush1.msra.mxu0 %v1131
      %1213 = vmatprep.subr.mxu0 0.0
      %1214 = vmatpush1.msra.mxu0 %v1132
      %1215 = vmatprep.subr.mxu0 0.0
      %1216 = vmatpush1.msra.mxu0 %v1133
      %1217 = vmatprep.subr.mxu0 0.0
      %1218 = vmatpush1.msra.mxu0 %v1134
      %1219 = vmatprep.subr.mxu0 0.0
      %1220 = vmatpush1.msra.mxu0 %v1135
      %1221 = vmatprep.subr.mxu0 0.0
      %1222 = vmatpush1.msra.mxu0 %v1136
      %1223 = vmatprep.subr.mxu0 0.0
      %1224 = vmatpush1.msra.mxu0 0.0
      %1225 = vmatprep.subr.mxu0 0.0
      %1226 = vmatpush1.msra.mxu0 0.0
      %1227 = vmatprep.subr.mxu0 0.0
      %1228 = vmatpush1.msra.mxu0 0.0
      %1229 = vmatprep.subr.mxu0 0.0
      %1230 = vmatpush1.msra.mxu0 0.0
      %1231 = vmatprep.subr.mxu0 0.0
      %1232 = vmatpush1.msra.mxu0 0.0
      %1233 = vmatprep.subr.mxu0 0.0
      %1234 = vmatpush1.msra.mxu0 0.0
      %1235 = vmatprep.subr.mxu0 0.0
      %1236 = vmatpush1.msra.mxu0 0.0
      %1237 = vmatprep.subr.mxu0 0.0
      %1238 = vmatpush1.msra.mxu0 0.0
      %1239 = vmatprep.subr.mxu0 0.0
      %1240 = vmatpush1.msra.mxu0 0.0
      %1241 = vmatprep.subr.mxu0 0.0
      %1242 = vmatpush1.msra.mxu0 0.0
      %1243 = vmatprep.subr.mxu0 0.0
      %1244 = vmatpush1.msra.mxu0 0.0
      %1245 = vmatprep.subr.mxu0 0.0
      %1246 = vmatpush1.msra.mxu0 0.0
      %1247 = vmatprep.subr.mxu0 0.0
      %1248 = vmatpush1.msra.mxu0 0.0
      %1249 = vmatprep.subr.mxu0 0.0
      %1250 = vmatpush1.msra.mxu0 0.0
      %1251 = vmatprep.subr.mxu0 0.0
      %1252 = vmatpush1.msra.mxu0 0.0
      %1253 = vmatprep.subr.mxu0 0.0
      %1254 = vmatpush1.msra.mxu0 0.0
      %1255 = vmatprep.subr.mxu0 0.0
      %1256 = vmatpush1.msra.mxu0 0.0
      %1257 = vmatprep.subr.mxu0 0.0
      %1258 = vmatpush1.msra.mxu0 0.0
      %1259 = vmatprep.subr.mxu0 0.0
      %1260 = vmatpush1.msra.mxu0 0.0
      %1261 = vmatprep.subr.mxu0 0.0
      %1262 = vmatpush1.msra.mxu0 0.0
      %1263 = vmatprep.subr.mxu0 0.0
      %1264 = vmatpush1.msra.mxu0 0.0
      %1265 = vmatprep.subr.mxu0 0.0
      %1266 = vmatpush1.msra.mxu0 0.0
      %1267 = vmatprep.subr.mxu0 0.0
      %1268 = vmatpush1.msra.mxu0 0.0
      %1269 = vmatprep.subr.mxu0 0.0
      %1270 = vmatpush1.msra.mxu0 0.0
      %1271 = vmatprep.mubr.f32.mxu0 0.0
      %1272 = vmatmul.mubr.f32.gmra.mrb[0].mxu0 %v1173
      %v1273 = vpop.f32.mrb[0].mxu0
      %v1274 = vadd.f32 0.0, %v1273
      %v1275 = vpop.f32.mrb[0].mxu0
      %1276 = vmatprep.mubr.f32.mxu0 0.0
      %1277 = vmatmul.mubr.f32.gmra.mrb[0].mxu0 %v1175
      %v1278 = vpop.f32.mrb[0].mxu0
      %v1279 = vadd.f32 0.0, %v1278
      %v1280 = vpop.f32.mrb[0].mxu0
      %1281 = vmatprep.mubr.f32.mxu0 0.0
      %1282 = vmatmul.mubr.f32.gmra.mrb[0].mxu0 %v1177
      %v1283 = vpop.f32.mrb[0].mxu0
      %v1284 = vadd.f32 0.0, %v1283
      %v1285 = vpop.f32.mrb[0].mxu0
      %1286 = vmatprep.mubr.f32.mxu0 0.0
      %1287 = vmatmul.mubr.f32.gmra.mrb[0].mxu0 %v1179
      %v1288 = vpop.f32.mrb[0].mxu0
      %v1289 = vadd.f32 0.0, %v1288
      %v1290 = vpop.f32.mrb[0].mxu0
      %1291 = vmatprep.mubr.f32.mxu0 0.0
      %1292 = vmatmul.mubr.f32.gmra.mrb[0].mxu0 %v1181
      %v1293 = vpop.f32.mrb[0].mxu0
      %v1294 = vadd.f32 0.0, %v1293
      %v1295 = vpop.f32.mrb[0].mxu0
      %1296 = vmatprep.mubr.f32.mxu0 0.0
      %1297 = vmatmul.mubr.f32.gmra.mrb[0].mxu0 %v1183
      %v1298 = vpop.f32.mrb[0].mxu0
      %v1299 = vadd.f32 0.0, %v1298
      %v1300 = vpop.f32.mrb[0].mxu0
      %1301 = vmatprep.mubr.f32.mxu0 0.0
      %1302 = vmatmul.mubr.f32.gmra.mrb[0].mxu0 %v1185
      %v1303 = vpop.f32.mrb[0].mxu0
      %v1304 = vadd.f32 0.0, %v1303
      %v1305 = vpop.f32.mrb[0].mxu0
      %1306 = vmatprep.mubr.f32.mxu0 0.0
      %1307 = vmatmul.mubr.f32.gmra.mrb[0].mxu0 %v1187
      %v1308 = vpop.f32.mrb[0].mxu0
      %v1309 = vadd.f32 0.0, %v1308
      %v1310 = vpop.f32.mrb[0].mxu0
      %1311 = vmatprep.mubr.f32.mxu0 0.0
      %1312 = vmatmul.mubr.f32.gmra.mrb[0].mxu0 %v1189
      %v1313 = vpop.f32.mrb[0].mxu0
      %v1314 = vadd.f32 0.0, %v1313
      %v1315 = vpop.f32.mrb[0].mxu0
      %1316 = vmatprep.mubr.f32.mxu0 0.0
      %1317 = vmatmul.mubr.f32.gmra.mrb[0].mxu0 %v1191
      %v1318 = vpop.f32.mrb[0].mxu0
      %v1319 = vadd.f32 0.0, %v1318
      %v1320 = vpop.f32.mrb[0].mxu0
      %1321 = vmatprep.mubr.f32.mxu0 0.0
      %1322 = vmatmul.mubr.f32.gmra.mrb[0].mxu0 %v1193
      %v1323 = vpop.f32.mrb[0].mxu0
      %v1324 = vadd.f32 0.0, %v1323
      %v1325 = vpop.f32.mrb[0].mxu0
      %1326 = vmatprep.mubr.f32.mxu0 0.0
      %1327 = vmatmul.mubr.f32.gmra.mrb[0].mxu0 %v1195
      %v1328 = vpop.f32.mrb[0].mxu0
      %v1329 = vadd.f32 0.0, %v1328
      %v1330 = vpop.f32.mrb[0].mxu0
      %1331 = vmatprep.mubr.f32.mxu0 0.0
      %1332 = vmatmul.mubr.f32.gmra.mrb[0].mxu0 %v1197
      %v1333 = vpop.f32.mrb[0].mxu0
      %v1334 = vadd.f32 0.0, %v1333
      %v1335 = vpop.f32.mrb[0].mxu0
      %1336 = vmatprep.mubr.f32.mxu0 0.0
      %1337 = vmatmul.mubr.f32.gmra.mrb[0].mxu0 %v1199
      %v1338 = vpop.f32.mrb[0].mxu0
      %v1339 = vadd.f32 0.0, %v1338
      %v1340 = vpop.f32.mrb[0].mxu0
      %1341 = vmatprep.mubr.f32.mxu0 0.0
      %1342 = vmatmul.mubr.f32.gmra.mrb[0].mxu0 %v1201
      %v1343 = vpop.f32.mrb[0].mxu0
      %v1344 = vadd.f32 0.0, %v1343
      %v1345 = vpop.f32.mrb[0].mxu0
      %1346 = vmatprep.mubr.f32.mxu0 0.0
      %1347 = vmatmul.mubr.f32.gmra.mrb[0].mxu0 %v1203
      %v1348 = vpop.f32.mrb[0].mxu0
      %v1349 = vadd.f32 0.0, %v1348
      %v1350 = vpop.f32.mrb[0].mxu0
      %1351 = vmatprep.mubr.f32.mxu0 0.0
      %1352 = vmatmul.mubr.f32.gmra.mrb[0].mxu0 %v1205
      %v1353 = vpop.f32.mrb[0].mxu0
      %v1354 = vadd.f32 0.0, %v1353
      %v1355 = vpop.f32.mrb[0].mxu0
      %1356 = vdwg.mxu0
      %v1357 = vadd.f32 %v1111, %v1274
      %v1358 = vadd.f32 %v1112, %v1279
      %v1359 = vadd.f32 %v1113, %v1284
      %v1360 = vadd.f32 %v1114, %v1289
      %v1361 = vadd.f32 %v1115, %v1294
      %v1362 = vadd.f32 %v1116, %v1299
      %v1363 = vadd.f32 %v1117, %v1304
      %v1364 = vadd.f32 %v1118, %v1309
      %v1365 = vadd.f32 %v1119, %v1314
      %v1366 = vadd.f32 %v1120, %v1319
      %v1367 = vadd.f32 %v1121, %v1324
      %v1368 = vadd.f32 %v1122, %v1329
      %v1369 = vadd.f32 %v1123, %v1334
      %v1370 = vadd.f32 %v1124, %v1339
      %v1371 = vadd.f32 %v1125, %v1344
      %v1372 = vadd.f32 %v1126, %v1349
      %v1373 = vadd.f32 %v1127, %v1354
      %s1374 = scalar_lea.vmem %s1, 320
      %v1375 = vld [vmem:[%s1374] sm:$0xff]
      %v1376 = vld [vmem:[%s1374 + $0x8] sm:$0xff]
      %v1377 = vld [vmem:[%s1374 + $0x10] sm:$0xff]
      %v1378 = vld [vmem:[%s1374 + $0x18] sm:$0xff]
      %v1379 = vld [vmem:[%s1374 + $0x20] sm:$0xff]
      %v1380 = vld [vmem:[%s1374 + $0x28] sm:$0xff]
      %v1381 = vld [vmem:[%s1374 + $0x30] sm:$0xff]
      %v1382 = vld [vmem:[%s1374 + $0x38] sm:$0xff]
      %vm1384 = vcmask 1041408
      %v1385 = vrot.slane %v172, 6
      %v1386 = vrot.slane %v173, 6
      %v1387 = vsel %vm1384, %v1385, %v1386
      %v1388 = vrot.slane %v174, 6
      %v1389 = vsel %vm1384, %v1386, %v1388
      %v1390 = vrot.slane %v175, 6
      %v1391 = vsel %vm1384, %v1388, %v1390
      %v1392 = vrot.slane %v176, 6
      %v1393 = vsel %vm1384, %v1390, %v1392
      %v1394 = vrot.slane %v177, 6
      %v1395 = vsel %vm1384, %v1392, %v1394
      %v1396 = vrot.slane %v178, 6
      %v1397 = vsel %vm1384, %v1394, %v1396
      %v1398 = vrot.slane %v179, 6
      %v1399 = vsel %vm1384, %v1396, %v1398
      %v1400 = vrot.slane %v180, 6
      %v1401 = vsel %vm1384, %v1398, %v1400
      %v1402 = vrot.slane %v181, 6
      %v1403 = vsel %vm1384, %v1400, %v1402
      %v1404 = vrot.slane %v182, 6
      %v1405 = vsel %vm1384, %v1402, %v1404
      %v1406 = vrot.slane %v183, 6
      %v1407 = vsel %vm1384, %v1404, %v1406
      %v1408 = vrot.slane %v184, 6
      %v1409 = vsel %vm1384, %v1406, %v1408
      %v1410 = vrot.slane %v185, 6
      %v1411 = vsel %vm1384, %v1408, %v1410
      %v1412 = vrot.slane %v186, 6
      %v1413 = vsel %vm1384, %v1410, %v1412
      %v1414 = vrot.slane %v187, 6
      %v1415 = vsel %vm1384, %v1412, %v1414
      %v1416 = vrot.slane %v188, 6
      %v1417 = vsel %vm1384, %v1414, %v1416
      %v1418 = vrot.slane %v189, 6
      %v1419 = vsel %vm1384, %v1416, %v1418
      %v1420 = vsel %vm267, %v1387, 0
      %v1422 = vsel %vm267, %v1389, 0
      %v1424 = vsel %vm267, %v1391, 0
      %v1426 = vsel %vm267, %v1393, 0
      %v1428 = vsel %vm267, %v1395, 0
      %v1430 = vsel %vm267, %v1397, 0
      %v1432 = vsel %vm267, %v1399, 0
      %v1434 = vsel %vm267, %v1401, 0
      %v1436 = vsel %vm267, %v1403, 0
      %v1438 = vsel %vm267, %v1405, 0
      %v1440 = vsel %vm267, %v1407, 0
      %v1442 = vsel %vm267, %v1409, 0
      %v1444 = vsel %vm267, %v1411, 0
      %v1446 = vsel %vm267, %v1413, 0
      %v1448 = vsel %vm267, %v1415, 0
      %v1450 = vsel %vm267, %v1417, 0
      %v1452 = vsel %vm267, %v1419, 0
      %1454 = vmatprep.subr.mxu0 0.0
      %1455 = vmatpush1.msra.mxu0 %v1375
      %1456 = vmatprep.subr.mxu0 0.0
      %1457 = vmatpush1.msra.mxu0 %v1376
      %1458 = vmatprep.subr.mxu0 0.0
      %1459 = vmatpush1.msra.mxu0 %v1377
      %1460 = vmatprep.subr.mxu0 0.0
      %1461 = vmatpush1.msra.mxu0 %v1378
      %1462 = vmatprep.subr.mxu0 0.0
      %1463 = vmatpush1.msra.mxu0 %v1379
      %1464 = vmatprep.subr.mxu0 0.0
      %1465 = vmatpush1.msra.mxu0 %v1380
      %1466 = vmatprep.subr.mxu0 0.0
      %1467 = vmatpush1.msra.mxu0 %v1381
      %1468 = vmatprep.subr.mxu0 0.0
      %1469 = vmatpush1.msra.mxu0 %v1382
      %1470 = vmatprep.subr.mxu0 0.0
      %1471 = vmatpush1.msra.mxu0 0.0
      %1472 = vmatprep.subr.mxu0 0.0
      %1473 = vmatpush1.msra.mxu0 0.0
      %1474 = vmatprep.subr.mxu0 0.0
      %1475 = vmatpush1.msra.mxu0 0.0
      %1476 = vmatprep.subr.mxu0 0.0
      %1477 = vmatpush1.msra.mxu0 0.0
      %1478 = vmatprep.subr.mxu0 0.0
      %1479 = vmatpush1.msra.mxu0 0.0
      %1480 = vmatprep.subr.mxu0 0.0
      %1481 = vmatpush1.msra.mxu0 0.0
      %1482 = vmatprep.subr.mxu0 0.0
      %1483 = vmatpush1.msra.mxu0 0.0
      %1484 = vmatprep.subr.mxu0 0.0
      %1485 = vmatpush1.msra.mxu0 0.0
      %1486 = vmatprep.subr.mxu0 0.0
      %1487 = vmatpush1.msra.mxu0 0.0
      %1488 = vmatprep.subr.mxu0 0.0
      %1489 = vmatpush1.msra.mxu0 0.0
      %1490 = vmatprep.subr.mxu0 0.0
      %1491 = vmatpush1.msra.mxu0 0.0
      %1492 = vmatprep.subr.mxu0 0.0
      %1493 = vmatpush1.msra.mxu0 0.0
      %1494 = vmatprep.subr.mxu0 0.0
      %1495 = vmatpush1.msra.mxu0 0.0
      %1496 = vmatprep.subr.mxu0 0.0
      %1497 = vmatpush1.msra.mxu0 0.0
      %1498 = vmatprep.subr.mxu0 0.0
      %1499 = vmatpush1.msra.mxu0 0.0
      %1500 = vmatprep.subr.mxu0 0.0
      %1501 = vmatpush1.msra.mxu0 0.0
      %1502 = vmatprep.subr.mxu0 0.0
      %1503 = vmatpush1.msra.mxu0 0.0
      %1504 = vmatprep.subr.mxu0 0.0
      %1505 = vmatpush1.msra.mxu0 0.0
      %1506 = vmatprep.subr.mxu0 0.0
      %1507 = vmatpush1.msra.mxu0 0.0
      %1508 = vmatprep.subr.mxu0 0.0
      %1509 = vmatpush1.msra.mxu0 0.0
      %1510 = vmatprep.subr.mxu0 0.0
      %1511 = vmatpush1.msra.mxu0 0.0
      %1512 = vmatprep.subr.mxu0 0.0
      %1513 = vmatpush1.msra.mxu0 0.0
      %1514 = vmatprep.subr.mxu0 0.0
      %1515 = vmatpush1.msra.mxu0 0.0
      %1516 = vmatprep.subr.mxu0 0.0
      %1517 = vmatpush1.msra.mxu0 0.0
      %1518 = vmatprep.mubr.f32.mxu0 0.0
      %1519 = vmatmul.mubr.f32.gmra.mrb[0].mxu0 %v1420
      %v1520 = vpop.f32.mrb[0].mxu0
      %v1521 = vadd.f32 0.0, %v1520
      %v1522 = vpop.f32.mrb[0].mxu0
      %1523 = vmatprep.mubr.f32.mxu0 0.0
      %1524 = vmatmul.mubr.f32.gmra.mrb[0].mxu0 %v1422
      %v1525 = vpop.f32.mrb[0].mxu0
      %v1526 = vadd.f32 0.0, %v1525
      %v1527 = vpop.f32.mrb[0].mxu0
      %1528 = vmatprep.mubr.f32.mxu0 0.0
      %1529 = vmatmul.mubr.f32.gmra.mrb[0].mxu0 %v1424
      %v1530 = vpop.f32.mrb[0].mxu0
      %v1531 = vadd.f32 0.0, %v1530
      %v1532 = vpop.f32.mrb[0].mxu0
      %1533 = vmatprep.mubr.f32.mxu0 0.0
      %1534 = vmatmul.mubr.f32.gmra.mrb[0].mxu0 %v1426
      %v1535 = vpop.f32.mrb[0].mxu0
      %v1536 = vadd.f32 0.0, %v1535
      %v1537 = vpop.f32.mrb[0].mxu0
      %1538 = vmatprep.mubr.f32.mxu0 0.0
      %1539 = vmatmul.mubr.f32.gmra.mrb[0].mxu0 %v1428
      %v1540 = vpop.f32.mrb[0].mxu0
      %v1541 = vadd.f32 0.0, %v1540
      %v1542 = vpop.f32.mrb[0].mxu0
      %1543 = vmatprep.mubr.f32.mxu0 0.0
      %1544 = vmatmul.mubr.f32.gmra.mrb[0].mxu0 %v1430
      %v1545 = vpop.f32.mrb[0].mxu0
      %v1546 = vadd.f32 0.0, %v1545
      %v1547 = vpop.f32.mrb[0].mxu0
      %1548 = vmatprep.mubr.f32.mxu0 0.0
      %1549 = vmatmul.mubr.f32.gmra.mrb[0].mxu0 %v1432
      %v1550 = vpop.f32.mrb[0].mxu0
      %v1551 = vadd.f32 0.0, %v1550
      %v1552 = vpop.f32.mrb[0].mxu0
      %1553 = vmatprep.mubr.f32.mxu0 0.0
      %1554 = vmatmul.mubr.f32.gmra.mrb[0].mxu0 %v1434
      %v1555 = vpop.f32.mrb[0].mxu0
      %v1556 = vadd.f32 0.0, %v1555
      %v1557 = vpop.f32.mrb[0].mxu0
      %1558 = vmatprep.mubr.f32.mxu0 0.0
      %1559 = vmatmul.mubr.f32.gmra.mrb[0].mxu0 %v1436
      %v1560 = vpop.f32.mrb[0].mxu0
      %v1561 = vadd.f32 0.0, %v1560
      %v1562 = vpop.f32.mrb[0].mxu0
      %1563 = vmatprep.mubr.f32.mxu0 0.0
      %1564 = vmatmul.mubr.f32.gmra.mrb[0].mxu0 %v1438
      %v1565 = vpop.f32.mrb[0].mxu0
      %v1566 = vadd.f32 0.0, %v1565
      %v1567 = vpop.f32.mrb[0].mxu0
      %1568 = vmatprep.mubr.f32.mxu0 0.0
      %1569 = vmatmul.mubr.f32.gmra.mrb[0].mxu0 %v1440
      %v1570 = vpop.f32.mrb[0].mxu0
      %v1571 = vadd.f32 0.0, %v1570
      %v1572 = vpop.f32.mrb[0].mxu0
      %1573 = vmatprep.mubr.f32.mxu0 0.0
      %1574 = vmatmul.mubr.f32.gmra.mrb[0].mxu0 %v1442
      %v1575 = vpop.f32.mrb[0].mxu0
      %v1576 = vadd.f32 0.0, %v1575
      %v1577 = vpop.f32.mrb[0].mxu0
      %1578 = vmatprep.mubr.f32.mxu0 0.0
      %1579 = vmatmul.mubr.f32.gmra.mrb[0].mxu0 %v1444
      %v1580 = vpop.f32.mrb[0].mxu0
      %v1581 = vadd.f32 0.0, %v1580
      %v1582 = vpop.f32.mrb[0].mxu0
      %1583 = vmatprep.mubr.f32.mxu0 0.0
      %1584 = vmatmul.mubr.f32.gmra.mrb[0].mxu0 %v1446
      %v1585 = vpop.f32.mrb[0].mxu0
      %v1586 = vadd.f32 0.0, %v1585
      %v1587 = vpop.f32.mrb[0].mxu0
      %1588 = vmatprep.mubr.f32.mxu0 0.0
      %1589 = vmatmul.mubr.f32.gmra.mrb[0].mxu0 %v1448
      %v1590 = vpop.f32.mrb[0].mxu0
      %v1591 = vadd.f32 0.0, %v1590
      %v1592 = vpop.f32.mrb[0].mxu0
      %1593 = vmatprep.mubr.f32.mxu0 0.0
      %1594 = vmatmul.mubr.f32.gmra.mrb[0].mxu0 %v1450
      %v1595 = vpop.f32.mrb[0].mxu0
      %v1596 = vadd.f32 0.0, %v1595
      %v1597 = vpop.f32.mrb[0].mxu0
      %1598 = vmatprep.mubr.f32.mxu0 0.0
      %1599 = vmatmul.mubr.f32.gmra.mrb[0].mxu0 %v1452
      %v1600 = vpop.f32.mrb[0].mxu0
      %v1601 = vadd.f32 0.0, %v1600
      %v1602 = vpop.f32.mrb[0].mxu0
      %1603 = vdwg.mxu0
      %v1604 = vadd.f32 %v1357, %v1521
      %v1605 = vadd.f32 %v1358, %v1526
      %v1606 = vadd.f32 %v1359, %v1531
      %v1607 = vadd.f32 %v1360, %v1536
      %v1608 = vadd.f32 %v1361, %v1541
      %v1609 = vadd.f32 %v1362, %v1546
      %v1610 = vadd.f32 %v1363, %v1551
      %v1611 = vadd.f32 %v1364, %v1556
      %v1612 = vadd.f32 %v1365, %v1561
      %v1613 = vadd.f32 %v1366, %v1566
      %v1614 = vadd.f32 %v1367, %v1571
      %v1615 = vadd.f32 %v1368, %v1576
      %v1616 = vadd.f32 %v1369, %v1581
      %v1617 = vadd.f32 %v1370, %v1586
      %v1618 = vadd.f32 %v1371, %v1591
      %v1619 = vadd.f32 %v1372, %v1596
      %v1620 = vadd.f32 %v1373, %v1601
      %s1621 = scalar_lea.vmem %s1, 384
      %v1622 = vld [vmem:[%s1621] sm:$0xff]
      %v1623 = vld [vmem:[%s1621 + $0x8] sm:$0xff]
      %v1624 = vld [vmem:[%s1621 + $0x10] sm:$0xff]
      %v1625 = vld [vmem:[%s1621 + $0x18] sm:$0xff]
      %v1626 = vld [vmem:[%s1621 + $0x20] sm:$0xff]
      %v1627 = vld [vmem:[%s1621 + $0x28] sm:$0xff]
      %v1628 = vld [vmem:[%s1621 + $0x30] sm:$0xff]
      %v1629 = vld [vmem:[%s1621 + $0x38] sm:$0xff]
      %vm1630 = vcmask 1040384
      %v1631 = vrot.slane %v172, 7
      %v1632 = vrot.slane %v173, 7
      %v1633 = vsel %vm1630, %v1631, %v1632
      %v1634 = vrot.slane %v174, 7
      %v1635 = vsel %vm1630, %v1632, %v1634
      %v1636 = vrot.slane %v175, 7
      %v1637 = vsel %vm1630, %v1634, %v1636
      %v1638 = vrot.slane %v176, 7
      %v1639 = vsel %vm1630, %v1636, %v1638
      %v1640 = vrot.slane %v177, 7
      %v1641 = vsel %vm1630, %v1638, %v1640
      %v1642 = vrot.slane %v178, 7
      %v1643 = vsel %vm1630, %v1640, %v1642
      %v1644 = vrot.slane %v179, 7
      %v1645 = vsel %vm1630, %v1642, %v1644
      %v1646 = vrot.slane %v180, 7
      %v1647 = vsel %vm1630, %v1644, %v1646
      %v1648 = vrot.slane %v181, 7
      %v1649 = vsel %vm1630, %v1646, %v1648
      %v1650 = vrot.slane %v182, 7
      %v1651 = vsel %vm1630, %v1648, %v1650
      %v1652 = vrot.slane %v183, 7
      %v1653 = vsel %vm1630, %v1650, %v1652
      %v1654 = vrot.slane %v184, 7
      %v1655 = vsel %vm1630, %v1652, %v1654
      %v1656 = vrot.slane %v185, 7
      %v1657 = vsel %vm1630, %v1654, %v1656
      %v1658 = vrot.slane %v186, 7
      %v1659 = vsel %vm1630, %v1656, %v1658
      %v1660 = vrot.slane %v187, 7
      %v1661 = vsel %vm1630, %v1658, %v1660
      %v1662 = vrot.slane %v188, 7
      %v1663 = vsel %vm1630, %v1660, %v1662
      %v1664 = vrot.slane %v189, 7
      %v1665 = vsel %vm1630, %v1662, %v1664
      %v1666 = vsel %vm267, %v1633, 0
      %v1668 = vsel %vm267, %v1635, 0
      %v1670 = vsel %vm267, %v1637, 0
      %v1672 = vsel %vm267, %v1639, 0
      %v1674 = vsel %vm267, %v1641, 0
      %v1676 = vsel %vm267, %v1643, 0
      %v1678 = vsel %vm267, %v1645, 0
      %v1680 = vsel %vm267, %v1647, 0
      %v1682 = vsel %vm267, %v1649, 0
      %v1684 = vsel %vm267, %v1651, 0
      %v1686 = vsel %vm267, %v1653, 0
      %v1688 = vsel %vm267, %v1655, 0
      %v1690 = vsel %vm267, %v1657, 0
      %v1692 = vsel %vm267, %v1659, 0
      %v1694 = vsel %vm267, %v1661, 0
      %v1696 = vsel %vm267, %v1663, 0
      %v1698 = vsel %vm267, %v1665, 0
      %1700 = vmatprep.subr.mxu0 0.0
      %1701 = vmatpush1.msra.mxu0 %v1622
      %1702 = vmatprep.subr.mxu0 0.0
      %1703 = vmatpush1.msra.mxu0 %v1623
      %1704 = vmatprep.subr.mxu0 0.0
      %1705 = vmatpush1.msra.mxu0 %v1624
      %1706 = vmatprep.subr.mxu0 0.0
      %1707 = vmatpush1.msra.mxu0 %v1625
      %1708 = vmatprep.subr.mxu0 0.0
      %1709 = vmatpush1.msra.mxu0 %v1626
      %1710 = vmatprep.subr.mxu0 0.0
      %1711 = vmatpush1.msra.mxu0 %v1627
      %1712 = vmatprep.subr.mxu0 0.0
      %1713 = vmatpush1.msra.mxu0 %v1628
      %1714 = vmatprep.subr.mxu0 0.0
      %1715 = vmatpush1.msra.mxu0 %v1629
      %1716 = vmatprep.subr.mxu0 0.0
      %1717 = vmatpush1.msra.mxu0 0.0
      %1718 = vmatprep.subr.mxu0 0.0
      %1719 = vmatpush1.msra.mxu0 0.0
      %1720 = vmatprep.subr.mxu0 0.0
      %1721 = vmatpush1.msra.mxu0 0.0
      %1722 = vmatprep.subr.mxu0 0.0
      %1723 = vmatpush1.msra.mxu0 0.0
      %1724 = vmatprep.subr.mxu0 0.0
      %1725 = vmatpush1.msra.mxu0 0.0
      %1726 = vmatprep.subr.mxu0 0.0
      %1727 = vmatpush1.msra.mxu0 0.0
      %1728 = vmatprep.subr.mxu0 0.0
      %1729 = vmatpush1.msra.mxu0 0.0
      %1730 = vmatprep.subr.mxu0 0.0
      %1731 = vmatpush1.msra.mxu0 0.0
      %1732 = vmatprep.subr.mxu0 0.0
      %1733 = vmatpush1.msra.mxu0 0.0
      %1734 = vmatprep.subr.mxu0 0.0
      %1735 = vmatpush1.msra.mxu0 0.0
      %1736 = vmatprep.subr.mxu0 0.0
      %1737 = vmatpush1.msra.mxu0 0.0
      %1738 = vmatprep.subr.mxu0 0.0
      %1739 = vmatpush1.msra.mxu0 0.0
      %1740 = vmatprep.subr.mxu0 0.0
      %1741 = vmatpush1.msra.mxu0 0.0
      %1742 = vmatprep.subr.mxu0 0.0
      %1743 = vmatpush1.msra.mxu0 0.0
      %1744 = vmatprep.subr.mxu0 0.0
      %1745 = vmatpush1.msra.mxu0 0.0
      %1746 = vmatprep.subr.mxu0 0.0
      %1747 = vmatpush1.msra.mxu0 0.0
      %1748 = vmatprep.subr.mxu0 0.0
      %1749 = vmatpush1.msra.mxu0 0.0
      %1750 = vmatprep.subr.mxu0 0.0
      %1751 = vmatpush1.msra.mxu0 0.0
      %1752 = vmatprep.subr.mxu0 0.0
      %1753 = vmatpush1.msra.mxu0 0.0
      %1754 = vmatprep.subr.mxu0 0.0
      %1755 = vmatpush1.msra.mxu0 0.0
      %1756 = vmatprep.subr.mxu0 0.0
      %1757 = vmatpush1.msra.mxu0 0.0
      %1758 = vmatprep.subr.mxu0 0.0
      %1759 = vmatpush1.msra.mxu0 0.0
      %1760 = vmatprep.subr.mxu0 0.0
      %1761 = vmatpush1.msra.mxu0 0.0
      %1762 = vmatprep.subr.mxu0 0.0
      %1763 = vmatpush1.msra.mxu0 0.0
      %1764 = vmatprep.mubr.f32.mxu0 0.0
      %1765 = vmatmul.mubr.f32.gmra.mrb[0].mxu0 %v1666
      %v1766 = vpop.f32.mrb[0].mxu0
      %v1767 = vadd.f32 0.0, %v1766
      %v1768 = vpop.f32.mrb[0].mxu0
      %1769 = vmatprep.mubr.f32.mxu0 0.0
      %1770 = vmatmul.mubr.f32.gmra.mrb[0].mxu0 %v1668
      %v1771 = vpop.f32.mrb[0].mxu0
      %v1772 = vadd.f32 0.0, %v1771
      %v1773 = vpop.f32.mrb[0].mxu0
      %1774 = vmatprep.mubr.f32.mxu0 0.0
      %1775 = vmatmul.mubr.f32.gmra.mrb[0].mxu0 %v1670
      %v1776 = vpop.f32.mrb[0].mxu0
      %v1777 = vadd.f32 0.0, %v1776
      %v1778 = vpop.f32.mrb[0].mxu0
      %1779 = vmatprep.mubr.f32.mxu0 0.0
      %1780 = vmatmul.mubr.f32.gmra.mrb[0].mxu0 %v1672
      %v1781 = vpop.f32.mrb[0].mxu0
      %v1782 = vadd.f32 0.0, %v1781
      %v1783 = vpop.f32.mrb[0].mxu0
      %1784 = vmatprep.mubr.f32.mxu0 0.0
      %1785 = vmatmul.mubr.f32.gmra.mrb[0].mxu0 %v1674
      %v1786 = vpop.f32.mrb[0].mxu0
      %v1787 = vadd.f32 0.0, %v1786
      %v1788 = vpop.f32.mrb[0].mxu0
      %1789 = vmatprep.mubr.f32.mxu0 0.0
      %1790 = vmatmul.mubr.f32.gmra.mrb[0].mxu0 %v1676
      %v1791 = vpop.f32.mrb[0].mxu0
      %v1792 = vadd.f32 0.0, %v1791
      %v1793 = vpop.f32.mrb[0].mxu0
      %1794 = vmatprep.mubr.f32.mxu0 0.0
      %1795 = vmatmul.mubr.f32.gmra.mrb[0].mxu0 %v1678
      %v1796 = vpop.f32.mrb[0].mxu0
      %v1797 = vadd.f32 0.0, %v1796
      %v1798 = vpop.f32.mrb[0].mxu0
      %1799 = vmatprep.mubr.f32.mxu0 0.0
      %1800 = vmatmul.mubr.f32.gmra.mrb[0].mxu0 %v1680
      %v1801 = vpop.f32.mrb[0].mxu0
      %v1802 = vadd.f32 0.0, %v1801
      %v1803 = vpop.f32.mrb[0].mxu0
      %1804 = vmatprep.mubr.f32.mxu0 0.0
      %1805 = vmatmul.mubr.f32.gmra.mrb[0].mxu0 %v1682
      %v1806 = vpop.f32.mrb[0].mxu0
      %v1807 = vadd.f32 0.0, %v1806
      %v1808 = vpop.f32.mrb[0].mxu0
      %1809 = vmatprep.mubr.f32.mxu0 0.0
      %1810 = vmatmul.mubr.f32.gmra.mrb[0].mxu0 %v1684
      %v1811 = vpop.f32.mrb[0].mxu0
      %v1812 = vadd.f32 0.0, %v1811
      %v1813 = vpop.f32.mrb[0].mxu0
      %1814 = vmatprep.mubr.f32.mxu0 0.0
      %1815 = vmatmul.mubr.f32.gmra.mrb[0].mxu0 %v1686
      %v1816 = vpop.f32.mrb[0].mxu0
      %v1817 = vadd.f32 0.0, %v1816
      %v1818 = vpop.f32.mrb[0].mxu0
      %1819 = vmatprep.mubr.f32.mxu0 0.0
      %1820 = vmatmul.mubr.f32.gmra.mrb[0].mxu0 %v1688
      %v1821 = vpop.f32.mrb[0].mxu0
      %v1822 = vadd.f32 0.0, %v1821
      %v1823 = vpop.f32.mrb[0].mxu0
      %1824 = vmatprep.mubr.f32.mxu0 0.0
      %1825 = vmatmul.mubr.f32.gmra.mrb[0].mxu0 %v1690
      %v1826 = vpop.f32.mrb[0].mxu0
      %v1827 = vadd.f32 0.0, %v1826
      %v1828 = vpop.f32.mrb[0].mxu0
      %1829 = vmatprep.mubr.f32.mxu0 0.0
      %1830 = vmatmul.mubr.f32.gmra.mrb[0].mxu0 %v1692
      %v1831 = vpop.f32.mrb[0].mxu0
      %v1832 = vadd.f32 0.0, %v1831
      %v1833 = vpop.f32.mrb[0].mxu0
      %1834 = vmatprep.mubr.f32.mxu0 0.0
      %1835 = vmatmul.mubr.f32.gmra.mrb[0].mxu0 %v1694
      %v1836 = vpop.f32.mrb[0].mxu0
      %v1837 = vadd.f32 0.0, %v1836
      %v1838 = vpop.f32.mrb[0].mxu0
      %1839 = vmatprep.mubr.f32.mxu0 0.0
      %1840 = vmatmul.mubr.f32.gmra.mrb[0].mxu0 %v1696
      %v1841 = vpop.f32.mrb[0].mxu0
      %v1842 = vadd.f32 0.0, %v1841
      %v1843 = vpop.f32.mrb[0].mxu0
      %1844 = vmatprep.mubr.f32.mxu0 0.0
      %1845 = vmatmul.mubr.f32.gmra.mrb[0].mxu0 %v1698
      %v1846 = vpop.f32.mrb[0].mxu0
      %v1847 = vadd.f32 0.0, %v1846
      %v1848 = vpop.f32.mrb[0].mxu0
      %1849 = vdwg.mxu0
      %v1850 = vadd.f32 %v1604, %v1767
      %v1851 = vadd.f32 %v1605, %v1772
      %v1852 = vadd.f32 %v1606, %v1777
      %v1853 = vadd.f32 %v1607, %v1782
      %v1854 = vadd.f32 %v1608, %v1787
      %v1855 = vadd.f32 %v1609, %v1792
      %v1856 = vadd.f32 %v1610, %v1797
      %v1857 = vadd.f32 %v1611, %v1802
      %v1858 = vadd.f32 %v1612, %v1807
      %v1859 = vadd.f32 %v1613, %v1812
      %v1860 = vadd.f32 %v1614, %v1817
      %v1861 = vadd.f32 %v1615, %v1822
      %v1862 = vadd.f32 %v1616, %v1827
      %v1863 = vadd.f32 %v1617, %v1832
      %v1864 = vadd.f32 %v1618, %v1837
      %v1865 = vadd.f32 %v1619, %v1842
      %v1866 = vadd.f32 %v1620, %v1847
      %s1867 = scalar_lea.vmem %s1, 448
      %v1868 = vld [vmem:[%s1867] sm:$0xff]
      %v1869 = vld [vmem:[%s1867 + $0x8] sm:$0xff]
      %v1870 = vld [vmem:[%s1867 + $0x10] sm:$0xff]
      %v1871 = vld [vmem:[%s1867 + $0x18] sm:$0xff]
      %v1872 = vld [vmem:[%s1867 + $0x20] sm:$0xff]
      %v1873 = vld [vmem:[%s1867 + $0x28] sm:$0xff]
      %v1874 = vld [vmem:[%s1867 + $0x30] sm:$0xff]
      %v1875 = vld [vmem:[%s1867 + $0x38] sm:$0xff]
      %v1876 = vsel %vm267, %v188, 0
      %v1878 = vsel %vm267, %v189, 0
      %1880 = vmatprep.subr.mxu0 0.0
      %1881 = vmatpush1.msra.mxu0 %v1868
      %1882 = vmatprep.subr.mxu0 0.0
      %1883 = vmatpush1.msra.mxu0 %v1869
      %1884 = vmatprep.subr.mxu0 0.0
      %1885 = vmatpush1.msra.mxu0 %v1870
      %1886 = vmatprep.subr.mxu0 0.0
      %1887 = vmatpush1.msra.mxu0 %v1871
      %1888 = vmatprep.subr.mxu0 0.0
      %1889 = vmatpush1.msra.mxu0 %v1872
      %1890 = vmatprep.subr.mxu0 0.0
      %1891 = vmatpush1.msra.mxu0 %v1873
      %1892 = vmatprep.subr.mxu0 0.0
      %1893 = vmatpush1.msra.mxu0 %v1874
      %1894 = vmatprep.subr.mxu0 0.0
      %1895 = vmatpush1.msra.mxu0 %v1875
      %1896 = vmatprep.subr.mxu0 0.0
      %1897 = vmatpush1.msra.mxu0 0.0
      %1898 = vmatprep.subr.mxu0 0.0
      %1899 = vmatpush1.msra.mxu0 0.0
      %1900 = vmatprep.subr.mxu0 0.0
      %1901 = vmatpush1.msra.mxu0 0.0
      %1902 = vmatprep.subr.mxu0 0.0
      %1903 = vmatpush1.msra.mxu0 0.0
      %1904 = vmatprep.subr.mxu0 0.0
      %1905 = vmatpush1.msra.mxu0 0.0
      %1906 = vmatprep.subr.mxu0 0.0
      %1907 = vmatpush1.msra.mxu0 0.0
      %1908 = vmatprep.subr.mxu0 0.0
      %1909 = vmatpush1.msra.mxu0 0.0
      %1910 = vmatprep.subr.mxu0 0.0
      %1911 = vmatpush1.msra.mxu0 0.0
      %1912 = vmatprep.subr.mxu0 0.0
      %1913 = vmatpush1.msra.mxu0 0.0
      %1914 = vmatprep.subr.mxu0 0.0
      %1915 = vmatpush1.msra.mxu0 0.0
      %1916 = vmatprep.subr.mxu0 0.0
      %1917 = vmatpush1.msra.mxu0 0.0
      %1918 = vmatprep.subr.mxu0 0.0
      %1919 = vmatpush1.msra.mxu0 0.0
      %1920 = vmatprep.subr.mxu0 0.0
      %1921 = vmatpush1.msra.mxu0 0.0
      %1922 = vmatprep.subr.mxu0 0.0
      %1923 = vmatpush1.msra.mxu0 0.0
      %1924 = vmatprep.subr.mxu0 0.0
      %1925 = vmatpush1.msra.mxu0 0.0
      %1926 = vmatprep.subr.mxu0 0.0
      %1927 = vmatpush1.msra.mxu0 0.0
      %1928 = vmatprep.subr.mxu0 0.0
      %1929 = vmatpush1.msra.mxu0 0.0
      %1930 = vmatprep.subr.mxu0 0.0
      %1931 = vmatpush1.msra.mxu0 0.0
      %1932 = vmatprep.subr.mxu0 0.0
      %1933 = vmatpush1.msra.mxu0 0.0
      %1934 = vmatprep.subr.mxu0 0.0
      %1935 = vmatpush1.msra.mxu0 0.0
      %1936 = vmatprep.subr.mxu0 0.0
      %1937 = vmatpush1.msra.mxu0 0.0
      %1938 = vmatprep.subr.mxu0 0.0
      %1939 = vmatpush1.msra.mxu0 0.0
      %1940 = vmatprep.subr.mxu0 0.0
      %1941 = vmatpush1.msra.mxu0 0.0
      %1942 = vmatprep.subr.mxu0 0.0
      %1943 = vmatpush1.msra.mxu0 0.0
      %1944 = vmatprep.mubr.f32.mxu0 0.0
      %1945 = vmatmul.mubr.f32.gmra.mrb[0].mxu0 %v456
      %v1946 = vpop.f32.mrb[0].mxu0
      %v1947 = vadd.f32 0.0, %v1946
      %v1948 = vpop.f32.mrb[0].mxu0
      %1949 = vmatprep.mubr.f32.mxu0 0.0
      %1950 = vmatmul.mubr.f32.gmra.mrb[0].mxu0 %v458
      %v1951 = vpop.f32.mrb[0].mxu0
      %v1952 = vadd.f32 0.0, %v1951
      %v1953 = vpop.f32.mrb[0].mxu0
      %1954 = vmatprep.mubr.f32.mxu0 0.0
      %1955 = vmatmul.mubr.f32.gmra.mrb[0].mxu0 %v460
      %v1956 = vpop.f32.mrb[0].mxu0
      %v1957 = vadd.f32 0.0, %v1956
      %v1958 = vpop.f32.mrb[0].mxu0
      %1959 = vmatprep.mubr.f32.mxu0 0.0
      %1960 = vmatmul.mubr.f32.gmra.mrb[0].mxu0 %v462
      %v1961 = vpop.f32.mrb[0].mxu0
      %v1962 = vadd.f32 0.0, %v1961
      %v1963 = vpop.f32.mrb[0].mxu0
      %1964 = vmatprep.mubr.f32.mxu0 0.0
      %1965 = vmatmul.mubr.f32.gmra.mrb[0].mxu0 %v464
      %v1966 = vpop.f32.mrb[0].mxu0
      %v1967 = vadd.f32 0.0, %v1966
      %v1968 = vpop.f32.mrb[0].mxu0
      %1969 = vmatprep.mubr.f32.mxu0 0.0
      %1970 = vmatmul.mubr.f32.gmra.mrb[0].mxu0 %v466
      %v1971 = vpop.f32.mrb[0].mxu0
      %v1972 = vadd.f32 0.0, %v1971
      %v1973 = vpop.f32.mrb[0].mxu0
      %1974 = vmatprep.mubr.f32.mxu0 0.0
      %1975 = vmatmul.mubr.f32.gmra.mrb[0].mxu0 %v468
      %v1976 = vpop.f32.mrb[0].mxu0
      %v1977 = vadd.f32 0.0, %v1976
      %v1978 = vpop.f32.mrb[0].mxu0
      %1979 = vmatprep.mubr.f32.mxu0 0.0
      %1980 = vmatmul.mubr.f32.gmra.mrb[0].mxu0 %v470
      %v1981 = vpop.f32.mrb[0].mxu0
      %v1982 = vadd.f32 0.0, %v1981
      %v1983 = vpop.f32.mrb[0].mxu0
      %1984 = vmatprep.mubr.f32.mxu0 0.0
      %1985 = vmatmul.mubr.f32.gmra.mrb[0].mxu0 %v472
      %v1986 = vpop.f32.mrb[0].mxu0
      %v1987 = vadd.f32 0.0, %v1986
      %v1988 = vpop.f32.mrb[0].mxu0
      %1989 = vmatprep.mubr.f32.mxu0 0.0
      %1990 = vmatmul.mubr.f32.gmra.mrb[0].mxu0 %v474
      %v1991 = vpop.f32.mrb[0].mxu0
      %v1992 = vadd.f32 0.0, %v1991
      %v1993 = vpop.f32.mrb[0].mxu0
      %1994 = vmatprep.mubr.f32.mxu0 0.0
      %1995 = vmatmul.mubr.f32.gmra.mrb[0].mxu0 %v476
      %v1996 = vpop.f32.mrb[0].mxu0
      %v1997 = vadd.f32 0.0, %v1996
      %v1998 = vpop.f32.mrb[0].mxu0
      %1999 = vmatprep.mubr.f32.mxu0 0.0
      %2000 = vmatmul.mubr.f32.gmra.mrb[0].mxu0 %v478
      %v2001 = vpop.f32.mrb[0].mxu0
      %v2002 = vadd.f32 0.0, %v2001
      %v2003 = vpop.f32.mrb[0].mxu0
      %2004 = vmatprep.mubr.f32.mxu0 0.0
      %2005 = vmatmul.mubr.f32.gmra.mrb[0].mxu0 %v480
      %v2006 = vpop.f32.mrb[0].mxu0
      %v2007 = vadd.f32 0.0, %v2006
      %v2008 = vpop.f32.mrb[0].mxu0
      %2009 = vmatprep.mubr.f32.mxu0 0.0
      %2010 = vmatmul.mubr.f32.gmra.mrb[0].mxu0 %v482
      %v2011 = vpop.f32.mrb[0].mxu0
      %v2012 = vadd.f32 0.0, %v2011
      %v2013 = vpop.f32.mrb[0].mxu0
      %2014 = vmatprep.mubr.f32.mxu0 0.0
      %2015 = vmatmul.mubr.f32.gmra.mrb[0].mxu0 %v484
      %v2016 = vpop.f32.mrb[0].mxu0
      %v2017 = vadd.f32 0.0, %v2016
      %v2018 = vpop.f32.mrb[0].mxu0
      %2019 = vmatprep.mubr.f32.mxu0 0.0
      %2020 = vmatmul.mubr.f32.gmra.mrb[0].mxu0 %v1876
      %v2021 = vpop.f32.mrb[0].mxu0
      %v2022 = vadd.f32 0.0, %v2021
      %v2023 = vpop.f32.mrb[0].mxu0
      %2024 = vmatprep.mubr.f32.mxu0 0.0
      %2025 = vmatmul.mubr.f32.gmra.mrb[0].mxu0 %v1878
      %v2026 = vpop.f32.mrb[0].mxu0
      %v2027 = vadd.f32 0.0, %v2026
      %v2028 = vpop.f32.mrb[0].mxu0
      %2029 = vdwg.mxu0
      %v2030 = vadd.f32 %v1850, %v1947
      %v2031 = vadd.f32 %v1851, %v1952
      %v2032 = vadd.f32 %v1852, %v1957
      %v2033 = vadd.f32 %v1853, %v1962
      %v2034 = vadd.f32 %v1854, %v1967
      %v2035 = vadd.f32 %v1855, %v1972
      %v2036 = vadd.f32 %v1856, %v1977
      %v2037 = vadd.f32 %v1857, %v1982
      %v2038 = vadd.f32 %v1858, %v1987
      %v2039 = vadd.f32 %v1859, %v1992
      %v2040 = vadd.f32 %v1860, %v1997
      %v2041 = vadd.f32 %v1861, %v2002
      %v2042 = vadd.f32 %v1862, %v2007
      %v2043 = vadd.f32 %v1863, %v2012
      %v2044 = vadd.f32 %v1864, %v2017
      %v2045 = vadd.f32 %v1865, %v2022
      %v2046 = vadd.f32 %v1866, %v2027
      %s2047 = scalar_lea.vmem %s1, 512
      %v2048 = vld [vmem:[%s2047] sm:$0xff]
      %v2049 = vld [vmem:[%s2047 + $0x8] sm:$0xff]
      %v2050 = vld [vmem:[%s2047 + $0x10] sm:$0xff]
      %v2051 = vld [vmem:[%s2047 + $0x18] sm:$0xff]
      %v2052 = vld [vmem:[%s2047 + $0x20] sm:$0xff]
      %v2053 = vld [vmem:[%s2047 + $0x28] sm:$0xff]
      %v2054 = vld [vmem:[%s2047 + $0x30] sm:$0xff]
      %v2055 = vld [vmem:[%s2047 + $0x38] sm:$0xff]
      %v2057 = vrot.slane %v189, 1
      %v2058 = vsel %vm231, %v265, %v2057
      %v2059 = vrot.slane %v190, 1
      %v2060 = vsel %vm231, %v2057, %v2059
      %v2061 = vsel %vm267, %v2058, 0
      %v2063 = vsel %vm267, %v2060, 0
      %2065 = vmatprep.subr.mxu0 0.0
      %2066 = vmatpush1.msra.mxu0 %v2048
      %2067 = vmatprep.subr.mxu0 0.0
      %2068 = vmatpush1.msra.mxu0 %v2049
      %2069 = vmatprep.subr.mxu0 0.0
      %2070 = vmatpush1.msra.mxu0 %v2050
      %2071 = vmatprep.subr.mxu0 0.0
      %2072 = vmatpush1.msra.mxu0 %v2051
      %2073 = vmatprep.subr.mxu0 0.0
      %2074 = vmatpush1.msra.mxu0 %v2052
      %2075 = vmatprep.subr.mxu0 0.0
      %2076 = vmatpush1.msra.mxu0 %v2053
      %2077 = vmatprep.subr.mxu0 0.0
      %2078 = vmatpush1.msra.mxu0 %v2054
      %2079 = vmatprep.subr.mxu0 0.0
      %2080 = vmatpush1.msra.mxu0 %v2055
      %2081 = vmatprep.subr.mxu0 0.0
      %2082 = vmatpush1.msra.mxu0 0.0
      %2083 = vmatprep.subr.mxu0 0.0
      %2084 = vmatpush1.msra.mxu0 0.0
      %2085 = vmatprep.subr.mxu0 0.0
      %2086 = vmatpush1.msra.mxu0 0.0
      %2087 = vmatprep.subr.mxu0 0.0
      %2088 = vmatpush1.msra.mxu0 0.0
      %2089 = vmatprep.subr.mxu0 0.0
      %2090 = vmatpush1.msra.mxu0 0.0
      %2091 = vmatprep.subr.mxu0 0.0
      %2092 = vmatpush1.msra.mxu0 0.0
      %2093 = vmatprep.subr.mxu0 0.0
      %2094 = vmatpush1.msra.mxu0 0.0
      %2095 = vmatprep.subr.mxu0 0.0
      %2096 = vmatpush1.msra.mxu0 0.0
      %2097 = vmatprep.subr.mxu0 0.0
      %2098 = vmatpush1.msra.mxu0 0.0
      %2099 = vmatprep.subr.mxu0 0.0
      %2100 = vmatpush1.msra.mxu0 0.0
      %2101 = vmatprep.subr.mxu0 0.0
      %2102 = vmatpush1.msra.mxu0 0.0
      %2103 = vmatprep.subr.mxu0 0.0
      %2104 = vmatpush1.msra.mxu0 0.0
      %2105 = vmatprep.subr.mxu0 0.0
      %2106 = vmatpush1.msra.mxu0 0.0
      %2107 = vmatprep.subr.mxu0 0.0
      %2108 = vmatpush1.msra.mxu0 0.0
      %2109 = vmatprep.subr.mxu0 0.0
      %2110 = vmatpush1.msra.mxu0 0.0
      %2111 = vmatprep.subr.mxu0 0.0
      %2112 = vmatpush1.msra.mxu0 0.0
      %2113 = vmatprep.subr.mxu0 0.0
      %2114 = vmatpush1.msra.mxu0 0.0
      %2115 = vmatprep.subr.mxu0 0.0
      %2116 = vmatpush1.msra.mxu0 0.0
      %2117 = vmatprep.subr.mxu0 0.0
      %2118 = vmatpush1.msra.mxu0 0.0
      %2119 = vmatprep.subr.mxu0 0.0
      %2120 = vmatpush1.msra.mxu0 0.0
      %2121 = vmatprep.subr.mxu0 0.0
      %2122 = vmatpush1.msra.mxu0 0.0
      %2123 = vmatprep.subr.mxu0 0.0
      %2124 = vmatpush1.msra.mxu0 0.0
      %2125 = vmatprep.subr.mxu0 0.0
      %2126 = vmatpush1.msra.mxu0 0.0
      %2127 = vmatprep.subr.mxu0 0.0
      %2128 = vmatpush1.msra.mxu0 0.0
      %2129 = vmatprep.mubr.f32.mxu0 0.0
      %2130 = vmatmul.mubr.f32.gmra.mrb[0].mxu0 %v272
      %v2131 = vpop.f32.mrb[0].mxu0
      %v2132 = vadd.f32 0.0, %v2131
      %v2133 = vpop.f32.mrb[0].mxu0
      %2134 = vmatprep.mubr.f32.mxu0 0.0
      %2135 = vmatmul.mubr.f32.gmra.mrb[0].mxu0 %v274
      %v2136 = vpop.f32.mrb[0].mxu0
      %v2137 = vadd.f32 0.0, %v2136
      %v2138 = vpop.f32.mrb[0].mxu0
      %2139 = vmatprep.mubr.f32.mxu0 0.0
      %2140 = vmatmul.mubr.f32.gmra.mrb[0].mxu0 %v276
      %v2141 = vpop.f32.mrb[0].mxu0
      %v2142 = vadd.f32 0.0, %v2141
      %v2143 = vpop.f32.mrb[0].mxu0
      %2144 = vmatprep.mubr.f32.mxu0 0.0
      %2145 = vmatmul.mubr.f32.gmra.mrb[0].mxu0 %v278
      %v2146 = vpop.f32.mrb[0].mxu0
      %v2147 = vadd.f32 0.0, %v2146
      %v2148 = vpop.f32.mrb[0].mxu0
      %2149 = vmatprep.mubr.f32.mxu0 0.0
      %2150 = vmatmul.mubr.f32.gmra.mrb[0].mxu0 %v280
      %v2151 = vpop.f32.mrb[0].mxu0
      %v2152 = vadd.f32 0.0, %v2151
      %v2153 = vpop.f32.mrb[0].mxu0
      %2154 = vmatprep.mubr.f32.mxu0 0.0
      %2155 = vmatmul.mubr.f32.gmra.mrb[0].mxu0 %v282
      %v2156 = vpop.f32.mrb[0].mxu0
      %v2157 = vadd.f32 0.0, %v2156
      %v2158 = vpop.f32.mrb[0].mxu0
      %2159 = vmatprep.mubr.f32.mxu0 0.0
      %2160 = vmatmul.mubr.f32.gmra.mrb[0].mxu0 %v284
      %v2161 = vpop.f32.mrb[0].mxu0
      %v2162 = vadd.f32 0.0, %v2161
      %v2163 = vpop.f32.mrb[0].mxu0
      %2164 = vmatprep.mubr.f32.mxu0 0.0
      %2165 = vmatmul.mubr.f32.gmra.mrb[0].mxu0 %v286
      %v2166 = vpop.f32.mrb[0].mxu0
      %v2167 = vadd.f32 0.0, %v2166
      %v2168 = vpop.f32.mrb[0].mxu0
      %2169 = vmatprep.mubr.f32.mxu0 0.0
      %2170 = vmatmul.mubr.f32.gmra.mrb[0].mxu0 %v288
      %v2171 = vpop.f32.mrb[0].mxu0
      %v2172 = vadd.f32 0.0, %v2171
      %v2173 = vpop.f32.mrb[0].mxu0
      %2174 = vmatprep.mubr.f32.mxu0 0.0
      %2175 = vmatmul.mubr.f32.gmra.mrb[0].mxu0 %v290
      %v2176 = vpop.f32.mrb[0].mxu0
      %v2177 = vadd.f32 0.0, %v2176
      %v2178 = vpop.f32.mrb[0].mxu0
      %2179 = vmatprep.mubr.f32.mxu0 0.0
      %2180 = vmatmul.mubr.f32.gmra.mrb[0].mxu0 %v292
      %v2181 = vpop.f32.mrb[0].mxu0
      %v2182 = vadd.f32 0.0, %v2181
      %v2183 = vpop.f32.mrb[0].mxu0
      %2184 = vmatprep.mubr.f32.mxu0 0.0
      %2185 = vmatmul.mubr.f32.gmra.mrb[0].mxu0 %v294
      %v2186 = vpop.f32.mrb[0].mxu0
      %v2187 = vadd.f32 0.0, %v2186
      %v2188 = vpop.f32.mrb[0].mxu0
      %2189 = vmatprep.mubr.f32.mxu0 0.0
      %2190 = vmatmul.mubr.f32.gmra.mrb[0].mxu0 %v296
      %v2191 = vpop.f32.mrb[0].mxu0
      %v2192 = vadd.f32 0.0, %v2191
      %v2193 = vpop.f32.mrb[0].mxu0
      %2194 = vmatprep.mubr.f32.mxu0 0.0
      %2195 = vmatmul.mubr.f32.gmra.mrb[0].mxu0 %v298
      %v2196 = vpop.f32.mrb[0].mxu0
      %v2197 = vadd.f32 0.0, %v2196
      %v2198 = vpop.f32.mrb[0].mxu0
      %2199 = vmatprep.mubr.f32.mxu0 0.0
      %2200 = vmatmul.mubr.f32.gmra.mrb[0].mxu0 %v300
      %v2201 = vpop.f32.mrb[0].mxu0
      %v2202 = vadd.f32 0.0, %v2201
      %v2203 = vpop.f32.mrb[0].mxu0
      %2204 = vmatprep.mubr.f32.mxu0 0.0
      %2205 = vmatmul.mubr.f32.gmra.mrb[0].mxu0 %v2061
      %v2206 = vpop.f32.mrb[0].mxu0
      %v2207 = vadd.f32 0.0, %v2206
      %v2208 = vpop.f32.mrb[0].mxu0
      %2209 = vmatprep.mubr.f32.mxu0 0.0
      %2210 = vmatmul.mubr.f32.gmra.mrb[0].mxu0 %v2063
      %v2211 = vpop.f32.mrb[0].mxu0
      %v2212 = vadd.f32 0.0, %v2211
      %v2213 = vpop.f32.mrb[0].mxu0
      %2214 = vdwg.mxu0
      %v2215 = vadd.f32 %v2030, %v2132
      %v2216 = vadd.f32 %v2031, %v2137
      %v2217 = vadd.f32 %v2032, %v2142
      %v2218 = vadd.f32 %v2033, %v2147
      %v2219 = vadd.f32 %v2034, %v2152
      %v2220 = vadd.f32 %v2035, %v2157
      %v2221 = vadd.f32 %v2036, %v2162
      %v2222 = vadd.f32 %v2037, %v2167
      %v2223 = vadd.f32 %v2038, %v2172
      %v2224 = vadd.f32 %v2039, %v2177
      %v2225 = vadd.f32 %v2040, %v2182
      %v2226 = vadd.f32 %v2041, %v2187
      %v2227 = vadd.f32 %v2042, %v2192
      %v2228 = vadd.f32 %v2043, %v2197
      %v2229 = vadd.f32 %v2044, %v2202
      %v2230 = vadd.f32 %v2045, %v2207
      %v2231 = vadd.f32 %v2046, %v2212
      %s2232 = scalar_lea.vmem %s1, 576
      %v2233 = vld [vmem:[%s2232] sm:$0xff]
      %v2234 = vld [vmem:[%s2232 + $0x8] sm:$0xff]
      %v2235 = vld [vmem:[%s2232 + $0x10] sm:$0xff]
      %v2236 = vld [vmem:[%s2232 + $0x18] sm:$0xff]
      %v2237 = vld [vmem:[%s2232 + $0x20] sm:$0xff]
      %v2238 = vld [vmem:[%s2232 + $0x28] sm:$0xff]
      %v2239 = vld [vmem:[%s2232 + $0x30] sm:$0xff]
      %v2240 = vld [vmem:[%s2232 + $0x38] sm:$0xff]
      %v2241 = vrot.slane %v189, 2
      %v2242 = vsel %vm645, %v679, %v2241
      %v2243 = vrot.slane %v190, 2
      %v2244 = vsel %vm645, %v2241, %v2243
      %v2245 = vsel %vm267, %v2242, 0
      %v2247 = vsel %vm267, %v2244, 0
      %2249 = vmatprep.subr.mxu0 0.0
      %2250 = vmatpush1.msra.mxu0 %v2233
      %2251 = vmatprep.subr.mxu0 0.0
      %2252 = vmatpush1.msra.mxu0 %v2234
      %2253 = vmatprep.subr.mxu0 0.0
      %2254 = vmatpush1.msra.mxu0 %v2235
      %2255 = vmatprep.subr.mxu0 0.0
      %2256 = vmatpush1.msra.mxu0 %v2236
      %2257 = vmatprep.subr.mxu0 0.0
      %2258 = vmatpush1.msra.mxu0 %v2237
      %2259 = vmatprep.subr.mxu0 0.0
      %2260 = vmatpush1.msra.mxu0 %v2238
      %2261 = vmatprep.subr.mxu0 0.0
      %2262 = vmatpush1.msra.mxu0 %v2239
      %2263 = vmatprep.subr.mxu0 0.0
      %2264 = vmatpush1.msra.mxu0 %v2240
      %2265 = vmatprep.subr.mxu0 0.0
      %2266 = vmatpush1.msra.mxu0 0.0
      %2267 = vmatprep.subr.mxu0 0.0
      %2268 = vmatpush1.msra.mxu0 0.0
      %2269 = vmatprep.subr.mxu0 0.0
      %2270 = vmatpush1.msra.mxu0 0.0
      %2271 = vmatprep.subr.mxu0 0.0
      %2272 = vmatpush1.msra.mxu0 0.0
      %2273 = vmatprep.subr.mxu0 0.0
      %2274 = vmatpush1.msra.mxu0 0.0
      %2275 = vmatprep.subr.mxu0 0.0
      %2276 = vmatpush1.msra.mxu0 0.0
      %2277 = vmatprep.subr.mxu0 0.0
      %2278 = vmatpush1.msra.mxu0 0.0
      %2279 = vmatprep.subr.mxu0 0.0
      %2280 = vmatpush1.msra.mxu0 0.0
      %2281 = vmatprep.subr.mxu0 0.0
      %2282 = vmatpush1.msra.mxu0 0.0
      %2283 = vmatprep.subr.mxu0 0.0
      %2284 = vmatpush1.msra.mxu0 0.0
      %2285 = vmatprep.subr.mxu0 0.0
      %2286 = vmatpush1.msra.mxu0 0.0
      %2287 = vmatprep.subr.mxu0 0.0
      %2288 = vmatpush1.msra.mxu0 0.0
      %2289 = vmatprep.subr.mxu0 0.0
      %2290 = vmatpush1.msra.mxu0 0.0
      %2291 = vmatprep.subr.mxu0 0.0
      %2292 = vmatpush1.msra.mxu0 0.0
      %2293 = vmatprep.subr.mxu0 0.0
      %2294 = vmatpush1.msra.mxu0 0.0
      %2295 = vmatprep.subr.mxu0 0.0
      %2296 = vmatpush1.msra.mxu0 0.0
      %2297 = vmatprep.subr.mxu0 0.0
      %2298 = vmatpush1.msra.mxu0 0.0
      %2299 = vmatprep.subr.mxu0 0.0
      %2300 = vmatpush1.msra.mxu0 0.0
      %2301 = vmatprep.subr.mxu0 0.0
      %2302 = vmatpush1.msra.mxu0 0.0
      %2303 = vmatprep.subr.mxu0 0.0
      %2304 = vmatpush1.msra.mxu0 0.0
      %2305 = vmatprep.subr.mxu0 0.0
      %2306 = vmatpush1.msra.mxu0 0.0
      %2307 = vmatprep.subr.mxu0 0.0
      %2308 = vmatpush1.msra.mxu0 0.0
      %2309 = vmatprep.subr.mxu0 0.0
      %2310 = vmatpush1.msra.mxu0 0.0
      %2311 = vmatprep.subr.mxu0 0.0
      %2312 = vmatpush1.msra.mxu0 0.0
      %2313 = vmatprep.mubr.f32.mxu0 0.0
      %2314 = vmatmul.mubr.f32.gmra.mrb[0].mxu0 %v685
      %v2315 = vpop.f32.mrb[0].mxu0
      %v2316 = vadd.f32 0.0, %v2315
      %v2317 = vpop.f32.mrb[0].mxu0
      %2318 = vmatprep.mubr.f32.mxu0 0.0
      %2319 = vmatmul.mubr.f32.gmra.mrb[0].mxu0 %v687
      %v2320 = vpop.f32.mrb[0].mxu0
      %v2321 = vadd.f32 0.0, %v2320
      %v2322 = vpop.f32.mrb[0].mxu0
      %2323 = vmatprep.mubr.f32.mxu0 0.0
      %2324 = vmatmul.mubr.f32.gmra.mrb[0].mxu0 %v689
      %v2325 = vpop.f32.mrb[0].mxu0
      %v2326 = vadd.f32 0.0, %v2325
      %v2327 = vpop.f32.mrb[0].mxu0
      %2328 = vmatprep.mubr.f32.mxu0 0.0
      %2329 = vmatmul.mubr.f32.gmra.mrb[0].mxu0 %v691
      %v2330 = vpop.f32.mrb[0].mxu0
      %v2331 = vadd.f32 0.0, %v2330
      %v2332 = vpop.f32.mrb[0].mxu0
      %2333 = vmatprep.mubr.f32.mxu0 0.0
      %2334 = vmatmul.mubr.f32.gmra.mrb[0].mxu0 %v693
      %v2335 = vpop.f32.mrb[0].mxu0
      %v2336 = vadd.f32 0.0, %v2335
      %v2337 = vpop.f32.mrb[0].mxu0
      %2338 = vmatprep.mubr.f32.mxu0 0.0
      %2339 = vmatmul.mubr.f32.gmra.mrb[0].mxu0 %v695
      %v2340 = vpop.f32.mrb[0].mxu0
      %v2341 = vadd.f32 0.0, %v2340
      %v2342 = vpop.f32.mrb[0].mxu0
      %2343 = vmatprep.mubr.f32.mxu0 0.0
      %2344 = vmatmul.mubr.f32.gmra.mrb[0].mxu0 %v697
      %v2345 = vpop.f32.mrb[0].mxu0
      %v2346 = vadd.f32 0.0, %v2345
      %v2347 = vpop.f32.mrb[0].mxu0
      %2348 = vmatprep.mubr.f32.mxu0 0.0
      %2349 = vmatmul.mubr.f32.gmra.mrb[0].mxu0 %v699
      %v2350 = vpop.f32.mrb[0].mxu0
      %v2351 = vadd.f32 0.0, %v2350
      %v2352 = vpop.f32.mrb[0].mxu0
      %2353 = vmatprep.mubr.f32.mxu0 0.0
      %2354 = vmatmul.mubr.f32.gmra.mrb[0].mxu0 %v701
      %v2355 = vpop.f32.mrb[0].mxu0
      %v2356 = vadd.f32 0.0, %v2355
      %v2357 = vpop.f32.mrb[0].mxu0
      %2358 = vmatprep.mubr.f32.mxu0 0.0
      %2359 = vmatmul.mubr.f32.gmra.mrb[0].mxu0 %v703
      %v2360 = vpop.f32.mrb[0].mxu0
      %v2361 = vadd.f32 0.0, %v2360
      %v2362 = vpop.f32.mrb[0].mxu0
      %2363 = vmatprep.mubr.f32.mxu0 0.0
      %2364 = vmatmul.mubr.f32.gmra.mrb[0].mxu0 %v705
      %v2365 = vpop.f32.mrb[0].mxu0
      %v2366 = vadd.f32 0.0, %v2365
      %v2367 = vpop.f32.mrb[0].mxu0
      %2368 = vmatprep.mubr.f32.mxu0 0.0
      %2369 = vmatmul.mubr.f32.gmra.mrb[0].mxu0 %v707
      %v2370 = vpop.f32.mrb[0].mxu0
      %v2371 = vadd.f32 0.0, %v2370
      %v2372 = vpop.f32.mrb[0].mxu0
      %2373 = vmatprep.mubr.f32.mxu0 0.0
      %2374 = vmatmul.mubr.f32.gmra.mrb[0].mxu0 %v709
      %v2375 = vpop.f32.mrb[0].mxu0
      %v2376 = vadd.f32 0.0, %v2375
      %v2377 = vpop.f32.mrb[0].mxu0
      %2378 = vmatprep.mubr.f32.mxu0 0.0
      %2379 = vmatmul.mubr.f32.gmra.mrb[0].mxu0 %v711
      %v2380 = vpop.f32.mrb[0].mxu0
      %v2381 = vadd.f32 0.0, %v2380
      %v2382 = vpop.f32.mrb[0].mxu0
      %2383 = vmatprep.mubr.f32.mxu0 0.0
      %2384 = vmatmul.mubr.f32.gmra.mrb[0].mxu0 %v713
      %v2385 = vpop.f32.mrb[0].mxu0
      %v2386 = vadd.f32 0.0, %v2385
      %v2387 = vpop.f32.mrb[0].mxu0
      %2388 = vmatprep.mubr.f32.mxu0 0.0
      %2389 = vmatmul.mubr.f32.gmra.mrb[0].mxu0 %v2245
      %v2390 = vpop.f32.mrb[0].mxu0
      %v2391 = vadd.f32 0.0, %v2390
      %v2392 = vpop.f32.mrb[0].mxu0
      %2393 = vmatprep.mubr.f32.mxu0 0.0
      %2394 = vmatmul.mubr.f32.gmra.mrb[0].mxu0 %v2247
      %v2395 = vpop.f32.mrb[0].mxu0
      %v2396 = vadd.f32 0.0, %v2395
      %v2397 = vpop.f32.mrb[0].mxu0
      %2398 = vdwg.mxu0
      %v2399 = vadd.f32 %v2215, %v2316
      %v2400 = vadd.f32 %v2216, %v2321
      %v2401 = vadd.f32 %v2217, %v2326
      %v2402 = vadd.f32 %v2218, %v2331
      %v2403 = vadd.f32 %v2219, %v2336
      %v2404 = vadd.f32 %v2220, %v2341
      %v2405 = vadd.f32 %v2221, %v2346
      %v2406 = vadd.f32 %v2222, %v2351
      %v2407 = vadd.f32 %v2223, %v2356
      %v2408 = vadd.f32 %v2224, %v2361
      %v2409 = vadd.f32 %v2225, %v2366
      %v2410 = vadd.f32 %v2226, %v2371
      %v2411 = vadd.f32 %v2227, %v2376
      %v2412 = vadd.f32 %v2228, %v2381
      %v2413 = vadd.f32 %v2229, %v2386
      %v2414 = vadd.f32 %v2230, %v2391
      %v2415 = vadd.f32 %v2231, %v2396
      %s2416 = scalar_lea.vmem %s1, 640
      %v2417 = vld [vmem:[%s2416] sm:$0xff]
      %v2418 = vld [vmem:[%s2416 + $0x8] sm:$0xff]
      %v2419 = vld [vmem:[%s2416 + $0x10] sm:$0xff]
      %v2420 = vld [vmem:[%s2416 + $0x18] sm:$0xff]
      %v2421 = vld [vmem:[%s2416 + $0x20] sm:$0xff]
      %v2422 = vld [vmem:[%s2416 + $0x28] sm:$0xff]
      %v2423 = vld [vmem:[%s2416 + $0x30] sm:$0xff]
      %v2424 = vld [vmem:[%s2416 + $0x38] sm:$0xff]
      %v2426 = vrot.slane %v189, 4
      %v2427 = vsel %vm1137, %v1171, %v2426
      %v2428 = vrot.slane %v190, 4
      %v2429 = vsel %vm1137, %v2426, %v2428
      %v2430 = vrot.slane %v191, 4
      %v2431 = vsel %vm1137, %v2428, %v2430
      %v2432 = vsel %vm267, %v2427, 0
      %v2434 = vsel %vm267, %v2429, 0
      %v2436 = vsel %vm267, %v2431, 0
      %2438 = vmatprep.subr.mxu0 0.0
      %2439 = vmatpush1.msra.mxu0 %v2417
      %2440 = vmatprep.subr.mxu0 0.0
      %2441 = vmatpush1.msra.mxu0 %v2418
      %2442 = vmatprep.subr.mxu0 0.0
      %2443 = vmatpush1.msra.mxu0 %v2419
      %2444 = vmatprep.subr.mxu0 0.0
      %2445 = vmatpush1.msra.mxu0 %v2420
      %2446 = vmatprep.subr.mxu0 0.0
      %2447 = vmatpush1.msra.mxu0 %v2421
      %2448 = vmatprep.subr.mxu0 0.0
      %2449 = vmatpush1.msra.mxu0 %v2422
      %2450 = vmatprep.subr.mxu0 0.0
      %2451 = vmatpush1.msra.mxu0 %v2423
      %2452 = vmatprep.subr.mxu0 0.0
      %2453 = vmatpush1.msra.mxu0 %v2424
      %2454 = vmatprep.subr.mxu0 0.0
      %2455 = vmatpush1.msra.mxu0 0.0
      %2456 = vmatprep.subr.mxu0 0.0
      %2457 = vmatpush1.msra.mxu0 0.0
      %2458 = vmatprep.subr.mxu0 0.0
      %2459 = vmatpush1.msra.mxu0 0.0
      %2460 = vmatprep.subr.mxu0 0.0
      %2461 = vmatpush1.msra.mxu0 0.0
      %2462 = vmatprep.subr.mxu0 0.0
      %2463 = vmatpush1.msra.mxu0 0.0
      %2464 = vmatprep.subr.mxu0 0.0
      %2465 = vmatpush1.msra.mxu0 0.0
      %2466 = vmatprep.subr.mxu0 0.0
      %2467 = vmatpush1.msra.mxu0 0.0
      %2468 = vmatprep.subr.mxu0 0.0
      %2469 = vmatpush1.msra.mxu0 0.0
      %2470 = vmatprep.subr.mxu0 0.0
      %2471 = vmatpush1.msra.mxu0 0.0
      %2472 = vmatprep.subr.mxu0 0.0
      %2473 = vmatpush1.msra.mxu0 0.0
      %2474 = vmatprep.subr.mxu0 0.0
      %2475 = vmatpush1.msra.mxu0 0.0
      %2476 = vmatprep.subr.mxu0 0.0
      %2477 = vmatpush1.msra.mxu0 0.0
      %2478 = vmatprep.subr.mxu0 0.0
      %2479 = vmatpush1.msra.mxu0 0.0
      %2480 = vmatprep.subr.mxu0 0.0
      %2481 = vmatpush1.msra.mxu0 0.0
      %2482 = vmatprep.subr.mxu0 0.0
      %2483 = vmatpush1.msra.mxu0 0.0
      %2484 = vmatprep.subr.mxu0 0.0
      %2485 = vmatpush1.msra.mxu0 0.0
      %2486 = vmatprep.subr.mxu0 0.0
      %2487 = vmatpush1.msra.mxu0 0.0
      %2488 = vmatprep.subr.mxu0 0.0
      %2489 = vmatpush1.msra.mxu0 0.0
      %2490 = vmatprep.subr.mxu0 0.0
      %2491 = vmatpush1.msra.mxu0 0.0
      %2492 = vmatprep.subr.mxu0 0.0
      %2493 = vmatpush1.msra.mxu0 0.0
      %2494 = vmatprep.subr.mxu0 0.0
      %2495 = vmatpush1.msra.mxu0 0.0
      %2496 = vmatprep.subr.mxu0 0.0
      %2497 = vmatpush1.msra.mxu0 0.0
      %2498 = vmatprep.subr.mxu0 0.0
      %2499 = vmatpush1.msra.mxu0 0.0
      %2500 = vmatprep.subr.mxu0 0.0
      %2501 = vmatpush1.msra.mxu0 0.0
      %2502 = vmatprep.mubr.f32.mxu0 0.0
      %2503 = vmatmul.mubr.f32.gmra.mrb[0].mxu0 %v1179
      %v2504 = vpop.f32.mrb[0].mxu0
      %v2505 = vadd.f32 0.0, %v2504
      %v2506 = vpop.f32.mrb[0].mxu0
      %2507 = vmatprep.mubr.f32.mxu0 0.0
      %2508 = vmatmul.mubr.f32.gmra.mrb[0].mxu0 %v1181
      %v2509 = vpop.f32.mrb[0].mxu0
      %v2510 = vadd.f32 0.0, %v2509
      %v2511 = vpop.f32.mrb[0].mxu0
      %2512 = vmatprep.mubr.f32.mxu0 0.0
      %2513 = vmatmul.mubr.f32.gmra.mrb[0].mxu0 %v1183
      %v2514 = vpop.f32.mrb[0].mxu0
      %v2515 = vadd.f32 0.0, %v2514
      %v2516 = vpop.f32.mrb[0].mxu0
      %2517 = vmatprep.mubr.f32.mxu0 0.0
      %2518 = vmatmul.mubr.f32.gmra.mrb[0].mxu0 %v1185
      %v2519 = vpop.f32.mrb[0].mxu0
      %v2520 = vadd.f32 0.0, %v2519
      %v2521 = vpop.f32.mrb[0].mxu0
      %2522 = vmatprep.mubr.f32.mxu0 0.0
      %2523 = vmatmul.mubr.f32.gmra.mrb[0].mxu0 %v1187
      %v2524 = vpop.f32.mrb[0].mxu0
      %v2525 = vadd.f32 0.0, %v2524
      %v2526 = vpop.f32.mrb[0].mxu0
      %2527 = vmatprep.mubr.f32.mxu0 0.0
      %2528 = vmatmul.mubr.f32.gmra.mrb[0].mxu0 %v1189
      %v2529 = vpop.f32.mrb[0].mxu0
      %v2530 = vadd.f32 0.0, %v2529
      %v2531 = vpop.f32.mrb[0].mxu0
      %2532 = vmatprep.mubr.f32.mxu0 0.0
      %2533 = vmatmul.mubr.f32.gmra.mrb[0].mxu0 %v1191
      %v2534 = vpop.f32.mrb[0].mxu0
      %v2535 = vadd.f32 0.0, %v2534
      %v2536 = vpop.f32.mrb[0].mxu0
      %2537 = vmatprep.mubr.f32.mxu0 0.0
      %2538 = vmatmul.mubr.f32.gmra.mrb[0].mxu0 %v1193
      %v2539 = vpop.f32.mrb[0].mxu0
      %v2540 = vadd.f32 0.0, %v2539
      %v2541 = vpop.f32.mrb[0].mxu0
      %2542 = vmatprep.mubr.f32.mxu0 0.0
      %2543 = vmatmul.mubr.f32.gmra.mrb[0].mxu0 %v1195
      %v2544 = vpop.f32.mrb[0].mxu0
      %v2545 = vadd.f32 0.0, %v2544
      %v2546 = vpop.f32.mrb[0].mxu0
      %2547 = vmatprep.mubr.f32.mxu0 0.0
      %2548 = vmatmul.mubr.f32.gmra.mrb[0].mxu0 %v1197
      %v2549 = vpop.f32.mrb[0].mxu0
      %v2550 = vadd.f32 0.0, %v2549
      %v2551 = vpop.f32.mrb[0].mxu0
      %2552 = vmatprep.mubr.f32.mxu0 0.0
      %2553 = vmatmul.mubr.f32.gmra.mrb[0].mxu0 %v1199
      %v2554 = vpop.f32.mrb[0].mxu0
      %v2555 = vadd.f32 0.0, %v2554
      %v2556 = vpop.f32.mrb[0].mxu0
      %2557 = vmatprep.mubr.f32.mxu0 0.0
      %2558 = vmatmul.mubr.f32.gmra.mrb[0].mxu0 %v1201
      %v2559 = vpop.f32.mrb[0].mxu0
      %v2560 = vadd.f32 0.0, %v2559
      %v2561 = vpop.f32.mrb[0].mxu0
      %2562 = vmatprep.mubr.f32.mxu0 0.0
      %2563 = vmatmul.mubr.f32.gmra.mrb[0].mxu0 %v1203
      %v2564 = vpop.f32.mrb[0].mxu0
      %v2565 = vadd.f32 0.0, %v2564
      %v2566 = vpop.f32.mrb[0].mxu0
      %2567 = vmatprep.mubr.f32.mxu0 0.0
      %2568 = vmatmul.mubr.f32.gmra.mrb[0].mxu0 %v1205
      %v2569 = vpop.f32.mrb[0].mxu0
      %v2570 = vadd.f32 0.0, %v2569
      %v2571 = vpop.f32.mrb[0].mxu0
      %2572 = vmatprep.mubr.f32.mxu0 0.0
      %2573 = vmatmul.mubr.f32.gmra.mrb[0].mxu0 %v2432
      %v2574 = vpop.f32.mrb[0].mxu0
      %v2575 = vadd.f32 0.0, %v2574
      %v2576 = vpop.f32.mrb[0].mxu0
      %2577 = vmatprep.mubr.f32.mxu0 0.0
      %2578 = vmatmul.mubr.f32.gmra.mrb[0].mxu0 %v2434
      %v2579 = vpop.f32.mrb[0].mxu0
      %v2580 = vadd.f32 0.0, %v2579
      %v2581 = vpop.f32.mrb[0].mxu0
      %2582 = vmatprep.mubr.f32.mxu0 0.0
      %2583 = vmatmul.mubr.f32.gmra.mrb[0].mxu0 %v2436
      %v2584 = vpop.f32.mrb[0].mxu0
      %v2585 = vadd.f32 0.0, %v2584
      %v2586 = vpop.f32.mrb[0].mxu0
      %2587 = vdwg.mxu0
      %v2588 = vadd.f32 %v2399, %v2505
      %v2589 = vadd.f32 %v2400, %v2510
      %v2590 = vadd.f32 %v2401, %v2515
      %v2591 = vadd.f32 %v2402, %v2520
      %v2592 = vadd.f32 %v2403, %v2525
      %v2593 = vadd.f32 %v2404, %v2530
      %v2594 = vadd.f32 %v2405, %v2535
      %v2595 = vadd.f32 %v2406, %v2540
      %v2596 = vadd.f32 %v2407, %v2545
      %v2597 = vadd.f32 %v2408, %v2550
      %v2598 = vadd.f32 %v2409, %v2555
      %v2599 = vadd.f32 %v2410, %v2560
      %v2600 = vadd.f32 %v2411, %v2565
      %v2601 = vadd.f32 %v2412, %v2570
      %v2602 = vadd.f32 %v2413, %v2575
      %v2603 = vadd.f32 %v2414, %v2580
      %v2604 = vadd.f32 %v2415, %v2585
      %s2605 = scalar_lea.vmem %s1, 704
      %v2606 = vld [vmem:[%s2605] sm:$0xff]
      %v2607 = vld [vmem:[%s2605 + $0x8] sm:$0xff]
      %v2608 = vld [vmem:[%s2605 + $0x10] sm:$0xff]
      %v2609 = vld [vmem:[%s2605 + $0x18] sm:$0xff]
      %v2610 = vld [vmem:[%s2605 + $0x20] sm:$0xff]
      %v2611 = vld [vmem:[%s2605 + $0x28] sm:$0xff]
      %v2612 = vld [vmem:[%s2605 + $0x30] sm:$0xff]
      %v2613 = vld [vmem:[%s2605 + $0x38] sm:$0xff]
      %vm2614 = vcmask 1042432
      %v2615 = vrot.slane %v174, 5
      %v2616 = vrot.slane %v175, 5
      %v2617 = vsel %vm2614, %v2615, %v2616
      %v2618 = vrot.slane %v176, 5
      %v2619 = vsel %vm2614, %v2616, %v2618
      %v2620 = vrot.slane %v177, 5
      %v2621 = vsel %vm2614, %v2618, %v2620
      %v2622 = vrot.slane %v178, 5
      %v2623 = vsel %vm2614, %v2620, %v2622
      %v2624 = vrot.slane %v179, 5
      %v2625 = vsel %vm2614, %v2622, %v2624
      %v2626 = vrot.slane %v180, 5
      %v2627 = vsel %vm2614, %v2624, %v2626
      %v2628 = vrot.slane %v181, 5
      %v2629 = vsel %vm2614, %v2626, %v2628
      %v2630 = vrot.slane %v182, 5
      %v2631 = vsel %vm2614, %v2628, %v2630
      %v2632 = vrot.slane %v183, 5
      %v2633 = vsel %vm2614, %v2630, %v2632
      %v2634 = vrot.slane %v184, 5
      %v2635 = vsel %vm2614, %v2632, %v2634
      %v2636 = vrot.slane %v185, 5
      %v2637 = vsel %vm2614, %v2634, %v2636
      %v2638 = vrot.slane %v186, 5
      %v2639 = vsel %vm2614, %v2636, %v2638
      %v2640 = vrot.slane %v187, 5
      %v2641 = vsel %vm2614, %v2638, %v2640
      %v2642 = vrot.slane %v188, 5
      %v2643 = vsel %vm2614, %v2640, %v2642
      %v2644 = vrot.slane %v189, 5
      %v2645 = vsel %vm2614, %v2642, %v2644
      %v2646 = vrot.slane %v190, 5
      %v2647 = vsel %vm2614, %v2644, %v2646
      %v2648 = vrot.slane %v191, 5
      %v2649 = vsel %vm2614, %v2646, %v2648
      %v2650 = vsel %vm267, %v2617, 0
      %v2652 = vsel %vm267, %v2619, 0
      %v2654 = vsel %vm267, %v2621, 0
      %v2656 = vsel %vm267, %v2623, 0
      %v2658 = vsel %vm267, %v2625, 0
      %v2660 = vsel %vm267, %v2627, 0
      %v2662 = vsel %vm267, %v2629, 0
      %v2664 = vsel %vm267, %v2631, 0
      %v2666 = vsel %vm267, %v2633, 0
      %v2668 = vsel %vm267, %v2635, 0
      %v2670 = vsel %vm267, %v2637, 0
      %v2672 = vsel %vm267, %v2639, 0
      %v2674 = vsel %vm267, %v2641, 0
      %v2676 = vsel %vm267, %v2643, 0
      %v2678 = vsel %vm267, %v2645, 0
      %v2680 = vsel %vm267, %v2647, 0
      %v2682 = vsel %vm267, %v2649, 0
      %2684 = vmatprep.subr.mxu0 0.0
      %2685 = vmatpush1.msra.mxu0 %v2606
      %2686 = vmatprep.subr.mxu0 0.0
      %2687 = vmatpush1.msra.mxu0 %v2607
      %2688 = vmatprep.subr.mxu0 0.0
      %2689 = vmatpush1.msra.mxu0 %v2608
      %2690 = vmatprep.subr.mxu0 0.0
      %2691 = vmatpush1.msra.mxu0 %v2609
      %2692 = vmatprep.subr.mxu0 0.0
      %2693 = vmatpush1.msra.mxu0 %v2610
      %2694 = vmatprep.subr.mxu0 0.0
      %2695 = vmatpush1.msra.mxu0 %v2611
      %2696 = vmatprep.subr.mxu0 0.0
      %2697 = vmatpush1.msra.mxu0 %v2612
      %2698 = vmatprep.subr.mxu0 0.0
      %2699 = vmatpush1.msra.mxu0 %v2613
      %2700 = vmatprep.subr.mxu0 0.0
      %2701 = vmatpush1.msra.mxu0 0.0
      %2702 = vmatprep.subr.mxu0 0.0
      %2703 = vmatpush1.msra.mxu0 0.0
      %2704 = vmatprep.subr.mxu0 0.0
      %2705 = vmatpush1.msra.mxu0 0.0
      %2706 = vmatprep.subr.mxu0 0.0
      %2707 = vmatpush1.msra.mxu0 0.0
      %2708 = vmatprep.subr.mxu0 0.0
      %2709 = vmatpush1.msra.mxu0 0.0
      %2710 = vmatprep.subr.mxu0 0.0
      %2711 = vmatpush1.msra.mxu0 0.0
      %2712 = vmatprep.subr.mxu0 0.0
      %2713 = vmatpush1.msra.mxu0 0.0
      %2714 = vmatprep.subr.mxu0 0.0
      %2715 = vmatpush1.msra.mxu0 0.0
      %2716 = vmatprep.subr.mxu0 0.0
      %2717 = vmatpush1.msra.mxu0 0.0
      %2718 = vmatprep.subr.mxu0 0.0
      %2719 = vmatpush1.msra.mxu0 0.0
      %2720 = vmatprep.subr.mxu0 0.0
      %2721 = vmatpush1.msra.mxu0 0.0
      %2722 = vmatprep.subr.mxu0 0.0
      %2723 = vmatpush1.msra.mxu0 0.0
      %2724 = vmatprep.subr.mxu0 0.0
      %2725 = vmatpush1.msra.mxu0 0.0
      %2726 = vmatprep.subr.mxu0 0.0
      %2727 = vmatpush1.msra.mxu0 0.0
      %2728 = vmatprep.subr.mxu0 0.0
      %2729 = vmatpush1.msra.mxu0 0.0
      %2730 = vmatprep.subr.mxu0 0.0
      %2731 = vmatpush1.msra.mxu0 0.0
      %2732 = vmatprep.subr.mxu0 0.0
      %2733 = vmatpush1.msra.mxu0 0.0
      %2734 = vmatprep.subr.mxu0 0.0
      %2735 = vmatpush1.msra.mxu0 0.0
      %2736 = vmatprep.subr.mxu0 0.0
      %2737 = vmatpush1.msra.mxu0 0.0
      %2738 = vmatprep.subr.mxu0 0.0
      %2739 = vmatpush1.msra.mxu0 0.0
      %2740 = vmatprep.subr.mxu0 0.0
      %2741 = vmatpush1.msra.mxu0 0.0
      %2742 = vmatprep.subr.mxu0 0.0
      %2743 = vmatpush1.msra.mxu0 0.0
      %2744 = vmatprep.subr.mxu0 0.0
      %2745 = vmatpush1.msra.mxu0 0.0
      %2746 = vmatprep.subr.mxu0 0.0
      %2747 = vmatpush1.msra.mxu0 0.0
      %2748 = vmatprep.mubr.f32.mxu0 0.0
      %2749 = vmatmul.mubr.f32.gmra.mrb[0].mxu0 %v2650
      %v2750 = vpop.f32.mrb[0].mxu0
      %v2751 = vadd.f32 0.0, %v2750
      %v2752 = vpop.f32.mrb[0].mxu0
      %2753 = vmatprep.mubr.f32.mxu0 0.0
      %2754 = vmatmul.mubr.f32.gmra.mrb[0].mxu0 %v2652
      %v2755 = vpop.f32.mrb[0].mxu0
      %v2756 = vadd.f32 0.0, %v2755
      %v2757 = vpop.f32.mrb[0].mxu0
      %2758 = vmatprep.mubr.f32.mxu0 0.0
      %2759 = vmatmul.mubr.f32.gmra.mrb[0].mxu0 %v2654
      %v2760 = vpop.f32.mrb[0].mxu0
      %v2761 = vadd.f32 0.0, %v2760
      %v2762 = vpop.f32.mrb[0].mxu0
      %2763 = vmatprep.mubr.f32.mxu0 0.0
      %2764 = vmatmul.mubr.f32.gmra.mrb[0].mxu0 %v2656
      %v2765 = vpop.f32.mrb[0].mxu0
      %v2766 = vadd.f32 0.0, %v2765
      %v2767 = vpop.f32.mrb[0].mxu0
      %2768 = vmatprep.mubr.f32.mxu0 0.0
      %2769 = vmatmul.mubr.f32.gmra.mrb[0].mxu0 %v2658
      %v2770 = vpop.f32.mrb[0].mxu0
      %v2771 = vadd.f32 0.0, %v2770
      %v2772 = vpop.f32.mrb[0].mxu0
      %2773 = vmatprep.mubr.f32.mxu0 0.0
      %2774 = vmatmul.mubr.f32.gmra.mrb[0].mxu0 %v2660
      %v2775 = vpop.f32.mrb[0].mxu0
      %v2776 = vadd.f32 0.0, %v2775
      %v2777 = vpop.f32.mrb[0].mxu0
      %2778 = vmatprep.mubr.f32.mxu0 0.0
      %2779 = vmatmul.mubr.f32.gmra.mrb[0].mxu0 %v2662
      %v2780 = vpop.f32.mrb[0].mxu0
      %v2781 = vadd.f32 0.0, %v2780
      %v2782 = vpop.f32.mrb[0].mxu0
      %2783 = vmatprep.mubr.f32.mxu0 0.0
      %2784 = vmatmul.mubr.f32.gmra.mrb[0].mxu0 %v2664
      %v2785 = vpop.f32.mrb[0].mxu0
      %v2786 = vadd.f32 0.0, %v2785
      %v2787 = vpop.f32.mrb[0].mxu0
      %2788 = vmatprep.mubr.f32.mxu0 0.0
      %2789 = vmatmul.mubr.f32.gmra.mrb[0].mxu0 %v2666
      %v2790 = vpop.f32.mrb[0].mxu0
      %v2791 = vadd.f32 0.0, %v2790
      %v2792 = vpop.f32.mrb[0].mxu0
      %2793 = vmatprep.mubr.f32.mxu0 0.0
      %2794 = vmatmul.mubr.f32.gmra.mrb[0].mxu0 %v2668
      %v2795 = vpop.f32.mrb[0].mxu0
      %v2796 = vadd.f32 0.0, %v2795
      %v2797 = vpop.f32.mrb[0].mxu0
      %2798 = vmatprep.mubr.f32.mxu0 0.0
      %2799 = vmatmul.mubr.f32.gmra.mrb[0].mxu0 %v2670
      %v2800 = vpop.f32.mrb[0].mxu0
      %v2801 = vadd.f32 0.0, %v2800
      %v2802 = vpop.f32.mrb[0].mxu0
      %2803 = vmatprep.mubr.f32.mxu0 0.0
      %2804 = vmatmul.mubr.f32.gmra.mrb[0].mxu0 %v2672
      %v2805 = vpop.f32.mrb[0].mxu0
      %v2806 = vadd.f32 0.0, %v2805
      %v2807 = vpop.f32.mrb[0].mxu0
      %2808 = vmatprep.mubr.f32.mxu0 0.0
      %2809 = vmatmul.mubr.f32.gmra.mrb[0].mxu0 %v2674
      %v2810 = vpop.f32.mrb[0].mxu0
      %v2811 = vadd.f32 0.0, %v2810
      %v2812 = vpop.f32.mrb[0].mxu0
      %2813 = vmatprep.mubr.f32.mxu0 0.0
      %2814 = vmatmul.mubr.f32.gmra.mrb[0].mxu0 %v2676
      %v2815 = vpop.f32.mrb[0].mxu0
      %v2816 = vadd.f32 0.0, %v2815
      %v2817 = vpop.f32.mrb[0].mxu0
      %2818 = vmatprep.mubr.f32.mxu0 0.0
      %2819 = vmatmul.mubr.f32.gmra.mrb[0].mxu0 %v2678
      %v2820 = vpop.f32.mrb[0].mxu0
      %v2821 = vadd.f32 0.0, %v2820
      %v2822 = vpop.f32.mrb[0].mxu0
      %2823 = vmatprep.mubr.f32.mxu0 0.0
      %2824 = vmatmul.mubr.f32.gmra.mrb[0].mxu0 %v2680
      %v2825 = vpop.f32.mrb[0].mxu0
      %v2826 = vadd.f32 0.0, %v2825
      %v2827 = vpop.f32.mrb[0].mxu0
      %2828 = vmatprep.mubr.f32.mxu0 0.0
      %2829 = vmatmul.mubr.f32.gmra.mrb[0].mxu0 %v2682
      %v2830 = vpop.f32.mrb[0].mxu0
      %v2831 = vadd.f32 0.0, %v2830
      %v2832 = vpop.f32.mrb[0].mxu0
      %2833 = vdwg.mxu0
      %v2834 = vadd.f32 %v2588, %v2751
      %v2835 = vadd.f32 %v2589, %v2756
      %v2836 = vadd.f32 %v2590, %v2761
      %v2837 = vadd.f32 %v2591, %v2766
      %v2838 = vadd.f32 %v2592, %v2771
      %v2839 = vadd.f32 %v2593, %v2776
      %v2840 = vadd.f32 %v2594, %v2781
      %v2841 = vadd.f32 %v2595, %v2786
      %v2842 = vadd.f32 %v2596, %v2791
      %v2843 = vadd.f32 %v2597, %v2796
      %v2844 = vadd.f32 %v2598, %v2801
      %v2845 = vadd.f32 %v2599, %v2806
      %v2846 = vadd.f32 %v2600, %v2811
      %v2847 = vadd.f32 %v2601, %v2816
      %v2848 = vadd.f32 %v2602, %v2821
      %v2849 = vadd.f32 %v2603, %v2826
      %v2850 = vadd.f32 %v2604, %v2831
      %s2851 = scalar_lea.vmem %s1, 768
      %v2852 = vld [vmem:[%s2851] sm:$0xff]
      %v2853 = vld [vmem:[%s2851 + $0x8] sm:$0xff]
      %v2854 = vld [vmem:[%s2851 + $0x10] sm:$0xff]
      %v2855 = vld [vmem:[%s2851 + $0x18] sm:$0xff]
      %v2856 = vld [vmem:[%s2851 + $0x20] sm:$0xff]
      %v2857 = vld [vmem:[%s2851 + $0x28] sm:$0xff]
      %v2858 = vld [vmem:[%s2851 + $0x30] sm:$0xff]
      %v2859 = vld [vmem:[%s2851 + $0x38] sm:$0xff]
      %v2860 = vrot.slane %v190, 6
      %v2861 = vsel %vm1384, %v1418, %v2860
      %v2862 = vrot.slane %v191, 6
      %v2863 = vsel %vm1384, %v2860, %v2862
      %v2864 = vsel %vm267, %v2861, 0
      %v2866 = vsel %vm267, %v2863, 0
      %2868 = vmatprep.subr.mxu0 0.0
      %2869 = vmatpush1.msra.mxu0 %v2852
      %2870 = vmatprep.subr.mxu0 0.0
      %2871 = vmatpush1.msra.mxu0 %v2853
      %2872 = vmatprep.subr.mxu0 0.0
      %2873 = vmatpush1.msra.mxu0 %v2854
      %2874 = vmatprep.subr.mxu0 0.0
      %2875 = vmatpush1.msra.mxu0 %v2855
      %2876 = vmatprep.subr.mxu0 0.0
      %2877 = vmatpush1.msra.mxu0 %v2856
      %2878 = vmatprep.subr.mxu0 0.0
      %2879 = vmatpush1.msra.mxu0 %v2857
      %2880 = vmatprep.subr.mxu0 0.0
      %2881 = vmatpush1.msra.mxu0 %v2858
      %2882 = vmatprep.subr.mxu0 0.0
      %2883 = vmatpush1.msra.mxu0 %v2859
      %2884 = vmatprep.subr.mxu0 0.0
      %2885 = vmatpush1.msra.mxu0 0.0
      %2886 = vmatprep.subr.mxu0 0.0
      %2887 = vmatpush1.msra.mxu0 0.0
      %2888 = vmatprep.subr.mxu0 0.0
      %2889 = vmatpush1.msra.mxu0 0.0
      %2890 = vmatprep.subr.mxu0 0.0
      %2891 = vmatpush1.msra.mxu0 0.0
      %2892 = vmatprep.subr.mxu0 0.0
      %2893 = vmatpush1.msra.mxu0 0.0
      %2894 = vmatprep.subr.mxu0 0.0
      %2895 = vmatpush1.msra.mxu0 0.0
      %2896 = vmatprep.subr.mxu0 0.0
      %2897 = vmatpush1.msra.mxu0 0.0
      %2898 = vmatprep.subr.mxu0 0.0
      %2899 = vmatpush1.msra.mxu0 0.0
      %2900 = vmatprep.subr.mxu0 0.0
      %2901 = vmatpush1.msra.mxu0 0.0
      %2902 = vmatprep.subr.mxu0 0.0
      %2903 = vmatpush1.msra.mxu0 0.0
      %2904 = vmatprep.subr.mxu0 0.0
      %2905 = vmatpush1.msra.mxu0 0.0
      %2906 = vmatprep.subr.mxu0 0.0
      %2907 = vmatpush1.msra.mxu0 0.0
      %2908 = vmatprep.subr.mxu0 0.0
      %2909 = vmatpush1.msra.mxu0 0.0
      %2910 = vmatprep.subr.mxu0 0.0
      %2911 = vmatpush1.msra.mxu0 0.0
      %2912 = vmatprep.subr.mxu0 0.0
      %2913 = vmatpush1.msra.mxu0 0.0
      %2914 = vmatprep.subr.mxu0 0.0
      %2915 = vmatpush1.msra.mxu0 0.0
      %2916 = vmatprep.subr.mxu0 0.0
      %2917 = vmatpush1.msra.mxu0 0.0
      %2918 = vmatprep.subr.mxu0 0.0
      %2919 = vmatpush1.msra.mxu0 0.0
      %2920 = vmatprep.subr.mxu0 0.0
      %2921 = vmatpush1.msra.mxu0 0.0
      %2922 = vmatprep.subr.mxu0 0.0
      %2923 = vmatpush1.msra.mxu0 0.0
      %2924 = vmatprep.subr.mxu0 0.0
      %2925 = vmatpush1.msra.mxu0 0.0
      %2926 = vmatprep.subr.mxu0 0.0
      %2927 = vmatpush1.msra.mxu0 0.0
      %2928 = vmatprep.subr.mxu0 0.0
      %2929 = vmatpush1.msra.mxu0 0.0
      %2930 = vmatprep.subr.mxu0 0.0
      %2931 = vmatpush1.msra.mxu0 0.0
      %2932 = vmatprep.mubr.f32.mxu0 0.0
      %2933 = vmatmul.mubr.f32.gmra.mrb[0].mxu0 %v1424
      %v2934 = vpop.f32.mrb[0].mxu0
      %v2935 = vadd.f32 0.0, %v2934
      %v2936 = vpop.f32.mrb[0].mxu0
      %2937 = vmatprep.mubr.f32.mxu0 0.0
      %2938 = vmatmul.mubr.f32.gmra.mrb[0].mxu0 %v1426
      %v2939 = vpop.f32.mrb[0].mxu0
      %v2940 = vadd.f32 0.0, %v2939
      %v2941 = vpop.f32.mrb[0].mxu0
      %2942 = vmatprep.mubr.f32.mxu0 0.0
      %2943 = vmatmul.mubr.f32.gmra.mrb[0].mxu0 %v1428
      %v2944 = vpop.f32.mrb[0].mxu0
      %v2945 = vadd.f32 0.0, %v2944
      %v2946 = vpop.f32.mrb[0].mxu0
      %2947 = vmatprep.mubr.f32.mxu0 0.0
      %2948 = vmatmul.mubr.f32.gmra.mrb[0].mxu0 %v1430
      %v2949 = vpop.f32.mrb[0].mxu0
      %v2950 = vadd.f32 0.0, %v2949
      %v2951 = vpop.f32.mrb[0].mxu0
      %2952 = vmatprep.mubr.f32.mxu0 0.0
      %2953 = vmatmul.mubr.f32.gmra.mrb[0].mxu0 %v1432
      %v2954 = vpop.f32.mrb[0].mxu0
      %v2955 = vadd.f32 0.0, %v2954
      %v2956 = vpop.f32.mrb[0].mxu0
      %2957 = vmatprep.mubr.f32.mxu0 0.0
      %2958 = vmatmul.mubr.f32.gmra.mrb[0].mxu0 %v1434
      %v2959 = vpop.f32.mrb[0].mxu0
      %v2960 = vadd.f32 0.0, %v2959
      %v2961 = vpop.f32.mrb[0].mxu0
      %2962 = vmatprep.mubr.f32.mxu0 0.0
      %2963 = vmatmul.mubr.f32.gmra.mrb[0].mxu0 %v1436
      %v2964 = vpop.f32.mrb[0].mxu0
      %v2965 = vadd.f32 0.0, %v2964
      %v2966 = vpop.f32.mrb[0].mxu0
      %2967 = vmatprep.mubr.f32.mxu0 0.0
      %2968 = vmatmul.mubr.f32.gmra.mrb[0].mxu0 %v1438
      %v2969 = vpop.f32.mrb[0].mxu0
      %v2970 = vadd.f32 0.0, %v2969
      %v2971 = vpop.f32.mrb[0].mxu0
      %2972 = vmatprep.mubr.f32.mxu0 0.0
      %2973 = vmatmul.mubr.f32.gmra.mrb[0].mxu0 %v1440
      %v2974 = vpop.f32.mrb[0].mxu0
      %v2975 = vadd.f32 0.0, %v2974
      %v2976 = vpop.f32.mrb[0].mxu0
      %2977 = vmatprep.mubr.f32.mxu0 0.0
      %2978 = vmatmul.mubr.f32.gmra.mrb[0].mxu0 %v1442
      %v2979 = vpop.f32.mrb[0].mxu0
      %v2980 = vadd.f32 0.0, %v2979
      %v2981 = vpop.f32.mrb[0].mxu0
      %2982 = vmatprep.mubr.f32.mxu0 0.0
      %2983 = vmatmul.mubr.f32.gmra.mrb[0].mxu0 %v1444
      %v2984 = vpop.f32.mrb[0].mxu0
      %v2985 = vadd.f32 0.0, %v2984
      %v2986 = vpop.f32.mrb[0].mxu0
      %2987 = vmatprep.mubr.f32.mxu0 0.0
      %2988 = vmatmul.mubr.f32.gmra.mrb[0].mxu0 %v1446
      %v2989 = vpop.f32.mrb[0].mxu0
      %v2990 = vadd.f32 0.0, %v2989
      %v2991 = vpop.f32.mrb[0].mxu0
      %2992 = vmatprep.mubr.f32.mxu0 0.0
      %2993 = vmatmul.mubr.f32.gmra.mrb[0].mxu0 %v1448
      %v2994 = vpop.f32.mrb[0].mxu0
      %v2995 = vadd.f32 0.0, %v2994
      %v2996 = vpop.f32.mrb[0].mxu0
      %2997 = vmatprep.mubr.f32.mxu0 0.0
      %2998 = vmatmul.mubr.f32.gmra.mrb[0].mxu0 %v1450
      %v2999 = vpop.f32.mrb[0].mxu0
      %v3000 = vadd.f32 0.0, %v2999
      %v3001 = vpop.f32.mrb[0].mxu0
      %3002 = vmatprep.mubr.f32.mxu0 0.0
      %3003 = vmatmul.mubr.f32.gmra.mrb[0].mxu0 %v1452
      %v3004 = vpop.f32.mrb[0].mxu0
      %v3005 = vadd.f32 0.0, %v3004
      %v3006 = vpop.f32.mrb[0].mxu0
      %3007 = vmatprep.mubr.f32.mxu0 0.0
      %3008 = vmatmul.mubr.f32.gmra.mrb[0].mxu0 %v2864
      %v3009 = vpop.f32.mrb[0].mxu0
      %v3010 = vadd.f32 0.0, %v3009
      %v3011 = vpop.f32.mrb[0].mxu0
      %3012 = vmatprep.mubr.f32.mxu0 0.0
      %3013 = vmatmul.mubr.f32.gmra.mrb[0].mxu0 %v2866
      %v3014 = vpop.f32.mrb[0].mxu0
      %v3015 = vadd.f32 0.0, %v3014
      %v3016 = vpop.f32.mrb[0].mxu0
      %3017 = vdwg.mxu0
      %v3018 = vadd.f32 %v2834, %v2935
      %v3019 = vadd.f32 %v2835, %v2940
      %v3020 = vadd.f32 %v2836, %v2945
      %v3021 = vadd.f32 %v2837, %v2950
      %v3022 = vadd.f32 %v2838, %v2955
      %v3023 = vadd.f32 %v2839, %v2960
      %v3024 = vadd.f32 %v2840, %v2965
      %v3025 = vadd.f32 %v2841, %v2970
      %v3026 = vadd.f32 %v2842, %v2975
      %v3027 = vadd.f32 %v2843, %v2980
      %v3028 = vadd.f32 %v2844, %v2985
      %v3029 = vadd.f32 %v2845, %v2990
      %v3030 = vadd.f32 %v2846, %v2995
      %v3031 = vadd.f32 %v2847, %v3000
      %v3032 = vadd.f32 %v2848, %v3005
      %v3033 = vadd.f32 %v2849, %v3010
      %v3034 = vadd.f32 %v2850, %v3015
      %s3035 = scalar_lea.vmem %s1, 832
      %v3036 = vld [vmem:[%s3035] sm:$0xff]
      %v3037 = vld [vmem:[%s3035 + $0x8] sm:$0xff]
      %v3038 = vld [vmem:[%s3035 + $0x10] sm:$0xff]
      %v3039 = vld [vmem:[%s3035 + $0x18] sm:$0xff]
      %v3040 = vld [vmem:[%s3035 + $0x20] sm:$0xff]
      %v3041 = vld [vmem:[%s3035 + $0x28] sm:$0xff]
      %v3042 = vld [vmem:[%s3035 + $0x30] sm:$0xff]
      %v3043 = vld [vmem:[%s3035 + $0x38] sm:$0xff]
      %v3044 = vrot.slane %v190, 7
      %v3045 = vsel %vm1630, %v1664, %v3044
      %v3046 = vrot.slane %v191, 7
      %v3047 = vsel %vm1630, %v3044, %v3046
      %v3048 = vsel %vm267, %v3045, 0
      %v3050 = vsel %vm267, %v3047, 0
      %3052 = vmatprep.subr.mxu0 0.0
      %3053 = vmatpush1.msra.mxu0 %v3036
      %3054 = vmatprep.subr.mxu0 0.0
      %3055 = vmatpush1.msra.mxu0 %v3037
      %3056 = vmatprep.subr.mxu0 0.0
      %3057 = vmatpush1.msra.mxu0 %v3038
      %3058 = vmatprep.subr.mxu0 0.0
      %3059 = vmatpush1.msra.mxu0 %v3039
      %3060 = vmatprep.subr.mxu0 0.0
      %3061 = vmatpush1.msra.mxu0 %v3040
      %3062 = vmatprep.subr.mxu0 0.0
      %3063 = vmatpush1.msra.mxu0 %v3041
      %3064 = vmatprep.subr.mxu0 0.0
      %3065 = vmatpush1.msra.mxu0 %v3042
      %3066 = vmatprep.subr.mxu0 0.0
      %3067 = vmatpush1.msra.mxu0 %v3043
      %3068 = vmatprep.subr.mxu0 0.0
      %3069 = vmatpush1.msra.mxu0 0.0
      %3070 = vmatprep.subr.mxu0 0.0
      %3071 = vmatpush1.msra.mxu0 0.0
      %3072 = vmatprep.subr.mxu0 0.0
      %3073 = vmatpush1.msra.mxu0 0.0
      %3074 = vmatprep.subr.mxu0 0.0
      %3075 = vmatpush1.msra.mxu0 0.0
      %3076 = vmatprep.subr.mxu0 0.0
      %3077 = vmatpush1.msra.mxu0 0.0
      %3078 = vmatprep.subr.mxu0 0.0
      %3079 = vmatpush1.msra.mxu0 0.0
      %3080 = vmatprep.subr.mxu0 0.0
      %3081 = vmatpush1.msra.mxu0 0.0
      %3082 = vmatprep.subr.mxu0 0.0
      %3083 = vmatpush1.msra.mxu0 0.0
      %3084 = vmatprep.subr.mxu0 0.0
      %3085 = vmatpush1.msra.mxu0 0.0
      %3086 = vmatprep.subr.mxu0 0.0
      %3087 = vmatpush1.msra.mxu0 0.0
      %3088 = vmatprep.subr.mxu0 0.0
      %3089 = vmatpush1.msra.mxu0 0.0
      %3090 = vmatprep.subr.mxu0 0.0
      %3091 = vmatpush1.msra.mxu0 0.0
      %3092 = vmatprep.subr.mxu0 0.0
      %3093 = vmatpush1.msra.mxu0 0.0
      %3094 = vmatprep.subr.mxu0 0.0
      %3095 = vmatpush1.msra.mxu0 0.0
      %3096 = vmatprep.subr.mxu0 0.0
      %3097 = vmatpush1.msra.mxu0 0.0
      %3098 = vmatprep.subr.mxu0 0.0
      %3099 = vmatpush1.msra.mxu0 0.0
      %3100 = vmatprep.subr.mxu0 0.0
      %3101 = vmatpush1.msra.mxu0 0.0
      %3102 = vmatprep.subr.mxu0 0.0
      %3103 = vmatpush1.msra.mxu0 0.0
      %3104 = vmatprep.subr.mxu0 0.0
      %3105 = vmatpush1.msra.mxu0 0.0
      %3106 = vmatprep.subr.mxu0 0.0
      %3107 = vmatpush1.msra.mxu0 0.0
      %3108 = vmatprep.subr.mxu0 0.0
      %3109 = vmatpush1.msra.mxu0 0.0
      %3110 = vmatprep.subr.mxu0 0.0
      %3111 = vmatpush1.msra.mxu0 0.0
      %3112 = vmatprep.subr.mxu0 0.0
      %3113 = vmatpush1.msra.mxu0 0.0
      %3114 = vmatprep.subr.mxu0 0.0
      %3115 = vmatpush1.msra.mxu0 0.0
      %3116 = vmatprep.mubr.f32.mxu0 0.0
      %3117 = vmatmul.mubr.f32.gmra.mrb[0].mxu0 %v1670
      %v3118 = vpop.f32.mrb[0].mxu0
      %v3119 = vadd.f32 0.0, %v3118
      %v3120 = vpop.f32.mrb[0].mxu0
      %3121 = vmatprep.mubr.f32.mxu0 0.0
      %3122 = vmatmul.mubr.f32.gmra.mrb[0].mxu0 %v1672
      %v3123 = vpop.f32.mrb[0].mxu0
      %v3124 = vadd.f32 0.0, %v3123
      %v3125 = vpop.f32.mrb[0].mxu0
      %3126 = vmatprep.mubr.f32.mxu0 0.0
      %3127 = vmatmul.mubr.f32.gmra.mrb[0].mxu0 %v1674
      %v3128 = vpop.f32.mrb[0].mxu0
      %v3129 = vadd.f32 0.0, %v3128
      %v3130 = vpop.f32.mrb[0].mxu0
      %3131 = vmatprep.mubr.f32.mxu0 0.0
      %3132 = vmatmul.mubr.f32.gmra.mrb[0].mxu0 %v1676
      %v3133 = vpop.f32.mrb[0].mxu0
      %v3134 = vadd.f32 0.0, %v3133
      %v3135 = vpop.f32.mrb[0].mxu0
      %3136 = vmatprep.mubr.f32.mxu0 0.0
      %3137 = vmatmul.mubr.f32.gmra.mrb[0].mxu0 %v1678
      %v3138 = vpop.f32.mrb[0].mxu0
      %v3139 = vadd.f32 0.0, %v3138
      %v3140 = vpop.f32.mrb[0].mxu0
      %3141 = vmatprep.mubr.f32.mxu0 0.0
      %3142 = vmatmul.mubr.f32.gmra.mrb[0].mxu0 %v1680
      %v3143 = vpop.f32.mrb[0].mxu0
      %v3144 = vadd.f32 0.0, %v3143
      %v3145 = vpop.f32.mrb[0].mxu0
      %3146 = vmatprep.mubr.f32.mxu0 0.0
      %3147 = vmatmul.mubr.f32.gmra.mrb[0].mxu0 %v1682
      %v3148 = vpop.f32.mrb[0].mxu0
      %v3149 = vadd.f32 0.0, %v3148
      %v3150 = vpop.f32.mrb[0].mxu0
      %3151 = vmatprep.mubr.f32.mxu0 0.0
      %3152 = vmatmul.mubr.f32.gmra.mrb[0].mxu0 %v1684
      %v3153 = vpop.f32.mrb[0].mxu0
      %v3154 = vadd.f32 0.0, %v3153
      %v3155 = vpop.f32.mrb[0].mxu0
      %3156 = vmatprep.mubr.f32.mxu0 0.0
      %3157 = vmatmul.mubr.f32.gmra.mrb[0].mxu0 %v1686
      %v3158 = vpop.f32.mrb[0].mxu0
      %v3159 = vadd.f32 0.0, %v3158
      %v3160 = vpop.f32.mrb[0].mxu0
      %3161 = vmatprep.mubr.f32.mxu0 0.0
      %3162 = vmatmul.mubr.f32.gmra.mrb[0].mxu0 %v1688
      %v3163 = vpop.f32.mrb[0].mxu0
      %v3164 = vadd.f32 0.0, %v3163
      %v3165 = vpop.f32.mrb[0].mxu0
      %3166 = vmatprep.mubr.f32.mxu0 0.0
      %3167 = vmatmul.mubr.f32.gmra.mrb[0].mxu0 %v1690
      %v3168 = vpop.f32.mrb[0].mxu0
      %v3169 = vadd.f32 0.0, %v3168
      %v3170 = vpop.f32.mrb[0].mxu0
      %3171 = vmatprep.mubr.f32.mxu0 0.0
      %3172 = vmatmul.mubr.f32.gmra.mrb[0].mxu0 %v1692
      %v3173 = vpop.f32.mrb[0].mxu0
      %v3174 = vadd.f32 0.0, %v3173
      %v3175 = vpop.f32.mrb[0].mxu0
      %3176 = vmatprep.mubr.f32.mxu0 0.0
      %3177 = vmatmul.mubr.f32.gmra.mrb[0].mxu0 %v1694
      %v3178 = vpop.f32.mrb[0].mxu0
      %v3179 = vadd.f32 0.0, %v3178
      %v3180 = vpop.f32.mrb[0].mxu0
      %3181 = vmatprep.mubr.f32.mxu0 0.0
      %3182 = vmatmul.mubr.f32.gmra.mrb[0].mxu0 %v1696
      %v3183 = vpop.f32.mrb[0].mxu0
      %v3184 = vadd.f32 0.0, %v3183
      %v3185 = vpop.f32.mrb[0].mxu0
      %3186 = vmatprep.mubr.f32.mxu0 0.0
      %3187 = vmatmul.mubr.f32.gmra.mrb[0].mxu0 %v1698
      %v3188 = vpop.f32.mrb[0].mxu0
      %v3189 = vadd.f32 0.0, %v3188
      %v3190 = vpop.f32.mrb[0].mxu0
      %3191 = vmatprep.mubr.f32.mxu0 0.0
      %3192 = vmatmul.mubr.f32.gmra.mrb[0].mxu0 %v3048
      %v3193 = vpop.f32.mrb[0].mxu0
      %v3194 = vadd.f32 0.0, %v3193
      %v3195 = vpop.f32.mrb[0].mxu0
      %3196 = vmatprep.mubr.f32.mxu0 0.0
      %3197 = vmatmul.mubr.f32.gmra.mrb[0].mxu0 %v3050
      %v3198 = vpop.f32.mrb[0].mxu0
      %v3199 = vadd.f32 0.0, %v3198
      %v3200 = vpop.f32.mrb[0].mxu0
      %3201 = vdwg.mxu0
      %v3202 = vadd.f32 %v3018, %v3119
      %v3203 = vadd.f32 %v3019, %v3124
      %v3204 = vadd.f32 %v3020, %v3129
      %v3205 = vadd.f32 %v3021, %v3134
      %v3206 = vadd.f32 %v3022, %v3139
      %v3207 = vadd.f32 %v3023, %v3144
      %v3208 = vadd.f32 %v3024, %v3149
      %v3209 = vadd.f32 %v3025, %v3154
      %v3210 = vadd.f32 %v3026, %v3159
      %v3211 = vadd.f32 %v3027, %v3164
      %v3212 = vadd.f32 %v3028, %v3169
      %v3213 = vadd.f32 %v3029, %v3174
      %v3214 = vadd.f32 %v3030, %v3179
      %v3215 = vadd.f32 %v3031, %v3184
      %v3216 = vadd.f32 %v3032, %v3189
      %v3217 = vadd.f32 %v3033, %v3194
      %v3218 = vadd.f32 %v3034, %v3199
      %s3219 = scalar_lea.vmem %s1, 896
      %v3220 = vld [vmem:[%s3219] sm:$0xff]
      %v3221 = vld [vmem:[%s3219 + $0x8] sm:$0xff]
      %v3222 = vld [vmem:[%s3219 + $0x10] sm:$0xff]
      %v3223 = vld [vmem:[%s3219 + $0x18] sm:$0xff]
      %v3224 = vld [vmem:[%s3219 + $0x20] sm:$0xff]
      %v3225 = vld [vmem:[%s3219 + $0x28] sm:$0xff]
      %v3226 = vld [vmem:[%s3219 + $0x30] sm:$0xff]
      %v3227 = vld [vmem:[%s3219 + $0x38] sm:$0xff]
      %v3228 = vsel %vm267, %v190, 0
      %v3230 = vsel %vm267, %v191, 0
      %3232 = vmatprep.subr.mxu0 0.0
      %3233 = vmatpush1.msra.mxu0 %v3220
      %3234 = vmatprep.subr.mxu0 0.0
      %3235 = vmatpush1.msra.mxu0 %v3221
      %3236 = vmatprep.subr.mxu0 0.0
      %3237 = vmatpush1.msra.mxu0 %v3222
      %3238 = vmatprep.subr.mxu0 0.0
      %3239 = vmatpush1.msra.mxu0 %v3223
      %3240 = vmatprep.subr.mxu0 0.0
      %3241 = vmatpush1.msra.mxu0 %v3224
      %3242 = vmatprep.subr.mxu0 0.0
      %3243 = vmatpush1.msra.mxu0 %v3225
      %3244 = vmatprep.subr.mxu0 0.0
      %3245 = vmatpush1.msra.mxu0 %v3226
      %3246 = vmatprep.subr.mxu0 0.0
      %3247 = vmatpush1.msra.mxu0 %v3227
      %3248 = vmatprep.subr.mxu0 0.0
      %3249 = vmatpush1.msra.mxu0 0.0
      %3250 = vmatprep.subr.mxu0 0.0
      %3251 = vmatpush1.msra.mxu0 0.0
      %3252 = vmatprep.subr.mxu0 0.0
      %3253 = vmatpush1.msra.mxu0 0.0
      %3254 = vmatprep.subr.mxu0 0.0
      %3255 = vmatpush1.msra.mxu0 0.0
      %3256 = vmatprep.subr.mxu0 0.0
      %3257 = vmatpush1.msra.mxu0 0.0
      %3258 = vmatprep.subr.mxu0 0.0
      %3259 = vmatpush1.msra.mxu0 0.0
      %3260 = vmatprep.subr.mxu0 0.0
      %3261 = vmatpush1.msra.mxu0 0.0
      %3262 = vmatprep.subr.mxu0 0.0
      %3263 = vmatpush1.msra.mxu0 0.0
      %3264 = vmatprep.subr.mxu0 0.0
      %3265 = vmatpush1.msra.mxu0 0.0
      %3266 = vmatprep.subr.mxu0 0.0
      %3267 = vmatpush1.msra.mxu0 0.0
      %3268 = vmatprep.subr.mxu0 0.0
      %3269 = vmatpush1.msra.mxu0 0.0
      %3270 = vmatprep.subr.mxu0 0.0
      %3271 = vmatpush1.msra.mxu0 0.0
      %3272 = vmatprep.subr.mxu0 0.0
      %3273 = vmatpush1.msra.mxu0 0.0
      %3274 = vmatprep.subr.mxu0 0.0
      %3275 = vmatpush1.msra.mxu0 0.0
      %3276 = vmatprep.subr.mxu0 0.0
      %3277 = vmatpush1.msra.mxu0 0.0
      %3278 = vmatprep.subr.mxu0 0.0
      %3279 = vmatpush1.msra.mxu0 0.0
      %3280 = vmatprep.subr.mxu0 0.0
      %3281 = vmatpush1.msra.mxu0 0.0
      %3282 = vmatprep.subr.mxu0 0.0
      %3283 = vmatpush1.msra.mxu0 0.0
      %3284 = vmatprep.subr.mxu0 0.0
      %3285 = vmatpush1.msra.mxu0 0.0
      %3286 = vmatprep.subr.mxu0 0.0
      %3287 = vmatpush1.msra.mxu0 0.0
      %3288 = vmatprep.subr.mxu0 0.0
      %3289 = vmatpush1.msra.mxu0 0.0
      %3290 = vmatprep.subr.mxu0 0.0
      %3291 = vmatpush1.msra.mxu0 0.0
      %3292 = vmatprep.subr.mxu0 0.0
      %3293 = vmatpush1.msra.mxu0 0.0
      %3294 = vmatprep.subr.mxu0 0.0
      %3295 = vmatpush1.msra.mxu0 0.0
      %3296 = vmatprep.mubr.f32.mxu0 0.0
      %3297 = vmatmul.mubr.f32.gmra.mrb[0].mxu0 %v460
      %v3298 = vpop.f32.mrb[0].mxu0
      %v3299 = vadd.f32 0.0, %v3298
      %v3300 = vpop.f32.mrb[0].mxu0
      %3301 = vmatprep.mubr.f32.mxu0 0.0
      %3302 = vmatmul.mubr.f32.gmra.mrb[0].mxu0 %v462
      %v3303 = vpop.f32.mrb[0].mxu0
      %v3304 = vadd.f32 0.0, %v3303
      %v3305 = vpop.f32.mrb[0].mxu0
      %3306 = vmatprep.mubr.f32.mxu0 0.0
      %3307 = vmatmul.mubr.f32.gmra.mrb[0].mxu0 %v464
      %v3308 = vpop.f32.mrb[0].mxu0
      %v3309 = vadd.f32 0.0, %v3308
      %v3310 = vpop.f32.mrb[0].mxu0
      %3311 = vmatprep.mubr.f32.mxu0 0.0
      %3312 = vmatmul.mubr.f32.gmra.mrb[0].mxu0 %v466
      %v3313 = vpop.f32.mrb[0].mxu0
      %v3314 = vadd.f32 0.0, %v3313
      %v3315 = vpop.f32.mrb[0].mxu0
      %3316 = vmatprep.mubr.f32.mxu0 0.0
      %3317 = vmatmul.mubr.f32.gmra.mrb[0].mxu0 %v468
      %v3318 = vpop.f32.mrb[0].mxu0
      %v3319 = vadd.f32 0.0, %v3318
      %v3320 = vpop.f32.mrb[0].mxu0
      %3321 = vmatprep.mubr.f32.mxu0 0.0
      %3322 = vmatmul.mubr.f32.gmra.mrb[0].mxu0 %v470
      %v3323 = vpop.f32.mrb[0].mxu0
      %v3324 = vadd.f32 0.0, %v3323
      %v3325 = vpop.f32.mrb[0].mxu0
      %3326 = vmatprep.mubr.f32.mxu0 0.0
      %3327 = vmatmul.mubr.f32.gmra.mrb[0].mxu0 %v472
      %v3328 = vpop.f32.mrb[0].mxu0
      %v3329 = vadd.f32 0.0, %v3328
      %v3330 = vpop.f32.mrb[0].mxu0
      %3331 = vmatprep.mubr.f32.mxu0 0.0
      %3332 = vmatmul.mubr.f32.gmra.mrb[0].mxu0 %v474
      %v3333 = vpop.f32.mrb[0].mxu0
      %v3334 = vadd.f32 0.0, %v3333
      %v3335 = vpop.f32.mrb[0].mxu0
      %3336 = vmatprep.mubr.f32.mxu0 0.0
      %3337 = vmatmul.mubr.f32.gmra.mrb[0].mxu0 %v476
      %v3338 = vpop.f32.mrb[0].mxu0
      %v3339 = vadd.f32 0.0, %v3338
      %v3340 = vpop.f32.mrb[0].mxu0
      %3341 = vmatprep.mubr.f32.mxu0 0.0
      %3342 = vmatmul.mubr.f32.gmra.mrb[0].mxu0 %v478
      %v3343 = vpop.f32.mrb[0].mxu0
      %v3344 = vadd.f32 0.0, %v3343
      %v3345 = vpop.f32.mrb[0].mxu0
      %3346 = vmatprep.mubr.f32.mxu0 0.0
      %3347 = vmatmul.mubr.f32.gmra.mrb[0].mxu0 %v480
      %v3348 = vpop.f32.mrb[0].mxu0
      %v3349 = vadd.f32 0.0, %v3348
      %v3350 = vpop.f32.mrb[0].mxu0
      %3351 = vmatprep.mubr.f32.mxu0 0.0
      %3352 = vmatmul.mubr.f32.gmra.mrb[0].mxu0 %v482
      %v3353 = vpop.f32.mrb[0].mxu0
      %v3354 = vadd.f32 0.0, %v3353
      %v3355 = vpop.f32.mrb[0].mxu0
      %3356 = vmatprep.mubr.f32.mxu0 0.0
      %3357 = vmatmul.mubr.f32.gmra.mrb[0].mxu0 %v484
      %v3358 = vpop.f32.mrb[0].mxu0
      %v3359 = vadd.f32 0.0, %v3358
      %v3360 = vpop.f32.mrb[0].mxu0
      %3361 = vmatprep.mubr.f32.mxu0 0.0
      %3362 = vmatmul.mubr.f32.gmra.mrb[0].mxu0 %v1876
      %v3363 = vpop.f32.mrb[0].mxu0
      %v3364 = vadd.f32 0.0, %v3363
      %v3365 = vpop.f32.mrb[0].mxu0
      %3366 = vmatprep.mubr.f32.mxu0 0.0
      %3367 = vmatmul.mubr.f32.gmra.mrb[0].mxu0 %v1878
      %v3368 = vpop.f32.mrb[0].mxu0
      %v3369 = vadd.f32 0.0, %v3368
      %v3370 = vpop.f32.mrb[0].mxu0
      %3371 = vmatprep.mubr.f32.mxu0 0.0
      %3372 = vmatmul.mubr.f32.gmra.mrb[0].mxu0 %v3228
      %v3373 = vpop.f32.mrb[0].mxu0
      %v3374 = vadd.f32 0.0, %v3373
      %v3375 = vpop.f32.mrb[0].mxu0
      %3376 = vmatprep.mubr.f32.mxu0 0.0
      %3377 = vmatmul.mubr.f32.gmra.mrb[0].mxu0 %v3230
      %v3378 = vpop.f32.mrb[0].mxu0
      %v3379 = vadd.f32 0.0, %v3378
      %v3380 = vpop.f32.mrb[0].mxu0
      %3381 = vdwg.mxu0
      %v3382 = vadd.f32 %v3202, %v3299
      %v3383 = vadd.f32 %v3203, %v3304
      %v3384 = vadd.f32 %v3204, %v3309
      %v3385 = vadd.f32 %v3205, %v3314
      %v3386 = vadd.f32 %v3206, %v3319
      %v3387 = vadd.f32 %v3207, %v3324
      %v3388 = vadd.f32 %v3208, %v3329
      %v3389 = vadd.f32 %v3209, %v3334
      %v3390 = vadd.f32 %v3210, %v3339
      %v3391 = vadd.f32 %v3211, %v3344
      %v3392 = vadd.f32 %v3212, %v3349
      %v3393 = vadd.f32 %v3213, %v3354
      %v3394 = vadd.f32 %v3214, %v3359
      %v3395 = vadd.f32 %v3215, %v3364
      %v3396 = vadd.f32 %v3216, %v3369
      %v3397 = vadd.f32 %v3217, %v3374
      %v3398 = vadd.f32 %v3218, %v3379
      %s3399 = scalar_lea.vmem %s1, 960
      %v3400 = vld [vmem:[%s3399] sm:$0xff]
      %v3401 = vld [vmem:[%s3399 + $0x8] sm:$0xff]
      %v3402 = vld [vmem:[%s3399 + $0x10] sm:$0xff]
      %v3403 = vld [vmem:[%s3399 + $0x18] sm:$0xff]
      %v3404 = vld [vmem:[%s3399 + $0x20] sm:$0xff]
      %v3405 = vld [vmem:[%s3399 + $0x28] sm:$0xff]
      %v3406 = vld [vmem:[%s3399 + $0x30] sm:$0xff]
      %v3407 = vld [vmem:[%s3399 + $0x38] sm:$0xff]
      %v3410 = vrot.slane %v191, 2
      %v3411 = vsel %vm645, %v2243, %v3410
      %v3412 = vrot.slane %v192, 2
      %v3413 = vsel %vm645, %v3410, %v3412
      %v3414 = vrot.slane %v193, 2
      %v3415 = vsel %vm645, %v3412, %v3414
      %v3416 = vsel %vm267, %v3411, 0
      %v3418 = vsel %vm267, %v3413, 0
      %v3420 = vsel %vm267, %v3415, 0
      %3422 = vmatprep.subr.mxu0 0.0
      %3423 = vmatpush1.msra.mxu0 %v3400
      %3424 = vmatprep.subr.mxu0 0.0
      %3425 = vmatpush1.msra.mxu0 %v3401
      %3426 = vmatprep.subr.mxu0 0.0
      %3427 = vmatpush1.msra.mxu0 %v3402
      %3428 = vmatprep.subr.mxu0 0.0
      %3429 = vmatpush1.msra.mxu0 %v3403
      %3430 = vmatprep.subr.mxu0 0.0
      %3431 = vmatpush1.msra.mxu0 %v3404
      %3432 = vmatprep.subr.mxu0 0.0
      %3433 = vmatpush1.msra.mxu0 %v3405
      %3434 = vmatprep.subr.mxu0 0.0
      %3435 = vmatpush1.msra.mxu0 %v3406
      %3436 = vmatprep.subr.mxu0 0.0
      %3437 = vmatpush1.msra.mxu0 %v3407
      %3438 = vmatprep.subr.mxu0 0.0
      %3439 = vmatpush1.msra.mxu0 0.0
      %3440 = vmatprep.subr.mxu0 0.0
      %3441 = vmatpush1.msra.mxu0 0.0
      %3442 = vmatprep.subr.mxu0 0.0
      %3443 = vmatpush1.msra.mxu0 0.0
      %3444 = vmatprep.subr.mxu0 0.0
      %3445 = vmatpush1.msra.mxu0 0.0
      %3446 = vmatprep.subr.mxu0 0.0
      %3447 = vmatpush1.msra.mxu0 0.0
      %3448 = vmatprep.subr.mxu0 0.0
      %3449 = vmatpush1.msra.mxu0 0.0
      %3450 = vmatprep.subr.mxu0 0.0
      %3451 = vmatpush1.msra.mxu0 0.0
      %3452 = vmatprep.subr.mxu0 0.0
      %3453 = vmatpush1.msra.mxu0 0.0
      %3454 = vmatprep.subr.mxu0 0.0
      %3455 = vmatpush1.msra.mxu0 0.0
      %3456 = vmatprep.subr.mxu0 0.0
      %3457 = vmatpush1.msra.mxu0 0.0
      %3458 = vmatprep.subr.mxu0 0.0
      %3459 = vmatpush1.msra.mxu0 0.0
      %3460 = vmatprep.subr.mxu0 0.0
      %3461 = vmatpush1.msra.mxu0 0.0
      %3462 = vmatprep.subr.mxu0 0.0
      %3463 = vmatpush1.msra.mxu0 0.0
      %3464 = vmatprep.subr.mxu0 0.0
      %3465 = vmatpush1.msra.mxu0 0.0
      %3466 = vmatprep.subr.mxu0 0.0
      %3467 = vmatpush1.msra.mxu0 0.0
      %3468 = vmatprep.subr.mxu0 0.0
      %3469 = vmatpush1.msra.mxu0 0.0
      %3470 = vmatprep.subr.mxu0 0.0
      %3471 = vmatpush1.msra.mxu0 0.0
      %3472 = vmatprep.subr.mxu0 0.0
      %3473 = vmatpush1.msra.mxu0 0.0
      %3474 = vmatprep.subr.mxu0 0.0
      %3475 = vmatpush1.msra.mxu0 0.0
      %3476 = vmatprep.subr.mxu0 0.0
      %3477 = vmatpush1.msra.mxu0 0.0
      %3478 = vmatprep.subr.mxu0 0.0
      %3479 = vmatpush1.msra.mxu0 0.0
      %3480 = vmatprep.subr.mxu0 0.0
      %3481 = vmatpush1.msra.mxu0 0.0
      %3482 = vmatprep.subr.mxu0 0.0
      %3483 = vmatpush1.msra.mxu0 0.0
      %3484 = vmatprep.subr.mxu0 0.0
      %3485 = vmatpush1.msra.mxu0 0.0
      %3486 = vmatprep.mubr.f32.mxu0 0.0
      %3487 = vmatmul.mubr.f32.gmra.mrb[0].mxu0 %v691
      %v3488 = vpop.f32.mrb[0].mxu0
      %v3489 = vadd.f32 0.0, %v3488
      %v3490 = vpop.f32.mrb[0].mxu0
      %3491 = vmatprep.mubr.f32.mxu0 0.0
      %3492 = vmatmul.mubr.f32.gmra.mrb[0].mxu0 %v693
      %v3493 = vpop.f32.mrb[0].mxu0
      %v3494 = vadd.f32 0.0, %v3493
      %v3495 = vpop.f32.mrb[0].mxu0
      %3496 = vmatprep.mubr.f32.mxu0 0.0
      %3497 = vmatmul.mubr.f32.gmra.mrb[0].mxu0 %v695
      %v3498 = vpop.f32.mrb[0].mxu0
      %v3499 = vadd.f32 0.0, %v3498
      %v3500 = vpop.f32.mrb[0].mxu0
      %3501 = vmatprep.mubr.f32.mxu0 0.0
      %3502 = vmatmul.mubr.f32.gmra.mrb[0].mxu0 %v697
      %v3503 = vpop.f32.mrb[0].mxu0
      %v3504 = vadd.f32 0.0, %v3503
      %v3505 = vpop.f32.mrb[0].mxu0
      %3506 = vmatprep.mubr.f32.mxu0 0.0
      %3507 = vmatmul.mubr.f32.gmra.mrb[0].mxu0 %v699
      %v3508 = vpop.f32.mrb[0].mxu0
      %v3509 = vadd.f32 0.0, %v3508
      %v3510 = vpop.f32.mrb[0].mxu0
      %3511 = vmatprep.mubr.f32.mxu0 0.0
      %3512 = vmatmul.mubr.f32.gmra.mrb[0].mxu0 %v701
      %v3513 = vpop.f32.mrb[0].mxu0
      %v3514 = vadd.f32 0.0, %v3513
      %v3515 = vpop.f32.mrb[0].mxu0
      %3516 = vmatprep.mubr.f32.mxu0 0.0
      %3517 = vmatmul.mubr.f32.gmra.mrb[0].mxu0 %v703
      %v3518 = vpop.f32.mrb[0].mxu0
      %v3519 = vadd.f32 0.0, %v3518
      %v3520 = vpop.f32.mrb[0].mxu0
      %3521 = vmatprep.mubr.f32.mxu0 0.0
      %3522 = vmatmul.mubr.f32.gmra.mrb[0].mxu0 %v705
      %v3523 = vpop.f32.mrb[0].mxu0
      %v3524 = vadd.f32 0.0, %v3523
      %v3525 = vpop.f32.mrb[0].mxu0
      %3526 = vmatprep.mubr.f32.mxu0 0.0
      %3527 = vmatmul.mubr.f32.gmra.mrb[0].mxu0 %v707
      %v3528 = vpop.f32.mrb[0].mxu0
      %v3529 = vadd.f32 0.0, %v3528
      %v3530 = vpop.f32.mrb[0].mxu0
      %3531 = vmatprep.mubr.f32.mxu0 0.0
      %3532 = vmatmul.mubr.f32.gmra.mrb[0].mxu0 %v709
      %v3533 = vpop.f32.mrb[0].mxu0
      %v3534 = vadd.f32 0.0, %v3533
      %v3535 = vpop.f32.mrb[0].mxu0
      %3536 = vmatprep.mubr.f32.mxu0 0.0
      %3537 = vmatmul.mubr.f32.gmra.mrb[0].mxu0 %v711
      %v3538 = vpop.f32.mrb[0].mxu0
      %v3539 = vadd.f32 0.0, %v3538
      %v3540 = vpop.f32.mrb[0].mxu0
      %3541 = vmatprep.mubr.f32.mxu0 0.0
      %3542 = vmatmul.mubr.f32.gmra.mrb[0].mxu0 %v713
      %v3543 = vpop.f32.mrb[0].mxu0
      %v3544 = vadd.f32 0.0, %v3543
      %v3545 = vpop.f32.mrb[0].mxu0
      %3546 = vmatprep.mubr.f32.mxu0 0.0
      %3547 = vmatmul.mubr.f32.gmra.mrb[0].mxu0 %v2245
      %v3548 = vpop.f32.mrb[0].mxu0
      %v3549 = vadd.f32 0.0, %v3548
      %v3550 = vpop.f32.mrb[0].mxu0
      %3551 = vmatprep.mubr.f32.mxu0 0.0
      %3552 = vmatmul.mubr.f32.gmra.mrb[0].mxu0 %v2247
      %v3553 = vpop.f32.mrb[0].mxu0
      %v3554 = vadd.f32 0.0, %v3553
      %v3555 = vpop.f32.mrb[0].mxu0
      %3556 = vmatprep.mubr.f32.mxu0 0.0
      %3557 = vmatmul.mubr.f32.gmra.mrb[0].mxu0 %v3416
      %v3558 = vpop.f32.mrb[0].mxu0
      %v3559 = vadd.f32 0.0, %v3558
      %v3560 = vpop.f32.mrb[0].mxu0
      %3561 = vmatprep.mubr.f32.mxu0 0.0
      %3562 = vmatmul.mubr.f32.gmra.mrb[0].mxu0 %v3418
      %v3563 = vpop.f32.mrb[0].mxu0
      %v3564 = vadd.f32 0.0, %v3563
      %v3565 = vpop.f32.mrb[0].mxu0
      %3566 = vmatprep.mubr.f32.mxu0 0.0
      %3567 = vmatmul.mubr.f32.gmra.mrb[0].mxu0 %v3420
      %v3568 = vpop.f32.mrb[0].mxu0
      %v3569 = vadd.f32 0.0, %v3568
      %v3570 = vpop.f32.mrb[0].mxu0
      %3571 = vdwg.mxu0
      %v3572 = vadd.f32 %v3382, %v3489
      %v3573 = vadd.f32 %v3383, %v3494
      %v3574 = vadd.f32 %v3384, %v3499
      %v3575 = vadd.f32 %v3385, %v3504
      %v3576 = vadd.f32 %v3386, %v3509
      %v3577 = vadd.f32 %v3387, %v3514
      %v3578 = vadd.f32 %v3388, %v3519
      %v3579 = vadd.f32 %v3389, %v3524
      %v3580 = vadd.f32 %v3390, %v3529
      %v3581 = vadd.f32 %v3391, %v3534
      %v3582 = vadd.f32 %v3392, %v3539
      %v3583 = vadd.f32 %v3393, %v3544
      %v3584 = vadd.f32 %v3394, %v3549
      %v3585 = vadd.f32 %v3395, %v3554
      %v3586 = vadd.f32 %v3396, %v3559
      %v3587 = vadd.f32 %v3397, %v3564
      %v3588 = vadd.f32 %v3398, %v3569
      %s3589 = scalar_lea.vmem %s1, 1024
      %v3590 = vld [vmem:[%s3589] sm:$0xff]
      %v3591 = vld [vmem:[%s3589 + $0x8] sm:$0xff]
      %v3592 = vld [vmem:[%s3589 + $0x10] sm:$0xff]
      %v3593 = vld [vmem:[%s3589 + $0x18] sm:$0xff]
      %v3594 = vld [vmem:[%s3589 + $0x20] sm:$0xff]
      %v3595 = vld [vmem:[%s3589 + $0x28] sm:$0xff]
      %v3596 = vld [vmem:[%s3589 + $0x30] sm:$0xff]
      %v3597 = vld [vmem:[%s3589 + $0x38] sm:$0xff]
      %v3598 = vrot.slane %v189, 3
      %v3599 = vsel %vm891, %v925, %v3598
      %v3600 = vrot.slane %v190, 3
      %v3601 = vsel %vm891, %v3598, %v3600
      %v3602 = vrot.slane %v191, 3
      %v3603 = vsel %vm891, %v3600, %v3602
      %v3604 = vrot.slane %v192, 3
      %v3605 = vsel %vm891, %v3602, %v3604
      %v3606 = vrot.slane %v193, 3
      %v3607 = vsel %vm891, %v3604, %v3606
      %v3608 = vsel %vm267, %v3599, 0
      %v3610 = vsel %vm267, %v3601, 0
      %v3612 = vsel %vm267, %v3603, 0
      %v3614 = vsel %vm267, %v3605, 0
      %v3616 = vsel %vm267, %v3607, 0
      %3618 = vmatprep.subr.mxu0 0.0
      %3619 = vmatpush1.msra.mxu0 %v3590
      %3620 = vmatprep.subr.mxu0 0.0
      %3621 = vmatpush1.msra.mxu0 %v3591
      %3622 = vmatprep.subr.mxu0 0.0
      %3623 = vmatpush1.msra.mxu0 %v3592
      %3624 = vmatprep.subr.mxu0 0.0
      %3625 = vmatpush1.msra.mxu0 %v3593
      %3626 = vmatprep.subr.mxu0 0.0
      %3627 = vmatpush1.msra.mxu0 %v3594
      %3628 = vmatprep.subr.mxu0 0.0
      %3629 = vmatpush1.msra.mxu0 %v3595
      %3630 = vmatprep.subr.mxu0 0.0
      %3631 = vmatpush1.msra.mxu0 %v3596
      %3632 = vmatprep.subr.mxu0 0.0
      %3633 = vmatpush1.msra.mxu0 %v3597
      %3634 = vmatprep.subr.mxu0 0.0
      %3635 = vmatpush1.msra.mxu0 0.0
      %3636 = vmatprep.subr.mxu0 0.0
      %3637 = vmatpush1.msra.mxu0 0.0
      %3638 = vmatprep.subr.mxu0 0.0
      %3639 = vmatpush1.msra.mxu0 0.0
      %3640 = vmatprep.subr.mxu0 0.0
      %3641 = vmatpush1.msra.mxu0 0.0
      %3642 = vmatprep.subr.mxu0 0.0
      %3643 = vmatpush1.msra.mxu0 0.0
      %3644 = vmatprep.subr.mxu0 0.0
      %3645 = vmatpush1.msra.mxu0 0.0
      %3646 = vmatprep.subr.mxu0 0.0
      %3647 = vmatpush1.msra.mxu0 0.0
      %3648 = vmatprep.subr.mxu0 0.0
      %3649 = vmatpush1.msra.mxu0 0.0
      %3650 = vmatprep.subr.mxu0 0.0
      %3651 = vmatpush1.msra.mxu0 0.0
      %3652 = vmatprep.subr.mxu0 0.0
      %3653 = vmatpush1.msra.mxu0 0.0
      %3654 = vmatprep.subr.mxu0 0.0
      %3655 = vmatpush1.msra.mxu0 0.0
      %3656 = vmatprep.subr.mxu0 0.0
      %3657 = vmatpush1.msra.mxu0 0.0
      %3658 = vmatprep.subr.mxu0 0.0
      %3659 = vmatpush1.msra.mxu0 0.0
      %3660 = vmatprep.subr.mxu0 0.0
      %3661 = vmatpush1.msra.mxu0 0.0
      %3662 = vmatprep.subr.mxu0 0.0
      %3663 = vmatpush1.msra.mxu0 0.0
      %3664 = vmatprep.subr.mxu0 0.0
      %3665 = vmatpush1.msra.mxu0 0.0
      %3666 = vmatprep.subr.mxu0 0.0
      %3667 = vmatpush1.msra.mxu0 0.0
      %3668 = vmatprep.subr.mxu0 0.0
      %3669 = vmatpush1.msra.mxu0 0.0
      %3670 = vmatprep.subr.mxu0 0.0
      %3671 = vmatpush1.msra.mxu0 0.0
      %3672 = vmatprep.subr.mxu0 0.0
      %3673 = vmatpush1.msra.mxu0 0.0
      %3674 = vmatprep.subr.mxu0 0.0
      %3675 = vmatpush1.msra.mxu0 0.0
      %3676 = vmatprep.subr.mxu0 0.0
      %3677 = vmatpush1.msra.mxu0 0.0
      %3678 = vmatprep.subr.mxu0 0.0
      %3679 = vmatpush1.msra.mxu0 0.0
      %3680 = vmatprep.subr.mxu0 0.0
      %3681 = vmatpush1.msra.mxu0 0.0
      %3682 = vmatprep.mubr.f32.mxu0 0.0
      %3683 = vmatmul.mubr.f32.gmra.mrb[0].mxu0 %v937
      %v3684 = vpop.f32.mrb[0].mxu0
      %v3685 = vadd.f32 0.0, %v3684
      %v3686 = vpop.f32.mrb[0].mxu0
      %3687 = vmatprep.mubr.f32.mxu0 0.0
      %3688 = vmatmul.mubr.f32.gmra.mrb[0].mxu0 %v939
      %v3689 = vpop.f32.mrb[0].mxu0
      %v3690 = vadd.f32 0.0, %v3689
      %v3691 = vpop.f32.mrb[0].mxu0
      %3692 = vmatprep.mubr.f32.mxu0 0.0
      %3693 = vmatmul.mubr.f32.gmra.mrb[0].mxu0 %v941
      %v3694 = vpop.f32.mrb[0].mxu0
      %v3695 = vadd.f32 0.0, %v3694
      %v3696 = vpop.f32.mrb[0].mxu0
      %3697 = vmatprep.mubr.f32.mxu0 0.0
      %3698 = vmatmul.mubr.f32.gmra.mrb[0].mxu0 %v943
      %v3699 = vpop.f32.mrb[0].mxu0
      %v3700 = vadd.f32 0.0, %v3699
      %v3701 = vpop.f32.mrb[0].mxu0
      %3702 = vmatprep.mubr.f32.mxu0 0.0
      %3703 = vmatmul.mubr.f32.gmra.mrb[0].mxu0 %v945
      %v3704 = vpop.f32.mrb[0].mxu0
      %v3705 = vadd.f32 0.0, %v3704
      %v3706 = vpop.f32.mrb[0].mxu0
      %3707 = vmatprep.mubr.f32.mxu0 0.0
      %3708 = vmatmul.mubr.f32.gmra.mrb[0].mxu0 %v947
      %v3709 = vpop.f32.mrb[0].mxu0
      %v3710 = vadd.f32 0.0, %v3709
      %v3711 = vpop.f32.mrb[0].mxu0
      %3712 = vmatprep.mubr.f32.mxu0 0.0
      %3713 = vmatmul.mubr.f32.gmra.mrb[0].mxu0 %v949
      %v3714 = vpop.f32.mrb[0].mxu0
      %v3715 = vadd.f32 0.0, %v3714
      %v3716 = vpop.f32.mrb[0].mxu0
      %3717 = vmatprep.mubr.f32.mxu0 0.0
      %3718 = vmatmul.mubr.f32.gmra.mrb[0].mxu0 %v951
      %v3719 = vpop.f32.mrb[0].mxu0
      %v3720 = vadd.f32 0.0, %v3719
      %v3721 = vpop.f32.mrb[0].mxu0
      %3722 = vmatprep.mubr.f32.mxu0 0.0
      %3723 = vmatmul.mubr.f32.gmra.mrb[0].mxu0 %v953
      %v3724 = vpop.f32.mrb[0].mxu0
      %v3725 = vadd.f32 0.0, %v3724
      %v3726 = vpop.f32.mrb[0].mxu0
      %3727 = vmatprep.mubr.f32.mxu0 0.0
      %3728 = vmatmul.mubr.f32.gmra.mrb[0].mxu0 %v955
      %v3729 = vpop.f32.mrb[0].mxu0
      %v3730 = vadd.f32 0.0, %v3729
      %v3731 = vpop.f32.mrb[0].mxu0
      %3732 = vmatprep.mubr.f32.mxu0 0.0
      %3733 = vmatmul.mubr.f32.gmra.mrb[0].mxu0 %v957
      %v3734 = vpop.f32.mrb[0].mxu0
      %v3735 = vadd.f32 0.0, %v3734
      %v3736 = vpop.f32.mrb[0].mxu0
      %3737 = vmatprep.mubr.f32.mxu0 0.0
      %3738 = vmatmul.mubr.f32.gmra.mrb[0].mxu0 %v959
      %v3739 = vpop.f32.mrb[0].mxu0
      %v3740 = vadd.f32 0.0, %v3739
      %v3741 = vpop.f32.mrb[0].mxu0
      %3742 = vmatprep.mubr.f32.mxu0 0.0
      %3743 = vmatmul.mubr.f32.gmra.mrb[0].mxu0 %v3608
      %v3744 = vpop.f32.mrb[0].mxu0
      %v3745 = vadd.f32 0.0, %v3744
      %v3746 = vpop.f32.mrb[0].mxu0
      %3747 = vmatprep.mubr.f32.mxu0 0.0
      %3748 = vmatmul.mubr.f32.gmra.mrb[0].mxu0 %v3610
      %v3749 = vpop.f32.mrb[0].mxu0
      %v3750 = vadd.f32 0.0, %v3749
      %v3751 = vpop.f32.mrb[0].mxu0
      %3752 = vmatprep.mubr.f32.mxu0 0.0
      %3753 = vmatmul.mubr.f32.gmra.mrb[0].mxu0 %v3612
      %v3754 = vpop.f32.mrb[0].mxu0
      %v3755 = vadd.f32 0.0, %v3754
      %v3756 = vpop.f32.mrb[0].mxu0
      %3757 = vmatprep.mubr.f32.mxu0 0.0
      %3758 = vmatmul.mubr.f32.gmra.mrb[0].mxu0 %v3614
      %v3759 = vpop.f32.mrb[0].mxu0
      %v3760 = vadd.f32 0.0, %v3759
      %v3761 = vpop.f32.mrb[0].mxu0
      %3762 = vmatprep.mubr.f32.mxu0 0.0
      %3763 = vmatmul.mubr.f32.gmra.mrb[0].mxu0 %v3616
      %v3764 = vpop.f32.mrb[0].mxu0
      %v3765 = vadd.f32 0.0, %v3764
      %v3766 = vpop.f32.mrb[0].mxu0
      %3767 = vdwg.mxu0
      %v3768 = vadd.f32 %v3572, %v3685
      %v3769 = vadd.f32 %v3573, %v3690
      %v3770 = vadd.f32 %v3574, %v3695
      %v3771 = vadd.f32 %v3575, %v3700
      %v3772 = vadd.f32 %v3576, %v3705
      %v3773 = vadd.f32 %v3577, %v3710
      %v3774 = vadd.f32 %v3578, %v3715
      %v3775 = vadd.f32 %v3579, %v3720
      %v3776 = vadd.f32 %v3580, %v3725
      %v3777 = vadd.f32 %v3581, %v3730
      %v3778 = vadd.f32 %v3582, %v3735
      %v3779 = vadd.f32 %v3583, %v3740
      %v3780 = vadd.f32 %v3584, %v3745
      %v3781 = vadd.f32 %v3585, %v3750
      %v3782 = vadd.f32 %v3586, %v3755
      %v3783 = vadd.f32 %v3587, %v3760
      %v3784 = vadd.f32 %v3588, %v3765
      %s3785 = scalar_lea.vmem %s1, 1088
      %v3786 = vld [vmem:[%s3785] sm:$0xff]
      %v3787 = vld [vmem:[%s3785 + $0x8] sm:$0xff]
      %v3788 = vld [vmem:[%s3785 + $0x10] sm:$0xff]
      %v3789 = vld [vmem:[%s3785 + $0x18] sm:$0xff]
      %v3790 = vld [vmem:[%s3785 + $0x20] sm:$0xff]
      %v3791 = vld [vmem:[%s3785 + $0x28] sm:$0xff]
      %v3792 = vld [vmem:[%s3785 + $0x30] sm:$0xff]
      %v3793 = vld [vmem:[%s3785 + $0x38] sm:$0xff]
      %v3794 = vrot.slane %v192, 4
      %v3795 = vsel %vm1137, %v2430, %v3794
      %v3796 = vrot.slane %v193, 4
      %v3797 = vsel %vm1137, %v3794, %v3796
      %v3798 = vsel %vm267, %v3795, 0
      %v3800 = vsel %vm267, %v3797, 0
      %3802 = vmatprep.subr.mxu0 0.0
      %3803 = vmatpush1.msra.mxu0 %v3786
      %3804 = vmatprep.subr.mxu0 0.0
      %3805 = vmatpush1.msra.mxu0 %v3787
      %3806 = vmatprep.subr.mxu0 0.0
      %3807 = vmatpush1.msra.mxu0 %v3788
      %3808 = vmatprep.subr.mxu0 0.0
      %3809 = vmatpush1.msra.mxu0 %v3789
      %3810 = vmatprep.subr.mxu0 0.0
      %3811 = vmatpush1.msra.mxu0 %v3790
      %3812 = vmatprep.subr.mxu0 0.0
      %3813 = vmatpush1.msra.mxu0 %v3791
      %3814 = vmatprep.subr.mxu0 0.0
      %3815 = vmatpush1.msra.mxu0 %v3792
      %3816 = vmatprep.subr.mxu0 0.0
      %3817 = vmatpush1.msra.mxu0 %v3793
      %3818 = vmatprep.subr.mxu0 0.0
      %3819 = vmatpush1.msra.mxu0 0.0
      %3820 = vmatprep.subr.mxu0 0.0
      %3821 = vmatpush1.msra.mxu0 0.0
      %3822 = vmatprep.subr.mxu0 0.0
      %3823 = vmatpush1.msra.mxu0 0.0
      %3824 = vmatprep.subr.mxu0 0.0
      %3825 = vmatpush1.msra.mxu0 0.0
      %3826 = vmatprep.subr.mxu0 0.0
      %3827 = vmatpush1.msra.mxu0 0.0
      %3828 = vmatprep.subr.mxu0 0.0
      %3829 = vmatpush1.msra.mxu0 0.0
      %3830 = vmatprep.subr.mxu0 0.0
      %3831 = vmatpush1.msra.mxu0 0.0
      %3832 = vmatprep.subr.mxu0 0.0
      %3833 = vmatpush1.msra.mxu0 0.0
      %3834 = vmatprep.subr.mxu0 0.0
      %3835 = vmatpush1.msra.mxu0 0.0
      %3836 = vmatprep.subr.mxu0 0.0
      %3837 = vmatpush1.msra.mxu0 0.0
      %3838 = vmatprep.subr.mxu0 0.0
      %3839 = vmatpush1.msra.mxu0 0.0
      %3840 = vmatprep.subr.mxu0 0.0
      %3841 = vmatpush1.msra.mxu0 0.0
      %3842 = vmatprep.subr.mxu0 0.0
      %3843 = vmatpush1.msra.mxu0 0.0
      %3844 = vmatprep.subr.mxu0 0.0
      %3845 = vmatpush1.msra.mxu0 0.0
      %3846 = vmatprep.subr.mxu0 0.0
      %3847 = vmatpush1.msra.mxu0 0.0
      %3848 = vmatprep.subr.mxu0 0.0
      %3849 = vmatpush1.msra.mxu0 0.0
      %3850 = vmatprep.subr.mxu0 0.0
      %3851 = vmatpush1.msra.mxu0 0.0
      %3852 = vmatprep.subr.mxu0 0.0
      %3853 = vmatpush1.msra.mxu0 0.0
      %3854 = vmatprep.subr.mxu0 0.0
      %3855 = vmatpush1.msra.mxu0 0.0
      %3856 = vmatprep.subr.mxu0 0.0
      %3857 = vmatpush1.msra.mxu0 0.0
      %3858 = vmatprep.subr.mxu0 0.0
      %3859 = vmatpush1.msra.mxu0 0.0
      %3860 = vmatprep.subr.mxu0 0.0
      %3861 = vmatpush1.msra.mxu0 0.0
      %3862 = vmatprep.subr.mxu0 0.0
      %3863 = vmatpush1.msra.mxu0 0.0
      %3864 = vmatprep.subr.mxu0 0.0
      %3865 = vmatpush1.msra.mxu0 0.0
      %3866 = vmatprep.mubr.f32.mxu0 0.0
      %3867 = vmatmul.mubr.f32.gmra.mrb[0].mxu0 %v1183
      %v3868 = vpop.f32.mrb[0].mxu0
      %v3869 = vadd.f32 0.0, %v3868
      %v3870 = vpop.f32.mrb[0].mxu0
      %3871 = vmatprep.mubr.f32.mxu0 0.0
      %3872 = vmatmul.mubr.f32.gmra.mrb[0].mxu0 %v1185
      %v3873 = vpop.f32.mrb[0].mxu0
      %v3874 = vadd.f32 0.0, %v3873
      %v3875 = vpop.f32.mrb[0].mxu0
      %3876 = vmatprep.mubr.f32.mxu0 0.0
      %3877 = vmatmul.mubr.f32.gmra.mrb[0].mxu0 %v1187
      %v3878 = vpop.f32.mrb[0].mxu0
      %v3879 = vadd.f32 0.0, %v3878
      %v3880 = vpop.f32.mrb[0].mxu0
      %3881 = vmatprep.mubr.f32.mxu0 0.0
      %3882 = vmatmul.mubr.f32.gmra.mrb[0].mxu0 %v1189
      %v3883 = vpop.f32.mrb[0].mxu0
      %v3884 = vadd.f32 0.0, %v3883
      %v3885 = vpop.f32.mrb[0].mxu0
      %3886 = vmatprep.mubr.f32.mxu0 0.0
      %3887 = vmatmul.mubr.f32.gmra.mrb[0].mxu0 %v1191
      %v3888 = vpop.f32.mrb[0].mxu0
      %v3889 = vadd.f32 0.0, %v3888
      %v3890 = vpop.f32.mrb[0].mxu0
      %3891 = vmatprep.mubr.f32.mxu0 0.0
      %3892 = vmatmul.mubr.f32.gmra.mrb[0].mxu0 %v1193
      %v3893 = vpop.f32.mrb[0].mxu0
      %v3894 = vadd.f32 0.0, %v3893
      %v3895 = vpop.f32.mrb[0].mxu0
      %3896 = vmatprep.mubr.f32.mxu0 0.0
      %3897 = vmatmul.mubr.f32.gmra.mrb[0].mxu0 %v1195
      %v3898 = vpop.f32.mrb[0].mxu0
      %v3899 = vadd.f32 0.0, %v3898
      %v3900 = vpop.f32.mrb[0].mxu0
      %3901 = vmatprep.mubr.f32.mxu0 0.0
      %3902 = vmatmul.mubr.f32.gmra.mrb[0].mxu0 %v1197
      %v3903 = vpop.f32.mrb[0].mxu0
      %v3904 = vadd.f32 0.0, %v3903
      %v3905 = vpop.f32.mrb[0].mxu0
      %3906 = vmatprep.mubr.f32.mxu0 0.0
      %3907 = vmatmul.mubr.f32.gmra.mrb[0].mxu0 %v1199
      %v3908 = vpop.f32.mrb[0].mxu0
      %v3909 = vadd.f32 0.0, %v3908
      %v3910 = vpop.f32.mrb[0].mxu0
      %3911 = vmatprep.mubr.f32.mxu0 0.0
      %3912 = vmatmul.mubr.f32.gmra.mrb[0].mxu0 %v1201
      %v3913 = vpop.f32.mrb[0].mxu0
      %v3914 = vadd.f32 0.0, %v3913
      %v3915 = vpop.f32.mrb[0].mxu0
      %3916 = vmatprep.mubr.f32.mxu0 0.0
      %3917 = vmatmul.mubr.f32.gmra.mrb[0].mxu0 %v1203
      %v3918 = vpop.f32.mrb[0].mxu0
      %v3919 = vadd.f32 0.0, %v3918
      %v3920 = vpop.f32.mrb[0].mxu0
      %3921 = vmatprep.mubr.f32.mxu0 0.0
      %3922 = vmatmul.mubr.f32.gmra.mrb[0].mxu0 %v1205
      %v3923 = vpop.f32.mrb[0].mxu0
      %v3924 = vadd.f32 0.0, %v3923
      %v3925 = vpop.f32.mrb[0].mxu0
      %3926 = vmatprep.mubr.f32.mxu0 0.0
      %3927 = vmatmul.mubr.f32.gmra.mrb[0].mxu0 %v2432
      %v3928 = vpop.f32.mrb[0].mxu0
      %v3929 = vadd.f32 0.0, %v3928
      %v3930 = vpop.f32.mrb[0].mxu0
      %3931 = vmatprep.mubr.f32.mxu0 0.0
      %3932 = vmatmul.mubr.f32.gmra.mrb[0].mxu0 %v2434
      %v3933 = vpop.f32.mrb[0].mxu0
      %v3934 = vadd.f32 0.0, %v3933
      %v3935 = vpop.f32.mrb[0].mxu0
      %3936 = vmatprep.mubr.f32.mxu0 0.0
      %3937 = vmatmul.mubr.f32.gmra.mrb[0].mxu0 %v2436
      %v3938 = vpop.f32.mrb[0].mxu0
      %v3939 = vadd.f32 0.0, %v3938
      %v3940 = vpop.f32.mrb[0].mxu0
      %3941 = vmatprep.mubr.f32.mxu0 0.0
      %3942 = vmatmul.mubr.f32.gmra.mrb[0].mxu0 %v3798
      %v3943 = vpop.f32.mrb[0].mxu0
      %v3944 = vadd.f32 0.0, %v3943
      %v3945 = vpop.f32.mrb[0].mxu0
      %3946 = vmatprep.mubr.f32.mxu0 0.0
      %3947 = vmatmul.mubr.f32.gmra.mrb[0].mxu0 %v3800
      %v3948 = vpop.f32.mrb[0].mxu0
      %v3949 = vadd.f32 0.0, %v3948
      %v3950 = vpop.f32.mrb[0].mxu0
      %3951 = vdwg.mxu0
      %v3952 = vadd.f32 %v3768, %v3869
      %v3953 = vadd.f32 %v3769, %v3874
      %v3954 = vadd.f32 %v3770, %v3879
      %v3955 = vadd.f32 %v3771, %v3884
      %v3956 = vadd.f32 %v3772, %v3889
      %v3957 = vadd.f32 %v3773, %v3894
      %v3958 = vadd.f32 %v3774, %v3899
      %v3959 = vadd.f32 %v3775, %v3904
      %v3960 = vadd.f32 %v3776, %v3909
      %v3961 = vadd.f32 %v3777, %v3914
      %v3962 = vadd.f32 %v3778, %v3919
      %v3963 = vadd.f32 %v3779, %v3924
      %v3964 = vadd.f32 %v3780, %v3929
      %v3965 = vadd.f32 %v3781, %v3934
      %v3966 = vadd.f32 %v3782, %v3939
      %v3967 = vadd.f32 %v3783, %v3944
      %v3968 = vadd.f32 %v3784, %v3949
      %s3969 = scalar_lea.vmem %s1, 1152
      %v3970 = vld [vmem:[%s3969] sm:$0xff]
      %v3971 = vld [vmem:[%s3969 + $0x8] sm:$0xff]
      %v3972 = vld [vmem:[%s3969 + $0x10] sm:$0xff]
      %v3973 = vld [vmem:[%s3969 + $0x18] sm:$0xff]
      %v3974 = vld [vmem:[%s3969 + $0x20] sm:$0xff]
      %v3975 = vld [vmem:[%s3969 + $0x28] sm:$0xff]
      %v3976 = vld [vmem:[%s3969 + $0x30] sm:$0xff]
      %v3977 = vld [vmem:[%s3969 + $0x38] sm:$0xff]
      %v3978 = vrot.slane %v192, 5
      %v3979 = vsel %vm2614, %v2648, %v3978
      %v3980 = vrot.slane %v193, 5
      %v3981 = vsel %vm2614, %v3978, %v3980
      %v3982 = vsel %vm267, %v3979, 0
      %v3984 = vsel %vm267, %v3981, 0
      %3986 = vmatprep.subr.mxu0 0.0
      %3987 = vmatpush1.msra.mxu0 %v3970
      %3988 = vmatprep.subr.mxu0 0.0
      %3989 = vmatpush1.msra.mxu0 %v3971
      %3990 = vmatprep.subr.mxu0 0.0
      %3991 = vmatpush1.msra.mxu0 %v3972
      %3992 = vmatprep.subr.mxu0 0.0
      %3993 = vmatpush1.msra.mxu0 %v3973
      %3994 = vmatprep.subr.mxu0 0.0
      %3995 = vmatpush1.msra.mxu0 %v3974
      %3996 = vmatprep.subr.mxu0 0.0
      %3997 = vmatpush1.msra.mxu0 %v3975
      %3998 = vmatprep.subr.mxu0 0.0
      %3999 = vmatpush1.msra.mxu0 %v3976
      %4000 = vmatprep.subr.mxu0 0.0
      %4001 = vmatpush1.msra.mxu0 %v3977
      %4002 = vmatprep.subr.mxu0 0.0
      %4003 = vmatpush1.msra.mxu0 0.0
      %4004 = vmatprep.subr.mxu0 0.0
      %4005 = vmatpush1.msra.mxu0 0.0
      %4006 = vmatprep.subr.mxu0 0.0
      %4007 = vmatpush1.msra.mxu0 0.0
      %4008 = vmatprep.subr.mxu0 0.0
      %4009 = vmatpush1.msra.mxu0 0.0
      %4010 = vmatprep.subr.mxu0 0.0
      %4011 = vmatpush1.msra.mxu0 0.0
      %4012 = vmatprep.subr.mxu0 0.0
      %4013 = vmatpush1.msra.mxu0 0.0
      %4014 = vmatprep.subr.mxu0 0.0
      %4015 = vmatpush1.msra.mxu0 0.0
      %4016 = vmatprep.subr.mxu0 0.0
      %4017 = vmatpush1.msra.mxu0 0.0
      %4018 = vmatprep.subr.mxu0 0.0
      %4019 = vmatpush1.msra.mxu0 0.0
      %4020 = vmatprep.subr.mxu0 0.0
      %4021 = vmatpush1.msra.mxu0 0.0
      %4022 = vmatprep.subr.mxu0 0.0
      %4023 = vmatpush1.msra.mxu0 0.0
      %4024 = vmatprep.subr.mxu0 0.0
      %4025 = vmatpush1.msra.mxu0 0.0
      %4026 = vmatprep.subr.mxu0 0.0
      %4027 = vmatpush1.msra.mxu0 0.0
      %4028 = vmatprep.subr.mxu0 0.0
      %4029 = vmatpush1.msra.mxu0 0.0
      %4030 = vmatprep.subr.mxu0 0.0
      %4031 = vmatpush1.msra.mxu0 0.0
      %4032 = vmatprep.subr.mxu0 0.0
      %4033 = vmatpush1.msra.mxu0 0.0
      %4034 = vmatprep.subr.mxu0 0.0
      %4035 = vmatpush1.msra.mxu0 0.0
      %4036 = vmatprep.subr.mxu0 0.0
      %4037 = vmatpush1.msra.mxu0 0.0
      %4038 = vmatprep.subr.mxu0 0.0
      %4039 = vmatpush1.msra.mxu0 0.0
      %4040 = vmatprep.subr.mxu0 0.0
      %4041 = vmatpush1.msra.mxu0 0.0
      %4042 = vmatprep.subr.mxu0 0.0
      %4043 = vmatpush1.msra.mxu0 0.0
      %4044 = vmatprep.subr.mxu0 0.0
      %4045 = vmatpush1.msra.mxu0 0.0
      %4046 = vmatprep.subr.mxu0 0.0
      %4047 = vmatpush1.msra.mxu0 0.0
      %4048 = vmatprep.subr.mxu0 0.0
      %4049 = vmatpush1.msra.mxu0 0.0
      %4050 = vmatprep.mubr.f32.mxu0 0.0
      %4051 = vmatmul.mubr.f32.gmra.mrb[0].mxu0 %v2654
      %v4052 = vpop.f32.mrb[0].mxu0
      %v4053 = vadd.f32 0.0, %v4052
      %v4054 = vpop.f32.mrb[0].mxu0
      %4055 = vmatprep.mubr.f32.mxu0 0.0
      %4056 = vmatmul.mubr.f32.gmra.mrb[0].mxu0 %v2656
      %v4057 = vpop.f32.mrb[0].mxu0
      %v4058 = vadd.f32 0.0, %v4057
      %v4059 = vpop.f32.mrb[0].mxu0
      %4060 = vmatprep.mubr.f32.mxu0 0.0
      %4061 = vmatmul.mubr.f32.gmra.mrb[0].mxu0 %v2658
      %v4062 = vpop.f32.mrb[0].mxu0
      %v4063 = vadd.f32 0.0, %v4062
      %v4064 = vpop.f32.mrb[0].mxu0
      %4065 = vmatprep.mubr.f32.mxu0 0.0
      %4066 = vmatmul.mubr.f32.gmra.mrb[0].mxu0 %v2660
      %v4067 = vpop.f32.mrb[0].mxu0
      %v4068 = vadd.f32 0.0, %v4067
      %v4069 = vpop.f32.mrb[0].mxu0
      %4070 = vmatprep.mubr.f32.mxu0 0.0
      %4071 = vmatmul.mubr.f32.gmra.mrb[0].mxu0 %v2662
      %v4072 = vpop.f32.mrb[0].mxu0
      %v4073 = vadd.f32 0.0, %v4072
      %v4074 = vpop.f32.mrb[0].mxu0
      %4075 = vmatprep.mubr.f32.mxu0 0.0
      %4076 = vmatmul.mubr.f32.gmra.mrb[0].mxu0 %v2664
      %v4077 = vpop.f32.mrb[0].mxu0
      %v4078 = vadd.f32 0.0, %v4077
      %v4079 = vpop.f32.mrb[0].mxu0
      %4080 = vmatprep.mubr.f32.mxu0 0.0
      %4081 = vmatmul.mubr.f32.gmra.mrb[0].mxu0 %v2666
      %v4082 = vpop.f32.mrb[0].mxu0
      %v4083 = vadd.f32 0.0, %v4082
      %v4084 = vpop.f32.mrb[0].mxu0
      %4085 = vmatprep.mubr.f32.mxu0 0.0
      %4086 = vmatmul.mubr.f32.gmra.mrb[0].mxu0 %v2668
      %v4087 = vpop.f32.mrb[0].mxu0
      %v4088 = vadd.f32 0.0, %v4087
      %v4089 = vpop.f32.mrb[0].mxu0
      %4090 = vmatprep.mubr.f32.mxu0 0.0
      %4091 = vmatmul.mubr.f32.gmra.mrb[0].mxu0 %v2670
      %v4092 = vpop.f32.mrb[0].mxu0
      %v4093 = vadd.f32 0.0, %v4092
      %v4094 = vpop.f32.mrb[0].mxu0
      %4095 = vmatprep.mubr.f32.mxu0 0.0
      %4096 = vmatmul.mubr.f32.gmra.mrb[0].mxu0 %v2672
      %v4097 = vpop.f32.mrb[0].mxu0
      %v4098 = vadd.f32 0.0, %v4097
      %v4099 = vpop.f32.mrb[0].mxu0
      %4100 = vmatprep.mubr.f32.mxu0 0.0
      %4101 = vmatmul.mubr.f32.gmra.mrb[0].mxu0 %v2674
      %v4102 = vpop.f32.mrb[0].mxu0
      %v4103 = vadd.f32 0.0, %v4102
      %v4104 = vpop.f32.mrb[0].mxu0
      %4105 = vmatprep.mubr.f32.mxu0 0.0
      %4106 = vmatmul.mubr.f32.gmra.mrb[0].mxu0 %v2676
      %v4107 = vpop.f32.mrb[0].mxu0
      %v4108 = vadd.f32 0.0, %v4107
      %v4109 = vpop.f32.mrb[0].mxu0
      %4110 = vmatprep.mubr.f32.mxu0 0.0
      %4111 = vmatmul.mubr.f32.gmra.mrb[0].mxu0 %v2678
      %v4112 = vpop.f32.mrb[0].mxu0
      %v4113 = vadd.f32 0.0, %v4112
      %v4114 = vpop.f32.mrb[0].mxu0
      %4115 = vmatprep.mubr.f32.mxu0 0.0
      %4116 = vmatmul.mubr.f32.gmra.mrb[0].mxu0 %v2680
      %v4117 = vpop.f32.mrb[0].mxu0
      %v4118 = vadd.f32 0.0, %v4117
      %v4119 = vpop.f32.mrb[0].mxu0
      %4120 = vmatprep.mubr.f32.mxu0 0.0
      %4121 = vmatmul.mubr.f32.gmra.mrb[0].mxu0 %v2682
      %v4122 = vpop.f32.mrb[0].mxu0
      %v4123 = vadd.f32 0.0, %v4122
      %v4124 = vpop.f32.mrb[0].mxu0
      %4125 = vmatprep.mubr.f32.mxu0 0.0
      %4126 = vmatmul.mubr.f32.gmra.mrb[0].mxu0 %v3982
      %v4127 = vpop.f32.mrb[0].mxu0
      %v4128 = vadd.f32 0.0, %v4127
      %v4129 = vpop.f32.mrb[0].mxu0
      %4130 = vmatprep.mubr.f32.mxu0 0.0
      %4131 = vmatmul.mubr.f32.gmra.mrb[0].mxu0 %v3984
      %v4132 = vpop.f32.mrb[0].mxu0
      %v4133 = vadd.f32 0.0, %v4132
      %v4134 = vpop.f32.mrb[0].mxu0
      %4135 = vdwg.mxu0
      %v4136 = vadd.f32 %v3952, %v4053
      %v4137 = vadd.f32 %v3953, %v4058
      %v4138 = vadd.f32 %v3954, %v4063
      %v4139 = vadd.f32 %v3955, %v4068
      %v4140 = vadd.f32 %v3956, %v4073
      %v4141 = vadd.f32 %v3957, %v4078
      %v4142 = vadd.f32 %v3958, %v4083
      %v4143 = vadd.f32 %v3959, %v4088
      %v4144 = vadd.f32 %v3960, %v4093
      %v4145 = vadd.f32 %v3961, %v4098
      %v4146 = vadd.f32 %v3962, %v4103
      %v4147 = vadd.f32 %v3963, %v4108
      %v4148 = vadd.f32 %v3964, %v4113
      %v4149 = vadd.f32 %v3965, %v4118
      %v4150 = vadd.f32 %v3966, %v4123
      %v4151 = vadd.f32 %v3967, %v4128
      %v4152 = vadd.f32 %v3968, %v4133
      %s4153 = scalar_lea.vmem %s1, 1216
      %v4154 = vld [vmem:[%s4153] sm:$0xff]
      %v4155 = vld [vmem:[%s4153 + $0x8] sm:$0xff]
      %v4156 = vld [vmem:[%s4153 + $0x10] sm:$0xff]
      %v4157 = vld [vmem:[%s4153 + $0x18] sm:$0xff]
      %v4158 = vld [vmem:[%s4153 + $0x20] sm:$0xff]
      %v4159 = vld [vmem:[%s4153 + $0x28] sm:$0xff]
      %v4160 = vld [vmem:[%s4153 + $0x30] sm:$0xff]
      %v4161 = vld [vmem:[%s4153 + $0x38] sm:$0xff]
      %v4162 = vrot.slane %v192, 6
      %v4163 = vsel %vm1384, %v2862, %v4162
      %v4164 = vrot.slane %v193, 6
      %v4165 = vsel %vm1384, %v4162, %v4164
      %v4166 = vsel %vm267, %v4163, 0
      %v4168 = vsel %vm267, %v4165, 0
      %4170 = vmatprep.subr.mxu0 0.0
      %4171 = vmatpush1.msra.mxu0 %v4154
      %4172 = vmatprep.subr.mxu0 0.0
      %4173 = vmatpush1.msra.mxu0 %v4155
      %4174 = vmatprep.subr.mxu0 0.0
      %4175 = vmatpush1.msra.mxu0 %v4156
      %4176 = vmatprep.subr.mxu0 0.0
      %4177 = vmatpush1.msra.mxu0 %v4157
      %4178 = vmatprep.subr.mxu0 0.0
      %4179 = vmatpush1.msra.mxu0 %v4158
      %4180 = vmatprep.subr.mxu0 0.0
      %4181 = vmatpush1.msra.mxu0 %v4159
      %4182 = vmatprep.subr.mxu0 0.0
      %4183 = vmatpush1.msra.mxu0 %v4160
      %4184 = vmatprep.subr.mxu0 0.0
      %4185 = vmatpush1.msra.mxu0 %v4161
      %4186 = vmatprep.subr.mxu0 0.0
      %4187 = vmatpush1.msra.mxu0 0.0
      %4188 = vmatprep.subr.mxu0 0.0
      %4189 = vmatpush1.msra.mxu0 0.0
      %4190 = vmatprep.subr.mxu0 0.0
      %4191 = vmatpush1.msra.mxu0 0.0
      %4192 = vmatprep.subr.mxu0 0.0
      %4193 = vmatpush1.msra.mxu0 0.0
      %4194 = vmatprep.subr.mxu0 0.0
      %4195 = vmatpush1.msra.mxu0 0.0
      %4196 = vmatprep.subr.mxu0 0.0
      %4197 = vmatpush1.msra.mxu0 0.0
      %4198 = vmatprep.subr.mxu0 0.0
      %4199 = vmatpush1.msra.mxu0 0.0
      %4200 = vmatprep.subr.mxu0 0.0
      %4201 = vmatpush1.msra.mxu0 0.0
      %4202 = vmatprep.subr.mxu0 0.0
      %4203 = vmatpush1.msra.mxu0 0.0
      %4204 = vmatprep.subr.mxu0 0.0
      %4205 = vmatpush1.msra.mxu0 0.0
      %4206 = vmatprep.subr.mxu0 0.0
      %4207 = vmatpush1.msra.mxu0 0.0
      %4208 = vmatprep.subr.mxu0 0.0
      %4209 = vmatpush1.msra.mxu0 0.0
      %4210 = vmatprep.subr.mxu0 0.0
      %4211 = vmatpush1.msra.mxu0 0.0
      %4212 = vmatprep.subr.mxu0 0.0
      %4213 = vmatpush1.msra.mxu0 0.0
      %4214 = vmatprep.subr.mxu0 0.0
      %4215 = vmatpush1.msra.mxu0 0.0
      %4216 = vmatprep.subr.mxu0 0.0
      %4217 = vmatpush1.msra.mxu0 0.0
      %4218 = vmatprep.subr.mxu0 0.0
      %4219 = vmatpush1.msra.mxu0 0.0
      %4220 = vmatprep.subr.mxu0 0.0
      %4221 = vmatpush1.msra.mxu0 0.0
      %4222 = vmatprep.subr.mxu0 0.0
      %4223 = vmatpush1.msra.mxu0 0.0
      %4224 = vmatprep.subr.mxu0 0.0
      %4225 = vmatpush1.msra.mxu0 0.0
      %4226 = vmatprep.subr.mxu0 0.0
      %4227 = vmatpush1.msra.mxu0 0.0
      %4228 = vmatprep.subr.mxu0 0.0
      %4229 = vmatpush1.msra.mxu0 0.0
      %4230 = vmatprep.subr.mxu0 0.0
      %4231 = vmatpush1.msra.mxu0 0.0
      %4232 = vmatprep.subr.mxu0 0.0
      %4233 = vmatpush1.msra.mxu0 0.0
      %4234 = vmatprep.mubr.f32.mxu0 0.0
      %4235 = vmatmul.mubr.f32.gmra.mrb[0].mxu0 %v1428
      %v4236 = vpop.f32.mrb[0].mxu0
      %v4237 = vadd.f32 0.0, %v4236
      %v4238 = vpop.f32.mrb[0].mxu0
      %4239 = vmatprep.mubr.f32.mxu0 0.0
      %4240 = vmatmul.mubr.f32.gmra.mrb[0].mxu0 %v1430
      %v4241 = vpop.f32.mrb[0].mxu0
      %v4242 = vadd.f32 0.0, %v4241
      %v4243 = vpop.f32.mrb[0].mxu0
      %4244 = vmatprep.mubr.f32.mxu0 0.0
      %4245 = vmatmul.mubr.f32.gmra.mrb[0].mxu0 %v1432
      %v4246 = vpop.f32.mrb[0].mxu0
      %v4247 = vadd.f32 0.0, %v4246
      %v4248 = vpop.f32.mrb[0].mxu0
      %4249 = vmatprep.mubr.f32.mxu0 0.0
      %4250 = vmatmul.mubr.f32.gmra.mrb[0].mxu0 %v1434
      %v4251 = vpop.f32.mrb[0].mxu0
      %v4252 = vadd.f32 0.0, %v4251
      %v4253 = vpop.f32.mrb[0].mxu0
      %4254 = vmatprep.mubr.f32.mxu0 0.0
      %4255 = vmatmul.mubr.f32.gmra.mrb[0].mxu0 %v1436
      %v4256 = vpop.f32.mrb[0].mxu0
      %v4257 = vadd.f32 0.0, %v4256
      %v4258 = vpop.f32.mrb[0].mxu0
      %4259 = vmatprep.mubr.f32.mxu0 0.0
      %4260 = vmatmul.mubr.f32.gmra.mrb[0].mxu0 %v1438
      %v4261 = vpop.f32.mrb[0].mxu0
      %v4262 = vadd.f32 0.0, %v4261
      %v4263 = vpop.f32.mrb[0].mxu0
      %4264 = vmatprep.mubr.f32.mxu0 0.0
      %4265 = vmatmul.mubr.f32.gmra.mrb[0].mxu0 %v1440
      %v4266 = vpop.f32.mrb[0].mxu0
      %v4267 = vadd.f32 0.0, %v4266
      %v4268 = vpop.f32.mrb[0].mxu0
      %4269 = vmatprep.mubr.f32.mxu0 0.0
      %4270 = vmatmul.mubr.f32.gmra.mrb[0].mxu0 %v1442
      %v4271 = vpop.f32.mrb[0].mxu0
      %v4272 = vadd.f32 0.0, %v4271
      %v4273 = vpop.f32.mrb[0].mxu0
      %4274 = vmatprep.mubr.f32.mxu0 0.0
      %4275 = vmatmul.mubr.f32.gmra.mrb[0].mxu0 %v1444
      %v4276 = vpop.f32.mrb[0].mxu0
      %v4277 = vadd.f32 0.0, %v4276
      %v4278 = vpop.f32.mrb[0].mxu0
      %4279 = vmatprep.mubr.f32.mxu0 0.0
      %4280 = vmatmul.mubr.f32.gmra.mrb[0].mxu0 %v1446
      %v4281 = vpop.f32.mrb[0].mxu0
      %v4282 = vadd.f32 0.0, %v4281
      %v4283 = vpop.f32.mrb[0].mxu0
      %4284 = vmatprep.mubr.f32.mxu0 0.0
      %4285 = vmatmul.mubr.f32.gmra.mrb[0].mxu0 %v1448
      %v4286 = vpop.f32.mrb[0].mxu0
      %v4287 = vadd.f32 0.0, %v4286
      %v4288 = vpop.f32.mrb[0].mxu0
      %4289 = vmatprep.mubr.f32.mxu0 0.0
      %4290 = vmatmul.mubr.f32.gmra.mrb[0].mxu0 %v1450
      %v4291 = vpop.f32.mrb[0].mxu0
      %v4292 = vadd.f32 0.0, %v4291
      %v4293 = vpop.f32.mrb[0].mxu0
      %4294 = vmatprep.mubr.f32.mxu0 0.0
      %4295 = vmatmul.mubr.f32.gmra.mrb[0].mxu0 %v1452
      %v4296 = vpop.f32.mrb[0].mxu0
      %v4297 = vadd.f32 0.0, %v4296
      %v4298 = vpop.f32.mrb[0].mxu0
      %4299 = vmatprep.mubr.f32.mxu0 0.0
      %4300 = vmatmul.mubr.f32.gmra.mrb[0].mxu0 %v2864
      %v4301 = vpop.f32.mrb[0].mxu0
      %v4302 = vadd.f32 0.0, %v4301
      %v4303 = vpop.f32.mrb[0].mxu0
      %4304 = vmatprep.mubr.f32.mxu0 0.0
      %4305 = vmatmul.mubr.f32.gmra.mrb[0].mxu0 %v2866
      %v4306 = vpop.f32.mrb[0].mxu0
      %v4307 = vadd.f32 0.0, %v4306
      %v4308 = vpop.f32.mrb[0].mxu0
      %4309 = vmatprep.mubr.f32.mxu0 0.0
      %4310 = vmatmul.mubr.f32.gmra.mrb[0].mxu0 %v4166
      %v4311 = vpop.f32.mrb[0].mxu0
      %v4312 = vadd.f32 0.0, %v4311
      %v4313 = vpop.f32.mrb[0].mxu0
      %4314 = vmatprep.mubr.f32.mxu0 0.0
      %4315 = vmatmul.mubr.f32.gmra.mrb[0].mxu0 %v4168
      %v4316 = vpop.f32.mrb[0].mxu0
      %v4317 = vadd.f32 0.0, %v4316
      %v4318 = vpop.f32.mrb[0].mxu0
      %4319 = vdwg.mxu0
      %v4320 = vadd.f32 %v4136, %v4237
      %v4321 = vadd.f32 %v4137, %v4242
      %v4322 = vadd.f32 %v4138, %v4247
      %v4323 = vadd.f32 %v4139, %v4252
      %v4324 = vadd.f32 %v4140, %v4257
      %v4325 = vadd.f32 %v4141, %v4262
      %v4326 = vadd.f32 %v4142, %v4267
      %v4327 = vadd.f32 %v4143, %v4272
      %v4328 = vadd.f32 %v4144, %v4277
      %v4329 = vadd.f32 %v4145, %v4282
      %v4330 = vadd.f32 %v4146, %v4287
      %v4331 = vadd.f32 %v4147, %v4292
      %v4332 = vadd.f32 %v4148, %v4297
      %v4333 = vadd.f32 %v4149, %v4302
      %v4334 = vadd.f32 %v4150, %v4307
      %v4335 = vadd.f32 %v4151, %v4312
      %v4336 = vadd.f32 %v4152, %v4317
      %s4337 = scalar_lea.vmem %s1, 1280
      %v4338 = vld [vmem:[%s4337] sm:$0xff]
      %v4339 = vld [vmem:[%s4337 + $0x8] sm:$0xff]
      %v4340 = vld [vmem:[%s4337 + $0x10] sm:$0xff]
      %v4341 = vld [vmem:[%s4337 + $0x18] sm:$0xff]
      %v4342 = vld [vmem:[%s4337 + $0x20] sm:$0xff]
      %v4343 = vld [vmem:[%s4337 + $0x28] sm:$0xff]
      %v4344 = vld [vmem:[%s4337 + $0x30] sm:$0xff]
      %v4345 = vld [vmem:[%s4337 + $0x38] sm:$0xff]
      %v4346 = vsel %vm267, %v192, 0
      %v4348 = vsel %vm267, %v193, 0
      %v4351 = vsel %vm267, %v194, 0
      %4353 = vmatprep.subr.mxu0 0.0
      %4354 = vmatpush1.msra.mxu0 %v4338
      %4355 = vmatprep.subr.mxu0 0.0
      %4356 = vmatpush1.msra.mxu0 %v4339
      %4357 = vmatprep.subr.mxu0 0.0
      %4358 = vmatpush1.msra.mxu0 %v4340
      %4359 = vmatprep.subr.mxu0 0.0
      %4360 = vmatpush1.msra.mxu0 %v4341
      %4361 = vmatprep.subr.mxu0 0.0
      %4362 = vmatpush1.msra.mxu0 %v4342
      %4363 = vmatprep.subr.mxu0 0.0
      %4364 = vmatpush1.msra.mxu0 %v4343
      %4365 = vmatprep.subr.mxu0 0.0
      %4366 = vmatpush1.msra.mxu0 %v4344
      %4367 = vmatprep.subr.mxu0 0.0
      %4368 = vmatpush1.msra.mxu0 %v4345
      %4369 = vmatprep.subr.mxu0 0.0
      %4370 = vmatpush1.msra.mxu0 0.0
      %4371 = vmatprep.subr.mxu0 0.0
      %4372 = vmatpush1.msra.mxu0 0.0
      %4373 = vmatprep.subr.mxu0 0.0
      %4374 = vmatpush1.msra.mxu0 0.0
      %4375 = vmatprep.subr.mxu0 0.0
      %4376 = vmatpush1.msra.mxu0 0.0
      %4377 = vmatprep.subr.mxu0 0.0
      %4378 = vmatpush1.msra.mxu0 0.0
      %4379 = vmatprep.subr.mxu0 0.0
      %4380 = vmatpush1.msra.mxu0 0.0
      %4381 = vmatprep.subr.mxu0 0.0
      %4382 = vmatpush1.msra.mxu0 0.0
      %4383 = vmatprep.subr.mxu0 0.0
      %4384 = vmatpush1.msra.mxu0 0.0
      %4385 = vmatprep.subr.mxu0 0.0
      %4386 = vmatpush1.msra.mxu0 0.0
      %4387 = vmatprep.subr.mxu0 0.0
      %4388 = vmatpush1.msra.mxu0 0.0
      %4389 = vmatprep.subr.mxu0 0.0
      %4390 = vmatpush1.msra.mxu0 0.0
      %4391 = vmatprep.subr.mxu0 0.0
      %4392 = vmatpush1.msra.mxu0 0.0
      %4393 = vmatprep.subr.mxu0 0.0
      %4394 = vmatpush1.msra.mxu0 0.0
      %4395 = vmatprep.subr.mxu0 0.0
      %4396 = vmatpush1.msra.mxu0 0.0
      %4397 = vmatprep.subr.mxu0 0.0
      %4398 = vmatpush1.msra.mxu0 0.0
      %4399 = vmatprep.subr.mxu0 0.0
      %4400 = vmatpush1.msra.mxu0 0.0
      %4401 = vmatprep.subr.mxu0 0.0
      %4402 = vmatpush1.msra.mxu0 0.0
      %4403 = vmatprep.subr.mxu0 0.0
      %4404 = vmatpush1.msra.mxu0 0.0
      %4405 = vmatprep.subr.mxu0 0.0
      %4406 = vmatpush1.msra.mxu0 0.0
      %4407 = vmatprep.subr.mxu0 0.0
      %4408 = vmatpush1.msra.mxu0 0.0
      %4409 = vmatprep.subr.mxu0 0.0
      %4410 = vmatpush1.msra.mxu0 0.0
      %4411 = vmatprep.subr.mxu0 0.0
      %4412 = vmatpush1.msra.mxu0 0.0
      %4413 = vmatprep.subr.mxu0 0.0
      %4414 = vmatpush1.msra.mxu0 0.0
      %4415 = vmatprep.subr.mxu0 0.0
      %4416 = vmatpush1.msra.mxu0 0.0
      %4417 = vmatprep.mubr.f32.mxu0 0.0
      %4418 = vmatmul.mubr.f32.gmra.mrb[0].mxu0 %v466
      %v4419 = vpop.f32.mrb[0].mxu0
      %v4420 = vadd.f32 0.0, %v4419
      %v4421 = vpop.f32.mrb[0].mxu0
      %4422 = vmatprep.mubr.f32.mxu0 0.0
      %4423 = vmatmul.mubr.f32.gmra.mrb[0].mxu0 %v468
      %v4424 = vpop.f32.mrb[0].mxu0
      %v4425 = vadd.f32 0.0, %v4424
      %v4426 = vpop.f32.mrb[0].mxu0
      %4427 = vmatprep.mubr.f32.mxu0 0.0
      %4428 = vmatmul.mubr.f32.gmra.mrb[0].mxu0 %v470
      %v4429 = vpop.f32.mrb[0].mxu0
      %v4430 = vadd.f32 0.0, %v4429
      %v4431 = vpop.f32.mrb[0].mxu0
      %4432 = vmatprep.mubr.f32.mxu0 0.0
      %4433 = vmatmul.mubr.f32.gmra.mrb[0].mxu0 %v472
      %v4434 = vpop.f32.mrb[0].mxu0
      %v4435 = vadd.f32 0.0, %v4434
      %v4436 = vpop.f32.mrb[0].mxu0
      %4437 = vmatprep.mubr.f32.mxu0 0.0
      %4438 = vmatmul.mubr.f32.gmra.mrb[0].mxu0 %v474
      %v4439 = vpop.f32.mrb[0].mxu0
      %v4440 = vadd.f32 0.0, %v4439
      %v4441 = vpop.f32.mrb[0].mxu0
      %4442 = vmatprep.mubr.f32.mxu0 0.0
      %4443 = vmatmul.mubr.f32.gmra.mrb[0].mxu0 %v476
      %v4444 = vpop.f32.mrb[0].mxu0
      %v4445 = vadd.f32 0.0, %v4444
      %v4446 = vpop.f32.mrb[0].mxu0
      %4447 = vmatprep.mubr.f32.mxu0 0.0
      %4448 = vmatmul.mubr.f32.gmra.mrb[0].mxu0 %v478
      %v4449 = vpop.f32.mrb[0].mxu0
      %v4450 = vadd.f32 0.0, %v4449
      %v4451 = vpop.f32.mrb[0].mxu0
      %4452 = vmatprep.mubr.f32.mxu0 0.0
      %4453 = vmatmul.mubr.f32.gmra.mrb[0].mxu0 %v480
      %v4454 = vpop.f32.mrb[0].mxu0
      %v4455 = vadd.f32 0.0, %v4454
      %v4456 = vpop.f32.mrb[0].mxu0
      %4457 = vmatprep.mubr.f32.mxu0 0.0
      %4458 = vmatmul.mubr.f32.gmra.mrb[0].mxu0 %v482
      %v4459 = vpop.f32.mrb[0].mxu0
      %v4460 = vadd.f32 0.0, %v4459
      %v4461 = vpop.f32.mrb[0].mxu0
      %4462 = vmatprep.mubr.f32.mxu0 0.0
      %4463 = vmatmul.mubr.f32.gmra.mrb[0].mxu0 %v484
      %v4464 = vpop.f32.mrb[0].mxu0
      %v4465 = vadd.f32 0.0, %v4464
      %v4466 = vpop.f32.mrb[0].mxu0
      %4467 = vmatprep.mubr.f32.mxu0 0.0
      %4468 = vmatmul.mubr.f32.gmra.mrb[0].mxu0 %v1876
      %v4469 = vpop.f32.mrb[0].mxu0
      %v4470 = vadd.f32 0.0, %v4469
      %v4471 = vpop.f32.mrb[0].mxu0
      %4472 = vmatprep.mubr.f32.mxu0 0.0
      %4473 = vmatmul.mubr.f32.gmra.mrb[0].mxu0 %v1878
      %v4474 = vpop.f32.mrb[0].mxu0
      %v4475 = vadd.f32 0.0, %v4474
      %v4476 = vpop.f32.mrb[0].mxu0
      %4477 = vmatprep.mubr.f32.mxu0 0.0
      %4478 = vmatmul.mubr.f32.gmra.mrb[0].mxu0 %v3228
      %v4479 = vpop.f32.mrb[0].mxu0
      %v4480 = vadd.f32 0.0, %v4479
      %v4481 = vpop.f32.mrb[0].mxu0
      %4482 = vmatprep.mubr.f32.mxu0 0.0
      %4483 = vmatmul.mubr.f32.gmra.mrb[0].mxu0 %v3230
      %v4484 = vpop.f32.mrb[0].mxu0
      %v4485 = vadd.f32 0.0, %v4484
      %v4486 = vpop.f32.mrb[0].mxu0
      %4487 = vmatprep.mubr.f32.mxu0 0.0
      %4488 = vmatmul.mubr.f32.gmra.mrb[0].mxu0 %v4346
      %v4489 = vpop.f32.mrb[0].mxu0
      %v4490 = vadd.f32 0.0, %v4489
      %v4491 = vpop.f32.mrb[0].mxu0
      %4492 = vmatprep.mubr.f32.mxu0 0.0
      %4493 = vmatmul.mubr.f32.gmra.mrb[0].mxu0 %v4348
      %v4494 = vpop.f32.mrb[0].mxu0
      %v4495 = vadd.f32 0.0, %v4494
      %v4496 = vpop.f32.mrb[0].mxu0
      %4497 = vmatprep.mubr.f32.mxu0 0.0
      %4498 = vmatmul.mubr.f32.gmra.mrb[0].mxu0 %v4351
      %v4499 = vpop.f32.mrb[0].mxu0
      %v4500 = vadd.f32 0.0, %v4499
      %v4501 = vpop.f32.mrb[0].mxu0
      %4502 = vdwg.mxu0
      %v4503 = vadd.f32 %v4320, %v4420
      %v4504 = vadd.f32 %v4321, %v4425
      %v4505 = vadd.f32 %v4322, %v4430
      %v4506 = vadd.f32 %v4323, %v4435
      %v4507 = vadd.f32 %v4324, %v4440
      %v4508 = vadd.f32 %v4325, %v4445
      %v4509 = vadd.f32 %v4326, %v4450
      %v4510 = vadd.f32 %v4327, %v4455
      %v4511 = vadd.f32 %v4328, %v4460
      %v4512 = vadd.f32 %v4329, %v4465
      %v4513 = vadd.f32 %v4330, %v4470
      %v4514 = vadd.f32 %v4331, %v4475
      %v4515 = vadd.f32 %v4332, %v4480
      %v4516 = vadd.f32 %v4333, %v4485
      %v4517 = vadd.f32 %v4334, %v4490
      %v4518 = vadd.f32 %v4335, %v4495
      %v4519 = vadd.f32 %v4336, %v4500
      %s4520 = scalar_lea.vmem %s1, 1344
      %v4521 = vld [vmem:[%s4520] sm:$0xff]
      %v4522 = vld [vmem:[%s4520 + $0x8] sm:$0xff]
      %v4523 = vld [vmem:[%s4520 + $0x10] sm:$0xff]
      %v4524 = vld [vmem:[%s4520 + $0x18] sm:$0xff]
      %v4525 = vld [vmem:[%s4520 + $0x20] sm:$0xff]
      %v4526 = vld [vmem:[%s4520 + $0x28] sm:$0xff]
      %v4527 = vld [vmem:[%s4520 + $0x30] sm:$0xff]
      %v4528 = vld [vmem:[%s4520 + $0x38] sm:$0xff]
      %v4530 = vrot.slane %v191, 1
      %v4531 = vsel %vm231, %v2059, %v4530
      %v4532 = vrot.slane %v192, 1
      %v4533 = vsel %vm231, %v4530, %v4532
      %v4534 = vrot.slane %v193, 1
      %v4535 = vsel %vm231, %v4532, %v4534
      %v4536 = vrot.slane %v194, 1
      %v4537 = vsel %vm231, %v4534, %v4536
      %v4538 = vrot.slane %v195, 1
      %v4539 = vsel %vm231, %v4536, %v4538
      %v4540 = vsel %vm267, %v4531, 0
      %v4542 = vsel %vm267, %v4533, 0
      %v4544 = vsel %vm267, %v4535, 0
      %v4546 = vsel %vm267, %v4537, 0
      %v4548 = vsel %vm267, %v4539, 0
      %4550 = vmatprep.subr.mxu0 0.0
      %4551 = vmatpush1.msra.mxu0 %v4521
      %4552 = vmatprep.subr.mxu0 0.0
      %4553 = vmatpush1.msra.mxu0 %v4522
      %4554 = vmatprep.subr.mxu0 0.0
      %4555 = vmatpush1.msra.mxu0 %v4523
      %4556 = vmatprep.subr.mxu0 0.0
      %4557 = vmatpush1.msra.mxu0 %v4524
      %4558 = vmatprep.subr.mxu0 0.0
      %4559 = vmatpush1.msra.mxu0 %v4525
      %4560 = vmatprep.subr.mxu0 0.0
      %4561 = vmatpush1.msra.mxu0 %v4526
      %4562 = vmatprep.subr.mxu0 0.0
      %4563 = vmatpush1.msra.mxu0 %v4527
      %4564 = vmatprep.subr.mxu0 0.0
      %4565 = vmatpush1.msra.mxu0 %v4528
      %4566 = vmatprep.subr.mxu0 0.0
      %4567 = vmatpush1.msra.mxu0 0.0
      %4568 = vmatprep.subr.mxu0 0.0
      %4569 = vmatpush1.msra.mxu0 0.0
      %4570 = vmatprep.subr.mxu0 0.0
      %4571 = vmatpush1.msra.mxu0 0.0
      %4572 = vmatprep.subr.mxu0 0.0
      %4573 = vmatpush1.msra.mxu0 0.0
      %4574 = vmatprep.subr.mxu0 0.0
      %4575 = vmatpush1.msra.mxu0 0.0
      %4576 = vmatprep.subr.mxu0 0.0
      %4577 = vmatpush1.msra.mxu0 0.0
      %4578 = vmatprep.subr.mxu0 0.0
      %4579 = vmatpush1.msra.mxu0 0.0
      %4580 = vmatprep.subr.mxu0 0.0
      %4581 = vmatpush1.msra.mxu0 0.0
      %4582 = vmatprep.subr.mxu0 0.0
      %4583 = vmatpush1.msra.mxu0 0.0
      %4584 = vmatprep.subr.mxu0 0.0
      %4585 = vmatpush1.msra.mxu0 0.0
      %4586 = vmatprep.subr.mxu0 0.0
      %4587 = vmatpush1.msra.mxu0 0.0
      %4588 = vmatprep.subr.mxu0 0.0
      %4589 = vmatpush1.msra.mxu0 0.0
      %4590 = vmatprep.subr.mxu0 0.0
      %4591 = vmatpush1.msra.mxu0 0.0
      %4592 = vmatprep.subr.mxu0 0.0
      %4593 = vmatpush1.msra.mxu0 0.0
      %4594 = vmatprep.subr.mxu0 0.0
      %4595 = vmatpush1.msra.mxu0 0.0
      %4596 = vmatprep.subr.mxu0 0.0
      %4597 = vmatpush1.msra.mxu0 0.0
      %4598 = vmatprep.subr.mxu0 0.0
      %4599 = vmatpush1.msra.mxu0 0.0
      %4600 = vmatprep.subr.mxu0 0.0
      %4601 = vmatpush1.msra.mxu0 0.0
      %4602 = vmatprep.subr.mxu0 0.0
      %4603 = vmatpush1.msra.mxu0 0.0
      %4604 = vmatprep.subr.mxu0 0.0
      %4605 = vmatpush1.msra.mxu0 0.0
      %4606 = vmatprep.subr.mxu0 0.0
      %4607 = vmatpush1.msra.mxu0 0.0
      %4608 = vmatprep.subr.mxu0 0.0
      %4609 = vmatpush1.msra.mxu0 0.0
      %4610 = vmatprep.subr.mxu0 0.0
      %4611 = vmatpush1.msra.mxu0 0.0
      %4612 = vmatprep.subr.mxu0 0.0
      %4613 = vmatpush1.msra.mxu0 0.0
      %4614 = vmatprep.mubr.f32.mxu0 0.0
      %4615 = vmatmul.mubr.f32.gmra.mrb[0].mxu0 %v282
      %v4616 = vpop.f32.mrb[0].mxu0
      %v4617 = vadd.f32 0.0, %v4616
      %v4618 = vpop.f32.mrb[0].mxu0
      %4619 = vmatprep.mubr.f32.mxu0 0.0
      %4620 = vmatmul.mubr.f32.gmra.mrb[0].mxu0 %v284
      %v4621 = vpop.f32.mrb[0].mxu0
      %v4622 = vadd.f32 0.0, %v4621
      %v4623 = vpop.f32.mrb[0].mxu0
      %4624 = vmatprep.mubr.f32.mxu0 0.0
      %4625 = vmatmul.mubr.f32.gmra.mrb[0].mxu0 %v286
      %v4626 = vpop.f32.mrb[0].mxu0
      %v4627 = vadd.f32 0.0, %v4626
      %v4628 = vpop.f32.mrb[0].mxu0
      %4629 = vmatprep.mubr.f32.mxu0 0.0
      %4630 = vmatmul.mubr.f32.gmra.mrb[0].mxu0 %v288
      %v4631 = vpop.f32.mrb[0].mxu0
      %v4632 = vadd.f32 0.0, %v4631
      %v4633 = vpop.f32.mrb[0].mxu0
      %4634 = vmatprep.mubr.f32.mxu0 0.0
      %4635 = vmatmul.mubr.f32.gmra.mrb[0].mxu0 %v290
      %v4636 = vpop.f32.mrb[0].mxu0
      %v4637 = vadd.f32 0.0, %v4636
      %v4638 = vpop.f32.mrb[0].mxu0
      %4639 = vmatprep.mubr.f32.mxu0 0.0
      %4640 = vmatmul.mubr.f32.gmra.mrb[0].mxu0 %v292
      %v4641 = vpop.f32.mrb[0].mxu0
      %v4642 = vadd.f32 0.0, %v4641
      %v4643 = vpop.f32.mrb[0].mxu0
      %4644 = vmatprep.mubr.f32.mxu0 0.0
      %4645 = vmatmul.mubr.f32.gmra.mrb[0].mxu0 %v294
      %v4646 = vpop.f32.mrb[0].mxu0
      %v4647 = vadd.f32 0.0, %v4646
      %v4648 = vpop.f32.mrb[0].mxu0
      %4649 = vmatprep.mubr.f32.mxu0 0.0
      %4650 = vmatmul.mubr.f32.gmra.mrb[0].mxu0 %v296
      %v4651 = vpop.f32.mrb[0].mxu0
      %v4652 = vadd.f32 0.0, %v4651
      %v4653 = vpop.f32.mrb[0].mxu0
      %4654 = vmatprep.mubr.f32.mxu0 0.0
      %4655 = vmatmul.mubr.f32.gmra.mrb[0].mxu0 %v298
      %v4656 = vpop.f32.mrb[0].mxu0
      %v4657 = vadd.f32 0.0, %v4656
      %v4658 = vpop.f32.mrb[0].mxu0
      %4659 = vmatprep.mubr.f32.mxu0 0.0
      %4660 = vmatmul.mubr.f32.gmra.mrb[0].mxu0 %v300
      %v4661 = vpop.f32.mrb[0].mxu0
      %v4662 = vadd.f32 0.0, %v4661
      %v4663 = vpop.f32.mrb[0].mxu0
      %4664 = vmatprep.mubr.f32.mxu0 0.0
      %4665 = vmatmul.mubr.f32.gmra.mrb[0].mxu0 %v2061
      %v4666 = vpop.f32.mrb[0].mxu0
      %v4667 = vadd.f32 0.0, %v4666
      %v4668 = vpop.f32.mrb[0].mxu0
      %4669 = vmatprep.mubr.f32.mxu0 0.0
      %4670 = vmatmul.mubr.f32.gmra.mrb[0].mxu0 %v2063
      %v4671 = vpop.f32.mrb[0].mxu0
      %v4672 = vadd.f32 0.0, %v4671
      %v4673 = vpop.f32.mrb[0].mxu0
      %4674 = vmatprep.mubr.f32.mxu0 0.0
      %4675 = vmatmul.mubr.f32.gmra.mrb[0].mxu0 %v4540
      %v4676 = vpop.f32.mrb[0].mxu0
      %v4677 = vadd.f32 0.0, %v4676
      %v4678 = vpop.f32.mrb[0].mxu0
      %4679 = vmatprep.mubr.f32.mxu0 0.0
      %4680 = vmatmul.mubr.f32.gmra.mrb[0].mxu0 %v4542
      %v4681 = vpop.f32.mrb[0].mxu0
      %v4682 = vadd.f32 0.0, %v4681
      %v4683 = vpop.f32.mrb[0].mxu0
      %4684 = vmatprep.mubr.f32.mxu0 0.0
      %4685 = vmatmul.mubr.f32.gmra.mrb[0].mxu0 %v4544
      %v4686 = vpop.f32.mrb[0].mxu0
      %v4687 = vadd.f32 0.0, %v4686
      %v4688 = vpop.f32.mrb[0].mxu0
      %4689 = vmatprep.mubr.f32.mxu0 0.0
      %4690 = vmatmul.mubr.f32.gmra.mrb[0].mxu0 %v4546
      %v4691 = vpop.f32.mrb[0].mxu0
      %v4692 = vadd.f32 0.0, %v4691
      %v4693 = vpop.f32.mrb[0].mxu0
      %4694 = vmatprep.mubr.f32.mxu0 0.0
      %4695 = vmatmul.mubr.f32.gmra.mrb[0].mxu0 %v4548
      %v4696 = vpop.f32.mrb[0].mxu0
      %v4697 = vadd.f32 0.0, %v4696
      %v4698 = vpop.f32.mrb[0].mxu0
      %4699 = vdwg.mxu0
      %v4700 = vadd.f32 %v4503, %v4617
      %v4701 = vadd.f32 %v4504, %v4622
      %v4702 = vadd.f32 %v4505, %v4627
      %v4703 = vadd.f32 %v4506, %v4632
      %v4704 = vadd.f32 %v4507, %v4637
      %v4705 = vadd.f32 %v4508, %v4642
      %v4706 = vadd.f32 %v4509, %v4647
      %v4707 = vadd.f32 %v4510, %v4652
      %v4708 = vadd.f32 %v4511, %v4657
      %v4709 = vadd.f32 %v4512, %v4662
      %v4710 = vadd.f32 %v4513, %v4667
      %v4711 = vadd.f32 %v4514, %v4672
      %v4712 = vadd.f32 %v4515, %v4677
      %v4713 = vadd.f32 %v4516, %v4682
      %v4714 = vadd.f32 %v4517, %v4687
      %v4715 = vadd.f32 %v4518, %v4692
      %v4716 = vadd.f32 %v4519, %v4697
      %s4717 = scalar_lea.vmem %s1, 1408
      %v4718 = vld [vmem:[%s4717] sm:$0xff]
      %v4719 = vld [vmem:[%s4717 + $0x8] sm:$0xff]
      %v4720 = vld [vmem:[%s4717 + $0x10] sm:$0xff]
      %v4721 = vld [vmem:[%s4717 + $0x18] sm:$0xff]
      %v4722 = vld [vmem:[%s4717 + $0x20] sm:$0xff]
      %v4723 = vld [vmem:[%s4717 + $0x28] sm:$0xff]
      %v4724 = vld [vmem:[%s4717 + $0x30] sm:$0xff]
      %v4725 = vld [vmem:[%s4717 + $0x38] sm:$0xff]
      %v4726 = vrot.slane %v194, 2
      %v4727 = vsel %vm645, %v3414, %v4726
      %v4728 = vrot.slane %v195, 2
      %v4729 = vsel %vm645, %v4726, %v4728
      %v4730 = vsel %vm267, %v4727, 0
      %v4732 = vsel %vm267, %v4729, 0
      %4734 = vmatprep.subr.mxu0 0.0
      %4735 = vmatpush1.msra.mxu0 %v4718
      %4736 = vmatprep.subr.mxu0 0.0
      %4737 = vmatpush1.msra.mxu0 %v4719
      %4738 = vmatprep.subr.mxu0 0.0
      %4739 = vmatpush1.msra.mxu0 %v4720
      %4740 = vmatprep.subr.mxu0 0.0
      %4741 = vmatpush1.msra.mxu0 %v4721
      %4742 = vmatprep.subr.mxu0 0.0
      %4743 = vmatpush1.msra.mxu0 %v4722
      %4744 = vmatprep.subr.mxu0 0.0
      %4745 = vmatpush1.msra.mxu0 %v4723
      %4746 = vmatprep.subr.mxu0 0.0
      %4747 = vmatpush1.msra.mxu0 %v4724
      %4748 = vmatprep.subr.mxu0 0.0
      %4749 = vmatpush1.msra.mxu0 %v4725
      %4750 = vmatprep.subr.mxu0 0.0
      %4751 = vmatpush1.msra.mxu0 0.0
      %4752 = vmatprep.subr.mxu0 0.0
      %4753 = vmatpush1.msra.mxu0 0.0
      %4754 = vmatprep.subr.mxu0 0.0
      %4755 = vmatpush1.msra.mxu0 0.0
      %4756 = vmatprep.subr.mxu0 0.0
      %4757 = vmatpush1.msra.mxu0 0.0
      %4758 = vmatprep.subr.mxu0 0.0
      %4759 = vmatpush1.msra.mxu0 0.0
      %4760 = vmatprep.subr.mxu0 0.0
      %4761 = vmatpush1.msra.mxu0 0.0
      %4762 = vmatprep.subr.mxu0 0.0
      %4763 = vmatpush1.msra.mxu0 0.0
      %4764 = vmatprep.subr.mxu0 0.0
      %4765 = vmatpush1.msra.mxu0 0.0
      %4766 = vmatprep.subr.mxu0 0.0
      %4767 = vmatpush1.msra.mxu0 0.0
      %4768 = vmatprep.subr.mxu0 0.0
      %4769 = vmatpush1.msra.mxu0 0.0
      %4770 = vmatprep.subr.mxu0 0.0
      %4771 = vmatpush1.msra.mxu0 0.0
      %4772 = vmatprep.subr.mxu0 0.0
      %4773 = vmatpush1.msra.mxu0 0.0
      %4774 = vmatprep.subr.mxu0 0.0
      %4775 = vmatpush1.msra.mxu0 0.0
      %4776 = vmatprep.subr.mxu0 0.0
      %4777 = vmatpush1.msra.mxu0 0.0
      %4778 = vmatprep.subr.mxu0 0.0
      %4779 = vmatpush1.msra.mxu0 0.0
      %4780 = vmatprep.subr.mxu0 0.0
      %4781 = vmatpush1.msra.mxu0 0.0
      %4782 = vmatprep.subr.mxu0 0.0
      %4783 = vmatpush1.msra.mxu0 0.0
      %4784 = vmatprep.subr.mxu0 0.0
      %4785 = vmatpush1.msra.mxu0 0.0
      %4786 = vmatprep.subr.mxu0 0.0
      %4787 = vmatpush1.msra.mxu0 0.0
      %4788 = vmatprep.subr.mxu0 0.0
      %4789 = vmatpush1.msra.mxu0 0.0
      %4790 = vmatprep.subr.mxu0 0.0
      %4791 = vmatpush1.msra.mxu0 0.0
      %4792 = vmatprep.subr.mxu0 0.0
      %4793 = vmatpush1.msra.mxu0 0.0
      %4794 = vmatprep.subr.mxu0 0.0
      %4795 = vmatpush1.msra.mxu0 0.0
      %4796 = vmatprep.subr.mxu0 0.0
      %4797 = vmatpush1.msra.mxu0 0.0
      %4798 = vmatprep.mubr.f32.mxu0 0.0
      %4799 = vmatmul.mubr.f32.gmra.mrb[0].mxu0 %v695
      %v4800 = vpop.f32.mrb[0].mxu0
      %v4801 = vadd.f32 0.0, %v4800
      %v4802 = vpop.f32.mrb[0].mxu0
      %4803 = vmatprep.mubr.f32.mxu0 0.0
      %4804 = vmatmul.mubr.f32.gmra.mrb[0].mxu0 %v697
      %v4805 = vpop.f32.mrb[0].mxu0
      %v4806 = vadd.f32 0.0, %v4805
      %v4807 = vpop.f32.mrb[0].mxu0
      %4808 = vmatprep.mubr.f32.mxu0 0.0
      %4809 = vmatmul.mubr.f32.gmra.mrb[0].mxu0 %v699
      %v4810 = vpop.f32.mrb[0].mxu0
      %v4811 = vadd.f32 0.0, %v4810
      %v4812 = vpop.f32.mrb[0].mxu0
      %4813 = vmatprep.mubr.f32.mxu0 0.0
      %4814 = vmatmul.mubr.f32.gmra.mrb[0].mxu0 %v701
      %v4815 = vpop.f32.mrb[0].mxu0
      %v4816 = vadd.f32 0.0, %v4815
      %v4817 = vpop.f32.mrb[0].mxu0
      %4818 = vmatprep.mubr.f32.mxu0 0.0
      %4819 = vmatmul.mubr.f32.gmra.mrb[0].mxu0 %v703
      %v4820 = vpop.f32.mrb[0].mxu0
      %v4821 = vadd.f32 0.0, %v4820
      %v4822 = vpop.f32.mrb[0].mxu0
      %4823 = vmatprep.mubr.f32.mxu0 0.0
      %4824 = vmatmul.mubr.f32.gmra.mrb[0].mxu0 %v705
      %v4825 = vpop.f32.mrb[0].mxu0
      %v4826 = vadd.f32 0.0, %v4825
      %v4827 = vpop.f32.mrb[0].mxu0
      %4828 = vmatprep.mubr.f32.mxu0 0.0
      %4829 = vmatmul.mubr.f32.gmra.mrb[0].mxu0 %v707
      %v4830 = vpop.f32.mrb[0].mxu0
      %v4831 = vadd.f32 0.0, %v4830
      %v4832 = vpop.f32.mrb[0].mxu0
      %4833 = vmatprep.mubr.f32.mxu0 0.0
      %4834 = vmatmul.mubr.f32.gmra.mrb[0].mxu0 %v709
      %v4835 = vpop.f32.mrb[0].mxu0
      %v4836 = vadd.f32 0.0, %v4835
      %v4837 = vpop.f32.mrb[0].mxu0
      %4838 = vmatprep.mubr.f32.mxu0 0.0
      %4839 = vmatmul.mubr.f32.gmra.mrb[0].mxu0 %v711
      %v4840 = vpop.f32.mrb[0].mxu0
      %v4841 = vadd.f32 0.0, %v4840
      %v4842 = vpop.f32.mrb[0].mxu0
      %4843 = vmatprep.mubr.f32.mxu0 0.0
      %4844 = vmatmul.mubr.f32.gmra.mrb[0].mxu0 %v713
      %v4845 = vpop.f32.mrb[0].mxu0
      %v4846 = vadd.f32 0.0, %v4845
      %v4847 = vpop.f32.mrb[0].mxu0
      %4848 = vmatprep.mubr.f32.mxu0 0.0
      %4849 = vmatmul.mubr.f32.gmra.mrb[0].mxu0 %v2245
      %v4850 = vpop.f32.mrb[0].mxu0
      %v4851 = vadd.f32 0.0, %v4850
      %v4852 = vpop.f32.mrb[0].mxu0
      %4853 = vmatprep.mubr.f32.mxu0 0.0
      %4854 = vmatmul.mubr.f32.gmra.mrb[0].mxu0 %v2247
      %v4855 = vpop.f32.mrb[0].mxu0
      %v4856 = vadd.f32 0.0, %v4855
      %v4857 = vpop.f32.mrb[0].mxu0
      %4858 = vmatprep.mubr.f32.mxu0 0.0
      %4859 = vmatmul.mubr.f32.gmra.mrb[0].mxu0 %v3416
      %v4860 = vpop.f32.mrb[0].mxu0
      %v4861 = vadd.f32 0.0, %v4860
      %v4862 = vpop.f32.mrb[0].mxu0
      %4863 = vmatprep.mubr.f32.mxu0 0.0
      %4864 = vmatmul.mubr.f32.gmra.mrb[0].mxu0 %v3418
      %v4865 = vpop.f32.mrb[0].mxu0
      %v4866 = vadd.f32 0.0, %v4865
      %v4867 = vpop.f32.mrb[0].mxu0
      %4868 = vmatprep.mubr.f32.mxu0 0.0
      %4869 = vmatmul.mubr.f32.gmra.mrb[0].mxu0 %v3420
      %v4870 = vpop.f32.mrb[0].mxu0
      %v4871 = vadd.f32 0.0, %v4870
      %v4872 = vpop.f32.mrb[0].mxu0
      %4873 = vmatprep.mubr.f32.mxu0 0.0
      %4874 = vmatmul.mubr.f32.gmra.mrb[0].mxu0 %v4730
      %v4875 = vpop.f32.mrb[0].mxu0
      %v4876 = vadd.f32 0.0, %v4875
      %v4877 = vpop.f32.mrb[0].mxu0
      %4878 = vmatprep.mubr.f32.mxu0 0.0
      %4879 = vmatmul.mubr.f32.gmra.mrb[0].mxu0 %v4732
      %v4880 = vpop.f32.mrb[0].mxu0
      %v4881 = vadd.f32 0.0, %v4880
      %v4882 = vpop.f32.mrb[0].mxu0
      %4883 = vdwg.mxu0
      %v4884 = vadd.f32 %v4700, %v4801
      %v4885 = vadd.f32 %v4701, %v4806
      %v4886 = vadd.f32 %v4702, %v4811
      %v4887 = vadd.f32 %v4703, %v4816
      %v4888 = vadd.f32 %v4704, %v4821
      %v4889 = vadd.f32 %v4705, %v4826
      %v4890 = vadd.f32 %v4706, %v4831
      %v4891 = vadd.f32 %v4707, %v4836
      %v4892 = vadd.f32 %v4708, %v4841
      %v4893 = vadd.f32 %v4709, %v4846
      %v4894 = vadd.f32 %v4710, %v4851
      %v4895 = vadd.f32 %v4711, %v4856
      %v4896 = vadd.f32 %v4712, %v4861
      %v4897 = vadd.f32 %v4713, %v4866
      %v4898 = vadd.f32 %v4714, %v4871
      %v4899 = vadd.f32 %v4715, %v4876
      %v4900 = vadd.f32 %v4716, %v4881
      %s4901 = scalar_lea.vmem %s1, 1472
      %v4902 = vld [vmem:[%s4901] sm:$0xff]
      %v4903 = vld [vmem:[%s4901 + $0x8] sm:$0xff]
      %v4904 = vld [vmem:[%s4901 + $0x10] sm:$0xff]
      %v4905 = vld [vmem:[%s4901 + $0x18] sm:$0xff]
      %v4906 = vld [vmem:[%s4901 + $0x20] sm:$0xff]
      %v4907 = vld [vmem:[%s4901 + $0x28] sm:$0xff]
      %v4908 = vld [vmem:[%s4901 + $0x30] sm:$0xff]
      %v4909 = vld [vmem:[%s4901 + $0x38] sm:$0xff]
      %v4910 = vrot.slane %v194, 3
      %v4911 = vsel %vm891, %v3606, %v4910
      %v4912 = vrot.slane %v195, 3
      %v4913 = vsel %vm891, %v4910, %v4912
      %v4914 = vsel %vm267, %v4911, 0
      %v4916 = vsel %vm267, %v4913, 0
      %4918 = vmatprep.subr.mxu0 0.0
      %4919 = vmatpush1.msra.mxu0 %v4902
      %4920 = vmatprep.subr.mxu0 0.0
      %4921 = vmatpush1.msra.mxu0 %v4903
      %4922 = vmatprep.subr.mxu0 0.0
      %4923 = vmatpush1.msra.mxu0 %v4904
      %4924 = vmatprep.subr.mxu0 0.0
      %4925 = vmatpush1.msra.mxu0 %v4905
      %4926 = vmatprep.subr.mxu0 0.0
      %4927 = vmatpush1.msra.mxu0 %v4906
      %4928 = vmatprep.subr.mxu0 0.0
      %4929 = vmatpush1.msra.mxu0 %v4907
      %4930 = vmatprep.subr.mxu0 0.0
      %4931 = vmatpush1.msra.mxu0 %v4908
      %4932 = vmatprep.subr.mxu0 0.0
      %4933 = vmatpush1.msra.mxu0 %v4909
      %4934 = vmatprep.subr.mxu0 0.0
      %4935 = vmatpush1.msra.mxu0 0.0
      %4936 = vmatprep.subr.mxu0 0.0
      %4937 = vmatpush1.msra.mxu0 0.0
      %4938 = vmatprep.subr.mxu0 0.0
      %4939 = vmatpush1.msra.mxu0 0.0
      %4940 = vmatprep.subr.mxu0 0.0
      %4941 = vmatpush1.msra.mxu0 0.0
      %4942 = vmatprep.subr.mxu0 0.0
      %4943 = vmatpush1.msra.mxu0 0.0
      %4944 = vmatprep.subr.mxu0 0.0
      %4945 = vmatpush1.msra.mxu0 0.0
      %4946 = vmatprep.subr.mxu0 0.0
      %4947 = vmatpush1.msra.mxu0 0.0
      %4948 = vmatprep.subr.mxu0 0.0
      %4949 = vmatpush1.msra.mxu0 0.0
      %4950 = vmatprep.subr.mxu0 0.0
      %4951 = vmatpush1.msra.mxu0 0.0
      %4952 = vmatprep.subr.mxu0 0.0
      %4953 = vmatpush1.msra.mxu0 0.0
      %4954 = vmatprep.subr.mxu0 0.0
      %4955 = vmatpush1.msra.mxu0 0.0
      %4956 = vmatprep.subr.mxu0 0.0
      %4957 = vmatpush1.msra.mxu0 0.0
      %4958 = vmatprep.subr.mxu0 0.0
      %4959 = vmatpush1.msra.mxu0 0.0
      %4960 = vmatprep.subr.mxu0 0.0
      %4961 = vmatpush1.msra.mxu0 0.0
      %4962 = vmatprep.subr.mxu0 0.0
      %4963 = vmatpush1.msra.mxu0 0.0
      %4964 = vmatprep.subr.mxu0 0.0
      %4965 = vmatpush1.msra.mxu0 0.0
      %4966 = vmatprep.subr.mxu0 0.0
      %4967 = vmatpush1.msra.mxu0 0.0
      %4968 = vmatprep.subr.mxu0 0.0
      %4969 = vmatpush1.msra.mxu0 0.0
      %4970 = vmatprep.subr.mxu0 0.0
      %4971 = vmatpush1.msra.mxu0 0.0
      %4972 = vmatprep.subr.mxu0 0.0
      %4973 = vmatpush1.msra.mxu0 0.0
      %4974 = vmatprep.subr.mxu0 0.0
      %4975 = vmatpush1.msra.mxu0 0.0
      %4976 = vmatprep.subr.mxu0 0.0
      %4977 = vmatpush1.msra.mxu0 0.0
      %4978 = vmatprep.subr.mxu0 0.0
      %4979 = vmatpush1.msra.mxu0 0.0
      %4980 = vmatprep.subr.mxu0 0.0
      %4981 = vmatpush1.msra.mxu0 0.0
      %4982 = vmatprep.mubr.f32.mxu0 0.0
      %4983 = vmatmul.mubr.f32.gmra.mrb[0].mxu0 %v941
      %v4984 = vpop.f32.mrb[0].mxu0
      %v4985 = vadd.f32 0.0, %v4984
      %v4986 = vpop.f32.mrb[0].mxu0
      %4987 = vmatprep.mubr.f32.mxu0 0.0
      %4988 = vmatmul.mubr.f32.gmra.mrb[0].mxu0 %v943
      %v4989 = vpop.f32.mrb[0].mxu0
      %v4990 = vadd.f32 0.0, %v4989
      %v4991 = vpop.f32.mrb[0].mxu0
      %4992 = vmatprep.mubr.f32.mxu0 0.0
      %4993 = vmatmul.mubr.f32.gmra.mrb[0].mxu0 %v945
      %v4994 = vpop.f32.mrb[0].mxu0
      %v4995 = vadd.f32 0.0, %v4994
      %v4996 = vpop.f32.mrb[0].mxu0
      %4997 = vmatprep.mubr.f32.mxu0 0.0
      %4998 = vmatmul.mubr.f32.gmra.mrb[0].mxu0 %v947
      %v4999 = vpop.f32.mrb[0].mxu0
      %v5000 = vadd.f32 0.0, %v4999
      %v5001 = vpop.f32.mrb[0].mxu0
      %5002 = vmatprep.mubr.f32.mxu0 0.0
      %5003 = vmatmul.mubr.f32.gmra.mrb[0].mxu0 %v949
      %v5004 = vpop.f32.mrb[0].mxu0
      %v5005 = vadd.f32 0.0, %v5004
      %v5006 = vpop.f32.mrb[0].mxu0
      %5007 = vmatprep.mubr.f32.mxu0 0.0
      %5008 = vmatmul.mubr.f32.gmra.mrb[0].mxu0 %v951
      %v5009 = vpop.f32.mrb[0].mxu0
      %v5010 = vadd.f32 0.0, %v5009
      %v5011 = vpop.f32.mrb[0].mxu0
      %5012 = vmatprep.mubr.f32.mxu0 0.0
      %5013 = vmatmul.mubr.f32.gmra.mrb[0].mxu0 %v953
      %v5014 = vpop.f32.mrb[0].mxu0
      %v5015 = vadd.f32 0.0, %v5014
      %v5016 = vpop.f32.mrb[0].mxu0
      %5017 = vmatprep.mubr.f32.mxu0 0.0
      %5018 = vmatmul.mubr.f32.gmra.mrb[0].mxu0 %v955
      %v5019 = vpop.f32.mrb[0].mxu0
      %v5020 = vadd.f32 0.0, %v5019
      %v5021 = vpop.f32.mrb[0].mxu0
      %5022 = vmatprep.mubr.f32.mxu0 0.0
      %5023 = vmatmul.mubr.f32.gmra.mrb[0].mxu0 %v957
      %v5024 = vpop.f32.mrb[0].mxu0
      %v5025 = vadd.f32 0.0, %v5024
      %v5026 = vpop.f32.mrb[0].mxu0
      %5027 = vmatprep.mubr.f32.mxu0 0.0
      %5028 = vmatmul.mubr.f32.gmra.mrb[0].mxu0 %v959
      %v5029 = vpop.f32.mrb[0].mxu0
      %v5030 = vadd.f32 0.0, %v5029
      %v5031 = vpop.f32.mrb[0].mxu0
      %5032 = vmatprep.mubr.f32.mxu0 0.0
      %5033 = vmatmul.mubr.f32.gmra.mrb[0].mxu0 %v3608
      %v5034 = vpop.f32.mrb[0].mxu0
      %v5035 = vadd.f32 0.0, %v5034
      %v5036 = vpop.f32.mrb[0].mxu0
      %5037 = vmatprep.mubr.f32.mxu0 0.0
      %5038 = vmatmul.mubr.f32.gmra.mrb[0].mxu0 %v3610
      %v5039 = vpop.f32.mrb[0].mxu0
      %v5040 = vadd.f32 0.0, %v5039
      %v5041 = vpop.f32.mrb[0].mxu0
      %5042 = vmatprep.mubr.f32.mxu0 0.0
      %5043 = vmatmul.mubr.f32.gmra.mrb[0].mxu0 %v3612
      %v5044 = vpop.f32.mrb[0].mxu0
      %v5045 = vadd.f32 0.0, %v5044
      %v5046 = vpop.f32.mrb[0].mxu0
      %5047 = vmatprep.mubr.f32.mxu0 0.0
      %5048 = vmatmul.mubr.f32.gmra.mrb[0].mxu0 %v3614
      %v5049 = vpop.f32.mrb[0].mxu0
      %v5050 = vadd.f32 0.0, %v5049
      %v5051 = vpop.f32.mrb[0].mxu0
      %5052 = vmatprep.mubr.f32.mxu0 0.0
      %5053 = vmatmul.mubr.f32.gmra.mrb[0].mxu0 %v3616
      %v5054 = vpop.f32.mrb[0].mxu0
      %v5055 = vadd.f32 0.0, %v5054
      %v5056 = vpop.f32.mrb[0].mxu0
      %5057 = vmatprep.mubr.f32.mxu0 0.0
      %5058 = vmatmul.mubr.f32.gmra.mrb[0].mxu0 %v4914
      %v5059 = vpop.f32.mrb[0].mxu0
      %v5060 = vadd.f32 0.0, %v5059
      %v5061 = vpop.f32.mrb[0].mxu0
      %5062 = vmatprep.mubr.f32.mxu0 0.0
      %5063 = vmatmul.mubr.f32.gmra.mrb[0].mxu0 %v4916
      %v5064 = vpop.f32.mrb[0].mxu0
      %v5065 = vadd.f32 0.0, %v5064
      %v5066 = vpop.f32.mrb[0].mxu0
      %5067 = vdwg.mxu0
      %v5068 = vadd.f32 %v4884, %v4985
      %v5069 = vadd.f32 %v4885, %v4990
      %v5070 = vadd.f32 %v4886, %v4995
      %v5071 = vadd.f32 %v4887, %v5000
      %v5072 = vadd.f32 %v4888, %v5005
      %v5073 = vadd.f32 %v4889, %v5010
      %v5074 = vadd.f32 %v4890, %v5015
      %v5075 = vadd.f32 %v4891, %v5020
      %v5076 = vadd.f32 %v4892, %v5025
      %v5077 = vadd.f32 %v4893, %v5030
      %v5078 = vadd.f32 %v4894, %v5035
      %v5079 = vadd.f32 %v4895, %v5040
      %v5080 = vadd.f32 %v4896, %v5045
      %v5081 = vadd.f32 %v4897, %v5050
      %v5082 = vadd.f32 %v4898, %v5055
      %v5083 = vadd.f32 %v4899, %v5060
      %v5084 = vadd.f32 %v4900, %v5065
      %s5085 = scalar_lea.vmem %s1, 1536
      %v5086 = vld [vmem:[%s5085] sm:$0xff]
      %v5087 = vld [vmem:[%s5085 + $0x8] sm:$0xff]
      %v5088 = vld [vmem:[%s5085 + $0x10] sm:$0xff]
      %v5089 = vld [vmem:[%s5085 + $0x18] sm:$0xff]
      %v5090 = vld [vmem:[%s5085 + $0x20] sm:$0xff]
      %v5091 = vld [vmem:[%s5085 + $0x28] sm:$0xff]
      %v5092 = vld [vmem:[%s5085 + $0x30] sm:$0xff]
      %v5093 = vld [vmem:[%s5085 + $0x38] sm:$0xff]
      %v5094 = vrot.slane %v194, 4
      %v5095 = vsel %vm1137, %v3796, %v5094
      %v5096 = vrot.slane %v195, 4
      %v5097 = vsel %vm1137, %v5094, %v5096
      %v5098 = vsel %vm267, %v5095, 0
      %v5100 = vsel %vm267, %v5097, 0
      %5102 = vmatprep.subr.mxu0 0.0
      %5103 = vmatpush1.msra.mxu0 %v5086
      %5104 = vmatprep.subr.mxu0 0.0
      %5105 = vmatpush1.msra.mxu0 %v5087
      %5106 = vmatprep.subr.mxu0 0.0
      %5107 = vmatpush1.msra.mxu0 %v5088
      %5108 = vmatprep.subr.mxu0 0.0
      %5109 = vmatpush1.msra.mxu0 %v5089
      %5110 = vmatprep.subr.mxu0 0.0
      %5111 = vmatpush1.msra.mxu0 %v5090
      %5112 = vmatprep.subr.mxu0 0.0
      %5113 = vmatpush1.msra.mxu0 %v5091
      %5114 = vmatprep.subr.mxu0 0.0
      %5115 = vmatpush1.msra.mxu0 %v5092
      %5116 = vmatprep.subr.mxu0 0.0
      %5117 = vmatpush1.msra.mxu0 %v5093
      %5118 = vmatprep.subr.mxu0 0.0
      %5119 = vmatpush1.msra.mxu0 0.0
      %5120 = vmatprep.subr.mxu0 0.0
      %5121 = vmatpush1.msra.mxu0 0.0
      %5122 = vmatprep.subr.mxu0 0.0
      %5123 = vmatpush1.msra.mxu0 0.0
      %5124 = vmatprep.subr.mxu0 0.0
      %5125 = vmatpush1.msra.mxu0 0.0
      %5126 = vmatprep.subr.mxu0 0.0
      %5127 = vmatpush1.msra.mxu0 0.0
      %5128 = vmatprep.subr.mxu0 0.0
      %5129 = vmatpush1.msra.mxu0 0.0
      %5130 = vmatprep.subr.mxu0 0.0
      %5131 = vmatpush1.msra.mxu0 0.0
      %5132 = vmatprep.subr.mxu0 0.0
      %5133 = vmatpush1.msra.mxu0 0.0
      %5134 = vmatprep.subr.mxu0 0.0
      %5135 = vmatpush1.msra.mxu0 0.0
      %5136 = vmatprep.subr.mxu0 0.0
      %5137 = vmatpush1.msra.mxu0 0.0
      %5138 = vmatprep.subr.mxu0 0.0
      %5139 = vmatpush1.msra.mxu0 0.0
      %5140 = vmatprep.subr.mxu0 0.0
      %5141 = vmatpush1.msra.mxu0 0.0
      %5142 = vmatprep.subr.mxu0 0.0
      %5143 = vmatpush1.msra.mxu0 0.0
      %5144 = vmatprep.subr.mxu0 0.0
      %5145 = vmatpush1.msra.mxu0 0.0
      %5146 = vmatprep.subr.mxu0 0.0
      %5147 = vmatpush1.msra.mxu0 0.0
      %5148 = vmatprep.subr.mxu0 0.0
      %5149 = vmatpush1.msra.mxu0 0.0
      %5150 = vmatprep.subr.mxu0 0.0
      %5151 = vmatpush1.msra.mxu0 0.0
      %5152 = vmatprep.subr.mxu0 0.0
      %5153 = vmatpush1.msra.mxu0 0.0
      %5154 = vmatprep.subr.mxu0 0.0
      %5155 = vmatpush1.msra.mxu0 0.0
      %5156 = vmatprep.subr.mxu0 0.0
      %5157 = vmatpush1.msra.mxu0 0.0
      %5158 = vmatprep.subr.mxu0 0.0
      %5159 = vmatpush1.msra.mxu0 0.0
      %5160 = vmatprep.subr.mxu0 0.0
      %5161 = vmatpush1.msra.mxu0 0.0
      %5162 = vmatprep.subr.mxu0 0.0
      %5163 = vmatpush1.msra.mxu0 0.0
      %5164 = vmatprep.subr.mxu0 0.0
      %5165 = vmatpush1.msra.mxu0 0.0
      %5166 = vmatprep.mubr.f32.mxu0 0.0
      %5167 = vmatmul.mubr.f32.gmra.mrb[0].mxu0 %v1187
      %v5168 = vpop.f32.mrb[0].mxu0
      %v5169 = vadd.f32 0.0, %v5168
      %v5170 = vpop.f32.mrb[0].mxu0
      %5171 = vmatprep.mubr.f32.mxu0 0.0
      %5172 = vmatmul.mubr.f32.gmra.mrb[0].mxu0 %v1189
      %v5173 = vpop.f32.mrb[0].mxu0
      %v5174 = vadd.f32 0.0, %v5173
      %v5175 = vpop.f32.mrb[0].mxu0
      %5176 = vmatprep.mubr.f32.mxu0 0.0
      %5177 = vmatmul.mubr.f32.gmra.mrb[0].mxu0 %v1191
      %v5178 = vpop.f32.mrb[0].mxu0
      %v5179 = vadd.f32 0.0, %v5178
      %v5180 = vpop.f32.mrb[0].mxu0
      %5181 = vmatprep.mubr.f32.mxu0 0.0
      %5182 = vmatmul.mubr.f32.gmra.mrb[0].mxu0 %v1193
      %v5183 = vpop.f32.mrb[0].mxu0
      %v5184 = vadd.f32 0.0, %v5183
      %v5185 = vpop.f32.mrb[0].mxu0
      %5186 = vmatprep.mubr.f32.mxu0 0.0
      %5187 = vmatmul.mubr.f32.gmra.mrb[0].mxu0 %v1195
      %v5188 = vpop.f32.mrb[0].mxu0
      %v5189 = vadd.f32 0.0, %v5188
      %v5190 = vpop.f32.mrb[0].mxu0
      %5191 = vmatprep.mubr.f32.mxu0 0.0
      %5192 = vmatmul.mubr.f32.gmra.mrb[0].mxu0 %v1197
      %v5193 = vpop.f32.mrb[0].mxu0
      %v5194 = vadd.f32 0.0, %v5193
      %v5195 = vpop.f32.mrb[0].mxu0
      %5196 = vmatprep.mubr.f32.mxu0 0.0
      %5197 = vmatmul.mubr.f32.gmra.mrb[0].mxu0 %v1199
      %v5198 = vpop.f32.mrb[0].mxu0
      %v5199 = vadd.f32 0.0, %v5198
      %v5200 = vpop.f32.mrb[0].mxu0
      %5201 = vmatprep.mubr.f32.mxu0 0.0
      %5202 = vmatmul.mubr.f32.gmra.mrb[0].mxu0 %v1201
      %v5203 = vpop.f32.mrb[0].mxu0
      %v5204 = vadd.f32 0.0, %v5203
      %v5205 = vpop.f32.mrb[0].mxu0
      %5206 = vmatprep.mubr.f32.mxu0 0.0
      %5207 = vmatmul.mubr.f32.gmra.mrb[0].mxu0 %v1203
      %v5208 = vpop.f32.mrb[0].mxu0
      %v5209 = vadd.f32 0.0, %v5208
      %v5210 = vpop.f32.mrb[0].mxu0
      %5211 = vmatprep.mubr.f32.mxu0 0.0
      %5212 = vmatmul.mubr.f32.gmra.mrb[0].mxu0 %v1205
      %v5213 = vpop.f32.mrb[0].mxu0
      %v5214 = vadd.f32 0.0, %v5213
      %v5215 = vpop.f32.mrb[0].mxu0
      %5216 = vmatprep.mubr.f32.mxu0 0.0
      %5217 = vmatmul.mubr.f32.gmra.mrb[0].mxu0 %v2432
      %v5218 = vpop.f32.mrb[0].mxu0
      %v5219 = vadd.f32 0.0, %v5218
      %v5220 = vpop.f32.mrb[0].mxu0
      %5221 = vmatprep.mubr.f32.mxu0 0.0
      %5222 = vmatmul.mubr.f32.gmra.mrb[0].mxu0 %v2434
      %v5223 = vpop.f32.mrb[0].mxu0
      %v5224 = vadd.f32 0.0, %v5223
      %v5225 = vpop.f32.mrb[0].mxu0
      %5226 = vmatprep.mubr.f32.mxu0 0.0
      %5227 = vmatmul.mubr.f32.gmra.mrb[0].mxu0 %v2436
      %v5228 = vpop.f32.mrb[0].mxu0
      %v5229 = vadd.f32 0.0, %v5228
      %v5230 = vpop.f32.mrb[0].mxu0
      %5231 = vmatprep.mubr.f32.mxu0 0.0
      %5232 = vmatmul.mubr.f32.gmra.mrb[0].mxu0 %v3798
      %v5233 = vpop.f32.mrb[0].mxu0
      %v5234 = vadd.f32 0.0, %v5233
      %v5235 = vpop.f32.mrb[0].mxu0
      %5236 = vmatprep.mubr.f32.mxu0 0.0
      %5237 = vmatmul.mubr.f32.gmra.mrb[0].mxu0 %v3800
      %v5238 = vpop.f32.mrb[0].mxu0
      %v5239 = vadd.f32 0.0, %v5238
      %v5240 = vpop.f32.mrb[0].mxu0
      %5241 = vmatprep.mubr.f32.mxu0 0.0
      %5242 = vmatmul.mubr.f32.gmra.mrb[0].mxu0 %v5098
      %v5243 = vpop.f32.mrb[0].mxu0
      %v5244 = vadd.f32 0.0, %v5243
      %v5245 = vpop.f32.mrb[0].mxu0
      %5246 = vmatprep.mubr.f32.mxu0 0.0
      %5247 = vmatmul.mubr.f32.gmra.mrb[0].mxu0 %v5100
      %v5248 = vpop.f32.mrb[0].mxu0
      %v5249 = vadd.f32 0.0, %v5248
      %v5250 = vpop.f32.mrb[0].mxu0
      %5251 = vdwg.mxu0
      %v5252 = vadd.f32 %v5068, %v5169
      %v5253 = vadd.f32 %v5069, %v5174
      %v5254 = vadd.f32 %v5070, %v5179
      %v5255 = vadd.f32 %v5071, %v5184
      %v5256 = vadd.f32 %v5072, %v5189
      %v5257 = vadd.f32 %v5073, %v5194
      %v5258 = vadd.f32 %v5074, %v5199
      %v5259 = vadd.f32 %v5075, %v5204
      %v5260 = vadd.f32 %v5076, %v5209
      %v5261 = vadd.f32 %v5077, %v5214
      %v5262 = vadd.f32 %v5078, %v5219
      %v5263 = vadd.f32 %v5079, %v5224
      %v5264 = vadd.f32 %v5080, %v5229
      %v5265 = vadd.f32 %v5081, %v5234
      %v5266 = vadd.f32 %v5082, %v5239
      %v5267 = vadd.f32 %v5083, %v5244
      %v5268 = vadd.f32 %v5084, %v5249
      %v5269 = vld [vmem:[%s2] sm:$0x1]
      %v5271 = vlaneseq
      %v5272 = vshrl.u32 %v5271, 7
      %v5273 = vsub.s32 0, %v5272
      %v5274 = vrot.slane %v5269, %v5273
      %v5276 = vadd.f32 %v5252, %v5274
      %v5277 = vadd.f32 %v5253, %v5274
      %v5278 = vadd.f32 %v5254, %v5274
      %v5279 = vadd.f32 %v5255, %v5274
      %v5280 = vadd.f32 %v5256, %v5274
      %v5281 = vadd.f32 %v5257, %v5274
      %v5282 = vadd.f32 %v5258, %v5274
      %v5283 = vadd.f32 %v5259, %v5274
      %v5284 = vadd.f32 %v5260, %v5274
      %v5285 = vadd.f32 %v5261, %v5274
      %v5286 = vadd.f32 %v5262, %v5274
      %v5287 = vadd.f32 %v5263, %v5274
      %v5288 = vadd.f32 %v5264, %v5274
      %v5289 = vadd.f32 %v5265, %v5274
      %v5290 = vadd.f32 %v5266, %v5274
      %v5291 = vadd.f32 %v5267, %v5274
      %v5292 = vadd.f32 %v5268, %v5274
      %v5293 = vmax.f32 %v5276, 0.0
      %v5294 = vmax.f32 %v5277, 0.0
      %v5295 = vmax.f32 %v5278, 0.0
      %v5296 = vmax.f32 %v5279, 0.0
      %v5297 = vmax.f32 %v5280, 0.0
      %v5298 = vmax.f32 %v5281, 0.0
      %v5299 = vmax.f32 %v5282, 0.0
      %v5300 = vmax.f32 %v5283, 0.0
      %v5301 = vmax.f32 %v5284, 0.0
      %v5302 = vmax.f32 %v5285, 0.0
      %v5303 = vmax.f32 %v5286, 0.0
      %v5304 = vmax.f32 %v5287, 0.0
      %v5305 = vmax.f32 %v5288, 0.0
      %v5306 = vmax.f32 %v5289, 0.0
      %v5307 = vmax.f32 %v5290, 0.0
      %v5308 = vmax.f32 %v5291, 0.0
      %v5309 = vmax.f32 %v5292, 0.0
      %5310 = vst [vmem:[%s170] sm:$0xff] %v5293
      %5311 = vst [vmem:[%s170 + $0x8] sm:$0x3] %v5294
      %s5312 = scalar_lea.vmem %s170, 16
      %5313 = vst [vmem:[%s5312 - $0x6] sm:$0xc0] %v5294
      %5314 = vst [vmem:[%s5312 + $0x2] sm:$0xff] %v5295
      %s5315 = scalar_lea.vmem %s170, 32
      %5316 = vst [vmem:[%s5315 - $0x4] sm:$0xf0] %v5296
      %5317 = vst [vmem:[%s5315 + $0x4] sm:$0x3f] %v5297
      %s5318 = scalar_lea.vmem %s170, 48
      %5319 = vst [vmem:[%s5318 - $0x2] sm:$0xfc] %v5298
      %5320 = vst [vmem:[%s5318 + $0x6] sm:$0xf] %v5299
      %s5321 = scalar_lea.vmem %s170, 64
      %5322 = vst [vmem:[%s5321] sm:$0xff] %v5300
      %5323 = vst [vmem:[%s5321 + $0x8] sm:$0x3] %v5301
      %s5324 = scalar_lea.vmem %s170, 80
      %5325 = vst [vmem:[%s5324 - $0x6] sm:$0xc0] %v5301
      %5326 = vst [vmem:[%s5324 + $0x2] sm:$0xff] %v5302
      %s5327 = scalar_lea.vmem %s170, 96
      %5328 = vst [vmem:[%s5327 - $0x4] sm:$0xf0] %v5303
      %5329 = vst [vmem:[%s5327 + $0x4] sm:$0x3f] %v5304
      %s5330 = scalar_lea.vmem %s170, 112
      %5331 = vst [vmem:[%s5330 - $0x2] sm:$0xfc] %v5305
      %5332 = vst [vmem:[%s5330 + $0x6] sm:$0xf] %v5306
      %s5333 = scalar_lea.vmem %s170, 128
      %5334 = vst [vmem:[%s5333] sm:$0xff] %v5307
      %5335 = vst [vmem:[%s5333 + $0x8] sm:$0x3] %v5308
      %s5336 = scalar_lea.vmem %s170, 144
      %5337 = vst [vmem:[%s5336 - $0x6] sm:$0xc0] %v5308
      %5338 = vst [vmem:[%s5336 + $0x2] sm:$0xff] %v5309
      %p5339 = scmp.lt.s32.totalorder %s14, 1
      %s5340 = scalar_select %p5339, %s14, 1
      %s5341 = smul.addr %s5340, 20
      %s5342 = smul.addr %s5341, 8
      %s5343 = scalar_lea.vmem %s3, %s5342
      // Predicated region
      $region33: #{net_forward.9} parent=31 // pred_check
        %p5344 = pneg %p100
      $region34: #{net_forward.9} parent=31 // pred_check_branch
        %5346 = sbr.rel (%p5344) target = $region36
      $region35: #{net_forward.9} parent=31 // pred_region
        _
      $region36: #{net_forward.9} parent=31 // pred_fallthru
        _
    $region32: #{net_forward.9} parent=5 // pred_fallthru
      _
    %p5347 = scmp.le.s32.totalorder 2, %s9
    // Predicated region
    $region37: #{net_forward.9} parent=5 // pred_check
      %p5348 = pneg %p5347
    $region38: #{net_forward.9} parent=5 // pred_check_branch
      %5350 = sbr.rel (%p5348) target = $region40
    $region39: #{net_forward.9} parent=5 // pred_region
      %s5351 = ssub.s32 %s9, 2
      // Predicated region
      $region41: #{net_forward.9} parent=39 // pred_check
        %p5352 = pneg %p106
      $region42: #{net_forward.9} parent=39 // pred_check_branch
        %5354 = sbr.rel (%p5352) target = $region44
      $region43: #{net_forward.9} parent=39 // pred_region
        %p5355 = scmp.lt.s32.totalorder %s15, 1
        %s5356 = scalar_select %p5355, %s15, 1
        %s5357 = smul.addr %s5356, 20
        %s5358 = smul.addr %s5357, 8
        %s5359 = scalar_lea.vmem %s3, %s5358
      $region44: #{net_forward.9} parent=39 // pred_fallthru
        _
    $region40: #{net_forward.9} parent=5 // pred_fallthru
      _
  $region6: #{net_forward.9} parent=0 // loop_footer
    %s13 = sadd.s32 1, %s9
  $region7: #{net_forward.9} parent=0 // loop_footer_branch
    %8 = sbr.rel target = $region3
  $region8: #{net_forward.9} parent=0 // loop_exit
    _

// kernel: net_forward.11
$region0: #{net_forward.11}
  #allocation0 [shape = 'u32[]', space=smem, size = 0x4, offset = 0x4, fixed_abs, tag = 'smem constant byte address 0x4 - core index']
  #allocation1 [shape = 'u32[144,128]{1,0:T(1,128)}', space=vmem, size = 0x12000, scoped, tag = 'internal scratch']
  %s0 = inlined_call_operand.vmem [shape: bf16[2,3200], index: 0, kind: input, shape index: {}]
  %s1 = inlined_call_operand.vmem [shape: bf16[3200,128], index: 1, kind: input, shape index: {}]
  %s2 = inlined_call_operand.vmem [shape: f32[1,128], index: 2, kind: input, shape index: {}]
  %s3 = inlined_call_operand.vmem [shape: bf16[128,128], index: 3, kind: input, shape index: {}]
  %s4 = inlined_call_operand.vmem [shape: f32[1,128], index: 4, kind: input, shape index: {}]
  %s5 = inlined_call_operand.vmem [shape: bf16[128,128], index: 5, kind: input, shape index: {}]
  %s6 = inlined_call_operand.vmem [shape: f32[1,128], index: 6, kind: input, shape index: {}]
  %s7 = inlined_call_operand.hbm [shape: f32[2,128], index: 7, kind: output, shape index: {}]
  %s8 = sld [smem:[#allocation0]]
  $region38: #{net_forward.11} parent=0
    _
  %s10 = ssub.s32 1, %s8
  %s11 = scalar_select 0, %s10, %s8
  $region1: #{net_forward.11} parent=0
    #allocation2 [shape = 'u8[1024]{0}', space=vmem, size = 0x400, scoped, tag = 'output window, operand 0, single buffered']
    #allocation3 [shape = 's32[1]{0}', space=sflag, size = 0x4, scoped, tag = 'scoped memory for net_forward.11']
    %12 = vsyncpa [#allocation3], 0
    // Predicated region
    $region2: #{net_forward.11} parent=1 // pred_check
      _
    $region3: #{net_forward.11} parent=1 // pred_check_branch
      %14 = sbr.rel (0) target = $region5
    $region4: #{net_forward.11} parent=1 // pred_region
      _
    $region5: #{net_forward.11} parent=1 // pred_fallthru
      _
    // Predicated region
    $region6: #{net_forward.11} parent=1 // pred_check
      _
    $region7: #{net_forward.11} parent=1 // pred_check_branch
      %16 = sbr.rel (0) target = $region9
    $region8: #{net_forward.11} parent=1 // pred_region
      _
    $region9: #{net_forward.11} parent=1 // pred_fallthru
      _
    // Predicated region
    $region10: #{net_forward.11} parent=1 // pred_check
      _
    $region11: #{net_forward.11} parent=1 // pred_check_branch
      %18 = sbr.rel (0) target = $region13
    $region12: #{net_forward.11} parent=1 // pred_region
      _
    $region13: #{net_forward.11} parent=1 // pred_fallthru
      _
    // Predicated region
    $region14: #{net_forward.11} parent=1 // pred_check
      _
    $region15: #{net_forward.11} parent=1 // pred_check_branch
      %20 = sbr.rel (0) target = $region17
    $region16: #{net_forward.11} parent=1 // pred_region
      _
    $region17: #{net_forward.11} parent=1 // pred_fallthru
      _
    // Predicated region
    $region18: #{net_forward.11} parent=1 // pred_check
      _
    $region19: #{net_forward.11} parent=1 // pred_check_branch
      %22 = sbr.rel (0) target = $region21
    $region20: #{net_forward.11} parent=1 // pred_region
      _
    $region21: #{net_forward.11} parent=1 // pred_fallthru
      _
    // Predicated region
    $region22: #{net_forward.11} parent=1 // pred_check
      _
    $region23: #{net_forward.11} parent=1 // pred_check_branch
      %24 = sbr.rel (0) target = $region25
    $region24: #{net_forward.11} parent=1 // pred_region
      _
    $region25: #{net_forward.11} parent=1 // pred_fallthru
      _
    // Predicated region
    $region26: #{net_forward.11} parent=1 // pred_check
      _
    $region27: #{net_forward.11} parent=1 // pred_check_branch
      %26 = sbr.rel (0) target = $region29
    $region28: #{net_forward.11} parent=1 // pred_region
      _
    $region29: #{net_forward.11} parent=1 // pred_fallthru
      _
    %v28 = vld [vmem:[%s0] sm:$0xff]
    %v29 = vld [vmem:[%s0 + $0x8] sm:$0xff]
    %v30 = vld [vmem:[%s0 + $0x10] sm:$0xff]
    %v31 = vld [vmem:[%s0 + $0x18] sm:$0x1]
    %v32 = vld [vmem:[%s1] sm:$0xf]
    %v33 = vld [vmem:[%s1 + $0x4] sm:$0xf]
    %v34 = vld [vmem:[%s1 + $0x8] sm:$0xf]
    %v35 = vld [vmem:[%s1 + $0xc] sm:$0xf]
    %v36 = vld [vmem:[%s1 + $0x10] sm:$0xf]
    %v37 = vld [vmem:[%s1 + $0x14] sm:$0xf]
    %v38 = vld [vmem:[%s1 + $0x18] sm:$0xf]
    %v39 = vld [vmem:[%s1 + $0x1c] sm:$0xf]
    %v40 = vld [vmem:[%s1 + $0x20] sm:$0xf]
    %v41 = vld [vmem:[%s1 + $0x24] sm:$0xf]
    %v42 = vld [vmem:[%s1 + $0x28] sm:$0xf]
    %v43 = vld [vmem:[%s1 + $0x2c] sm:$0xf]
    %v44 = vld [vmem:[%s1 + $0x30] sm:$0xf]
    %v45 = vld [vmem:[%s1 + $0x34] sm:$0xf]
    %v46 = vld [vmem:[%s1 + $0x38] sm:$0xf]
    %v47 = vld [vmem:[%s1 + $0x3c] sm:$0xf]
    %v48 = vld [vmem:[%s1 + $0x40] sm:$0xf]
    %v49 = vld [vmem:[%s1 + $0x44] sm:$0xf]
    %v50 = vld [vmem:[%s1 + $0x48] sm:$0xf]
    %v51 = vld [vmem:[%s1 + $0x4c] sm:$0xf]
    %v52 = vld [vmem:[%s1 + $0x50] sm:$0xf]
    %v53 = vld [vmem:[%s1 + $0x54] sm:$0xf]
    %v54 = vld [vmem:[%s1 + $0x58] sm:$0xf]
    %v55 = vld [vmem:[%s1 + $0x5c] sm:$0xf]
    %v56 = vld [vmem:[%s1 + $0x60] sm:$0xf]
    %v57 = vld [vmem:[%s1 + $0x64] sm:$0xf]
    %v58 = vld [vmem:[%s1 + $0x68] sm:$0xf]
    %v59 = vld [vmem:[%s1 + $0x6c] sm:$0xf]
    %v60 = vld [vmem:[%s1 + $0x70] sm:$0xf]
    %v61 = vld [vmem:[%s1 + $0x74] sm:$0xf]
    %v62 = vld [vmem:[%s1 + $0x78] sm:$0xf]
    %v63 = vld [vmem:[%s1 + $0x7c] sm:$0xf]
    %v64 = vld [vmem:[%s1 + $0x80] sm:$0xf]
    %v65 = vld [vmem:[%s1 + $0x84] sm:$0xf]
    %v66 = vld [vmem:[%s1 + $0x88] sm:$0xf]
    %v67 = vld [vmem:[%s1 + $0x8c] sm:$0xf]
    %v68 = vld [vmem:[%s1 + $0x90] sm:$0xf]
    %v69 = vld [vmem:[%s1 + $0x94] sm:$0xf]
    %v70 = vld [vmem:[%s1 + $0x98] sm:$0xf]
    %v71 = vld [vmem:[%s1 + $0x9c] sm:$0xf]
    %v72 = vld [vmem:[%s1 + $0xa0] sm:$0xf]
    %v73 = vld [vmem:[%s1 + $0xa4] sm:$0xf]
    %v74 = vld [vmem:[%s1 + $0xa8] sm:$0xf]
    %v75 = vld [vmem:[%s1 + $0xac] sm:$0xf]
    %v76 = vld [vmem:[%s1 + $0xb0] sm:$0xf]
    %v77 = vld [vmem:[%s1 + $0xb4] sm:$0xf]
    %v78 = vld [vmem:[%s1 + $0xb8] sm:$0xf]
    %v79 = vld [vmem:[%s1 + $0xbc] sm:$0xf]
    %v80 = vld [vmem:[%s1 + $0xc0] sm:$0xf]
    %v81 = vld [vmem:[%s1 + $0xc4] sm:$0xf]
    %v82 = vld [vmem:[%s1 + $0xc8] sm:$0xf]
    %v83 = vld [vmem:[%s1 + $0xcc] sm:$0xf]
    %v84 = vld [vmem:[%s1 + $0xd0] sm:$0xf]
    %v85 = vld [vmem:[%s1 + $0xd4] sm:$0xf]
    %v86 = vld [vmem:[%s1 + $0xd8] sm:$0xf]
    %v87 = vld [vmem:[%s1 + $0xdc] sm:$0xf]
    %v88 = vld [vmem:[%s1 + $0xe0] sm:$0xf]
    %v89 = vld [vmem:[%s1 + $0xe4] sm:$0xf]
    %v90 = vld [vmem:[%s1 + $0xe8] sm:$0xf]
    %v91 = vld [vmem:[%s1 + $0xec] sm:$0xf]
    %v92 = vld [vmem:[%s1 + $0xf0] sm:$0xf]
    %v93 = vld [vmem:[%s1 + $0xf4] sm:$0xf]
    %v94 = vld [vmem:[%s1 + $0xf8] sm:$0xf]
    %v95 = vld [vmem:[%s1 + $0xfc] sm:$0xf]
    %v96 = vld [vmem:[%s1 + $0x100] sm:$0xf]
    %v97 = vld [vmem:[%s1 + $0x104] sm:$0xf]
    %v98 = vld [vmem:[%s1 + $0x108] sm:$0xf]
    %v99 = vld [vmem:[%s1 + $0x10c] sm:$0xf]
    %v100 = vld [vmem:[%s1 + $0x110] sm:$0xf]
    %v101 = vld [vmem:[%s1 + $0x114] sm:$0xf]
    %v102 = vld [vmem:[%s1 + $0x118] sm:$0xf]
    %v103 = vld [vmem:[%s1 + $0x11c] sm:$0xf]
    %v104 = vld [vmem:[%s1 + $0x120] sm:$0xf]
    %v105 = vld [vmem:[%s1 + $0x124] sm:$0xf]
    %v106 = vld [vmem:[%s1 + $0x128] sm:$0xf]
    %v107 = vld [vmem:[%s1 + $0x12c] sm:$0xf]
    %v108 = vld [vmem:[%s1 + $0x130] sm:$0xf]
    %v109 = vld [vmem:[%s1 + $0x134] sm:$0xf]
    %v110 = vld [vmem:[%s1 + $0x138] sm:$0xf]
    %v111 = vld [vmem:[%s1 + $0x13c] sm:$0xf]
    %v112 = vld [vmem:[%s1 + $0x140] sm:$0xf]
    %v113 = vld [vmem:[%s1 + $0x144] sm:$0xf]
    %v114 = vld [vmem:[%s1 + $0x148] sm:$0xf]
    %v115 = vld [vmem:[%s1 + $0x14c] sm:$0xf]
    %v116 = vld [vmem:[%s1 + $0x150] sm:$0xf]
    %v117 = vld [vmem:[%s1 + $0x154] sm:$0xf]
    %v118 = vld [vmem:[%s1 + $0x158] sm:$0xf]
    %v119 = vld [vmem:[%s1 + $0x15c] sm:$0xf]
    %v120 = vld [vmem:[%s1 + $0x160] sm:$0xf]
    %v121 = vld [vmem:[%s1 + $0x164] sm:$0xf]
    %v122 = vld [vmem:[%s1 + $0x168] sm:$0xf]
    %v123 = vld [vmem:[%s1 + $0x16c] sm:$0xf]
    %v124 = vld [vmem:[%s1 + $0x170] sm:$0xf]
    %v125 = vld [vmem:[%s1 + $0x174] sm:$0xf]
    %v126 = vld [vmem:[%s1 + $0x178] sm:$0xf]
    %v127 = vld [vmem:[%s1 + $0x17c] sm:$0xf]
    %v128 = vld [vmem:[%s1 + $0x180] sm:$0xf]
    %v129 = vld [vmem:[%s1 + $0x184] sm:$0xf]
    %v130 = vld [vmem:[%s1 + $0x188] sm:$0xf]
    %v131 = vld [vmem:[%s1 + $0x18c] sm:$0xf]
    %v132 = vld [vmem:[%s1 + $0x190] sm:$0xf]
    %v133 = vld [vmem:[%s1 + $0x194] sm:$0xf]
    %v134 = vld [vmem:[%s1 + $0x198] sm:$0xf]
    %v135 = vld [vmem:[%s1 + $0x19c] sm:$0xf]
    %v136 = vld [vmem:[%s1 + $0x1a0] sm:$0xf]
    %v137 = vld [vmem:[%s1 + $0x1a4] sm:$0xf]
    %v138 = vld [vmem:[%s1 + $0x1a8] sm:$0xf]
    %v139 = vld [vmem:[%s1 + $0x1ac] sm:$0xf]
    %v140 = vld [vmem:[%s1 + $0x1b0] sm:$0xf]
    %v141 = vld [vmem:[%s1 + $0x1b4] sm:$0xf]
    %v142 = vld [vmem:[%s1 + $0x1b8] sm:$0xf]
    %v143 = vld [vmem:[%s1 + $0x1bc] sm:$0xf]
    %v144 = vld [vmem:[%s1 + $0x1c0] sm:$0xf]
    %v145 = vld [vmem:[%s1 + $0x1c4] sm:$0xf]
    %v146 = vld [vmem:[%s1 + $0x1c8] sm:$0xf]
    %v147 = vld [vmem:[%s1 + $0x1cc] sm:$0xf]
    %v148 = vld [vmem:[%s1 + $0x1d0] sm:$0xf]
    %v149 = vld [vmem:[%s1 + $0x1d4] sm:$0xf]
    %v150 = vld [vmem:[%s1 + $0x1d8] sm:$0xf]
    %v151 = vld [vmem:[%s1 + $0x1dc] sm:$0xf]
    %v152 = vld [vmem:[%s1 + $0x1e0] sm:$0xf]
    %v153 = vld [vmem:[%s1 + $0x1e4] sm:$0xf]
    %v154 = vld [vmem:[%s1 + $0x1e8] sm:$0xf]
    %v155 = vld [vmem:[%s1 + $0x1ec] sm:$0xf]
    %v156 = vld [vmem:[%s1 + $0x1f0] sm:$0xf]
    %v157 = vld [vmem:[%s1 + $0x1f4] sm:$0xf]
    %v158 = vld [vmem:[%s1 + $0x1f8] sm:$0xf]
    %v159 = vld [vmem:[%s1 + $0x1fc] sm:$0xf]
    %v160 = vld [vmem:[%s1 + $0x200] sm:$0xf]
    %v161 = vld [vmem:[%s1 + $0x204] sm:$0xf]
    %v162 = vld [vmem:[%s1 + $0x208] sm:$0xf]
    %v163 = vld [vmem:[%s1 + $0x20c] sm:$0xf]
    %v164 = vld [vmem:[%s1 + $0x210] sm:$0xf]
    %v165 = vld [vmem:[%s1 + $0x214] sm:$0xf]
    %v166 = vld [vmem:[%s1 + $0x218] sm:$0xf]
    %v167 = vld [vmem:[%s1 + $0x21c] sm:$0xf]
    %v168 = vld [vmem:[%s1 + $0x220] sm:$0xf]
    %v169 = vld [vmem:[%s1 + $0x224] sm:$0xf]
    %v170 = vld [vmem:[%s1 + $0x228] sm:$0xf]
    %v171 = vld [vmem:[%s1 + $0x22c] sm:$0xf]
    %v172 = vld [vmem:[%s1 + $0x230] sm:$0xf]
    %v173 = vld [vmem:[%s1 + $0x234] sm:$0xf]
    %v174 = vld [vmem:[%s1 + $0x238] sm:$0xf]
    %v175 = vld [vmem:[%s1 + $0x23c] sm:$0xf]
    %v176 = vld [vmem:[%s1 + $0x240] sm:$0xf]
    %v177 = vld [vmem:[%s1 + $0x244] sm:$0xf]
    %v178 = vld [vmem:[%s1 + $0x248] sm:$0xf]
    %v179 = vld [vmem:[%s1 + $0x24c] sm:$0xf]
    %v180 = vld [vmem:[%s1 + $0x250] sm:$0xf]
    %v181 = vld [vmem:[%s1 + $0x254] sm:$0xf]
    %v182 = vld [vmem:[%s1 + $0x258] sm:$0xf]
    %v183 = vld [vmem:[%s1 + $0x25c] sm:$0xf]
    %v184 = vld [vmem:[%s1 + $0x260] sm:$0xf]
    %v185 = vld [vmem:[%s1 + $0x264] sm:$0xf]
    %v186 = vld [vmem:[%s1 + $0x268] sm:$0xf]
    %v187 = vld [vmem:[%s1 + $0x26c] sm:$0xf]
    %v188 = vld [vmem:[%s1 + $0x270] sm:$0xf]
    %v189 = vld [vmem:[%s1 + $0x274] sm:$0xf]
    %v190 = vld [vmem:[%s1 + $0x278] sm:$0xf]
    %v191 = vld [vmem:[%s1 + $0x27c] sm:$0xf]
    %v192 = vld [vmem:[%s1 + $0x280] sm:$0xf]
    %v193 = vld [vmem:[%s1 + $0x284] sm:$0xf]
    %v194 = vld [vmem:[%s1 + $0x288] sm:$0xf]
    %v195 = vld [vmem:[%s1 + $0x28c] sm:$0xf]
    %v196 = vld [vmem:[%s1 + $0x290] sm:$0xf]
    %v197 = vld [vmem:[%s1 + $0x294] sm:$0xf]
    %v198 = vld [vmem:[%s1 + $0x298] sm:$0xf]
    %v199 = vld [vmem:[%s1 + $0x29c] sm:$0xf]
    %v200 = vld [vmem:[%s1 + $0x2a0] sm:$0xf]
    %v201 = vld [vmem:[%s1 + $0x2a4] sm:$0xf]
    %v202 = vld [vmem:[%s1 + $0x2a8] sm:$0xf]
    %v203 = vld [vmem:[%s1 + $0x2ac] sm:$0xf]
    %v204 = vld [vmem:[%s1 + $0x2b0] sm:$0xf]
    %v205 = vld [vmem:[%s1 + $0x2b4] sm:$0xf]
    %v206 = vld [vmem:[%s1 + $0x2b8] sm:$0xf]
    %v207 = vld [vmem:[%s1 + $0x2bc] sm:$0xf]
    %v208 = vld [vmem:[%s1 + $0x2c0] sm:$0xf]
    %v209 = vld [vmem:[%s1 + $0x2c4] sm:$0xf]
    %v210 = vld [vmem:[%s1 + $0x2c8] sm:$0xf]
    %v211 = vld [vmem:[%s1 + $0x2cc] sm:$0xf]
    %v212 = vld [vmem:[%s1 + $0x2d0] sm:$0xf]
    %v213 = vld [vmem:[%s1 + $0x2d4] sm:$0xf]
    %v214 = vld [vmem:[%s1 + $0x2d8] sm:$0xf]
    %v215 = vld [vmem:[%s1 + $0x2dc] sm:$0xf]
    %v216 = vld [vmem:[%s1 + $0x2e0] sm:$0xf]
    %v217 = vld [vmem:[%s1 + $0x2e4] sm:$0xf]
    %v218 = vld [vmem:[%s1 + $0x2e8] sm:$0xf]
    %v219 = vld [vmem:[%s1 + $0x2ec] sm:$0xf]
    %v220 = vld [vmem:[%s1 + $0x2f0] sm:$0xf]
    %v221 = vld [vmem:[%s1 + $0x2f4] sm:$0xf]
    %v222 = vld [vmem:[%s1 + $0x2f8] sm:$0xf]
    %v223 = vld [vmem:[%s1 + $0x2fc] sm:$0xf]
    %v224 = vld [vmem:[%s1 + $0x300] sm:$0xf]
    %v225 = vld [vmem:[%s1 + $0x304] sm:$0xf]
    %v226 = vld [vmem:[%s1 + $0x308] sm:$0xf]
    %v227 = vld [vmem:[%s1 + $0x30c] sm:$0xf]
    %v228 = vld [vmem:[%s1 + $0x310] sm:$0xf]
    %v229 = vld [vmem:[%s1 + $0x314] sm:$0xf]
    %v230 = vld [vmem:[%s1 + $0x318] sm:$0xf]
    %v231 = vld [vmem:[%s1 + $0x31c] sm:$0xf]
    %v232 = vld [vmem:[%s1 + $0x320] sm:$0xf]
    %v233 = vld [vmem:[%s1 + $0x324] sm:$0xf]
    %v234 = vld [vmem:[%s1 + $0x328] sm:$0xf]
    %v235 = vld [vmem:[%s1 + $0x32c] sm:$0xf]
    %v236 = vld [vmem:[%s1 + $0x330] sm:$0xf]
    %v237 = vld [vmem:[%s1 + $0x334] sm:$0xf]
    %v238 = vld [vmem:[%s1 + $0x338] sm:$0xf]
    %v239 = vld [vmem:[%s1 + $0x33c] sm:$0xf]
    %v240 = vld [vmem:[%s1 + $0x340] sm:$0xf]
    %v241 = vld [vmem:[%s1 + $0x344] sm:$0xf]
    %v242 = vld [vmem:[%s1 + $0x348] sm:$0xf]
    %v243 = vld [vmem:[%s1 + $0x34c] sm:$0xf]
    %v244 = vld [vmem:[%s1 + $0x350] sm:$0xf]
    %v245 = vld [vmem:[%s1 + $0x354] sm:$0xf]
    %v246 = vld [vmem:[%s1 + $0x358] sm:$0xf]
    %v247 = vld [vmem:[%s1 + $0x35c] sm:$0xf]
    %v248 = vld [vmem:[%s1 + $0x360] sm:$0xf]
    %v249 = vld [vmem:[%s1 + $0x364] sm:$0xf]
    %v250 = vld [vmem:[%s1 + $0x368] sm:$0xf]
    %v251 = vld [vmem:[%s1 + $0x36c] sm:$0xf]
    %v252 = vld [vmem:[%s1 + $0x370] sm:$0xf]
    %v253 = vld [vmem:[%s1 + $0x374] sm:$0xf]
    %v254 = vld [vmem:[%s1 + $0x378] sm:$0xf]
    %v255 = vld [vmem:[%s1 + $0x37c] sm:$0xf]
    %v256 = vld [vmem:[%s1 + $0x380] sm:$0xf]
    %v257 = vld [vmem:[%s1 + $0x384] sm:$0xf]
    %v258 = vld [vmem:[%s1 + $0x388] sm:$0xf]
    %v259 = vld [vmem:[%s1 + $0x38c] sm:$0xf]
    %v260 = vld [vmem:[%s1 + $0x390] sm:$0xf]
    %v261 = vld [vmem:[%s1 + $0x394] sm:$0xf]
    %v262 = vld [vmem:[%s1 + $0x398] sm:$0xf]
    %v263 = vld [vmem:[%s1 + $0x39c] sm:$0xf]
    %v264 = vld [vmem:[%s1 + $0x3a0] sm:$0xf]
    %v265 = vld [vmem:[%s1 + $0x3a4] sm:$0xf]
    %v266 = vld [vmem:[%s1 + $0x3a8] sm:$0xf]
    %v267 = vld [vmem:[%s1 + $0x3ac] sm:$0xf]
    %v268 = vld [vmem:[%s1 + $0x3b0] sm:$0xf]
    %v269 = vld [vmem:[%s1 + $0x3b4] sm:$0xf]
    %v270 = vld [vmem:[%s1 + $0x3b8] sm:$0xf]
    %v271 = vld [vmem:[%s1 + $0x3bc] sm:$0xf]
    %v272 = vld [vmem:[%s1 + $0x3c0] sm:$0xf]
    %v273 = vld [vmem:[%s1 + $0x3c4] sm:$0xf]
    %v274 = vld [vmem:[%s1 + $0x3c8] sm:$0xf]
    %v275 = vld [vmem:[%s1 + $0x3cc] sm:$0xf]
    %v276 = vld [vmem:[%s1 + $0x3d0] sm:$0xf]
    %v277 = vld [vmem:[%s1 + $0x3d4] sm:$0xf]
    %v278 = vld [vmem:[%s1 + $0x3d8] sm:$0xf]
    %v279 = vld [vmem:[%s1 + $0x3dc] sm:$0xf]
    %v280 = vld [vmem:[%s1 + $0x3e0] sm:$0xf]
    %v281 = vld [vmem:[%s1 + $0x3e4] sm:$0xf]
    %v282 = vld [vmem:[%s1 + $0x3e8] sm:$0xf]
    %v283 = vld [vmem:[%s1 + $0x3ec] sm:$0xf]
    %v284 = vld [vmem:[%s1 + $0x3f0] sm:$0xf]
    %v285 = vld [vmem:[%s1 + $0x3f4] sm:$0xf]
    %v286 = vld [vmem:[%s1 + $0x3f8] sm:$0xf]
    %v287 = vld [vmem:[%s1 + $0x3fc] sm:$0xf]
    %v288 = vld [vmem:[%s1 + $0x400] sm:$0xf]
    %v289 = vld [vmem:[%s1 + $0x404] sm:$0xf]
    %v290 = vld [vmem:[%s1 + $0x408] sm:$0xf]
    %v291 = vld [vmem:[%s1 + $0x40c] sm:$0xf]
    %v292 = vld [vmem:[%s1 + $0x410] sm:$0xf]
    %v293 = vld [vmem:[%s1 + $0x414] sm:$0xf]
    %v294 = vld [vmem:[%s1 + $0x418] sm:$0xf]
    %v295 = vld [vmem:[%s1 + $0x41c] sm:$0xf]
    %v296 = vld [vmem:[%s1 + $0x420] sm:$0xf]
    %v297 = vld [vmem:[%s1 + $0x424] sm:$0xf]
    %v298 = vld [vmem:[%s1 + $0x428] sm:$0xf]
    %v299 = vld [vmem:[%s1 + $0x42c] sm:$0xf]
    %v300 = vld [vmem:[%s1 + $0x430] sm:$0xf]
    %v301 = vld [vmem:[%s1 + $0x434] sm:$0xf]
    %v302 = vld [vmem:[%s1 + $0x438] sm:$0xf]
    %v303 = vld [vmem:[%s1 + $0x43c] sm:$0xf]
    %v304 = vld [vmem:[%s1 + $0x440] sm:$0xf]
    %v305 = vld [vmem:[%s1 + $0x444] sm:$0xf]
    %v306 = vld [vmem:[%s1 + $0x448] sm:$0xf]
    %v307 = vld [vmem:[%s1 + $0x44c] sm:$0xf]
    %v308 = vld [vmem:[%s1 + $0x450] sm:$0xf]
    %v309 = vld [vmem:[%s1 + $0x454] sm:$0xf]
    %v310 = vld [vmem:[%s1 + $0x458] sm:$0xf]
    %v311 = vld [vmem:[%s1 + $0x45c] sm:$0xf]
    %v312 = vld [vmem:[%s1 + $0x460] sm:$0xf]
    %v313 = vld [vmem:[%s1 + $0x464] sm:$0xf]
    %v314 = vld [vmem:[%s1 + $0x468] sm:$0xf]
    %v315 = vld [vmem:[%s1 + $0x46c] sm:$0xf]
    %v316 = vld [vmem:[%s1 + $0x470] sm:$0xf]
    %v317 = vld [vmem:[%s1 + $0x474] sm:$0xf]
    %v318 = vld [vmem:[%s1 + $0x478] sm:$0xf]
    %v319 = vld [vmem:[%s1 + $0x47c] sm:$0xf]
    %v320 = vld [vmem:[%s1 + $0x480] sm:$0xf]
    %v321 = vld [vmem:[%s1 + $0x484] sm:$0xf]
    %v322 = vld [vmem:[%s1 + $0x488] sm:$0xf]
    %v323 = vld [vmem:[%s1 + $0x48c] sm:$0xf]
    %v324 = vld [vmem:[%s1 + $0x490] sm:$0xf]
    %v325 = vld [vmem:[%s1 + $0x494] sm:$0xf]
    %v326 = vld [vmem:[%s1 + $0x498] sm:$0xf]
    %v327 = vld [vmem:[%s1 + $0x49c] sm:$0xf]
    %v328 = vld [vmem:[%s1 + $0x4a0] sm:$0xf]
    %v329 = vld [vmem:[%s1 + $0x4a4] sm:$0xf]
    %v330 = vld [vmem:[%s1 + $0x4a8] sm:$0xf]
    %v331 = vld [vmem:[%s1 + $0x4ac] sm:$0xf]
    %v332 = vld [vmem:[%s1 + $0x4b0] sm:$0xf]
    %v333 = vld [vmem:[%s1 + $0x4b4] sm:$0xf]
    %v334 = vld [vmem:[%s1 + $0x4b8] sm:$0xf]
    %v335 = vld [vmem:[%s1 + $0x4bc] sm:$0xf]
    %v336 = vld [vmem:[%s1 + $0x4c0] sm:$0xf]
    %v337 = vld [vmem:[%s1 + $0x4c4] sm:$0xf]
    %v338 = vld [vmem:[%s1 + $0x4c8] sm:$0xf]
    %v339 = vld [vmem:[%s1 + $0x4cc] sm:$0xf]
    %v340 = vld [vmem:[%s1 + $0x4d0] sm:$0xf]
    %v341 = vld [vmem:[%s1 + $0x4d4] sm:$0xf]
    %v342 = vld [vmem:[%s1 + $0x4d8] sm:$0xf]
    %v343 = vld [vmem:[%s1 + $0x4dc] sm:$0xf]
    %v344 = vld [vmem:[%s1 + $0x4e0] sm:$0xf]
    %v345 = vld [vmem:[%s1 + $0x4e4] sm:$0xf]
    %v346 = vld [vmem:[%s1 + $0x4e8] sm:$0xf]
    %v347 = vld [vmem:[%s1 + $0x4ec] sm:$0xf]
    %v348 = vld [vmem:[%s1 + $0x4f0] sm:$0xf]
    %v349 = vld [vmem:[%s1 + $0x4f4] sm:$0xf]
    %v350 = vld [vmem:[%s1 + $0x4f8] sm:$0xf]
    %v351 = vld [vmem:[%s1 + $0x4fc] sm:$0xf]
    %v352 = vld [vmem:[%s1 + $0x500] sm:$0xf]
    %v353 = vld [vmem:[%s1 + $0x504] sm:$0xf]
    %v354 = vld [vmem:[%s1 + $0x508] sm:$0xf]
    %v355 = vld [vmem:[%s1 + $0x50c] sm:$0xf]
    %v356 = vld [vmem:[%s1 + $0x510] sm:$0xf]
    %v357 = vld [vmem:[%s1 + $0x514] sm:$0xf]
    %v358 = vld [vmem:[%s1 + $0x518] sm:$0xf]
    %v359 = vld [vmem:[%s1 + $0x51c] sm:$0xf]
    %v360 = vld [vmem:[%s1 + $0x520] sm:$0xf]
    %v361 = vld [vmem:[%s1 + $0x524] sm:$0xf]
    %v362 = vld [vmem:[%s1 + $0x528] sm:$0xf]
    %v363 = vld [vmem:[%s1 + $0x52c] sm:$0xf]
    %v364 = vld [vmem:[%s1 + $0x530] sm:$0xf]
    %v365 = vld [vmem:[%s1 + $0x534] sm:$0xf]
    %v366 = vld [vmem:[%s1 + $0x538] sm:$0xf]
    %v367 = vld [vmem:[%s1 + $0x53c] sm:$0xf]
    %v368 = vld [vmem:[%s1 + $0x540] sm:$0xf]
    %v369 = vld [vmem:[%s1 + $0x544] sm:$0xf]
    %v370 = vld [vmem:[%s1 + $0x548] sm:$0xf]
    %v371 = vld [vmem:[%s1 + $0x54c] sm:$0xf]
    %v372 = vld [vmem:[%s1 + $0x550] sm:$0xf]
    %v373 = vld [vmem:[%s1 + $0x554] sm:$0xf]
    %v374 = vld [vmem:[%s1 + $0x558] sm:$0xf]
    %v375 = vld [vmem:[%s1 + $0x55c] sm:$0xf]
    %v376 = vld [vmem:[%s1 + $0x560] sm:$0xf]
    %v377 = vld [vmem:[%s1 + $0x564] sm:$0xf]
    %v378 = vld [vmem:[%s1 + $0x568] sm:$0xf]
    %v379 = vld [vmem:[%s1 + $0x56c] sm:$0xf]
    %v380 = vld [vmem:[%s1 + $0x570] sm:$0xf]
    %v381 = vld [vmem:[%s1 + $0x574] sm:$0xf]
    %v382 = vld [vmem:[%s1 + $0x578] sm:$0xf]
    %v383 = vld [vmem:[%s1 + $0x57c] sm:$0xf]
    %v384 = vld [vmem:[%s1 + $0x580] sm:$0xf]
    %v385 = vld [vmem:[%s1 + $0x584] sm:$0xf]
    %v386 = vld [vmem:[%s1 + $0x588] sm:$0xf]
    %v387 = vld [vmem:[%s1 + $0x58c] sm:$0xf]
    %v388 = vld [vmem:[%s1 + $0x590] sm:$0xf]
    %v389 = vld [vmem:[%s1 + $0x594] sm:$0xf]
    %v390 = vld [vmem:[%s1 + $0x598] sm:$0xf]
    %v391 = vld [vmem:[%s1 + $0x59c] sm:$0xf]
    %v392 = vld [vmem:[%s1 + $0x5a0] sm:$0xf]
    %v393 = vld [vmem:[%s1 + $0x5a4] sm:$0xf]
    %v394 = vld [vmem:[%s1 + $0x5a8] sm:$0xf]
    %v395 = vld [vmem:[%s1 + $0x5ac] sm:$0xf]
    %v396 = vld [vmem:[%s1 + $0x5b0] sm:$0xf]
    %v397 = vld [vmem:[%s1 + $0x5b4] sm:$0xf]
    %v398 = vld [vmem:[%s1 + $0x5b8] sm:$0xf]
    %v399 = vld [vmem:[%s1 + $0x5bc] sm:$0xf]
    %v400 = vld [vmem:[%s1 + $0x5c0] sm:$0xf]
    %v401 = vld [vmem:[%s1 + $0x5c4] sm:$0xf]
    %v402 = vld [vmem:[%s1 + $0x5c8] sm:$0xf]
    %v403 = vld [vmem:[%s1 + $0x5cc] sm:$0xf]
    %v404 = vld [vmem:[%s1 + $0x5d0] sm:$0xf]
    %v405 = vld [vmem:[%s1 + $0x5d4] sm:$0xf]
    %v406 = vld [vmem:[%s1 + $0x5d8] sm:$0xf]
    %v407 = vld [vmem:[%s1 + $0x5dc] sm:$0xf]
    %v408 = vld [vmem:[%s1 + $0x5e0] sm:$0xf]
    %v409 = vld [vmem:[%s1 + $0x5e4] sm:$0xf]
    %v410 = vld [vmem:[%s1 + $0x5e8] sm:$0xf]
    %v411 = vld [vmem:[%s1 + $0x5ec] sm:$0xf]
    %v412 = vld [vmem:[%s1 + $0x5f0] sm:$0xf]
    %v413 = vld [vmem:[%s1 + $0x5f4] sm:$0xf]
    %v414 = vld [vmem:[%s1 + $0x5f8] sm:$0xf]
    %v415 = vld [vmem:[%s1 + $0x5fc] sm:$0xf]
    %v416 = vld [vmem:[%s1 + $0x600] sm:$0xf]
    %v417 = vld [vmem:[%s1 + $0x604] sm:$0xf]
    %v418 = vld [vmem:[%s1 + $0x608] sm:$0xf]
    %v419 = vld [vmem:[%s1 + $0x60c] sm:$0xf]
    %v420 = vld [vmem:[%s1 + $0x610] sm:$0xf]
    %v421 = vld [vmem:[%s1 + $0x614] sm:$0xf]
    %v422 = vld [vmem:[%s1 + $0x618] sm:$0xf]
    %v423 = vld [vmem:[%s1 + $0x61c] sm:$0xf]
    %v424 = vld [vmem:[%s1 + $0x620] sm:$0xf]
    %v425 = vld [vmem:[%s1 + $0x624] sm:$0xf]
    %v426 = vld [vmem:[%s1 + $0x628] sm:$0xf]
    %v427 = vld [vmem:[%s1 + $0x62c] sm:$0xf]
    %v428 = vld [vmem:[%s1 + $0x630] sm:$0xf]
    %v429 = vld [vmem:[%s1 + $0x634] sm:$0xf]
    %v430 = vld [vmem:[%s1 + $0x638] sm:$0xf]
    %v431 = vld [vmem:[%s1 + $0x63c] sm:$0xf]
    %v432 = vld [vmem:[%s2] sm:$0x1]
    %v434 = vlaneseq
    %v435 = vshrl.u32 %v434, 7
    %v436 = vsub.s32 0, %v435
    %v437 = vrot.slane %v432, %v436
    %v443 = vcombine.high %v28, %v28
    %v445 = vunpack.c.l.s4 1966171168
    %v446 = vunpack.c.0.s8 %v445
    %v447 = vlaneseq
    %v448 = vshrl.u32 %v447, 7
    %v449 = vsub.s32 %v446, %v448
    %v450 = vrot.slane %v28, %v449
    %v452 = vunpack.c.l.s4 1966171168
    %v453 = vunpack.c.0.s8 %v452
    %v454 = vlaneseq
    %v455 = vshrl.u32 %v454, 7
    %v456 = vsub.s32 %v453, %v455
    %v457 = vrot.slane %v443, %v456
    %v458 = vcombine.high %v450, %v450
    %v459 = vcombine.high %v457, %v457
    %v461 = vunpack.c.l.s4 1966171168
    %v462 = vunpack.c.0.s8 %v461
    %v463 = vlaneseq
    %v464 = vshrl.u32 %v463, 7
    %v465 = vsub.s32 %v462, %v464
    %v466 = vrot.slane %v450, %v465
    %v468 = vunpack.c.l.s4 1966171168
    %v469 = vunpack.c.0.s8 %v468
    %v470 = vlaneseq
    %v471 = vshrl.u32 %v470, 7
    %v472 = vsub.s32 %v469, %v471
    %v473 = vrot.slane %v457, %v472
    %v475 = vunpack.c.l.s4 1966171168
    %v476 = vunpack.c.0.s8 %v475
    %v477 = vlaneseq
    %v478 = vshrl.u32 %v477, 7
    %v479 = vsub.s32 %v476, %v478
    %v480 = vrot.slane %v458, %v479
    %v482 = vunpack.c.l.s4 1966171168
    %v483 = vunpack.c.0.s8 %v482
    %v484 = vlaneseq
    %v485 = vshrl.u32 %v484, 7
    %v486 = vsub.s32 %v483, %v485
    %v487 = vrot.slane %v459, %v486
    %v488 = vcombine.high %v466, %v466
    %v489 = vcombine.high %v473, %v473
    %v490 = vcombine.high %v480, %v480
    %v491 = vcombine.high %v487, %v487
    %v492 = vcombine.high %v29, %v29
    %v494 = vunpack.c.l.s4 1966171168
    %v495 = vunpack.c.0.s8 %v494
    %v496 = vlaneseq
    %v497 = vshrl.u32 %v496, 7
    %v498 = vsub.s32 %v495, %v497
    %v499 = vrot.slane %v29, %v498
    %v501 = vunpack.c.l.s4 1966171168
    %v502 = vunpack.c.0.s8 %v501
    %v503 = vlaneseq
    %v504 = vshrl.u32 %v503, 7
    %v505 = vsub.s32 %v502, %v504
    %v506 = vrot.slane %v492, %v505
    %v507 = vcombine.high %v499, %v499
    %v508 = vcombine.high %v506, %v506
    %v510 = vunpack.c.l.s4 1966171168
    %v511 = vunpack.c.0.s8 %v510
    %v512 = vlaneseq
    %v513 = vshrl.u32 %v512, 7
    %v514 = vsub.s32 %v511, %v513
    %v515 = vrot.slane %v499, %v514
    %v517 = vunpack.c.l.s4 1966171168
    %v518 = vunpack.c.0.s8 %v517
    %v519 = vlaneseq
    %v520 = vshrl.u32 %v519, 7
    %v521 = vsub.s32 %v518, %v520
    %v522 = vrot.slane %v506, %v521
    %v524 = vunpack.c.l.s4 1966171168
    %v525 = vunpack.c.0.s8 %v524
    %v526 = vlaneseq
    %v527 = vshrl.u32 %v526, 7
    %v528 = vsub.s32 %v525, %v527
    %v529 = vrot.slane %v507, %v528
    %v531 = vunpack.c.l.s4 1966171168
    %v532 = vunpack.c.0.s8 %v531
    %v533 = vlaneseq
    %v534 = vshrl.u32 %v533, 7
    %v535 = vsub.s32 %v532, %v534
    %v536 = vrot.slane %v508, %v535
    %v537 = vcombine.high %v515, %v515
    %v538 = vcombine.high %v522, %v522
    %v539 = vcombine.high %v529, %v529
    %v540 = vcombine.high %v536, %v536
    %v541 = vcombine.high %v30, %v30
    %v543 = vunpack.c.l.s4 1966171168
    %v544 = vunpack.c.0.s8 %v543
    %v545 = vlaneseq
    %v546 = vshrl.u32 %v545, 7
    %v547 = vsub.s32 %v544, %v546
    %v548 = vrot.slane %v30, %v547
    %v550 = vunpack.c.l.s4 1966171168
    %v551 = vunpack.c.0.s8 %v550
    %v552 = vlaneseq
    %v553 = vshrl.u32 %v552, 7
    %v554 = vsub.s32 %v551, %v553
    %v555 = vrot.slane %v541, %v554
    %v556 = vcombine.high %v548, %v548
    %v557 = vcombine.high %v555, %v555
    %v559 = vunpack.c.l.s4 1966171168
    %v560 = vunpack.c.0.s8 %v559
    %v561 = vlaneseq
    %v562 = vshrl.u32 %v561, 7
    %v563 = vsub.s32 %v560, %v562
    %v564 = vrot.slane %v548, %v563
    %v566 = vunpack.c.l.s4 1966171168
    %v567 = vunpack.c.0.s8 %v566
    %v568 = vlaneseq
    %v569 = vshrl.u32 %v568, 7
    %v570 = vsub.s32 %v567, %v569
    %v571 = vrot.slane %v555, %v570
    %v573 = vunpack.c.l.s4 1966171168
    %v574 = vunpack.c.0.s8 %v573
    %v575 = vlaneseq
    %v576 = vshrl.u32 %v575, 7
    %v577 = vsub.s32 %v574, %v576
    %v578 = vrot.slane %v556, %v577
    %v580 = vunpack.c.l.s4 1966171168
    %v581 = vunpack.c.0.s8 %v580
    %v582 = vlaneseq
    %v583 = vshrl.u32 %v582, 7
    %v584 = vsub.s32 %v581, %v583
    %v585 = vrot.slane %v557, %v584
    %v586 = vcombine.high %v564, %v564
    %v587 = vcombine.high %v571, %v571
    %v588 = vcombine.high %v578, %v578
    %v589 = vcombine.high %v585, %v585
    %v591 = vunpack.c.l.s4 1966171168
    %v592 = vunpack.c.0.s8 %v591
    %v593 = vlaneseq
    %v594 = vshrl.u32 %v593, 7
    %v595 = vsub.s32 %v592, %v594
    %v596 = vrot.slane %v31, %v595
    %v598 = vunpack.c.l.s4 1966171168
    %v599 = vunpack.c.0.s8 %v598
    %v600 = vlaneseq
    %v601 = vshrl.u32 %v600, 7
    %v602 = vsub.s32 %v599, %v601
    %v603 = vrot.slane %v596, %v602
    %v1029 = vunpack.c.l.b16 %v32
    %v1030 = vunpack.c.l.b16 %v33
    %v1031 = vunpack.c.l.b16 %v34
    %v1032 = vunpack.c.l.b16 %v35
    %v1033 = vunpack.c.l.b16 %v36
    %v1034 = vunpack.c.l.b16 %v37
    %v1035 = vunpack.c.l.b16 %v38
    %v1036 = vunpack.c.l.b16 %v39
    %v1037 = vunpack.c.l.b16 %v40
    %v1038 = vunpack.c.l.b16 %v41
    %v1039 = vunpack.c.l.b16 %v42
    %v1040 = vunpack.c.l.b16 %v43
    %v1041 = vunpack.c.l.b16 %v44
    %v1042 = vunpack.c.l.b16 %v45
    %v1043 = vunpack.c.l.b16 %v46
    %v1044 = vunpack.c.l.b16 %v47
    %v1045 = vunpack.c.l.b16 %v48
    %v1046 = vunpack.c.l.b16 %v49
    %v1047 = vunpack.c.l.b16 %v50
    %v1048 = vunpack.c.l.b16 %v51
    %v1049 = vunpack.c.l.b16 %v52
    %v1050 = vunpack.c.l.b16 %v53
    %v1051 = vunpack.c.l.b16 %v54
    %v1052 = vunpack.c.l.b16 %v55
    %v1053 = vunpack.c.l.b16 %v56
    %v1054 = vunpack.c.l.b16 %v57
    %v1055 = vunpack.c.l.b16 %v58
    %v1056 = vunpack.c.l.b16 %v59
    %v1057 = vunpack.c.l.b16 %v60
    %v1058 = vunpack.c.l.b16 %v61
    %v1059 = vunpack.c.l.b16 %v62
    %v1060 = vunpack.c.l.b16 %v63
    %v1061 = vunpack.c.l.b16 %v64
    %v1062 = vunpack.c.l.b16 %v65
    %v1063 = vunpack.c.l.b16 %v66
    %v1064 = vunpack.c.l.b16 %v67
    %v1065 = vunpack.c.l.b16 %v68
    %v1066 = vunpack.c.l.b16 %v69
    %v1067 = vunpack.c.l.b16 %v70
    %v1068 = vunpack.c.l.b16 %v71
    %v1069 = vunpack.c.l.b16 %v72
    %v1070 = vunpack.c.l.b16 %v73
    %v1071 = vunpack.c.l.b16 %v74
    %v1072 = vunpack.c.l.b16 %v75
    %v1073 = vunpack.c.l.b16 %v76
    %v1074 = vunpack.c.l.b16 %v77
    %v1075 = vunpack.c.l.b16 %v78
    %v1076 = vunpack.c.l.b16 %v79
    %v1077 = vunpack.c.l.b16 %v80
    %v1078 = vunpack.c.l.b16 %v81
    %v1079 = vunpack.c.l.b16 %v82
    %v1080 = vunpack.c.l.b16 %v83
    %v1081 = vunpack.c.l.b16 %v84
    %v1082 = vunpack.c.l.b16 %v85
    %v1083 = vunpack.c.l.b16 %v86
    %v1084 = vunpack.c.l.b16 %v87
    %v1085 = vunpack.c.l.b16 %v88
    %v1086 = vunpack.c.l.b16 %v89
    %v1087 = vunpack.c.l.b16 %v90
    %v1088 = vunpack.c.l.b16 %v91
    %v1089 = vunpack.c.l.b16 %v92
    %v1090 = vunpack.c.l.b16 %v93
    %v1091 = vunpack.c.l.b16 %v94
    %v1092 = vunpack.c.l.b16 %v95
    %v1093 = vunpack.c.l.b16 %v96
    %v1094 = vunpack.c.l.b16 %v97
    %v1095 = vunpack.c.l.b16 %v98
    %v1096 = vunpack.c.l.b16 %v99
    %v1097 = vunpack.c.l.b16 %v100
    %v1098 = vunpack.c.l.b16 %v101
    %v1099 = vunpack.c.l.b16 %v102
    %v1100 = vunpack.c.l.b16 %v103
    %v1101 = vunpack.c.l.b16 %v104
    %v1102 = vunpack.c.l.b16 %v105
    %v1103 = vunpack.c.l.b16 %v106
    %v1104 = vunpack.c.l.b16 %v107
    %v1105 = vunpack.c.l.b16 %v108
    %v1106 = vunpack.c.l.b16 %v109
    %v1107 = vunpack.c.l.b16 %v110
    %v1108 = vunpack.c.l.b16 %v111
    %v1109 = vunpack.c.l.b16 %v112
    %v1110 = vunpack.c.l.b16 %v113
    %v1111 = vunpack.c.l.b16 %v114
    %v1112 = vunpack.c.l.b16 %v115
    %v1113 = vunpack.c.l.b16 %v116
    %v1114 = vunpack.c.l.b16 %v117
    %v1115 = vunpack.c.l.b16 %v118
    %v1116 = vunpack.c.l.b16 %v119
    %v1117 = vunpack.c.l.b16 %v120
    %v1118 = vunpack.c.l.b16 %v121
    %v1119 = vunpack.c.l.b16 %v122
    %v1120 = vunpack.c.l.b16 %v123
    %v1121 = vunpack.c.l.b16 %v124
    %v1122 = vunpack.c.l.b16 %v125
    %v1123 = vunpack.c.l.b16 %v126
    %v1124 = vunpack.c.l.b16 %v127
    %v1125 = vunpack.c.l.b16 %v128
    %v1126 = vunpack.c.l.b16 %v129
    %v1127 = vunpack.c.l.b16 %v130
    %v1128 = vunpack.c.l.b16 %v131
    %v1129 = vunpack.c.l.b16 %v132
    %v1130 = vunpack.c.l.b16 %v133
    %v1131 = vunpack.c.l.b16 %v134
    %v1132 = vunpack.c.l.b16 %v135
    %v1133 = vunpack.c.l.b16 %v136
    %v1134 = vunpack.c.l.b16 %v137
    %v1135 = vunpack.c.l.b16 %v138
    %v1136 = vunpack.c.l.b16 %v139
    %v1137 = vunpack.c.l.b16 %v140
    %v1138 = vunpack.c.l.b16 %v141
    %v1139 = vunpack.c.l.b16 %v142
    %v1140 = vunpack.c.l.b16 %v143
    %v1141 = vunpack.c.l.b16 %v144
    %v1142 = vunpack.c.l.b16 %v145
    %v1143 = vunpack.c.l.b16 %v146
    %v1144 = vunpack.c.l.b16 %v147
    %v1145 = vunpack.c.l.b16 %v148
    %v1146 = vunpack.c.l.b16 %v149
    %v1147 = vunpack.c.l.b16 %v150
    %v1148 = vunpack.c.l.b16 %v151
    %v1149 = vunpack.c.l.b16 %v152
    %v1150 = vunpack.c.l.b16 %v153
    %v1151 = vunpack.c.l.b16 %v154
    %v1152 = vunpack.c.l.b16 %v155
    %v1153 = vunpack.c.l.b16 %v156
    %v1154 = vunpack.c.l.b16 %v157
    %v1155 = vunpack.c.l.b16 %v158
    %v1156 = vunpack.c.l.b16 %v159
    %v1157 = vunpack.c.l.b16 %v160
    %v1158 = vunpack.c.l.b16 %v161
    %v1159 = vunpack.c.l.b16 %v162
    %v1160 = vunpack.c.l.b16 %v163
    %v1161 = vunpack.c.l.b16 %v164
    %v1162 = vunpack.c.l.b16 %v165
    %v1163 = vunpack.c.l.b16 %v166
    %v1164 = vunpack.c.l.b16 %v167
    %v1165 = vunpack.c.l.b16 %v168
    %v1166 = vunpack.c.l.b16 %v169
    %v1167 = vunpack.c.l.b16 %v170
    %v1168 = vunpack.c.l.b16 %v171
    %v1169 = vunpack.c.l.b16 %v172
    %v1170 = vunpack.c.l.b16 %v173
    %v1171 = vunpack.c.l.b16 %v174
    %v1172 = vunpack.c.l.b16 %v175
    %v1173 = vunpack.c.l.b16 %v176
    %v1174 = vunpack.c.l.b16 %v177
    %v1175 = vunpack.c.l.b16 %v178
    %v1176 = vunpack.c.l.b16 %v179
    %v1177 = vunpack.c.l.b16 %v180
    %v1178 = vunpack.c.l.b16 %v181
    %v1179 = vunpack.c.l.b16 %v182
    %v1180 = vunpack.c.l.b16 %v183
    %v1181 = vunpack.c.l.b16 %v184
    %v1182 = vunpack.c.l.b16 %v185
    %v1183 = vunpack.c.l.b16 %v186
    %v1184 = vunpack.c.l.b16 %v187
    %v1185 = vunpack.c.l.b16 %v188
    %v1186 = vunpack.c.l.b16 %v189
    %v1187 = vunpack.c.l.b16 %v190
    %v1188 = vunpack.c.l.b16 %v191
    %v1189 = vunpack.c.l.b16 %v192
    %v1190 = vunpack.c.l.b16 %v193
    %v1191 = vunpack.c.l.b16 %v194
    %v1192 = vunpack.c.l.b16 %v195
    %v1193 = vunpack.c.l.b16 %v196
    %v1194 = vunpack.c.l.b16 %v197
    %v1195 = vunpack.c.l.b16 %v198
    %v1196 = vunpack.c.l.b16 %v199
    %v1197 = vunpack.c.l.b16 %v200
    %v1198 = vunpack.c.l.b16 %v201
    %v1199 = vunpack.c.l.b16 %v202
    %v1200 = vunpack.c.l.b16 %v203
    %v1201 = vunpack.c.l.b16 %v204
    %v1202 = vunpack.c.l.b16 %v205
    %v1203 = vunpack.c.l.b16 %v206
    %v1204 = vunpack.c.l.b16 %v207
    %v1205 = vunpack.c.l.b16 %v208
    %v1206 = vunpack.c.l.b16 %v209
    %v1207 = vunpack.c.l.b16 %v210
    %v1208 = vunpack.c.l.b16 %v211
    %v1209 = vunpack.c.l.b16 %v212
    %v1210 = vunpack.c.l.b16 %v213
    %v1211 = vunpack.c.l.b16 %v214
    %v1212 = vunpack.c.l.b16 %v215
    %v1213 = vunpack.c.l.b16 %v216
    %v1214 = vunpack.c.l.b16 %v217
    %v1215 = vunpack.c.l.b16 %v218
    %v1216 = vunpack.c.l.b16 %v219
    %v1217 = vunpack.c.l.b16 %v220
    %v1218 = vunpack.c.l.b16 %v221
    %v1219 = vunpack.c.l.b16 %v222
    %v1220 = vunpack.c.l.b16 %v223
    %v1221 = vunpack.c.l.b16 %v224
    %v1222 = vunpack.c.l.b16 %v225
    %v1223 = vunpack.c.l.b16 %v226
    %v1224 = vunpack.c.l.b16 %v227
    %v1225 = vunpack.c.l.b16 %v228
    %v1226 = vunpack.c.l.b16 %v229
    %v1227 = vunpack.c.l.b16 %v230
    %v1228 = vunpack.c.l.b16 %v231
    %v1229 = vunpack.c.l.b16 %v232
    %v1230 = vunpack.c.l.b16 %v233
    %v1231 = vunpack.c.l.b16 %v234
    %v1232 = vunpack.c.l.b16 %v235
    %v1233 = vunpack.c.l.b16 %v236
    %v1234 = vunpack.c.l.b16 %v237
    %v1235 = vunpack.c.l.b16 %v238
    %v1236 = vunpack.c.l.b16 %v239
    %v1237 = vunpack.c.l.b16 %v240
    %v1238 = vunpack.c.l.b16 %v241
    %v1239 = vunpack.c.l.b16 %v242
    %v1240 = vunpack.c.l.b16 %v243
    %v1241 = vunpack.c.l.b16 %v244
    %v1242 = vunpack.c.l.b16 %v245
    %v1243 = vunpack.c.l.b16 %v246
    %v1244 = vunpack.c.l.b16 %v247
    %v1245 = vunpack.c.l.b16 %v248
    %v1246 = vunpack.c.l.b16 %v249
    %v1247 = vunpack.c.l.b16 %v250
    %v1248 = vunpack.c.l.b16 %v251
    %v1249 = vunpack.c.l.b16 %v252
    %v1250 = vunpack.c.l.b16 %v253
    %v1251 = vunpack.c.l.b16 %v254
    %v1252 = vunpack.c.l.b16 %v255
    %v1253 = vunpack.c.l.b16 %v256
    %v1254 = vunpack.c.l.b16 %v257
    %v1255 = vunpack.c.l.b16 %v258
    %v1256 = vunpack.c.l.b16 %v259
    %v1257 = vunpack.c.l.b16 %v260
    %v1258 = vunpack.c.l.b16 %v261
    %v1259 = vunpack.c.l.b16 %v262
    %v1260 = vunpack.c.l.b16 %v263
    %v1261 = vunpack.c.l.b16 %v264
    %v1262 = vunpack.c.l.b16 %v265
    %v1263 = vunpack.c.l.b16 %v266
    %v1264 = vunpack.c.l.b16 %v267
    %v1265 = vunpack.c.l.b16 %v268
    %v1266 = vunpack.c.l.b16 %v269
    %v1267 = vunpack.c.l.b16 %v270
    %v1268 = vunpack.c.l.b16 %v271
    %v1269 = vunpack.c.l.b16 %v272
    %v1270 = vunpack.c.l.b16 %v273
    %v1271 = vunpack.c.l.b16 %v274
    %v1272 = vunpack.c.l.b16 %v275
    %v1273 = vunpack.c.l.b16 %v276
    %v1274 = vunpack.c.l.b16 %v277
    %v1275 = vunpack.c.l.b16 %v278
    %v1276 = vunpack.c.l.b16 %v279
    %v1277 = vunpack.c.l.b16 %v280
    %v1278 = vunpack.c.l.b16 %v281
    %v1279 = vunpack.c.l.b16 %v282
    %v1280 = vunpack.c.l.b16 %v283
    %v1281 = vunpack.c.l.b16 %v284
    %v1282 = vunpack.c.l.b16 %v285
    %v1283 = vunpack.c.l.b16 %v286
    %v1284 = vunpack.c.l.b16 %v287
    %v1285 = vunpack.c.l.b16 %v288
    %v1286 = vunpack.c.l.b16 %v289
    %v1287 = vunpack.c.l.b16 %v290
    %v1288 = vunpack.c.l.b16 %v291
    %v1289 = vunpack.c.l.b16 %v292
    %v1290 = vunpack.c.l.b16 %v293
    %v1291 = vunpack.c.l.b16 %v294
    %v1292 = vunpack.c.l.b16 %v295
    %v1293 = vunpack.c.l.b16 %v296
    %v1294 = vunpack.c.l.b16 %v297
    %v1295 = vunpack.c.l.b16 %v298
    %v1296 = vunpack.c.l.b16 %v299
    %v1297 = vunpack.c.l.b16 %v300
    %v1298 = vunpack.c.l.b16 %v301
    %v1299 = vunpack.c.l.b16 %v302
    %v1300 = vunpack.c.l.b16 %v303
    %v1301 = vunpack.c.l.b16 %v304
    %v1302 = vunpack.c.l.b16 %v305
    %v1303 = vunpack.c.l.b16 %v306
    %v1304 = vunpack.c.l.b16 %v307
    %v1305 = vunpack.c.l.b16 %v308
    %v1306 = vunpack.c.l.b16 %v309
    %v1307 = vunpack.c.l.b16 %v310
    %v1308 = vunpack.c.l.b16 %v311
    %v1309 = vunpack.c.l.b16 %v312
    %v1310 = vunpack.c.l.b16 %v313
    %v1311 = vunpack.c.l.b16 %v314
    %v1312 = vunpack.c.l.b16 %v315
    %v1313 = vunpack.c.l.b16 %v316
    %v1314 = vunpack.c.l.b16 %v317
    %v1315 = vunpack.c.l.b16 %v318
    %v1316 = vunpack.c.l.b16 %v319
    %v1317 = vunpack.c.l.b16 %v320
    %v1318 = vunpack.c.l.b16 %v321
    %v1319 = vunpack.c.l.b16 %v322
    %v1320 = vunpack.c.l.b16 %v323
    %v1321 = vunpack.c.l.b16 %v324
    %v1322 = vunpack.c.l.b16 %v325
    %v1323 = vunpack.c.l.b16 %v326
    %v1324 = vunpack.c.l.b16 %v327
    %v1325 = vunpack.c.l.b16 %v328
    %v1326 = vunpack.c.l.b16 %v329
    %v1327 = vunpack.c.l.b16 %v330
    %v1328 = vunpack.c.l.b16 %v331
    %v1329 = vunpack.c.l.b16 %v332
    %v1330 = vunpack.c.l.b16 %v333
    %v1331 = vunpack.c.l.b16 %v334
    %v1332 = vunpack.c.l.b16 %v335
    %v1333 = vunpack.c.l.b16 %v336
    %v1334 = vunpack.c.l.b16 %v337
    %v1335 = vunpack.c.l.b16 %v338
    %v1336 = vunpack.c.l.b16 %v339
    %v1337 = vunpack.c.l.b16 %v340
    %v1338 = vunpack.c.l.b16 %v341
    %v1339 = vunpack.c.l.b16 %v342
    %v1340 = vunpack.c.l.b16 %v343
    %v1341 = vunpack.c.l.b16 %v344
    %v1342 = vunpack.c.l.b16 %v345
    %v1343 = vunpack.c.l.b16 %v346
    %v1344 = vunpack.c.l.b16 %v347
    %v1345 = vunpack.c.l.b16 %v348
    %v1346 = vunpack.c.l.b16 %v349
    %v1347 = vunpack.c.l.b16 %v350
    %v1348 = vunpack.c.l.b16 %v351
    %v1349 = vunpack.c.l.b16 %v352
    %v1350 = vunpack.c.l.b16 %v353
    %v1351 = vunpack.c.l.b16 %v354
    %v1352 = vunpack.c.l.b16 %v355
    %v1353 = vunpack.c.l.b16 %v356
    %v1354 = vunpack.c.l.b16 %v357
    %v1355 = vunpack.c.l.b16 %v358
    %v1356 = vunpack.c.l.b16 %v359
    %v1357 = vunpack.c.l.b16 %v360
    %v1358 = vunpack.c.l.b16 %v361
    %v1359 = vunpack.c.l.b16 %v362
    %v1360 = vunpack.c.l.b16 %v363
    %v1361 = vunpack.c.l.b16 %v364
    %v1362 = vunpack.c.l.b16 %v365
    %v1363 = vunpack.c.l.b16 %v366
    %v1364 = vunpack.c.l.b16 %v367
    %v1365 = vunpack.c.l.b16 %v368
    %v1366 = vunpack.c.l.b16 %v369
    %v1367 = vunpack.c.l.b16 %v370
    %v1368 = vunpack.c.l.b16 %v371
    %v1369 = vunpack.c.l.b16 %v372
    %v1370 = vunpack.c.l.b16 %v373
    %v1371 = vunpack.c.l.b16 %v374
    %v1372 = vunpack.c.l.b16 %v375
    %v1373 = vunpack.c.l.b16 %v376
    %v1374 = vunpack.c.l.b16 %v377
    %v1375 = vunpack.c.l.b16 %v378
    %v1376 = vunpack.c.l.b16 %v379
    %v1377 = vunpack.c.l.b16 %v380
    %v1378 = vunpack.c.l.b16 %v381
    %v1379 = vunpack.c.l.b16 %v382
    %v1380 = vunpack.c.l.b16 %v383
    %v1381 = vunpack.c.l.b16 %v384
    %v1382 = vunpack.c.l.b16 %v385
    %v1383 = vunpack.c.l.b16 %v386
    %v1384 = vunpack.c.l.b16 %v387
    %v1385 = vunpack.c.l.b16 %v388
    %v1386 = vunpack.c.l.b16 %v389
    %v1387 = vunpack.c.l.b16 %v390
    %v1388 = vunpack.c.l.b16 %v391
    %v1389 = vunpack.c.l.b16 %v392
    %v1390 = vunpack.c.l.b16 %v393
    %v1391 = vunpack.c.l.b16 %v394
    %v1392 = vunpack.c.l.b16 %v395
    %v1393 = vunpack.c.l.b16 %v396
    %v1394 = vunpack.c.l.b16 %v397
    %v1395 = vunpack.c.l.b16 %v398
    %v1396 = vunpack.c.l.b16 %v399
    %v1397 = vunpack.c.l.b16 %v400
    %v1398 = vunpack.c.l.b16 %v401
    %v1399 = vunpack.c.l.b16 %v402
    %v1400 = vunpack.c.l.b16 %v403
    %v1401 = vunpack.c.l.b16 %v404
    %v1402 = vunpack.c.l.b16 %v405
    %v1403 = vunpack.c.l.b16 %v406
    %v1404 = vunpack.c.l.b16 %v407
    %v1405 = vunpack.c.l.b16 %v408
    %v1406 = vunpack.c.l.b16 %v409
    %v1407 = vunpack.c.l.b16 %v410
    %v1408 = vunpack.c.l.b16 %v411
    %v1409 = vunpack.c.l.b16 %v412
    %v1410 = vunpack.c.l.b16 %v413
    %v1411 = vunpack.c.l.b16 %v414
    %v1412 = vunpack.c.l.b16 %v415
    %v1413 = vunpack.c.l.b16 %v416
    %v1414 = vunpack.c.l.b16 %v417
    %v1415 = vunpack.c.l.b16 %v418
    %v1416 = vunpack.c.l.b16 %v419
    %v1417 = vunpack.c.l.b16 %v420
    %v1418 = vunpack.c.l.b16 %v421
    %v1419 = vunpack.c.l.b16 %v422
    %v1420 = vunpack.c.l.b16 %v423
    %v1421 = vunpack.c.l.b16 %v424
    %v1422 = vunpack.c.l.b16 %v425
    %v1423 = vunpack.c.l.b16 %v426
    %v1424 = vunpack.c.l.b16 %v427
    %v1425 = vunpack.c.l.b16 %v428
    %v1426 = vunpack.c.l.b16 %v429
    %v1427 = vunpack.c.l.b16 %v430
    %v1428 = vunpack.c.l.b16 %v431
    %v1429 = vpack.c.b16 %v1030, %v1029
    %v1430 = vpack.c.b16 %v1032, %v1031
    %v1431 = vpack.c.b16 %v1034, %v1033
    %v1432 = vpack.c.b16 %v1036, %v1035
    %v1433 = vpack.c.b16 %v1038, %v1037
    %v1434 = vpack.c.b16 %v1040, %v1039
    %v1435 = vpack.c.b16 %v1042, %v1041
    %v1436 = vpack.c.b16 %v1044, %v1043
    %v1437 = vpack.c.b16 %v1046, %v1045
    %v1438 = vpack.c.b16 %v1048, %v1047
    %v1439 = vpack.c.b16 %v1050, %v1049
    %v1440 = vpack.c.b16 %v1052, %v1051
    %v1441 = vpack.c.b16 %v1054, %v1053
    %v1442 = vpack.c.b16 %v1056, %v1055
    %v1443 = vpack.c.b16 %v1058, %v1057
    %v1444 = vpack.c.b16 %v1060, %v1059
    %v1445 = vpack.c.b16 %v1062, %v1061
    %v1446 = vpack.c.b16 %v1064, %v1063
    %v1447 = vpack.c.b16 %v1066, %v1065
    %v1448 = vpack.c.b16 %v1068, %v1067
    %v1449 = vpack.c.b16 %v1070, %v1069
    %v1450 = vpack.c.b16 %v1072, %v1071
    %v1451 = vpack.c.b16 %v1074, %v1073
    %v1452 = vpack.c.b16 %v1076, %v1075
    %v1453 = vpack.c.b16 %v1078, %v1077
    %v1454 = vpack.c.b16 %v1080, %v1079
    %v1455 = vpack.c.b16 %v1082, %v1081
    %v1456 = vpack.c.b16 %v1084, %v1083
    %v1457 = vpack.c.b16 %v1086, %v1085
    %v1458 = vpack.c.b16 %v1088, %v1087
    %v1459 = vpack.c.b16 %v1090, %v1089
    %v1460 = vpack.c.b16 %v1092, %v1091
    %v1461 = vpack.c.b16 %v1094, %v1093
    %v1462 = vpack.c.b16 %v1096, %v1095
    %v1463 = vpack.c.b16 %v1098, %v1097
    %v1464 = vpack.c.b16 %v1100, %v1099
    %v1465 = vpack.c.b16 %v1102, %v1101
    %v1466 = vpack.c.b16 %v1104, %v1103
    %v1467 = vpack.c.b16 %v1106, %v1105
    %v1468 = vpack.c.b16 %v1108, %v1107
    %v1469 = vpack.c.b16 %v1110, %v1109
    %v1470 = vpack.c.b16 %v1112, %v1111
    %v1471 = vpack.c.b16 %v1114, %v1113
    %v1472 = vpack.c.b16 %v1116, %v1115
    %v1473 = vpack.c.b16 %v1118, %v1117
    %v1474 = vpack.c.b16 %v1120, %v1119
    %v1475 = vpack.c.b16 %v1122, %v1121
    %v1476 = vpack.c.b16 %v1124, %v1123
    %v1477 = vpack.c.b16 %v1126, %v1125
    %v1478 = vpack.c.b16 %v1128, %v1127
    %v1479 = vpack.c.b16 %v1130, %v1129
    %v1480 = vpack.c.b16 %v1132, %v1131
    %v1481 = vpack.c.b16 %v1134, %v1133
    %v1482 = vpack.c.b16 %v1136, %v1135
    %v1483 = vpack.c.b16 %v1138, %v1137
    %v1484 = vpack.c.b16 %v1140, %v1139
    %v1485 = vpack.c.b16 %v1142, %v1141
    %v1486 = vpack.c.b16 %v1144, %v1143
    %v1487 = vpack.c.b16 %v1146, %v1145
    %v1488 = vpack.c.b16 %v1148, %v1147
    %v1489 = vpack.c.b16 %v1150, %v1149
    %v1490 = vpack.c.b16 %v1152, %v1151
    %v1491 = vpack.c.b16 %v1154, %v1153
    %v1492 = vpack.c.b16 %v1156, %v1155
    %v1493 = vpack.c.b16 %v1158, %v1157
    %v1494 = vpack.c.b16 %v1160, %v1159
    %v1495 = vpack.c.b16 %v1162, %v1161
    %v1496 = vpack.c.b16 %v1164, %v1163
    %v1497 = vpack.c.b16 %v1166, %v1165
    %v1498 = vpack.c.b16 %v1168, %v1167
    %v1499 = vpack.c.b16 %v1170, %v1169
    %v1500 = vpack.c.b16 %v1172, %v1171
    %v1501 = vpack.c.b16 %v1174, %v1173
    %v1502 = vpack.c.b16 %v1176, %v1175
    %v1503 = vpack.c.b16 %v1178, %v1177
    %v1504 = vpack.c.b16 %v1180, %v1179
    %v1505 = vpack.c.b16 %v1182, %v1181
    %v1506 = vpack.c.b16 %v1184, %v1183
    %v1507 = vpack.c.b16 %v1186, %v1185
    %v1508 = vpack.c.b16 %v1188, %v1187
    %v1509 = vpack.c.b16 %v1190, %v1189
    %v1510 = vpack.c.b16 %v1192, %v1191
    %v1511 = vpack.c.b16 %v1194, %v1193
    %v1512 = vpack.c.b16 %v1196, %v1195
    %v1513 = vpack.c.b16 %v1198, %v1197
    %v1514 = vpack.c.b16 %v1200, %v1199
    %v1515 = vpack.c.b16 %v1202, %v1201
    %v1516 = vpack.c.b16 %v1204, %v1203
    %v1517 = vpack.c.b16 %v1206, %v1205
    %v1518 = vpack.c.b16 %v1208, %v1207
    %v1519 = vpack.c.b16 %v1210, %v1209
    %v1520 = vpack.c.b16 %v1212, %v1211
    %v1521 = vpack.c.b16 %v1214, %v1213
    %v1522 = vpack.c.b16 %v1216, %v1215
    %v1523 = vpack.c.b16 %v1218, %v1217
    %v1524 = vpack.c.b16 %v1220, %v1219
    %v1525 = vpack.c.b16 %v1222, %v1221
    %v1526 = vpack.c.b16 %v1224, %v1223
    %v1527 = vpack.c.b16 %v1226, %v1225
    %v1528 = vpack.c.b16 %v1228, %v1227
    %v1529 = vpack.c.b16 %v1230, %v1229
    %v1530 = vpack.c.b16 %v1232, %v1231
    %v1531 = vpack.c.b16 %v1234, %v1233
    %v1532 = vpack.c.b16 %v1236, %v1235
    %v1533 = vpack.c.b16 %v1238, %v1237
    %v1534 = vpack.c.b16 %v1240, %v1239
    %v1535 = vpack.c.b16 %v1242, %v1241
    %v1536 = vpack.c.b16 %v1244, %v1243
    %v1537 = vpack.c.b16 %v1246, %v1245
    %v1538 = vpack.c.b16 %v1248, %v1247
    %v1539 = vpack.c.b16 %v1250, %v1249
    %v1540 = vpack.c.b16 %v1252, %v1251
    %v1541 = vpack.c.b16 %v1254, %v1253
    %v1542 = vpack.c.b16 %v1256, %v1255
    %v1543 = vpack.c.b16 %v1258, %v1257
    %v1544 = vpack.c.b16 %v1260, %v1259
    %v1545 = vpack.c.b16 %v1262, %v1261
    %v1546 = vpack.c.b16 %v1264, %v1263
    %v1547 = vpack.c.b16 %v1266, %v1265
    %v1548 = vpack.c.b16 %v1268, %v1267
    %v1549 = vpack.c.b16 %v1270, %v1269
    %v1550 = vpack.c.b16 %v1272, %v1271
    %v1551 = vpack.c.b16 %v1274, %v1273
    %v1552 = vpack.c.b16 %v1276, %v1275
    %v1553 = vpack.c.b16 %v1278, %v1277
    %v1554 = vpack.c.b16 %v1280, %v1279
    %v1555 = vpack.c.b16 %v1282, %v1281
    %v1556 = vpack.c.b16 %v1284, %v1283
    %v1557 = vpack.c.b16 %v1286, %v1285
    %v1558 = vpack.c.b16 %v1288, %v1287
    %v1559 = vpack.c.b16 %v1290, %v1289
    %v1560 = vpack.c.b16 %v1292, %v1291
    %v1561 = vpack.c.b16 %v1294, %v1293
    %v1562 = vpack.c.b16 %v1296, %v1295
    %v1563 = vpack.c.b16 %v1298, %v1297
    %v1564 = vpack.c.b16 %v1300, %v1299
    %v1565 = vpack.c.b16 %v1302, %v1301
    %v1566 = vpack.c.b16 %v1304, %v1303
    %v1567 = vpack.c.b16 %v1306, %v1305
    %v1568 = vpack.c.b16 %v1308, %v1307
    %v1569 = vpack.c.b16 %v1310, %v1309
    %v1570 = vpack.c.b16 %v1312, %v1311
    %v1571 = vpack.c.b16 %v1314, %v1313
    %v1572 = vpack.c.b16 %v1316, %v1315
    %v1573 = vpack.c.b16 %v1318, %v1317
    %v1574 = vpack.c.b16 %v1320, %v1319
    %v1575 = vpack.c.b16 %v1322, %v1321
    %v1576 = vpack.c.b16 %v1324, %v1323
    %v1577 = vpack.c.b16 %v1326, %v1325
    %v1578 = vpack.c.b16 %v1328, %v1327
    %v1579 = vpack.c.b16 %v1330, %v1329
    %v1580 = vpack.c.b16 %v1332, %v1331
    %v1581 = vpack.c.b16 %v1334, %v1333
    %v1582 = vpack.c.b16 %v1336, %v1335
    %v1583 = vpack.c.b16 %v1338, %v1337
    %v1584 = vpack.c.b16 %v1340, %v1339
    %v1585 = vpack.c.b16 %v1342, %v1341
    %v1586 = vpack.c.b16 %v1344, %v1343
    %v1587 = vpack.c.b16 %v1346, %v1345
    %v1588 = vpack.c.b16 %v1348, %v1347
    %v1589 = vpack.c.b16 %v1350, %v1349
    %v1590 = vpack.c.b16 %v1352, %v1351
    %v1591 = vpack.c.b16 %v1354, %v1353
    %v1592 = vpack.c.b16 %v1356, %v1355
    %v1593 = vpack.c.b16 %v1358, %v1357
    %v1594 = vpack.c.b16 %v1360, %v1359
    %v1595 = vpack.c.b16 %v1362, %v1361
    %v1596 = vpack.c.b16 %v1364, %v1363
    %v1597 = vpack.c.b16 %v1366, %v1365
    %v1598 = vpack.c.b16 %v1368, %v1367
    %v1599 = vpack.c.b16 %v1370, %v1369
    %v1600 = vpack.c.b16 %v1372, %v1371
    %v1601 = vpack.c.b16 %v1374, %v1373
    %v1602 = vpack.c.b16 %v1376, %v1375
    %v1603 = vpack.c.b16 %v1378, %v1377
    %v1604 = vpack.c.b16 %v1380, %v1379
    %v1605 = vpack.c.b16 %v1382, %v1381
    %v1606 = vpack.c.b16 %v1384, %v1383
    %v1607 = vpack.c.b16 %v1386, %v1385
    %v1608 = vpack.c.b16 %v1388, %v1387
    %v1609 = vpack.c.b16 %v1390, %v1389
    %v1610 = vpack.c.b16 %v1392, %v1391
    %v1611 = vpack.c.b16 %v1394, %v1393
    %v1612 = vpack.c.b16 %v1396, %v1395
    %v1613 = vpack.c.b16 %v1398, %v1397
    %v1614 = vpack.c.b16 %v1400, %v1399
    %v1615 = vpack.c.b16 %v1402, %v1401
    %v1616 = vpack.c.b16 %v1404, %v1403
    %v1617 = vpack.c.b16 %v1406, %v1405
    %v1618 = vpack.c.b16 %v1408, %v1407
    %v1619 = vpack.c.b16 %v1410, %v1409
    %v1620 = vpack.c.b16 %v1412, %v1411
    %v1621 = vpack.c.b16 %v1414, %v1413
    %v1622 = vpack.c.b16 %v1416, %v1415
    %v1623 = vpack.c.b16 %v1418, %v1417
    %v1624 = vpack.c.b16 %v1420, %v1419
    %v1625 = vpack.c.b16 %v1422, %v1421
    %v1626 = vpack.c.b16 %v1424, %v1423
    %v1627 = vpack.c.b16 %v1426, %v1425
    %v1628 = vpack.c.b16 %v1428, %v1427
    %1829 = vmatprep.subr.bf16.mxu0 0
    %1830 = vmatpush1.bf16.msra.mxu0 %v1429
    %1831 = vmatprep.subr.bf16.mxu0 0
    %1832 = vmatpush1.bf16.msra.mxu0 %v1430
    %1833 = vmatprep.subr.bf16.mxu0 0
    %1834 = vmatpush1.bf16.msra.mxu0 %v1431
    %1835 = vmatprep.subr.bf16.mxu0 0
    %1836 = vmatpush1.bf16.msra.mxu0 %v1432
    %1837 = vmatprep.subr.bf16.mxu0 0
    %1838 = vmatpush1.bf16.msra.mxu0 %v1433
    %1839 = vmatprep.subr.bf16.mxu0 0
    %1840 = vmatpush1.bf16.msra.mxu0 %v1434
    %1841 = vmatprep.subr.bf16.mxu0 0
    %1842 = vmatpush1.bf16.msra.mxu0 %v1435
    %1843 = vmatprep.subr.bf16.mxu0 0
    %1844 = vmatpush1.bf16.msra.mxu0 %v1436
    %1845 = vmatprep.subr.bf16.mxu0 0
    %1846 = vmatpush1.bf16.msra.mxu0 %v1437
    %1847 = vmatprep.subr.bf16.mxu0 0
    %1848 = vmatpush1.bf16.msra.mxu0 %v1438
    %1849 = vmatprep.subr.bf16.mxu0 0
    %1850 = vmatpush1.bf16.msra.mxu0 %v1439
    %1851 = vmatprep.subr.bf16.mxu0 0
    %1852 = vmatpush1.bf16.msra.mxu0 %v1440
    %1853 = vmatprep.subr.bf16.mxu0 0
    %1854 = vmatpush1.bf16.msra.mxu0 %v1441
    %1855 = vmatprep.subr.bf16.mxu0 0
    %1856 = vmatpush1.bf16.msra.mxu0 %v1442
    %1857 = vmatprep.subr.bf16.mxu0 0
    %1858 = vmatpush1.bf16.msra.mxu0 %v1443
    %1859 = vmatprep.subr.bf16.mxu0 0
    %1860 = vmatpush1.bf16.msra.mxu0 %v1444
    %1861 = vmatprep.mubr.bf16.mxu0 %v480
    %1862 = vmatmul.mubr.bf16.gmra.mrb[0].mxu0 %v466
    %v1863 = vpop.f32.mrb[0].mxu0
    %v1864 = vadd.f32 %v437, %v1863
    %v1865 = vpop.f32.mrb[0].mxu0
    %v1866 = vpop.f32.mrb[0].mxu0
    %v1867 = vpop.f32.mrb[0].mxu0
    %1868 = vdwg.mxu0
    %1869 = vmatprep.subr.bf16.mxu0 0
    %1870 = vmatpush1.bf16.msra.mxu0 %v1445
    %1871 = vmatprep.subr.bf16.mxu0 0
    %1872 = vmatpush1.bf16.msra.mxu0 %v1446
    %1873 = vmatprep.subr.bf16.mxu0 0
    %1874 = vmatpush1.bf16.msra.mxu0 %v1447
    %1875 = vmatprep.subr.bf16.mxu0 0
    %1876 = vmatpush1.bf16.msra.mxu0 %v1448
    %1877 = vmatprep.subr.bf16.mxu0 0
    %1878 = vmatpush1.bf16.msra.mxu0 %v1449
    %1879 = vmatprep.subr.bf16.mxu0 0
    %1880 = vmatpush1.bf16.msra.mxu0 %v1450
    %1881 = vmatprep.subr.bf16.mxu0 0
    %1882 = vmatpush1.bf16.msra.mxu0 %v1451
    %1883 = vmatprep.subr.bf16.mxu0 0
    %1884 = vmatpush1.bf16.msra.mxu0 %v1452
    %1885 = vmatprep.subr.bf16.mxu0 0
    %1886 = vmatpush1.bf16.msra.mxu0 %v1453
    %1887 = vmatprep.subr.bf16.mxu0 0
    %1888 = vmatpush1.bf16.msra.mxu0 %v1454
    %1889 = vmatprep.subr.bf16.mxu0 0
    %1890 = vmatpush1.bf16.msra.mxu0 %v1455
    %1891 = vmatprep.subr.bf16.mxu0 0
    %1892 = vmatpush1.bf16.msra.mxu0 %v1456
    %1893 = vmatprep.subr.bf16.mxu0 0
    %1894 = vmatpush1.bf16.msra.mxu0 %v1457
    %1895 = vmatprep.subr.bf16.mxu0 0
    %1896 = vmatpush1.bf16.msra.mxu0 %v1458
    %1897 = vmatprep.subr.bf16.mxu0 0
    %1898 = vmatpush1.bf16.msra.mxu0 %v1459
    %1899 = vmatprep.subr.bf16.mxu0 0
    %1900 = vmatpush1.bf16.msra.mxu0 %v1460
    %1901 = vmatprep.mubr.bf16.mxu0 %v490
    %1902 = vmatmul.mubr.bf16.gmra.mrb[0].mxu0 %v488
    %v1903 = vpop.f32.mrb[0].mxu0
    %v1904 = vadd.f32 %v1864, %v1903
    %v1905 = vpop.f32.mrb[0].mxu0
    %v1906 = vpop.f32.mrb[0].mxu0
    %v1907 = vpop.f32.mrb[0].mxu0
    %1908 = vdwg.mxu0
    %1909 = vmatprep.subr.bf16.mxu0 0
    %1910 = vmatpush1.bf16.msra.mxu0 %v1461
    %1911 = vmatprep.subr.bf16.mxu0 0
    %1912 = vmatpush1.bf16.msra.mxu0 %v1462
    %1913 = vmatprep.subr.bf16.mxu0 0
    %1914 = vmatpush1.bf16.msra.mxu0 %v1463
    %1915 = vmatprep.subr.bf16.mxu0 0
    %1916 = vmatpush1.bf16.msra.mxu0 %v1464
    %1917 = vmatprep.subr.bf16.mxu0 0
    %1918 = vmatpush1.bf16.msra.mxu0 %v1465
    %1919 = vmatprep.subr.bf16.mxu0 0
    %1920 = vmatpush1.bf16.msra.mxu0 %v1466
    %1921 = vmatprep.subr.bf16.mxu0 0
    %1922 = vmatpush1.bf16.msra.mxu0 %v1467
    %1923 = vmatprep.subr.bf16.mxu0 0
    %1924 = vmatpush1.bf16.msra.mxu0 %v1468
    %1925 = vmatprep.subr.bf16.mxu0 0
    %1926 = vmatpush1.bf16.msra.mxu0 %v1469
    %1927 = vmatprep.subr.bf16.mxu0 0
    %1928 = vmatpush1.bf16.msra.mxu0 %v1470
    %1929 = vmatprep.subr.bf16.mxu0 0
    %1930 = vmatpush1.bf16.msra.mxu0 %v1471
    %1931 = vmatprep.subr.bf16.mxu0 0
    %1932 = vmatpush1.bf16.msra.mxu0 %v1472
    %1933 = vmatprep.subr.bf16.mxu0 0
    %1934 = vmatpush1.bf16.msra.mxu0 %v1473
    %1935 = vmatprep.subr.bf16.mxu0 0
    %1936 = vmatpush1.bf16.msra.mxu0 %v1474
    %1937 = vmatprep.subr.bf16.mxu0 0
    %1938 = vmatpush1.bf16.msra.mxu0 %v1475
    %1939 = vmatprep.subr.bf16.mxu0 0
    %1940 = vmatpush1.bf16.msra.mxu0 %v1476
    %1941 = vmatprep.mubr.bf16.mxu0 %v487
    %1942 = vmatmul.mubr.bf16.gmra.mrb[0].mxu0 %v473
    %v1943 = vpop.f32.mrb[0].mxu0
    %v1944 = vadd.f32 %v1904, %v1943
    %v1945 = vpop.f32.mrb[0].mxu0
    %v1946 = vpop.f32.mrb[0].mxu0
    %v1947 = vpop.f32.mrb[0].mxu0
    %1948 = vdwg.mxu0
    %1949 = vmatprep.subr.bf16.mxu0 0
    %1950 = vmatpush1.bf16.msra.mxu0 %v1477
    %1951 = vmatprep.subr.bf16.mxu0 0
    %1952 = vmatpush1.bf16.msra.mxu0 %v1478
    %1953 = vmatprep.subr.bf16.mxu0 0
    %1954 = vmatpush1.bf16.msra.mxu0 %v1479
    %1955 = vmatprep.subr.bf16.mxu0 0
    %1956 = vmatpush1.bf16.msra.mxu0 %v1480
    %1957 = vmatprep.subr.bf16.mxu0 0
    %1958 = vmatpush1.bf16.msra.mxu0 %v1481
    %1959 = vmatprep.subr.bf16.mxu0 0
    %1960 = vmatpush1.bf16.msra.mxu0 %v1482
    %1961 = vmatprep.subr.bf16.mxu0 0
    %1962 = vmatpush1.bf16.msra.mxu0 %v1483
    %1963 = vmatprep.subr.bf16.mxu0 0
    %1964 = vmatpush1.bf16.msra.mxu0 %v1484
    %1965 = vmatprep.subr.bf16.mxu0 0
    %1966 = vmatpush1.bf16.msra.mxu0 %v1485
    %1967 = vmatprep.subr.bf16.mxu0 0
    %1968 = vmatpush1.bf16.msra.mxu0 %v1486
    %1969 = vmatprep.subr.bf16.mxu0 0
    %1970 = vmatpush1.bf16.msra.mxu0 %v1487
    %1971 = vmatprep.subr.bf16.mxu0 0
    %1972 = vmatpush1.bf16.msra.mxu0 %v1488
    %1973 = vmatprep.subr.bf16.mxu0 0
    %1974 = vmatpush1.bf16.msra.mxu0 %v1489
    %1975 = vmatprep.subr.bf16.mxu0 0
    %1976 = vmatpush1.bf16.msra.mxu0 %v1490
    %1977 = vmatprep.subr.bf16.mxu0 0
    %1978 = vmatpush1.bf16.msra.mxu0 %v1491
    %1979 = vmatprep.subr.bf16.mxu0 0
    %1980 = vmatpush1.bf16.msra.mxu0 %v1492
    %1981 = vmatprep.mubr.bf16.mxu0 %v491
    %1982 = vmatmul.mubr.bf16.gmra.mrb[0].mxu0 %v489
    %v1983 = vpop.f32.mrb[0].mxu0
    %v1984 = vadd.f32 %v1944, %v1983
    %v1985 = vpop.f32.mrb[0].mxu0
    %v1986 = vpop.f32.mrb[0].mxu0
    %v1987 = vpop.f32.mrb[0].mxu0
    %1988 = vdwg.mxu0
    %1989 = vmatprep.subr.bf16.mxu0 0
    %1990 = vmatpush1.bf16.msra.mxu0 %v1493
    %1991 = vmatprep.subr.bf16.mxu0 0
    %1992 = vmatpush1.bf16.msra.mxu0 %v1494
    %1993 = vmatprep.subr.bf16.mxu0 0
    %1994 = vmatpush1.bf16.msra.mxu0 %v1495
    %1995 = vmatprep.subr.bf16.mxu0 0
    %1996 = vmatpush1.bf16.msra.mxu0 %v1496
    %1997 = vmatprep.subr.bf16.mxu0 0
    %1998 = vmatpush1.bf16.msra.mxu0 %v1497
    %1999 = vmatprep.subr.bf16.mxu0 0
    %2000 = vmatpush1.bf16.msra.mxu0 %v1498
    %2001 = vmatprep.subr.bf16.mxu0 0
    %2002 = vmatpush1.bf16.msra.mxu0 %v1499
    %2003 = vmatprep.subr.bf16.mxu0 0
    %2004 = vmatpush1.bf16.msra.mxu0 %v1500
    %2005 = vmatprep.subr.bf16.mxu0 0
    %2006 = vmatpush1.bf16.msra.mxu0 %v1501
    %2007 = vmatprep.subr.bf16.mxu0 0
    %2008 = vmatpush1.bf16.msra.mxu0 %v1502
    %2009 = vmatprep.subr.bf16.mxu0 0
    %2010 = vmatpush1.bf16.msra.mxu0 %v1503
    %2011 = vmatprep.subr.bf16.mxu0 0
    %2012 = vmatpush1.bf16.msra.mxu0 %v1504
    %2013 = vmatprep.subr.bf16.mxu0 0
    %2014 = vmatpush1.bf16.msra.mxu0 %v1505
    %2015 = vmatprep.subr.bf16.mxu0 0
    %2016 = vmatpush1.bf16.msra.mxu0 %v1506
    %2017 = vmatprep.subr.bf16.mxu0 0
    %2018 = vmatpush1.bf16.msra.mxu0 %v1507
    %2019 = vmatprep.subr.bf16.mxu0 0
    %2020 = vmatpush1.bf16.msra.mxu0 %v1508
    %2021 = vmatprep.mubr.bf16.mxu0 %v529
    %2022 = vmatmul.mubr.bf16.gmra.mrb[0].mxu0 %v515
    %v2023 = vpop.f32.mrb[0].mxu0
    %v2024 = vadd.f32 %v1984, %v2023
    %v2025 = vpop.f32.mrb[0].mxu0
    %v2026 = vpop.f32.mrb[0].mxu0
    %v2027 = vpop.f32.mrb[0].mxu0
    %2028 = vdwg.mxu0
    %2029 = vmatprep.subr.bf16.mxu0 0
    %2030 = vmatpush1.bf16.msra.mxu0 %v1509
    %2031 = vmatprep.subr.bf16.mxu0 0
    %2032 = vmatpush1.bf16.msra.mxu0 %v1510
    %2033 = vmatprep.subr.bf16.mxu0 0
    %2034 = vmatpush1.bf16.msra.mxu0 %v1511
    %2035 = vmatprep.subr.bf16.mxu0 0
    %2036 = vmatpush1.bf16.msra.mxu0 %v1512
    %2037 = vmatprep.subr.bf16.mxu0 0
    %2038 = vmatpush1.bf16.msra.mxu0 %v1513
    %2039 = vmatprep.subr.bf16.mxu0 0
    %2040 = vmatpush1.bf16.msra.mxu0 %v1514
    %2041 = vmatprep.subr.bf16.mxu0 0
    %2042 = vmatpush1.bf16.msra.mxu0 %v1515
    %2043 = vmatprep.subr.bf16.mxu0 0
    %2044 = vmatpush1.bf16.msra.mxu0 %v1516
    %2045 = vmatprep.subr.bf16.mxu0 0
    %2046 = vmatpush1.bf16.msra.mxu0 %v1517
    %2047 = vmatprep.subr.bf16.mxu0 0
    %2048 = vmatpush1.bf16.msra.mxu0 %v1518
    %2049 = vmatprep.subr.bf16.mxu0 0
    %2050 = vmatpush1.bf16.msra.mxu0 %v1519
    %2051 = vmatprep.subr.bf16.mxu0 0
    %2052 = vmatpush1.bf16.msra.mxu0 %v1520
    %2053 = vmatprep.subr.bf16.mxu0 0
    %2054 = vmatpush1.bf16.msra.mxu0 %v1521
    %2055 = vmatprep.subr.bf16.mxu0 0
    %2056 = vmatpush1.bf16.msra.mxu0 %v1522
    %2057 = vmatprep.subr.bf16.mxu0 0
    %2058 = vmatpush1.bf16.msra.mxu0 %v1523
    %2059 = vmatprep.subr.bf16.mxu0 0
    %2060 = vmatpush1.bf16.msra.mxu0 %v1524
    %2061 = vmatprep.mubr.bf16.mxu0 %v539
    %2062 = vmatmul.mubr.bf16.gmra.mrb[0].mxu0 %v537
    %v2063 = vpop.f32.mrb[0].mxu0
    %v2064 = vadd.f32 %v2024, %v2063
    %v2065 = vpop.f32.mrb[0].mxu0
    %v2066 = vpop.f32.mrb[0].mxu0
    %v2067 = vpop.f32.mrb[0].mxu0
    %2068 = vdwg.mxu0
    %2069 = vmatprep.subr.bf16.mxu0 0
    %2070 = vmatpush1.bf16.msra.mxu0 %v1525
    %2071 = vmatprep.subr.bf16.mxu0 0
    %2072 = vmatpush1.bf16.msra.mxu0 %v1526
    %2073 = vmatprep.subr.bf16.mxu0 0
    %2074 = vmatpush1.bf16.msra.mxu0 %v1527
    %2075 = vmatprep.subr.bf16.mxu0 0
    %2076 = vmatpush1.bf16.msra.mxu0 %v1528
    %2077 = vmatprep.subr.bf16.mxu0 0
    %2078 = vmatpush1.bf16.msra.mxu0 %v1529
    %2079 = vmatprep.subr.bf16.mxu0 0
    %2080 = vmatpush1.bf16.msra.mxu0 %v1530
    %2081 = vmatprep.subr.bf16.mxu0 0
    %2082 = vmatpush1.bf16.msra.mxu0 %v1531
    %2083 = vmatprep.subr.bf16.mxu0 0
    %2084 = vmatpush1.bf16.msra.mxu0 %v1532
    %2085 = vmatprep.subr.bf16.mxu0 0
    %2086 = vmatpush1.bf16.msra.mxu0 %v1533
    %2087 = vmatprep.subr.bf16.mxu0 0
    %2088 = vmatpush1.bf16.msra.mxu0 %v1534
    %2089 = vmatprep.subr.bf16.mxu0 0
    %2090 = vmatpush1.bf16.msra.mxu0 %v1535
    %2091 = vmatprep.subr.bf16.mxu0 0
    %2092 = vmatpush1.bf16.msra.mxu0 %v1536
    %2093 = vmatprep.subr.bf16.mxu0 0
    %2094 = vmatpush1.bf16.msra.mxu0 %v1537
    %2095 = vmatprep.subr.bf16.mxu0 0
    %2096 = vmatpush1.bf16.msra.mxu0 %v1538
    %2097 = vmatprep.subr.bf16.mxu0 0
    %2098 = vmatpush1.bf16.msra.mxu0 %v1539
    %2099 = vmatprep.subr.bf16.mxu0 0
    %2100 = vmatpush1.bf16.msra.mxu0 %v1540
    %2101 = vmatprep.mubr.bf16.mxu0 %v536
    %2102 = vmatmul.mubr.bf16.gmra.mrb[0].mxu0 %v522
    %v2103 = vpop.f32.mrb[0].mxu0
    %v2104 = vadd.f32 %v2064, %v2103
    %v2105 = vpop.f32.mrb[0].mxu0
    %v2106 = vpop.f32.mrb[0].mxu0
    %v2107 = vpop.f32.mrb[0].mxu0
    %2108 = vdwg.mxu0
    %2109 = vmatprep.subr.bf16.mxu0 0
    %2110 = vmatpush1.bf16.msra.mxu0 %v1541
    %2111 = vmatprep.subr.bf16.mxu0 0
    %2112 = vmatpush1.bf16.msra.mxu0 %v1542
    %2113 = vmatprep.subr.bf16.mxu0 0
    %2114 = vmatpush1.bf16.msra.mxu0 %v1543
    %2115 = vmatprep.subr.bf16.mxu0 0
    %2116 = vmatpush1.bf16.msra.mxu0 %v1544
    %2117 = vmatprep.subr.bf16.mxu0 0
    %2118 = vmatpush1.bf16.msra.mxu0 %v1545
    %2119 = vmatprep.subr.bf16.mxu0 0
    %2120 = vmatpush1.bf16.msra.mxu0 %v1546
    %2121 = vmatprep.subr.bf16.mxu0 0
    %2122 = vmatpush1.bf16.msra.mxu0 %v1547
    %2123 = vmatprep.subr.bf16.mxu0 0
    %2124 = vmatpush1.bf16.msra.mxu0 %v1548
    %2125 = vmatprep.subr.bf16.mxu0 0
    %2126 = vmatpush1.bf16.msra.mxu0 %v1549
    %2127 = vmatprep.subr.bf16.mxu0 0
    %2128 = vmatpush1.bf16.msra.mxu0 %v1550
    %2129 = vmatprep.subr.bf16.mxu0 0
    %2130 = vmatpush1.bf16.msra.mxu0 %v1551
    %2131 = vmatprep.subr.bf16.mxu0 0
    %2132 = vmatpush1.bf16.msra.mxu0 %v1552
    %2133 = vmatprep.subr.bf16.mxu0 0
    %2134 = vmatpush1.bf16.msra.mxu0 %v1553
    %2135 = vmatprep.subr.bf16.mxu0 0
    %2136 = vmatpush1.bf16.msra.mxu0 %v1554
    %2137 = vmatprep.subr.bf16.mxu0 0
    %2138 = vmatpush1.bf16.msra.mxu0 %v1555
    %2139 = vmatprep.subr.bf16.mxu0 0
    %2140 = vmatpush1.bf16.msra.mxu0 %v1556
    %2141 = vmatprep.mubr.bf16.mxu0 %v540
    %2142 = vmatmul.mubr.bf16.gmra.mrb[0].mxu0 %v538
    %v2143 = vpop.f32.mrb[0].mxu0
    %v2144 = vadd.f32 %v2104, %v2143
    %v2145 = vpop.f32.mrb[0].mxu0
    %v2146 = vpop.f32.mrb[0].mxu0
    %v2147 = vpop.f32.mrb[0].mxu0
    %2148 = vdwg.mxu0
    %2149 = vmatprep.subr.bf16.mxu0 0
    %2150 = vmatpush1.bf16.msra.mxu0 %v1557
    %2151 = vmatprep.subr.bf16.mxu0 0
    %2152 = vmatpush1.bf16.msra.mxu0 %v1558
    %2153 = vmatprep.subr.bf16.mxu0 0
    %2154 = vmatpush1.bf16.msra.mxu0 %v1559
    %2155 = vmatprep.subr.bf16.mxu0 0
    %2156 = vmatpush1.bf16.msra.mxu0 %v1560
    %2157 = vmatprep.subr.bf16.mxu0 0
    %2158 = vmatpush1.bf16.msra.mxu0 %v1561
    %2159 = vmatprep.subr.bf16.mxu0 0
    %2160 = vmatpush1.bf16.msra.mxu0 %v1562
    %2161 = vmatprep.subr.bf16.mxu0 0
    %2162 = vmatpush1.bf16.msra.mxu0 %v1563
    %2163 = vmatprep.subr.bf16.mxu0 0
    %2164 = vmatpush1.bf16.msra.mxu0 %v1564
    %2165 = vmatprep.subr.bf16.mxu0 0
    %2166 = vmatpush1.bf16.msra.mxu0 %v1565
    %2167 = vmatprep.subr.bf16.mxu0 0
    %2168 = vmatpush1.bf16.msra.mxu0 %v1566
    %2169 = vmatprep.subr.bf16.mxu0 0
    %2170 = vmatpush1.bf16.msra.mxu0 %v1567
    %2171 = vmatprep.subr.bf16.mxu0 0
    %2172 = vmatpush1.bf16.msra.mxu0 %v1568
    %2173 = vmatprep.subr.bf16.mxu0 0
    %2174 = vmatpush1.bf16.msra.mxu0 %v1569
    %2175 = vmatprep.subr.bf16.mxu0 0
    %2176 = vmatpush1.bf16.msra.mxu0 %v1570
    %2177 = vmatprep.subr.bf16.mxu0 0
    %2178 = vmatpush1.bf16.msra.mxu0 %v1571
    %2179 = vmatprep.subr.bf16.mxu0 0
    %2180 = vmatpush1.bf16.msra.mxu0 %v1572
    %2181 = vmatprep.mubr.bf16.mxu0 %v578
    %2182 = vmatmul.mubr.bf16.gmra.mrb[0].mxu0 %v564
    %v2183 = vpop.f32.mrb[0].mxu0
    %v2184 = vadd.f32 %v2144, %v2183
    %v2185 = vpop.f32.mrb[0].mxu0
    %v2186 = vpop.f32.mrb[0].mxu0
    %v2187 = vpop.f32.mrb[0].mxu0
    %2188 = vdwg.mxu0
    %2189 = vmatprep.subr.bf16.mxu0 0
    %2190 = vmatpush1.bf16.msra.mxu0 %v1573
    %2191 = vmatprep.subr.bf16.mxu0 0
    %2192 = vmatpush1.bf16.msra.mxu0 %v1574
    %2193 = vmatprep.subr.bf16.mxu0 0
    %2194 = vmatpush1.bf16.msra.mxu0 %v1575
    %2195 = vmatprep.subr.bf16.mxu0 0
    %2196 = vmatpush1.bf16.msra.mxu0 %v1576
    %2197 = vmatprep.subr.bf16.mxu0 0
    %2198 = vmatpush1.bf16.msra.mxu0 %v1577
    %2199 = vmatprep.subr.bf16.mxu0 0
    %2200 = vmatpush1.bf16.msra.mxu0 %v1578
    %2201 = vmatprep.subr.bf16.mxu0 0
    %2202 = vmatpush1.bf16.msra.mxu0 %v1579
    %2203 = vmatprep.subr.bf16.mxu0 0
    %2204 = vmatpush1.bf16.msra.mxu0 %v1580
    %2205 = vmatprep.subr.bf16.mxu0 0
    %2206 = vmatpush1.bf16.msra.mxu0 %v1581
    %2207 = vmatprep.subr.bf16.mxu0 0
    %2208 = vmatpush1.bf16.msra.mxu0 %v1582
    %2209 = vmatprep.subr.bf16.mxu0 0
    %2210 = vmatpush1.bf16.msra.mxu0 %v1583
    %2211 = vmatprep.subr.bf16.mxu0 0
    %2212 = vmatpush1.bf16.msra.mxu0 %v1584
    %2213 = vmatprep.subr.bf16.mxu0 0
    %2214 = vmatpush1.bf16.msra.mxu0 %v1585
    %2215 = vmatprep.subr.bf16.mxu0 0
    %2216 = vmatpush1.bf16.msra.mxu0 %v1586
    %2217 = vmatprep.subr.bf16.mxu0 0
    %2218 = vmatpush1.bf16.msra.mxu0 %v1587
    %2219 = vmatprep.subr.bf16.mxu0 0
    %2220 = vmatpush1.bf16.msra.mxu0 %v1588
    %2221 = vmatprep.mubr.bf16.mxu0 %v588
    %2222 = vmatmul.mubr.bf16.gmra.mrb[0].mxu0 %v586
    %v2223 = vpop.f32.mrb[0].mxu0
    %v2224 = vadd.f32 %v2184, %v2223
    %v2225 = vpop.f32.mrb[0].mxu0
    %v2226 = vpop.f32.mrb[0].mxu0
    %v2227 = vpop.f32.mrb[0].mxu0
    %2228 = vdwg.mxu0
    %2229 = vmatprep.subr.bf16.mxu0 0
    %2230 = vmatpush1.bf16.msra.mxu0 %v1589
    %2231 = vmatprep.subr.bf16.mxu0 0
    %2232 = vmatpush1.bf16.msra.mxu0 %v1590
    %2233 = vmatprep.subr.bf16.mxu0 0
    %2234 = vmatpush1.bf16.msra.mxu0 %v1591
    %2235 = vmatprep.subr.bf16.mxu0 0
    %2236 = vmatpush1.bf16.msra.mxu0 %v1592
    %2237 = vmatprep.subr.bf16.mxu0 0
    %2238 = vmatpush1.bf16.msra.mxu0 %v1593
    %2239 = vmatprep.subr.bf16.mxu0 0
    %2240 = vmatpush1.bf16.msra.mxu0 %v1594
    %2241 = vmatprep.subr.bf16.mxu0 0
    %2242 = vmatpush1.bf16.msra.mxu0 %v1595
    %2243 = vmatprep.subr.bf16.mxu0 0
    %2244 = vmatpush1.bf16.msra.mxu0 %v1596
    %2245 = vmatprep.subr.bf16.mxu0 0
    %2246 = vmatpush1.bf16.msra.mxu0 %v1597
    %2247 = vmatprep.subr.bf16.mxu0 0
    %2248 = vmatpush1.bf16.msra.mxu0 %v1598
    %2249 = vmatprep.subr.bf16.mxu0 0
    %2250 = vmatpush1.bf16.msra.mxu0 %v1599
    %2251 = vmatprep.subr.bf16.mxu0 0
    %2252 = vmatpush1.bf16.msra.mxu0 %v1600
    %2253 = vmatprep.subr.bf16.mxu0 0
    %2254 = vmatpush1.bf16.msra.mxu0 %v1601
    %2255 = vmatprep.subr.bf16.mxu0 0
    %2256 = vmatpush1.bf16.msra.mxu0 %v1602
    %2257 = vmatprep.subr.bf16.mxu0 0
    %2258 = vmatpush1.bf16.msra.mxu0 %v1603
    %2259 = vmatprep.subr.bf16.mxu0 0
    %2260 = vmatpush1.bf16.msra.mxu0 %v1604
    %2261 = vmatprep.mubr.bf16.mxu0 %v585
    %2262 = vmatmul.mubr.bf16.gmra.mrb[0].mxu0 %v571
    %v2263 = vpop.f32.mrb[0].mxu0
    %v2264 = vadd.f32 %v2224, %v2263
    %v2265 = vpop.f32.mrb[0].mxu0
    %v2266 = vpop.f32.mrb[0].mxu0
    %v2267 = vpop.f32.mrb[0].mxu0
    %2268 = vdwg.mxu0
    %2269 = vmatprep.subr.bf16.mxu0 0
    %2270 = vmatpush1.bf16.msra.mxu0 %v1605
    %2271 = vmatprep.subr.bf16.mxu0 0
    %2272 = vmatpush1.bf16.msra.mxu0 %v1606
    %2273 = vmatprep.subr.bf16.mxu0 0
    %2274 = vmatpush1.bf16.msra.mxu0 %v1607
    %2275 = vmatprep.subr.bf16.mxu0 0
    %2276 = vmatpush1.bf16.msra.mxu0 %v1608
    %2277 = vmatprep.subr.bf16.mxu0 0
    %2278 = vmatpush1.bf16.msra.mxu0 %v1609
    %2279 = vmatprep.subr.bf16.mxu0 0
    %2280 = vmatpush1.bf16.msra.mxu0 %v1610
    %2281 = vmatprep.subr.bf16.mxu0 0
    %2282 = vmatpush1.bf16.msra.mxu0 %v1611
    %2283 = vmatprep.subr.bf16.mxu0 0
    %2284 = vmatpush1.bf16.msra.mxu0 %v1612
    %2285 = vmatprep.subr.bf16.mxu0 0
    %2286 = vmatpush1.bf16.msra.mxu0 %v1613
    %2287 = vmatprep.subr.bf16.mxu0 0
    %2288 = vmatpush1.bf16.msra.mxu0 %v1614
    %2289 = vmatprep.subr.bf16.mxu0 0
    %2290 = vmatpush1.bf16.msra.mxu0 %v1615
    %2291 = vmatprep.subr.bf16.mxu0 0
    %2292 = vmatpush1.bf16.msra.mxu0 %v1616
    %2293 = vmatprep.subr.bf16.mxu0 0
    %2294 = vmatpush1.bf16.msra.mxu0 %v1617
    %2295 = vmatprep.subr.bf16.mxu0 0
    %2296 = vmatpush1.bf16.msra.mxu0 %v1618
    %2297 = vmatprep.subr.bf16.mxu0 0
    %2298 = vmatpush1.bf16.msra.mxu0 %v1619
    %2299 = vmatprep.subr.bf16.mxu0 0
    %2300 = vmatpush1.bf16.msra.mxu0 %v1620
    %2301 = vmatprep.mubr.bf16.mxu0 %v589
    %2302 = vmatmul.mubr.bf16.gmra.mrb[0].mxu0 %v587
    %v2303 = vpop.f32.mrb[0].mxu0
    %v2304 = vadd.f32 %v2264, %v2303
    %v2305 = vpop.f32.mrb[0].mxu0
    %v2306 = vpop.f32.mrb[0].mxu0
    %v2307 = vpop.f32.mrb[0].mxu0
    %2308 = vdwg.mxu0
    %2309 = vmatprep.subr.bf16.mxu0 0
    %2310 = vmatpush1.bf16.msra.mxu0 %v1621
    %2311 = vmatprep.subr.bf16.mxu0 0
    %2312 = vmatpush1.bf16.msra.mxu0 %v1622
    %2313 = vmatprep.subr.bf16.mxu0 0
    %2314 = vmatpush1.bf16.msra.mxu0 %v1623
    %2315 = vmatprep.subr.bf16.mxu0 0
    %2316 = vmatpush1.bf16.msra.mxu0 %v1624
    %2317 = vmatprep.subr.bf16.mxu0 0
    %2318 = vmatpush1.bf16.msra.mxu0 %v1625
    %2319 = vmatprep.subr.bf16.mxu0 0
    %2320 = vmatpush1.bf16.msra.mxu0 %v1626
    %2321 = vmatprep.subr.bf16.mxu0 0
    %2322 = vmatpush1.bf16.msra.mxu0 %v1627
    %2323 = vmatprep.subr.bf16.mxu0 0
    %2324 = vmatpush1.bf16.msra.mxu0 %v1628
    %2325 = vmatprep.subr.bf16.mxu0 0
    %2326 = vmatpush1.bf16.msra.mxu0 0
    %2327 = vmatprep.subr.bf16.mxu0 0
    %2328 = vmatpush1.bf16.msra.mxu0 0
    %2329 = vmatprep.subr.bf16.mxu0 0
    %2330 = vmatpush1.bf16.msra.mxu0 0
    %2331 = vmatprep.subr.bf16.mxu0 0
    %2332 = vmatpush1.bf16.msra.mxu0 0
    %2333 = vmatprep.subr.bf16.mxu0 0
    %2334 = vmatpush1.bf16.msra.mxu0 0
    %2335 = vmatprep.subr.bf16.mxu0 0
    %2336 = vmatpush1.bf16.msra.mxu0 0
    %2337 = vmatprep.subr.bf16.mxu0 0
    %2338 = vmatpush1.bf16.msra.mxu0 0
    %2339 = vmatprep.subr.bf16.mxu0 0
    %2340 = vmatpush1.bf16.msra.mxu0 0
    %2341 = vmatprep.mubr.bf16.mxu0 0
    %2342 = vmatmul.mubr.bf16.gmra.mrb[0].mxu0 %v603
    %v2343 = vpop.f32.mrb[0].mxu0
    %v2344 = vadd.f32 %v2304, %v2343
    %v2345 = vpop.f32.mrb[0].mxu0
    %v2346 = vpop.f32.mrb[0].mxu0
    %v2347 = vpop.f32.mrb[0].mxu0
    %2348 = vdwg.mxu0
    %v2349 = vmax.f32 %v2344, 0.0
    %v2350 = vpack.c.bf16 %v2349, %v2349
    %v2351 = vld [vmem:[%s3] sm:$0xf]
    %v2352 = vld [vmem:[%s3 + $0x4] sm:$0xf]
    %v2353 = vld [vmem:[%s3 + $0x8] sm:$0xf]
    %v2354 = vld [vmem:[%s3 + $0xc] sm:$0xf]
    %v2355 = vld [vmem:[%s3 + $0x10] sm:$0xf]
    %v2356 = vld [vmem:[%s3 + $0x14] sm:$0xf]
    %v2357 = vld [vmem:[%s3 + $0x18] sm:$0xf]
    %v2358 = vld [vmem:[%s3 + $0x1c] sm:$0xf]
    %v2359 = vld [vmem:[%s3 + $0x20] sm:$0xf]
    %v2360 = vld [vmem:[%s3 + $0x24] sm:$0xf]
    %v2361 = vld [vmem:[%s3 + $0x28] sm:$0xf]
    %v2362 = vld [vmem:[%s3 + $0x2c] sm:$0xf]
    %v2363 = vld [vmem:[%s3 + $0x30] sm:$0xf]
    %v2364 = vld [vmem:[%s3 + $0x34] sm:$0xf]
    %v2365 = vld [vmem:[%s3 + $0x38] sm:$0xf]
    %v2366 = vld [vmem:[%s3 + $0x3c] sm:$0xf]
    %v2367 = vld [vmem:[%s4] sm:$0x1]
    %v2369 = vlaneseq
    %v2370 = vshrl.u32 %v2369, 7
    %v2371 = vsub.s32 0, %v2370
    %v2372 = vrot.slane %v2367, %v2371
    %v2390 = vunpack.c.l.b16 %v2351
    %v2391 = vunpack.c.l.b16 %v2352
    %v2392 = vunpack.c.l.b16 %v2353
    %v2393 = vunpack.c.l.b16 %v2354
    %v2394 = vunpack.c.l.b16 %v2355
    %v2395 = vunpack.c.l.b16 %v2356
    %v2396 = vunpack.c.l.b16 %v2357
    %v2397 = vunpack.c.l.b16 %v2358
    %v2398 = vunpack.c.l.b16 %v2359
    %v2399 = vunpack.c.l.b16 %v2360
    %v2400 = vunpack.c.l.b16 %v2361
    %v2401 = vunpack.c.l.b16 %v2362
    %v2402 = vunpack.c.l.b16 %v2363
    %v2403 = vunpack.c.l.b16 %v2364
    %v2404 = vunpack.c.l.b16 %v2365
    %v2405 = vunpack.c.l.b16 %v2366
    %v2406 = vpack.c.b16 %v2391, %v2390
    %v2407 = vpack.c.b16 %v2393, %v2392
    %v2408 = vpack.c.b16 %v2395, %v2394
    %v2409 = vpack.c.b16 %v2397, %v2396
    %v2410 = vpack.c.b16 %v2399, %v2398
    %v2411 = vpack.c.b16 %v2401, %v2400
    %v2412 = vpack.c.b16 %v2403, %v2402
    %v2413 = vpack.c.b16 %v2405, %v2404
    %2422 = vmatprep.subr.bf16.mxu0 0
    %2423 = vmatpush1.bf16.msra.mxu0 %v2406
    %2424 = vmatprep.subr.bf16.mxu0 0
    %2425 = vmatpush1.bf16.msra.mxu0 %v2407
    %2426 = vmatprep.subr.bf16.mxu0 0
    %2427 = vmatpush1.bf16.msra.mxu0 %v2408
    %2428 = vmatprep.subr.bf16.mxu0 0
    %2429 = vmatpush1.bf16.msra.mxu0 %v2409
    %2430 = vmatprep.subr.bf16.mxu0 0
    %2431 = vmatpush1.bf16.msra.mxu0 %v2410
    %2432 = vmatprep.subr.bf16.mxu0 0
    %2433 = vmatpush1.bf16.msra.mxu0 %v2411
    %2434 = vmatprep.subr.bf16.mxu0 0
    %2435 = vmatpush1.bf16.msra.mxu0 %v2412
    %2436 = vmatprep.subr.bf16.mxu0 0
    %2437 = vmatpush1.bf16.msra.mxu0 %v2413
    %2438 = vmatprep.subr.bf16.mxu0 0
    %2439 = vmatpush1.bf16.msra.mxu0 0
    %2440 = vmatprep.subr.bf16.mxu0 0
    %2441 = vmatpush1.bf16.msra.mxu0 0
    %2442 = vmatprep.subr.bf16.mxu0 0
    %2443 = vmatpush1.bf16.msra.mxu0 0
    %2444 = vmatprep.subr.bf16.mxu0 0
    %2445 = vmatpush1.bf16.msra.mxu0 0
    %2446 = vmatprep.subr.bf16.mxu0 0
    %2447 = vmatpush1.bf16.msra.mxu0 0
    %2448 = vmatprep.subr.bf16.mxu0 0
    %2449 = vmatpush1.bf16.msra.mxu0 0
    %2450 = vmatprep.subr.bf16.mxu0 0
    %2451 = vmatpush1.bf16.msra.mxu0 0
    %2452 = vmatprep.subr.bf16.mxu0 0
    %2453 = vmatpush1.bf16.msra.mxu0 0
    %2454 = vmatprep.mubr.bf16.mxu0 0
    %2455 = vmatmul.mubr.bf16.gmra.mrb[0].mxu0 %v2350
    %v2456 = vpop.f32.mrb[0].mxu0
    %v2457 = vadd.f32 %v2372, %v2456
    %v2458 = vpop.f32.mrb[0].mxu0
    %v2459 = vpop.f32.mrb[0].mxu0
    %v2460 = vpop.f32.mrb[0].mxu0
    %2461 = vdwg.mxu0
    %v2462 = vmax.f32 %v2457, 0.0
    %v2463 = vpack.c.bf16 %v2462, %v2462
    %v2464 = vld [vmem:[%s5] sm:$0xf]
    %v2465 = vld [vmem:[%s5 + $0x4] sm:$0xf]
    %v2466 = vld [vmem:[%s5 + $0x8] sm:$0xf]
    %v2467 = vld [vmem:[%s5 + $0xc] sm:$0xf]
    %v2468 = vld [vmem:[%s5 + $0x10] sm:$0xf]
    %v2469 = vld [vmem:[%s5 + $0x14] sm:$0xf]
    %v2470 = vld [vmem:[%s5 + $0x18] sm:$0xf]
    %v2471 = vld [vmem:[%s5 + $0x1c] sm:$0xf]
    %v2472 = vld [vmem:[%s5 + $0x20] sm:$0xf]
    %v2473 = vld [vmem:[%s5 + $0x24] sm:$0xf]
    %v2474 = vld [vmem:[%s5 + $0x28] sm:$0xf]
    %v2475 = vld [vmem:[%s5 + $0x2c] sm:$0xf]
    %v2476 = vld [vmem:[%s5 + $0x30] sm:$0xf]
    %v2477 = vld [vmem:[%s5 + $0x34] sm:$0xf]
    %v2478 = vld [vmem:[%s5 + $0x38] sm:$0xf]
    %v2479 = vld [vmem:[%s5 + $0x3c] sm:$0xf]
    %v2480 = vld [vmem:[%s6] sm:$0x1]
    %v2482 = vlaneseq
    %v2483 = vshrl.u32 %v2482, 7
    %v2484 = vsub.s32 0, %v2483
    %v2485 = vrot.slane %v2480, %v2484
    %v2503 = vunpack.c.l.b16 %v2464
    %v2504 = vunpack.c.l.b16 %v2465
    %v2505 = vunpack.c.l.b16 %v2466
    %v2506 = vunpack.c.l.b16 %v2467
    %v2507 = vunpack.c.l.b16 %v2468
    %v2508 = vunpack.c.l.b16 %v2469
    %v2509 = vunpack.c.l.b16 %v2470
    %v2510 = vunpack.c.l.b16 %v2471
    %v2511 = vunpack.c.l.b16 %v2472
    %v2512 = vunpack.c.l.b16 %v2473
    %v2513 = vunpack.c.l.b16 %v2474
    %v2514 = vunpack.c.l.b16 %v2475
    %v2515 = vunpack.c.l.b16 %v2476
    %v2516 = vunpack.c.l.b16 %v2477
    %v2517 = vunpack.c.l.b16 %v2478
    %v2518 = vunpack.c.l.b16 %v2479
    %v2519 = vpack.c.b16 %v2504, %v2503
    %v2520 = vpack.c.b16 %v2506, %v2505
    %v2521 = vpack.c.b16 %v2508, %v2507
    %v2522 = vpack.c.b16 %v2510, %v2509
    %v2523 = vpack.c.b16 %v2512, %v2511
    %v2524 = vpack.c.b16 %v2514, %v2513
    %v2525 = vpack.c.b16 %v2516, %v2515
    %v2526 = vpack.c.b16 %v2518, %v2517
    %2535 = vmatprep.subr.bf16.mxu0 0
    %2536 = vmatpush1.bf16.msra.mxu0 %v2519
    %2537 = vmatprep.subr.bf16.mxu0 0
    %2538 = vmatpush1.bf16.msra.mxu0 %v2520
    %2539 = vmatprep.subr.bf16.mxu0 0
    %2540 = vmatpush1.bf16.msra.mxu0 %v2521
    %2541 = vmatprep.subr.bf16.mxu0 0
    %2542 = vmatpush1.bf16.msra.mxu0 %v2522
    %2543 = vmatprep.subr.bf16.mxu0 0
    %2544 = vmatpush1.bf16.msra.mxu0 %v2523
    %2545 = vmatprep.subr.bf16.mxu0 0
    %2546 = vmatpush1.bf16.msra.mxu0 %v2524
    %2547 = vmatprep.subr.bf16.mxu0 0
    %2548 = vmatpush1.bf16.msra.mxu0 %v2525
    %2549 = vmatprep.subr.bf16.mxu0 0
    %2550 = vmatpush1.bf16.msra.mxu0 %v2526
    %2551 = vmatprep.subr.bf16.mxu0 0
    %2552 = vmatpush1.bf16.msra.mxu0 0
    %2553 = vmatprep.subr.bf16.mxu0 0
    %2554 = vmatpush1.bf16.msra.mxu0 0
    %2555 = vmatprep.subr.bf16.mxu0 0
    %2556 = vmatpush1.bf16.msra.mxu0 0
    %2557 = vmatprep.subr.bf16.mxu0 0
    %2558 = vmatpush1.bf16.msra.mxu0 0
    %2559 = vmatprep.subr.bf16.mxu0 0
    %2560 = vmatpush1.bf16.msra.mxu0 0
    %2561 = vmatprep.subr.bf16.mxu0 0
    %2562 = vmatpush1.bf16.msra.mxu0 0
    %2563 = vmatprep.subr.bf16.mxu0 0
    %2564 = vmatpush1.bf16.msra.mxu0 0
    %2565 = vmatprep.subr.bf16.mxu0 0
    %2566 = vmatpush1.bf16.msra.mxu0 0
    %2567 = vmatprep.mubr.bf16.mxu0 0
    %2568 = vmatmul.mubr.bf16.gmra.mrb[0].mxu0 %v2463
    %v2569 = vpop.f32.mrb[0].mxu0
    %v2570 = vadd.f32 %v2485, %v2569
    %v2571 = vpop.f32.mrb[0].mxu0
    %v2572 = vpop.f32.mrb[0].mxu0
    %v2573 = vpop.f32.mrb[0].mxu0
    %2574 = vdwg.mxu0
    %2575 = vst [vmem:[#allocation2] sm:$0x3] %v2570
    // Predicated region
    $region30: #{net_forward.11} parent=1 // pred_check
      _
    $region31: #{net_forward.11} parent=1 // pred_check_branch
      %2577 = sbr.rel (0) target = $region33
    $region32: #{net_forward.11} parent=1 // pred_region
      %s2579 = ssub.s32 32, 32
      %2580 = vsyncadd [#allocation3], %s2579
      %s2582 = sshll.u32 [#allocation2], 4
      %s2583 = int_to_ptr.vmem [resolvable:$true] %s2582
      %2585 = dma.vmem_to_hbm [thread:$0]  %s2583, 32, %s7, [#allocation3]
    $region33: #{net_forward.11} parent=1 // pred_fallthru
      _
    // Predicated region
    $region34: #{net_forward.11} parent=1 // pred_check
      _
    $region35: #{net_forward.11} parent=1 // pred_check_branch
      %2587 = sbr.rel (0) target = $region37
    $region36: #{net_forward.11} parent=1 // pred_region
      %2588 = dma.done [#allocation3], 32
    $region37: #{net_forward.11} parent=1 // pred_fallthru
      _
    %2589 = vsyncpa [#allocation3], 1

</llo_original>
